<compile_context>
chip_gen: v6e
topology: v6e:2x2x1
jax: 0.10.0
libtpu: 0.0.40
codegen_flags: <defaults>
</compile_context>

<pallas_src>
import functools

import jax
import jax.numpy as jnp
from jax.experimental import pallas as pl
from jax.experimental.pallas import tpu as pltpu

NC_LANE = 128   # lane-dense padding for the logits axis
SUBLANE = 8     # f32 sublane tile


def _classifier_kernel(x_ref, cw_ref, cb_ref, fw_ref, fb_ref, out_ref, *, h, w, cin):
    """Fused per-tile kernel: in-kernel im2col -> one MXU conv matmul + ReLU6
    -> reshape + sublane-axis global-sum pool -> Linear head.

    x_ref  : (B_TILE, H+2, W+2, Cin)  zero-padded NHWC activation tile (single 1x DMA)
    cw_ref : (9*Cin, Cf)              conv weights, (kh, kw, cin)-major rows
    cb_ref : (1, Cf)                  conv bias (f32)
    fw_ref : (Cf, NC_PAD)             classifier weight, pre-scaled by 1/(H*W), lane-padded
    fb_ref : (1, NC_PAD)              classifier bias (f32), lane-padded
    out_ref: (B_TILE, NC_PAD)         logits tile (lane-dense, sublane-aligned)
    """
    # Load once; do the (cheap, tiny) shuffles in f32 vregs for robust relayouts. The HBM
    # traffic is already the (optionally bf16) x_ref DMA -- these are in-VMEM ops only.
    xt = x_ref[...].astype(jnp.float32)
    b_tile = xt.shape[0]

    # In-kernel im2col: nine statically shifted views of the padded tile, concatenated along
    # the channel (lane) axis. Row order per (b, h, w) is (kh, kw, cin)-major, matching cw.
    taps = [xt[:, kh:kh + h, kw:kw + w, :] for kh in range(3) for kw in range(3)]
    patches = jnp.concatenate(taps, axis=-1)                       # (B_TILE, H, W, 9*Cin)
    patches = patches.reshape(b_tile * h * w, 9 * cin)             # layout-preserving (W % 8 == 0)

    # Conv as ONE im2col matmul on the MXU (f32 accumulate); bias + ReLU6 epilogue in f32.
    acc = jnp.dot(patches.astype(cw_ref.dtype), cw_ref[...],
                  preferred_element_type=jnp.float32)              # (rows, Cf)
    acc = jnp.clip(acc + cb_ref[...], 0.0, 6.0)

    # Global average pool: per-image spatial sum over the sublane-side H*W axis
    # (the 1/(H*W) scale is folded into fw in the wrapper). No kron / zero-FLOP matmul.
    feat = jnp.sum(acc.reshape(b_tile, h * w, acc.shape[-1]), axis=1)   # (B_TILE, Cf)

    # Classifier head: (B_TILE, Cf) x (Cf, NC_PAD) -> lane-dense 128-padded logits.
    logits = jnp.dot(feat.astype(fw_ref.dtype), fw_ref[...],
                     preferred_element_type=jnp.float32) + fb_ref[...]
    out_ref[...] = logits.astype(out_ref.dtype)


def _pick_b_tile(n, h, w, cin, cf, in_itemsize, vmem_budget_bytes):
    """Largest sublane-aligned batch tile whose double-buffered activation DMA plus the
    in-kernel f32 patches/conv-accumulator intermediates fit the VMEM budget."""
    per_img = (2 * (h + 2) * (w + 2) * cin * in_itemsize          # double-buffered input DMA
               + h * w * (9 * cin + cf) * 4)                      # f32 patches + conv acc
    bt = max(SUBLANE, int(vmem_budget_bytes // max(per_img, 1)))
    bt = (bt // SUBLANE) * SUBLANE
    n_pad8 = ((n + SUBLANE - 1) // SUBLANE) * SUBLANE
    # Cap rows = b_tile*H*W so the conv accumulator stays modest even for big batches.
    return int(max(SUBLANE, min(bt, n_pad8, 128)))


@functools.partial(jax.jit, static_argnames=("use_bf16", "b_tile", "vmem_budget_bytes"))
def base_classifier_forward(x_nchw, conv_w, conv_b, fc_w, fc_b, *,
                            use_bf16=True, b_tile=None,
                            vmem_budget_bytes=12 * 1024 * 1024):
    """x_nchw: (N, Cin, H, W) f32 (PyTorch layout). conv_w: (Cf, Cin, 3, 3); conv_b: (Cf,);
    fc_w: (NC, Cf); fc_b: (NC,). Returns logits (N, NC) in f32."""
    N, Cin, H, W = x_nchw.shape
    Cf = conv_w.shape[0]
    NC = fc_w.shape[0]
    K = 9 * Cin
    HW = H * W
    NC_PAD = max(NC_LANE, ((NC + NC_LANE - 1) // NC_LANE) * NC_LANE)

    mm_dtype = jnp.bfloat16 if use_bf16 else jnp.float32
    in_itemsize = 2 if use_bf16 else 4

    # VMEM-budget-driven, sublane-aligned batch tile; no forced 2-way split (single-TC parts
    # would just pay an extra grid step), batch zero-padded so any N (incl. odd) works.
    if b_tile is None:
        b_tile = _pick_b_tile(N, H, W, Cin, Cf, in_itemsize, vmem_budget_bytes)
    b_tile = max(SUBLANE, (b_tile // SUBLANE) * SUBLANE)
    n_pad = ((N + b_tile - 1) // b_tile) * b_tile
    num_tiles = n_pad // b_tile

    # ---- layout glue (single 1x pass over the activations; no im2col slab) ----
    x_nhwc = jnp.transpose(x_nchw, (0, 2, 3, 1))                        # (N, H, W, Cin)
    x_pad = jnp.pad(x_nhwc, ((0, n_pad - N), (1, 1), (1, 1), (0, 0))).astype(mm_dtype)

    cw = jnp.transpose(conv_w, (2, 3, 1, 0)).reshape(K, Cf).astype(mm_dtype)  # (9*Cin, Cf)
    cb = conv_b.reshape(1, Cf).astype(jnp.float32)

    fw = jnp.transpose(fc_w, (1, 0)) / float(HW)                        # fold mean-pool scale
    fw = jnp.pad(fw, ((0, 0), (0, NC_PAD - NC))).astype(mm_dtype)       # (Cf, NC_PAD) lane-dense
    fb = jnp.pad(fc_b, (0, NC_PAD - NC)).reshape(1, NC_PAD).astype(jnp.float32)

    kernel = functools.partial(_classifier_kernel, h=H, w=W, cin=Cin)

    out = pl.pallas_call(
        kernel,
        out_shape=jax.ShapeDtypeStruct((n_pad, NC_PAD), jnp.float32),
        grid_spec=pltpu.PrefetchScalarGridSpec(
            num_scalar_prefetch=0,
            grid=(num_tiles,),
            in_specs=[
                # padded NHWC activation tile: only the batch axis is tiled.
                pl.BlockSpec((b_tile, H + 2, W + 2, Cin), lambda t: (t, 0, 0, 0)),
                pl.BlockSpec((K, Cf), lambda t: (0, 0)),        # conv weight (grid-invariant)
                pl.BlockSpec((1, Cf), lambda t: (0, 0)),        # conv bias
                pl.BlockSpec((Cf, NC_PAD), lambda t: (0, 0)),   # fc weight (pre-scaled)
                pl.BlockSpec((1, NC_PAD), lambda t: (0, 0)),    # fc bias
            ],
            out_specs=pl.BlockSpec((b_tile, NC_PAD), lambda t: (t, 0)),
        ),
        compiler_params=pltpu.CompilerParams(
            dimension_semantics=("parallel",),
            vmem_limit_bytes=32 * 1024 * 1024,
        ),
    )(x_pad, cw, cb, fw, fb)

    return out[:N, :NC]


def _reference_forward(x_nchw, conv_w, conv_b, fc_w, fc_b):
    """Pure-JAX reference for correctness checking."""
    y = jax.lax.conv_general_dilated(
        x_nchw, conv_w, window_strides=(1, 1), padding="SAME",
        dimension_numbers=("NCHW", "OIHW", "NCHW"))
    y = y + conv_b[None, :, None, None]
    y = jnp.clip(y, 0.0, 6.0)                                           # ReLU6
    feat = jnp.mean(y, axis=(2, 3))                                     # (N, Cf)
    return feat @ fc_w.T + fc_b[None, :]


if __name__ == "__main__":
    key = jax.random.PRNGKey(0)
    k_x, k_cw, k_cb, k_fw, k_fb = jax.random.split(key, 5)

    N, Cin, H, W = 2, 3, 16, 16        # NCHW, as the PyTorch module expects (3-channel input)
    feature_dim = 32                   # synthetic backbone feature width
    num_classes = 10

    x = jax.random.normal(k_x, (N, Cin, H, W), dtype=jnp.float32)
    conv_w = jax.random.normal(k_cw, (feature_dim, Cin, 3, 3), dtype=jnp.float32) * 0.1
    conv_b = jax.random.normal(k_cb, (feature_dim,), dtype=jnp.float32) * 0.1
    fc_w = jax.random.normal(k_fw, (num_classes, feature_dim), dtype=jnp.float32) * 0.1
    fc_b = jax.random.normal(k_fb, (num_classes,), dtype=jnp.float32) * 0.1

    ref = _reference_forward(x, conv_w, conv_b, fc_w, fc_b)

    # f32 matmul path: exact semantics match.
    logits = base_classifier_forward(x, conv_w, conv_b, fc_w, fc_b, use_bf16=False)
    jax.block_until_ready(logits)
    assert logits.shape == (N, num_classes)
    assert jnp.allclose(logits, ref, atol=1e-4, rtol=1e-4), "f32 mismatch vs reference"

    # bf16 matmul-operand path (default; MXU-native on all gens), f32 accumulate/epilogue.
    logits_bf16 = base_classifier_forward(x, conv_w, conv_b, fc_w, fc_b, use_bf16=True)
    jax.block_until_ready(logits_bf16)
    assert logits_bf16.shape == (N, num_classes)
    assert jnp.allclose(logits_bf16, ref, atol=3e-2, rtol=3e-2), "bf16 mismatch vs reference"

    # Odd batch (review correctness concern): batch is zero-padded to a b_tile multiple.
    N_odd = 5
    x5 = jax.random.normal(jax.random.PRNGKey(1), (N_odd, Cin, H, W), dtype=jnp.float32)
    ref5 = _reference_forward(x5, conv_w, conv_b, fc_w, fc_b)
    logits5 = base_classifier_forward(x5, conv_w, conv_b, fc_w, fc_b, use_bf16=False)
    jax.block_until_ready(logits5)
    assert logits5.shape == (N_odd, num_classes)
    assert jnp.allclose(logits5, ref5, atol=1e-4, rtol=1e-4), "odd-N mismatch vs reference"

    print("KERNEL_OK")
</pallas_src>

<mosaic_0001>
module attributes {stable_mosaic.version = 11 : i64} {
  func.func @_classifier_kernel(%arg0: i32, %arg1: memref<8x18x18x3xf32, #tpu.memory_space<vmem>>, %arg2: memref<27x32xf32, #tpu.memory_space<vmem>>, %arg3: memref<1x32xf32, #tpu.memory_space<vmem>>, %arg4: memref<32x128xf32, #tpu.memory_space<vmem>>, %arg5: memref<1x128xf32, #tpu.memory_space<vmem>>, %arg6: memref<8x128xf32, #tpu.memory_space<vmem>>) attributes {dimension_semantics = [#tpu.dimension_semantics<parallel>], iteration_bounds = array<i64: 1>, scalar_prefetch = 0 : i64, scratch_operands = 0 : i64, tpu.core_type = #tpu.core_type<tc>, window_params = [{transform_indices = @transform_0, window_bounds = array<i64: 8, 18, 18, 3>}, {pipeline_mode = #tpu.pipeline_mode<synchronous>, transform_indices = @transform_1, window_bounds = array<i64: 27, 32>}, {pipeline_mode = #tpu.pipeline_mode<synchronous>, transform_indices = @transform_2, window_bounds = array<i64: 1, 32>}, {pipeline_mode = #tpu.pipeline_mode<synchronous>, transform_indices = @transform_3, window_bounds = array<i64: 32, 128>}, {pipeline_mode = #tpu.pipeline_mode<synchronous>, transform_indices = @transform_4, window_bounds = array<i64: 1, 128>}, {transform_indices = @transform_5, window_bounds = array<i64: 8, 128>}]} {
    %c0 = arith.constant 0 : index
    %c0_0 = arith.constant 0 : index
    %c0_1 = arith.constant 0 : index
    %c0_2 = arith.constant 0 : index
    %0 = vector.load %arg1[%c0, %c0_0, %c0_1, %c0_2] : memref<8x18x18x3xf32, #tpu.memory_space<vmem>>, vector<8x18x18x3xf32>
    %1 = vector.extract_strided_slice %0 {offsets = [0, 0, 0, 0], sizes = [8, 16, 16, 3], strides = [1, 1, 1, 1]} : vector<8x18x18x3xf32> to vector<8x16x16x3xf32>
    %2 = vector.extract_strided_slice %0 {offsets = [0, 0, 1, 0], sizes = [8, 16, 16, 3], strides = [1, 1, 1, 1]} : vector<8x18x18x3xf32> to vector<8x16x16x3xf32>
    %3 = vector.extract_strided_slice %0 {offsets = [0, 0, 2, 0], sizes = [8, 16, 16, 3], strides = [1, 1, 1, 1]} : vector<8x18x18x3xf32> to vector<8x16x16x3xf32>
    %4 = vector.extract_strided_slice %0 {offsets = [0, 1, 0, 0], sizes = [8, 16, 16, 3], strides = [1, 1, 1, 1]} : vector<8x18x18x3xf32> to vector<8x16x16x3xf32>
    %5 = vector.extract_strided_slice %0 {offsets = [0, 1, 1, 0], sizes = [8, 16, 16, 3], strides = [1, 1, 1, 1]} : vector<8x18x18x3xf32> to vector<8x16x16x3xf32>
    %6 = vector.extract_strided_slice %0 {offsets = [0, 1, 2, 0], sizes = [8, 16, 16, 3], strides = [1, 1, 1, 1]} : vector<8x18x18x3xf32> to vector<8x16x16x3xf32>
    %7 = vector.extract_strided_slice %0 {offsets = [0, 2, 0, 0], sizes = [8, 16, 16, 3], strides = [1, 1, 1, 1]} : vector<8x18x18x3xf32> to vector<8x16x16x3xf32>
    %8 = vector.extract_strided_slice %0 {offsets = [0, 2, 1, 0], sizes = [8, 16, 16, 3], strides = [1, 1, 1, 1]} : vector<8x18x18x3xf32> to vector<8x16x16x3xf32>
    %9 = vector.extract_strided_slice %0 {offsets = [0, 2, 2, 0], sizes = [8, 16, 16, 3], strides = [1, 1, 1, 1]} : vector<8x18x18x3xf32> to vector<8x16x16x3xf32>
    %10 = tpu.concatenate %1, %2, %3, %4, %5, %6, %7, %8, %9 in 3 : vector<8x16x16x3xf32>, vector<8x16x16x3xf32>, vector<8x16x16x3xf32>, vector<8x16x16x3xf32>, vector<8x16x16x3xf32>, vector<8x16x16x3xf32>, vector<8x16x16x3xf32>, vector<8x16x16x3xf32>, vector<8x16x16x3xf32> -> vector<8x16x16x27xf32>
    %11 = vector.shape_cast %10 : vector<8x16x16x27xf32> to vector<2048x27xf32>
    %c0_3 = arith.constant 0 : index
    %c0_4 = arith.constant 0 : index
    %12 = vector.load %arg2[%c0_3, %c0_4] : memref<27x32xf32, #tpu.memory_space<vmem>>, vector<27x32xf32>
    %cst = arith.constant dense<0.000000e+00> : vector<2048x32xf32>
    %13 = tpu.matmul %11, %12, %cst {dimension_numbers = #tpu.dot_dimension_numbers<[1], [0], [0], [1], [0, 0, 1, 1], [], []>} : vector<2048x27xf32>, vector<27x32xf32>, vector<2048x32xf32> -> vector<2048x32xf32>
    %c0_5 = arith.constant 0 : index
    %c0_6 = arith.constant 0 : index
    %14 = vector.load %arg3[%c0_5, %c0_6] : memref<1x32xf32, #tpu.memory_space<vmem>>, vector<1x32xf32>
    %15 = vector.broadcast %14 : vector<1x32xf32> to vector<2048x32xf32>
    %16 = arith.addf %13, %15 : vector<2048x32xf32>
    %cst_7 = arith.constant 0.000000e+00 : f32
    %cst_8 = arith.constant 6.000000e+00 : f32
    %17 = vector.broadcast %cst_7 : f32 to vector<2048x32xf32>
    %18 = arith.maximumf %17, %16 : vector<2048x32xf32>
    %19 = vector.broadcast %cst_8 : f32 to vector<2048x32xf32>
    %20 = arith.minimumf %19, %18 : vector<2048x32xf32>
    %21 = vector.shape_cast %20 : vector<2048x32xf32> to vector<8x256x32xf32>
    %cst_9 = arith.constant dense<0.000000e+00> : vector<8x32xf32>
    %22 = vector.multi_reduction <add>, %21, %cst_9 [1] : vector<8x256x32xf32> to vector<8x32xf32>
    %c0_10 = arith.constant 0 : index
    %c0_11 = arith.constant 0 : index
    %23 = vector.load %arg4[%c0_10, %c0_11] : memref<32x128xf32, #tpu.memory_space<vmem>>, vector<32x128xf32>
    %cst_12 = arith.constant dense<0.000000e+00> : vector<8x128xf32>
    %24 = tpu.matmul %22, %23, %cst_12 {dimension_numbers = #tpu.dot_dimension_numbers<[1], [0], [0], [1], [0, 0, 1, 1], [], []>} : vector<8x32xf32>, vector<32x128xf32>, vector<8x128xf32> -> vector<8x128xf32>
    %c0_13 = arith.constant 0 : index
    %c0_14 = arith.constant 0 : index
    %25 = vector.load %arg5[%c0_13, %c0_14] : memref<1x128xf32, #tpu.memory_space<vmem>>, vector<1x128xf32>
    %26 = vector.broadcast %25 : vector<1x128xf32> to vector<8x128xf32>
    %27 = arith.addf %24, %26 : vector<8x128xf32>
    %c0_15 = arith.constant 0 : index
    %c0_16 = arith.constant 0 : index
    %28 = vector.load %arg6[%c0_15, %c0_16] : memref<8x128xf32, #tpu.memory_space<vmem>>, vector<8x128xf32>
    tpu.vector_store %arg6[%c0_15, %c0_16], %27 {strides = array<i32>} : memref<8x128xf32, #tpu.memory_space<vmem>>, vector<8x128xf32>,
    return
  }
  func.func @transform_0(%arg0: i32) -> (i32, i32, i32, i32) {
    %c0_i32 = arith.constant 0 : i32
    %c0_i32_0 = arith.constant 0 : i32
    %c0_i32_1 = arith.constant 0 : i32
    %c0_i32_2 = arith.constant 0 : i32
    return %arg0, %c0_i32, %c0_i32_0, %c0_i32_1 : i32, i32, i32, i32
  }
  func.func @transform_1(%arg0: i32) -> (i32, i32) {
    %c0_i32 = arith.constant 0 : i32
    %c0_i32_0 = arith.constant 0 : i32
    %c0_i32_1 = arith.constant 0 : i32
    return %c0_i32, %c0_i32_0 : i32, i32
  }
  func.func @transform_2(%arg0: i32) -> (i32, i32) {
    %c0_i32 = arith.constant 0 : i32
    %c0_i32_0 = arith.constant 0 : i32
    %c0_i32_1 = arith.constant 0 : i32
    return %c0_i32, %c0_i32_0 : i32, i32
  }
  func.func @transform_3(%arg0: i32) -> (i32, i32) {
    %c0_i32 = arith.constant 0 : i32
    %c0_i32_0 = arith.constant 0 : i32
    %c0_i32_1 = arith.constant 0 : i32
    return %c0_i32, %c0_i32_0 : i32, i32
  }
  func.func @transform_4(%arg0: i32) -> (i32, i32) {
    %c0_i32 = arith.constant 0 : i32
    %c0_i32_0 = arith.constant 0 : i32
    %c0_i32_1 = arith.constant 0 : i32
    return %c0_i32, %c0_i32_0 : i32, i32
  }
  func.func @transform_5(%arg0: i32) -> (i32, i32) {
    %c0_i32 = arith.constant 0 : i32
    %c0_i32_0 = arith.constant 0 : i32
    return %arg0, %c0_i32 : i32, i32
  }
}

</mosaic_0001>

<llo_original>
// kernel: base_classifier_forward.1
$region0: #{base_classifier_forward.1}
  #allocation0 [shape = 'u32[]', space=smem, size = 0x4, offset = 0x4, fixed_abs, tag = 'smem constant byte address 0x4 - core index']
  #allocation1 [shape = 'u32[144,128]{1,0:T(1,128)}', space=vmem, size = 0x12000, scoped, tag = 'internal scratch']
  %s0 = inlined_call_operand.vmem [shape: f32[8,18,18,3], index: 0, kind: input, shape index: {}]
  %s1 = inlined_call_operand.vmem [shape: f32[27,32], index: 1, kind: input, shape index: {}]
  %s2 = inlined_call_operand.vmem [shape: f32[1,32], index: 2, kind: input, shape index: {}]
  %s3 = inlined_call_operand.vmem [shape: f32[32,128], index: 3, kind: input, shape index: {}]
  %s4 = inlined_call_operand.vmem [shape: f32[1,128], index: 4, kind: input, shape index: {}]
  %s5 = inlined_call_operand.vmem [shape: f32[8,128], index: 5, kind: output, shape index: {}]
  %s6 = sld [smem:[#allocation0]]
  $region30: #{base_classifier_forward.1} parent=0
    _
  %s8 = ssub.s32 1, %s6
  %s9 = scalar_select 0, %s8, %s6
  // Predicated region
  $region2: #{base_classifier_forward.1} parent=0 // pred_check
    _
  $region3: #{base_classifier_forward.1} parent=0 // pred_check_branch
    %11 = sbr.rel (0) target = $region5
  $region4: #{base_classifier_forward.1} parent=0 // pred_region
    _
  $region5: #{base_classifier_forward.1} parent=0 // pred_fallthru
    _
  // Predicated region
  $region6: #{base_classifier_forward.1} parent=0 // pred_check
    _
  $region7: #{base_classifier_forward.1} parent=0 // pred_check_branch
    %13 = sbr.rel (0) target = $region9
  $region8: #{base_classifier_forward.1} parent=0 // pred_region
    _
  $region9: #{base_classifier_forward.1} parent=0 // pred_fallthru
    _
  // Predicated region
  $region10: #{base_classifier_forward.1} parent=0 // pred_check
    _
  $region11: #{base_classifier_forward.1} parent=0 // pred_check_branch
    %15 = sbr.rel (0) target = $region13
  $region12: #{base_classifier_forward.1} parent=0 // pred_region
    _
  $region13: #{base_classifier_forward.1} parent=0 // pred_fallthru
    _
  // Predicated region
  $region14: #{base_classifier_forward.1} parent=0 // pred_check
    _
  $region15: #{base_classifier_forward.1} parent=0 // pred_check_branch
    %17 = sbr.rel (0) target = $region17
  $region16: #{base_classifier_forward.1} parent=0 // pred_region
    _
  $region17: #{base_classifier_forward.1} parent=0 // pred_fallthru
    _
  // Predicated region
  $region18: #{base_classifier_forward.1} parent=0 // pred_check
    _
  $region19: #{base_classifier_forward.1} parent=0 // pred_check_branch
    %19 = sbr.rel (0) target = $region21
  $region20: #{base_classifier_forward.1} parent=0 // pred_region
    _
  $region21: #{base_classifier_forward.1} parent=0 // pred_fallthru
    _
  %v20 = vld [vmem:[%s0] sm:$0xff]
  %v21 = vld [vmem:[%s0 + $0x8] sm:$0xff]
  %v22 = vld [vmem:[%s0 + $0x10] sm:$0x3]
  %v23 = vld [vmem:[%s0 + $0x18] sm:$0xff]
  %v24 = vld [vmem:[%s0 + $0x20] sm:$0xff]
  %v25 = vld [vmem:[%s0 + $0x28] sm:$0x3]
  %v26 = vld [vmem:[%s0 + $0x30] sm:$0xff]
  %v27 = vld [vmem:[%s0 + $0x38] sm:$0xff]
  %v28 = vld [vmem:[%s0 + $0x40] sm:$0x3]
  %v29 = vld [vmem:[%s0 + $0x48] sm:$0xff]
  %v30 = vld [vmem:[%s0 + $0x50] sm:$0xff]
  %v31 = vld [vmem:[%s0 + $0x58] sm:$0x3]
  %v32 = vld [vmem:[%s0 + $0x60] sm:$0xff]
  %v33 = vld [vmem:[%s0 + $0x68] sm:$0xff]
  %v34 = vld [vmem:[%s0 + $0x70] sm:$0x3]
  %v35 = vld [vmem:[%s0 + $0x78] sm:$0xff]
  %v36 = vld [vmem:[%s0 + $0x80] sm:$0xff]
  %v37 = vld [vmem:[%s0 + $0x88] sm:$0x3]
  %v38 = vld [vmem:[%s0 + $0x90] sm:$0xff]
  %v39 = vld [vmem:[%s0 + $0x98] sm:$0xff]
  %v40 = vld [vmem:[%s0 + $0xa0] sm:$0x3]
  %v41 = vld [vmem:[%s0 + $0xa8] sm:$0xff]
  %v42 = vld [vmem:[%s0 + $0xb0] sm:$0xff]
  %v43 = vld [vmem:[%s0 + $0xb8] sm:$0x3]
  %v44 = vld [vmem:[%s0 + $0xc0] sm:$0xff]
  %v45 = vld [vmem:[%s0 + $0xc8] sm:$0xff]
  %v46 = vld [vmem:[%s0 + $0xd0] sm:$0x3]
  %v47 = vld [vmem:[%s0 + $0xd8] sm:$0xff]
  %v48 = vld [vmem:[%s0 + $0xe0] sm:$0xff]
  %v49 = vld [vmem:[%s0 + $0xe8] sm:$0x3]
  %v50 = vld [vmem:[%s0 + $0xf0] sm:$0xff]
  %v51 = vld [vmem:[%s0 + $0xf8] sm:$0xff]
  %v52 = vld [vmem:[%s0 + $0x100] sm:$0x3]
  %v53 = vld [vmem:[%s0 + $0x108] sm:$0xff]
  %v54 = vld [vmem:[%s0 + $0x110] sm:$0xff]
  %v55 = vld [vmem:[%s0 + $0x118] sm:$0x3]
  %v56 = vld [vmem:[%s0 + $0x120] sm:$0xff]
  %v57 = vld [vmem:[%s0 + $0x128] sm:$0xff]
  %v58 = vld [vmem:[%s0 + $0x130] sm:$0x3]
  %v59 = vld [vmem:[%s0 + $0x138] sm:$0xff]
  %v60 = vld [vmem:[%s0 + $0x140] sm:$0xff]
  %v61 = vld [vmem:[%s0 + $0x148] sm:$0x3]
  %v62 = vld [vmem:[%s0 + $0x150] sm:$0xff]
  %v63 = vld [vmem:[%s0 + $0x158] sm:$0xff]
  %v64 = vld [vmem:[%s0 + $0x160] sm:$0x3]
  %v65 = vld [vmem:[%s0 + $0x168] sm:$0xff]
  %v66 = vld [vmem:[%s0 + $0x170] sm:$0xff]
  %v67 = vld [vmem:[%s0 + $0x178] sm:$0x3]
  %v68 = vld [vmem:[%s0 + $0x180] sm:$0xff]
  %v69 = vld [vmem:[%s0 + $0x188] sm:$0xff]
  %v70 = vld [vmem:[%s0 + $0x190] sm:$0x3]
  %v71 = vld [vmem:[%s0 + $0x198] sm:$0xff]
  %v72 = vld [vmem:[%s0 + $0x1a0] sm:$0xff]
  %v73 = vld [vmem:[%s0 + $0x1a8] sm:$0x3]
  %v74 = vld [vmem:[%s0 + $0x1b0] sm:$0xff]
  %v75 = vld [vmem:[%s0 + $0x1b8] sm:$0xff]
  %v76 = vld [vmem:[%s0 + $0x1c0] sm:$0x3]
  %v77 = vld [vmem:[%s0 + $0x1c8] sm:$0xff]
  %v78 = vld [vmem:[%s0 + $0x1d0] sm:$0xff]
  %v79 = vld [vmem:[%s0 + $0x1d8] sm:$0x3]
  %v80 = vld [vmem:[%s0 + $0x1e0] sm:$0xff]
  %v81 = vld [vmem:[%s0 + $0x1e8] sm:$0xff]
  %v82 = vld [vmem:[%s0 + $0x1f0] sm:$0x3]
  %v83 = vld [vmem:[%s0 + $0x1f8] sm:$0xff]
  %v84 = vld [vmem:[%s0 + $0x200] sm:$0xff]
  %v85 = vld [vmem:[%s0 + $0x208] sm:$0x3]
  %v86 = vld [vmem:[%s0 + $0x210] sm:$0xff]
  %v87 = vld [vmem:[%s0 + $0x218] sm:$0xff]
  %v88 = vld [vmem:[%s0 + $0x220] sm:$0x3]
  %v89 = vld [vmem:[%s0 + $0x228] sm:$0xff]
  %v90 = vld [vmem:[%s0 + $0x230] sm:$0xff]
  %v91 = vld [vmem:[%s0 + $0x238] sm:$0x3]
  %v92 = vld [vmem:[%s0 + $0x240] sm:$0xff]
  %v93 = vld [vmem:[%s0 + $0x248] sm:$0xff]
  %v94 = vld [vmem:[%s0 + $0x250] sm:$0x3]
  %v95 = vld [vmem:[%s0 + $0x258] sm:$0xff]
  %v96 = vld [vmem:[%s0 + $0x260] sm:$0xff]
  %v97 = vld [vmem:[%s0 + $0x268] sm:$0x3]
  %v98 = vld [vmem:[%s0 + $0x270] sm:$0xff]
  %v99 = vld [vmem:[%s0 + $0x278] sm:$0xff]
  %v100 = vld [vmem:[%s0 + $0x280] sm:$0x3]
  %v101 = vld [vmem:[%s0 + $0x288] sm:$0xff]
  %v102 = vld [vmem:[%s0 + $0x290] sm:$0xff]
  %v103 = vld [vmem:[%s0 + $0x298] sm:$0x3]
  %v104 = vld [vmem:[%s0 + $0x2a0] sm:$0xff]
  %v105 = vld [vmem:[%s0 + $0x2a8] sm:$0xff]
  %v106 = vld [vmem:[%s0 + $0x2b0] sm:$0x3]
  %v107 = vld [vmem:[%s0 + $0x2b8] sm:$0xff]
  %v108 = vld [vmem:[%s0 + $0x2c0] sm:$0xff]
  %v109 = vld [vmem:[%s0 + $0x2c8] sm:$0x3]
  %v110 = vld [vmem:[%s0 + $0x2d0] sm:$0xff]
  %v111 = vld [vmem:[%s0 + $0x2d8] sm:$0xff]
  %v112 = vld [vmem:[%s0 + $0x2e0] sm:$0x3]
  %v113 = vld [vmem:[%s0 + $0x2e8] sm:$0xff]
  %v114 = vld [vmem:[%s0 + $0x2f0] sm:$0xff]
  %v115 = vld [vmem:[%s0 + $0x2f8] sm:$0x3]
  %v116 = vld [vmem:[%s0 + $0x300] sm:$0xff]
  %v117 = vld [vmem:[%s0 + $0x308] sm:$0xff]
  %v118 = vld [vmem:[%s0 + $0x310] sm:$0x3]
  %v119 = vld [vmem:[%s0 + $0x318] sm:$0xff]
  %v120 = vld [vmem:[%s0 + $0x320] sm:$0xff]
  %v121 = vld [vmem:[%s0 + $0x328] sm:$0x3]
  %v122 = vld [vmem:[%s0 + $0x330] sm:$0xff]
  %v123 = vld [vmem:[%s0 + $0x338] sm:$0xff]
  %v124 = vld [vmem:[%s0 + $0x340] sm:$0x3]
  %v125 = vld [vmem:[%s0 + $0x348] sm:$0xff]
  %v126 = vld [vmem:[%s0 + $0x350] sm:$0xff]
  %v127 = vld [vmem:[%s0 + $0x358] sm:$0x3]
  %v128 = vld [vmem:[%s0 + $0x360] sm:$0xff]
  %v129 = vld [vmem:[%s0 + $0x368] sm:$0xff]
  %v130 = vld [vmem:[%s0 + $0x370] sm:$0x3]
  %v131 = vld [vmem:[%s0 + $0x378] sm:$0xff]
  %v132 = vld [vmem:[%s0 + $0x380] sm:$0xff]
  %v133 = vld [vmem:[%s0 + $0x388] sm:$0x3]
  %v134 = vld [vmem:[%s0 + $0x390] sm:$0xff]
  %v135 = vld [vmem:[%s0 + $0x398] sm:$0xff]
  %v136 = vld [vmem:[%s0 + $0x3a0] sm:$0x3]
  %v137 = vld [vmem:[%s0 + $0x3a8] sm:$0xff]
  %v138 = vld [vmem:[%s0 + $0x3b0] sm:$0xff]
  %v139 = vld [vmem:[%s0 + $0x3b8] sm:$0x3]
  %v140 = vld [vmem:[%s0 + $0x3c0] sm:$0xff]
  %v141 = vld [vmem:[%s0 + $0x3c8] sm:$0xff]
  %v142 = vld [vmem:[%s0 + $0x3d0] sm:$0x3]
  %v143 = vld [vmem:[%s0 + $0x3d8] sm:$0xff]
  %v144 = vld [vmem:[%s0 + $0x3e0] sm:$0xff]
  %v145 = vld [vmem:[%s0 + $0x3e8] sm:$0x3]
  %v146 = vld [vmem:[%s0 + $0x3f0] sm:$0xff]
  %v147 = vld [vmem:[%s0 + $0x3f8] sm:$0xff]
  %v148 = vld [vmem:[%s0 + $0x400] sm:$0x3]
  %v149 = vld [vmem:[%s0 + $0x408] sm:$0xff]
  %v150 = vld [vmem:[%s0 + $0x410] sm:$0xff]
  %v151 = vld [vmem:[%s0 + $0x418] sm:$0x3]
  %v152 = vld [vmem:[%s0 + $0x420] sm:$0xff]
  %v153 = vld [vmem:[%s0 + $0x428] sm:$0xff]
  %v154 = vld [vmem:[%s0 + $0x430] sm:$0x3]
  %v155 = vld [vmem:[%s0 + $0x438] sm:$0xff]
  %v156 = vld [vmem:[%s0 + $0x440] sm:$0xff]
  %v157 = vld [vmem:[%s0 + $0x448] sm:$0x3]
  %v158 = vld [vmem:[%s0 + $0x450] sm:$0xff]
  %v159 = vld [vmem:[%s0 + $0x458] sm:$0xff]
  %v160 = vld [vmem:[%s0 + $0x460] sm:$0x3]
  %v161 = vld [vmem:[%s0 + $0x468] sm:$0xff]
  %v162 = vld [vmem:[%s0 + $0x470] sm:$0xff]
  %v163 = vld [vmem:[%s0 + $0x478] sm:$0x3]
  %v164 = vld [vmem:[%s0 + $0x480] sm:$0xff]
  %v165 = vld [vmem:[%s0 + $0x488] sm:$0xff]
  %v166 = vld [vmem:[%s0 + $0x490] sm:$0x3]
  %v167 = vld [vmem:[%s0 + $0x498] sm:$0xff]
  %v168 = vld [vmem:[%s0 + $0x4a0] sm:$0xff]
  %v169 = vld [vmem:[%s0 + $0x4a8] sm:$0x3]
  %v170 = vld [vmem:[%s0 + $0x4b0] sm:$0xff]
  %v171 = vld [vmem:[%s0 + $0x4b8] sm:$0xff]
  %v172 = vld [vmem:[%s0 + $0x4c0] sm:$0x3]
  %v173 = vld [vmem:[%s0 + $0x4c8] sm:$0xff]
  %v174 = vld [vmem:[%s0 + $0x4d0] sm:$0xff]
  %v175 = vld [vmem:[%s0 + $0x4d8] sm:$0x3]
  %v176 = vld [vmem:[%s0 + $0x4e0] sm:$0xff]
  %v177 = vld [vmem:[%s0 + $0x4e8] sm:$0xff]
  %v178 = vld [vmem:[%s0 + $0x4f0] sm:$0x3]
  %v179 = vld [vmem:[%s0 + $0x4f8] sm:$0xff]
  %v180 = vld [vmem:[%s0 + $0x500] sm:$0xff]
  %v181 = vld [vmem:[%s0 + $0x508] sm:$0x3]
  %v182 = vld [vmem:[%s0 + $0x510] sm:$0xff]
  %v183 = vld [vmem:[%s0 + $0x518] sm:$0xff]
  %v184 = vld [vmem:[%s0 + $0x520] sm:$0x3]
  %v185 = vld [vmem:[%s0 + $0x528] sm:$0xff]
  %v186 = vld [vmem:[%s0 + $0x530] sm:$0xff]
  %v187 = vld [vmem:[%s0 + $0x538] sm:$0x3]
  %v188 = vld [vmem:[%s0 + $0x540] sm:$0xff]
  %v189 = vld [vmem:[%s0 + $0x548] sm:$0xff]
  %v190 = vld [vmem:[%s0 + $0x550] sm:$0x3]
  %v191 = vld [vmem:[%s0 + $0x558] sm:$0xff]
  %v192 = vld [vmem:[%s0 + $0x560] sm:$0xff]
  %v193 = vld [vmem:[%s0 + $0x568] sm:$0x3]
  %v194 = vld [vmem:[%s0 + $0x570] sm:$0xff]
  %v195 = vld [vmem:[%s0 + $0x578] sm:$0xff]
  %v196 = vld [vmem:[%s0 + $0x580] sm:$0x3]
  %v197 = vld [vmem:[%s0 + $0x588] sm:$0xff]
  %v198 = vld [vmem:[%s0 + $0x590] sm:$0xff]
  %v199 = vld [vmem:[%s0 + $0x598] sm:$0x3]
  %v200 = vld [vmem:[%s0 + $0x5a0] sm:$0xff]
  %v201 = vld [vmem:[%s0 + $0x5a8] sm:$0xff]
  %v202 = vld [vmem:[%s0 + $0x5b0] sm:$0x3]
  %v203 = vld [vmem:[%s0 + $0x5b8] sm:$0xff]
  %v204 = vld [vmem:[%s0 + $0x5c0] sm:$0xff]
  %v205 = vld [vmem:[%s0 + $0x5c8] sm:$0x3]
  %v206 = vld [vmem:[%s0 + $0x5d0] sm:$0xff]
  %v207 = vld [vmem:[%s0 + $0x5d8] sm:$0xff]
  %v208 = vld [vmem:[%s0 + $0x5e0] sm:$0x3]
  %v209 = vld [vmem:[%s0 + $0x5e8] sm:$0xff]
  %v210 = vld [vmem:[%s0 + $0x5f0] sm:$0xff]
  %v211 = vld [vmem:[%s0 + $0x5f8] sm:$0x3]
  %v212 = vld [vmem:[%s0 + $0x600] sm:$0xff]
  %v213 = vld [vmem:[%s0 + $0x608] sm:$0xff]
  %v214 = vld [vmem:[%s0 + $0x610] sm:$0x3]
  %v215 = vld [vmem:[%s0 + $0x618] sm:$0xff]
  %v216 = vld [vmem:[%s0 + $0x620] sm:$0xff]
  %v217 = vld [vmem:[%s0 + $0x628] sm:$0x3]
  %v218 = vld [vmem:[%s0 + $0x630] sm:$0xff]
  %v219 = vld [vmem:[%s0 + $0x638] sm:$0xff]
  %v220 = vld [vmem:[%s0 + $0x640] sm:$0x3]
  %v221 = vld [vmem:[%s0 + $0x648] sm:$0xff]
  %v222 = vld [vmem:[%s0 + $0x650] sm:$0xff]
  %v223 = vld [vmem:[%s0 + $0x658] sm:$0x3]
  %v224 = vld [vmem:[%s0 + $0x660] sm:$0xff]
  %v225 = vld [vmem:[%s0 + $0x668] sm:$0xff]
  %v226 = vld [vmem:[%s0 + $0x670] sm:$0x3]
  %v227 = vld [vmem:[%s0 + $0x678] sm:$0xff]
  %v228 = vld [vmem:[%s0 + $0x680] sm:$0xff]
  %v229 = vld [vmem:[%s0 + $0x688] sm:$0x3]
  %v230 = vld [vmem:[%s0 + $0x690] sm:$0xff]
  %v231 = vld [vmem:[%s0 + $0x698] sm:$0xff]
  %v232 = vld [vmem:[%s0 + $0x6a0] sm:$0x3]
  %v233 = vld [vmem:[%s0 + $0x6a8] sm:$0xff]
  %v234 = vld [vmem:[%s0 + $0x6b0] sm:$0xff]
  %v235 = vld [vmem:[%s0 + $0x6b8] sm:$0x3]
  %v236 = vld [vmem:[%s0 + $0x6c0] sm:$0xff]
  %v237 = vld [vmem:[%s0 + $0x6c8] sm:$0xff]
  %v238 = vld [vmem:[%s0 + $0x6d0] sm:$0x3]
  %v239 = vld [vmem:[%s0 + $0x6d8] sm:$0xff]
  %v240 = vld [vmem:[%s0 + $0x6e0] sm:$0xff]
  %v241 = vld [vmem:[%s0 + $0x6e8] sm:$0x3]
  %v242 = vld [vmem:[%s0 + $0x6f0] sm:$0xff]
  %v243 = vld [vmem:[%s0 + $0x6f8] sm:$0xff]
  %v244 = vld [vmem:[%s0 + $0x700] sm:$0x3]
  %v245 = vld [vmem:[%s0 + $0x708] sm:$0xff]
  %v246 = vld [vmem:[%s0 + $0x710] sm:$0xff]
  %v247 = vld [vmem:[%s0 + $0x718] sm:$0x3]
  %v248 = vld [vmem:[%s0 + $0x720] sm:$0xff]
  %v249 = vld [vmem:[%s0 + $0x728] sm:$0xff]
  %v250 = vld [vmem:[%s0 + $0x730] sm:$0x3]
  %v251 = vld [vmem:[%s0 + $0x738] sm:$0xff]
  %v252 = vld [vmem:[%s0 + $0x740] sm:$0xff]
  %v253 = vld [vmem:[%s0 + $0x748] sm:$0x3]
  %v254 = vld [vmem:[%s0 + $0x750] sm:$0xff]
  %v255 = vld [vmem:[%s0 + $0x758] sm:$0xff]
  %v256 = vld [vmem:[%s0 + $0x760] sm:$0x3]
  %v257 = vld [vmem:[%s0 + $0x768] sm:$0xff]
  %v258 = vld [vmem:[%s0 + $0x770] sm:$0xff]
  %v259 = vld [vmem:[%s0 + $0x778] sm:$0x3]
  %v260 = vld [vmem:[%s0 + $0x780] sm:$0xff]
  %v261 = vld [vmem:[%s0 + $0x788] sm:$0xff]
  %v262 = vld [vmem:[%s0 + $0x790] sm:$0x3]
  %v263 = vld [vmem:[%s0 + $0x798] sm:$0xff]
  %v264 = vld [vmem:[%s0 + $0x7a0] sm:$0xff]
  %v265 = vld [vmem:[%s0 + $0x7a8] sm:$0x3]
  %v266 = vld [vmem:[%s0 + $0x7b0] sm:$0xff]
  %v267 = vld [vmem:[%s0 + $0x7b8] sm:$0xff]
  %v268 = vld [vmem:[%s0 + $0x7c0] sm:$0x3]
  %v269 = vld [vmem:[%s0 + $0x7c8] sm:$0xff]
  %v270 = vld [vmem:[%s0 + $0x7d0] sm:$0xff]
  %v271 = vld [vmem:[%s0 + $0x7d8] sm:$0x3]
  %v272 = vld [vmem:[%s0 + $0x7e0] sm:$0xff]
  %v273 = vld [vmem:[%s0 + $0x7e8] sm:$0xff]
  %v274 = vld [vmem:[%s0 + $0x7f0] sm:$0x3]
  %v275 = vld [vmem:[%s0 + $0x7f8] sm:$0xff]
  %v276 = vld [vmem:[%s0 + $0x800] sm:$0xff]
  %v277 = vld [vmem:[%s0 + $0x808] sm:$0x3]
  %v278 = vld [vmem:[%s0 + $0x810] sm:$0xff]
  %v279 = vld [vmem:[%s0 + $0x818] sm:$0xff]
  %v280 = vld [vmem:[%s0 + $0x820] sm:$0x3]
  %v281 = vld [vmem:[%s0 + $0x828] sm:$0xff]
  %v282 = vld [vmem:[%s0 + $0x830] sm:$0xff]
  %v283 = vld [vmem:[%s0 + $0x838] sm:$0x3]
  %v284 = vld [vmem:[%s0 + $0x840] sm:$0xff]
  %v285 = vld [vmem:[%s0 + $0x848] sm:$0xff]
  %v286 = vld [vmem:[%s0 + $0x850] sm:$0x3]
  %v287 = vld [vmem:[%s0 + $0x858] sm:$0xff]
  %v288 = vld [vmem:[%s0 + $0x860] sm:$0xff]
  %v289 = vld [vmem:[%s0 + $0x868] sm:$0x3]
  %v290 = vld [vmem:[%s0 + $0x870] sm:$0xff]
  %v291 = vld [vmem:[%s0 + $0x878] sm:$0xff]
  %v292 = vld [vmem:[%s0 + $0x880] sm:$0x3]
  %v293 = vld [vmem:[%s0 + $0x888] sm:$0xff]
  %v294 = vld [vmem:[%s0 + $0x890] sm:$0xff]
  %v295 = vld [vmem:[%s0 + $0x898] sm:$0x3]
  %v296 = vld [vmem:[%s0 + $0x8a0] sm:$0xff]
  %v297 = vld [vmem:[%s0 + $0x8a8] sm:$0xff]
  %v298 = vld [vmem:[%s0 + $0x8b0] sm:$0x3]
  %v299 = vld [vmem:[%s0 + $0x8b8] sm:$0xff]
  %v300 = vld [vmem:[%s0 + $0x8c0] sm:$0xff]
  %v301 = vld [vmem:[%s0 + $0x8c8] sm:$0x3]
  %v302 = vld [vmem:[%s0 + $0x8d0] sm:$0xff]
  %v303 = vld [vmem:[%s0 + $0x8d8] sm:$0xff]
  %v304 = vld [vmem:[%s0 + $0x8e0] sm:$0x3]
  %v305 = vld [vmem:[%s0 + $0x8e8] sm:$0xff]
  %v306 = vld [vmem:[%s0 + $0x8f0] sm:$0xff]
  %v307 = vld [vmem:[%s0 + $0x8f8] sm:$0x3]
  %v308 = vld [vmem:[%s0 + $0x900] sm:$0xff]
  %v309 = vld [vmem:[%s0 + $0x908] sm:$0xff]
  %v310 = vld [vmem:[%s0 + $0x910] sm:$0x3]
  %v311 = vld [vmem:[%s0 + $0x918] sm:$0xff]
  %v312 = vld [vmem:[%s0 + $0x920] sm:$0xff]
  %v313 = vld [vmem:[%s0 + $0x928] sm:$0x3]
  %v314 = vld [vmem:[%s0 + $0x930] sm:$0xff]
  %v315 = vld [vmem:[%s0 + $0x938] sm:$0xff]
  %v316 = vld [vmem:[%s0 + $0x940] sm:$0x3]
  %v317 = vld [vmem:[%s0 + $0x948] sm:$0xff]
  %v318 = vld [vmem:[%s0 + $0x950] sm:$0xff]
  %v319 = vld [vmem:[%s0 + $0x958] sm:$0x3]
  %v320 = vld [vmem:[%s0 + $0x960] sm:$0xff]
  %v321 = vld [vmem:[%s0 + $0x968] sm:$0xff]
  %v322 = vld [vmem:[%s0 + $0x970] sm:$0x3]
  %v323 = vld [vmem:[%s0 + $0x978] sm:$0xff]
  %v324 = vld [vmem:[%s0 + $0x980] sm:$0xff]
  %v325 = vld [vmem:[%s0 + $0x988] sm:$0x3]
  %v326 = vld [vmem:[%s0 + $0x990] sm:$0xff]
  %v327 = vld [vmem:[%s0 + $0x998] sm:$0xff]
  %v328 = vld [vmem:[%s0 + $0x9a0] sm:$0x3]
  %v329 = vld [vmem:[%s0 + $0x9a8] sm:$0xff]
  %v330 = vld [vmem:[%s0 + $0x9b0] sm:$0xff]
  %v331 = vld [vmem:[%s0 + $0x9b8] sm:$0x3]
  %v332 = vld [vmem:[%s0 + $0x9c0] sm:$0xff]
  %v333 = vld [vmem:[%s0 + $0x9c8] sm:$0xff]
  %v334 = vld [vmem:[%s0 + $0x9d0] sm:$0x3]
  %v335 = vld [vmem:[%s0 + $0x9d8] sm:$0xff]
  %v336 = vld [vmem:[%s0 + $0x9e0] sm:$0xff]
  %v337 = vld [vmem:[%s0 + $0x9e8] sm:$0x3]
  %v338 = vld [vmem:[%s0 + $0x9f0] sm:$0xff]
  %v339 = vld [vmem:[%s0 + $0x9f8] sm:$0xff]
  %v340 = vld [vmem:[%s0 + $0xa00] sm:$0x3]
  %v341 = vld [vmem:[%s0 + $0xa08] sm:$0xff]
  %v342 = vld [vmem:[%s0 + $0xa10] sm:$0xff]
  %v343 = vld [vmem:[%s0 + $0xa18] sm:$0x3]
  %v344 = vld [vmem:[%s0 + $0xa20] sm:$0xff]
  %v345 = vld [vmem:[%s0 + $0xa28] sm:$0xff]
  %v346 = vld [vmem:[%s0 + $0xa30] sm:$0x3]
  %v347 = vld [vmem:[%s0 + $0xa38] sm:$0xff]
  %v348 = vld [vmem:[%s0 + $0xa40] sm:$0xff]
  %v349 = vld [vmem:[%s0 + $0xa48] sm:$0x3]
  %v350 = vld [vmem:[%s0 + $0xa50] sm:$0xff]
  %v351 = vld [vmem:[%s0 + $0xa58] sm:$0xff]
  %v352 = vld [vmem:[%s0 + $0xa60] sm:$0x3]
  %v353 = vld [vmem:[%s0 + $0xa68] sm:$0xff]
  %v354 = vld [vmem:[%s0 + $0xa70] sm:$0xff]
  %v355 = vld [vmem:[%s0 + $0xa78] sm:$0x3]
  %v356 = vld [vmem:[%s0 + $0xa80] sm:$0xff]
  %v357 = vld [vmem:[%s0 + $0xa88] sm:$0xff]
  %v358 = vld [vmem:[%s0 + $0xa90] sm:$0x3]
  %v359 = vld [vmem:[%s0 + $0xa98] sm:$0xff]
  %v360 = vld [vmem:[%s0 + $0xaa0] sm:$0xff]
  %v361 = vld [vmem:[%s0 + $0xaa8] sm:$0x3]
  %v362 = vld [vmem:[%s0 + $0xab0] sm:$0xff]
  %v363 = vld [vmem:[%s0 + $0xab8] sm:$0xff]
  %v364 = vld [vmem:[%s0 + $0xac0] sm:$0x3]
  %v365 = vld [vmem:[%s0 + $0xac8] sm:$0xff]
  %v366 = vld [vmem:[%s0 + $0xad0] sm:$0xff]
  %v367 = vld [vmem:[%s0 + $0xad8] sm:$0x3]
  %v368 = vld [vmem:[%s0 + $0xae0] sm:$0xff]
  %v369 = vld [vmem:[%s0 + $0xae8] sm:$0xff]
  %v370 = vld [vmem:[%s0 + $0xaf0] sm:$0x3]
  %v371 = vld [vmem:[%s0 + $0xaf8] sm:$0xff]
  %v372 = vld [vmem:[%s0 + $0xb00] sm:$0xff]
  %v373 = vld [vmem:[%s0 + $0xb08] sm:$0x3]
  %v374 = vld [vmem:[%s0 + $0xb10] sm:$0xff]
  %v375 = vld [vmem:[%s0 + $0xb18] sm:$0xff]
  %v376 = vld [vmem:[%s0 + $0xb20] sm:$0x3]
  %v377 = vld [vmem:[%s0 + $0xb28] sm:$0xff]
  %v378 = vld [vmem:[%s0 + $0xb30] sm:$0xff]
  %v379 = vld [vmem:[%s0 + $0xb38] sm:$0x3]
  %v380 = vld [vmem:[%s0 + $0xb40] sm:$0xff]
  %v381 = vld [vmem:[%s0 + $0xb48] sm:$0xff]
  %v382 = vld [vmem:[%s0 + $0xb50] sm:$0x3]
  %v383 = vld [vmem:[%s0 + $0xb58] sm:$0xff]
  %v384 = vld [vmem:[%s0 + $0xb60] sm:$0xff]
  %v385 = vld [vmem:[%s0 + $0xb68] sm:$0x3]
  %v386 = vld [vmem:[%s0 + $0xb70] sm:$0xff]
  %v387 = vld [vmem:[%s0 + $0xb78] sm:$0xff]
  %v388 = vld [vmem:[%s0 + $0xb80] sm:$0x3]
  %v389 = vld [vmem:[%s0 + $0xb88] sm:$0xff]
  %v390 = vld [vmem:[%s0 + $0xb90] sm:$0xff]
  %v391 = vld [vmem:[%s0 + $0xb98] sm:$0x3]
  %v392 = vld [vmem:[%s0 + $0xba0] sm:$0xff]
  %v393 = vld [vmem:[%s0 + $0xba8] sm:$0xff]
  %v394 = vld [vmem:[%s0 + $0xbb0] sm:$0x3]
  %v395 = vld [vmem:[%s0 + $0xbb8] sm:$0xff]
  %v396 = vld [vmem:[%s0 + $0xbc0] sm:$0xff]
  %v397 = vld [vmem:[%s0 + $0xbc8] sm:$0x3]
  %v398 = vld [vmem:[%s0 + $0xbd0] sm:$0xff]
  %v399 = vld [vmem:[%s0 + $0xbd8] sm:$0xff]
  %v400 = vld [vmem:[%s0 + $0xbe0] sm:$0x3]
  %v401 = vld [vmem:[%s0 + $0xbe8] sm:$0xff]
  %v402 = vld [vmem:[%s0 + $0xbf0] sm:$0xff]
  %v403 = vld [vmem:[%s0 + $0xbf8] sm:$0x3]
  %v404 = vld [vmem:[%s0 + $0xc00] sm:$0xff]
  %v405 = vld [vmem:[%s0 + $0xc08] sm:$0xff]
  %v406 = vld [vmem:[%s0 + $0xc10] sm:$0x3]
  %v407 = vld [vmem:[%s0 + $0xc18] sm:$0xff]
  %v408 = vld [vmem:[%s0 + $0xc20] sm:$0xff]
  %v409 = vld [vmem:[%s0 + $0xc28] sm:$0x3]
  %v410 = vld [vmem:[%s0 + $0xc30] sm:$0xff]
  %v411 = vld [vmem:[%s0 + $0xc38] sm:$0xff]
  %v412 = vld [vmem:[%s0 + $0xc40] sm:$0x3]
  %v413 = vld [vmem:[%s0 + $0xc48] sm:$0xff]
  %v414 = vld [vmem:[%s0 + $0xc50] sm:$0xff]
  %v415 = vld [vmem:[%s0 + $0xc58] sm:$0x3]
  %v416 = vld [vmem:[%s0 + $0xc60] sm:$0xff]
  %v417 = vld [vmem:[%s0 + $0xc68] sm:$0xff]
  %v418 = vld [vmem:[%s0 + $0xc70] sm:$0x3]
  %v419 = vld [vmem:[%s0 + $0xc78] sm:$0xff]
  %v420 = vld [vmem:[%s0 + $0xc80] sm:$0xff]
  %v421 = vld [vmem:[%s0 + $0xc88] sm:$0x3]
  %v422 = vld [vmem:[%s0 + $0xc90] sm:$0xff]
  %v423 = vld [vmem:[%s0 + $0xc98] sm:$0xff]
  %v424 = vld [vmem:[%s0 + $0xca0] sm:$0x3]
  %v425 = vld [vmem:[%s0 + $0xca8] sm:$0xff]
  %v426 = vld [vmem:[%s0 + $0xcb0] sm:$0xff]
  %v427 = vld [vmem:[%s0 + $0xcb8] sm:$0x3]
  %v428 = vld [vmem:[%s0 + $0xcc0] sm:$0xff]
  %v429 = vld [vmem:[%s0 + $0xcc8] sm:$0xff]
  %v430 = vld [vmem:[%s0 + $0xcd0] sm:$0x3]
  %v431 = vld [vmem:[%s0 + $0xcd8] sm:$0xff]
  %v432 = vld [vmem:[%s0 + $0xce0] sm:$0xff]
  %v433 = vld [vmem:[%s0 + $0xce8] sm:$0x3]
  %v434 = vld [vmem:[%s0 + $0xcf0] sm:$0xff]
  %v435 = vld [vmem:[%s0 + $0xcf8] sm:$0xff]
  %v436 = vld [vmem:[%s0 + $0xd00] sm:$0x3]
  %v437 = vld [vmem:[%s0 + $0xd08] sm:$0xff]
  %v438 = vld [vmem:[%s0 + $0xd10] sm:$0xff]
  %v439 = vld [vmem:[%s0 + $0xd18] sm:$0x3]
  %v440 = vld [vmem:[%s0 + $0xd20] sm:$0xff]
  %v441 = vld [vmem:[%s0 + $0xd28] sm:$0xff]
  %v442 = vld [vmem:[%s0 + $0xd30] sm:$0x3]
  %v443 = vld [vmem:[%s0 + $0xd38] sm:$0xff]
  %v444 = vld [vmem:[%s0 + $0xd40] sm:$0xff]
  %v445 = vld [vmem:[%s0 + $0xd48] sm:$0x3]
  %v446 = vld [vmem:[%s0 + $0xd50] sm:$0xff]
  %v447 = vld [vmem:[%s0 + $0xd58] sm:$0xff]
  %v448 = vld [vmem:[%s0 + $0xd60] sm:$0x3]
  %v449 = vld [vmem:[%s0 + $0xd68] sm:$0xff]
  %v450 = vld [vmem:[%s0 + $0xd70] sm:$0xff]
  %v451 = vld [vmem:[%s0 + $0xd78] sm:$0x3]
  %vm836 = vcmask 1046528
  %v837 = vrot.slane %v20, 1
  %v838 = vrot.slane %v21, 1
  %v839 = vsel %vm836, %v837, %v838
  %v840 = vrot.slane %v22, 1
  %v841 = vsel %vm836, %v838, %v840
  %v842 = vrot.slane %v23, 1
  %v843 = vrot.slane %v24, 1
  %v844 = vsel %vm836, %v842, %v843
  %v845 = vrot.slane %v25, 1
  %v846 = vsel %vm836, %v843, %v845
  %v847 = vrot.slane %v26, 1
  %v848 = vrot.slane %v27, 1
  %v849 = vsel %vm836, %v847, %v848
  %v850 = vrot.slane %v28, 1
  %v851 = vsel %vm836, %v848, %v850
  %v852 = vrot.slane %v29, 1
  %v853 = vrot.slane %v30, 1
  %v854 = vsel %vm836, %v852, %v853
  %v855 = vrot.slane %v31, 1
  %v856 = vsel %vm836, %v853, %v855
  %v857 = vrot.slane %v32, 1
  %v858 = vrot.slane %v33, 1
  %v859 = vsel %vm836, %v857, %v858
  %v860 = vrot.slane %v34, 1
  %v861 = vsel %vm836, %v858, %v860
  %v862 = vrot.slane %v35, 1
  %v863 = vrot.slane %v36, 1
  %v864 = vsel %vm836, %v862, %v863
  %v865 = vrot.slane %v37, 1
  %v866 = vsel %vm836, %v863, %v865
  %v867 = vrot.slane %v38, 1
  %v868 = vrot.slane %v39, 1
  %v869 = vsel %vm836, %v867, %v868
  %v870 = vrot.slane %v40, 1
  %v871 = vsel %vm836, %v868, %v870
  %v872 = vrot.slane %v41, 1
  %v873 = vrot.slane %v42, 1
  %v874 = vsel %vm836, %v872, %v873
  %v875 = vrot.slane %v43, 1
  %v876 = vsel %vm836, %v873, %v875
  %v877 = vrot.slane %v44, 1
  %v878 = vrot.slane %v45, 1
  %v879 = vsel %vm836, %v877, %v878
  %v880 = vrot.slane %v46, 1
  %v881 = vsel %vm836, %v878, %v880
  %v882 = vrot.slane %v47, 1
  %v883 = vrot.slane %v48, 1
  %v884 = vsel %vm836, %v882, %v883
  %v885 = vrot.slane %v49, 1
  %v886 = vsel %vm836, %v883, %v885
  %v887 = vrot.slane %v50, 1
  %v888 = vrot.slane %v51, 1
  %v889 = vsel %vm836, %v887, %v888
  %v890 = vrot.slane %v52, 1
  %v891 = vsel %vm836, %v888, %v890
  %v892 = vrot.slane %v53, 1
  %v893 = vrot.slane %v54, 1
  %v894 = vsel %vm836, %v892, %v893
  %v895 = vrot.slane %v55, 1
  %v896 = vsel %vm836, %v893, %v895
  %v897 = vrot.slane %v56, 1
  %v898 = vrot.slane %v57, 1
  %v899 = vsel %vm836, %v897, %v898
  %v900 = vrot.slane %v58, 1
  %v901 = vsel %vm836, %v898, %v900
  %v902 = vrot.slane %v59, 1
  %v903 = vrot.slane %v60, 1
  %v904 = vsel %vm836, %v902, %v903
  %v905 = vrot.slane %v61, 1
  %v906 = vsel %vm836, %v903, %v905
  %v907 = vrot.slane %v62, 1
  %v908 = vrot.slane %v63, 1
  %v909 = vsel %vm836, %v907, %v908
  %v910 = vrot.slane %v64, 1
  %v911 = vsel %vm836, %v908, %v910
  %v912 = vrot.slane %v65, 1
  %v913 = vrot.slane %v66, 1
  %v914 = vsel %vm836, %v912, %v913
  %v915 = vrot.slane %v67, 1
  %v916 = vsel %vm836, %v913, %v915
  %v917 = vrot.slane %v74, 1
  %v918 = vrot.slane %v75, 1
  %v919 = vsel %vm836, %v917, %v918
  %v920 = vrot.slane %v76, 1
  %v921 = vsel %vm836, %v918, %v920
  %v922 = vrot.slane %v77, 1
  %v923 = vrot.slane %v78, 1
  %v924 = vsel %vm836, %v922, %v923
  %v925 = vrot.slane %v79, 1
  %v926 = vsel %vm836, %v923, %v925
  %v927 = vrot.slane %v80, 1
  %v928 = vrot.slane %v81, 1
  %v929 = vsel %vm836, %v927, %v928
  %v930 = vrot.slane %v82, 1
  %v931 = vsel %vm836, %v928, %v930
  %v932 = vrot.slane %v83, 1
  %v933 = vrot.slane %v84, 1
  %v934 = vsel %vm836, %v932, %v933
  %v935 = vrot.slane %v85, 1
  %v936 = vsel %vm836, %v933, %v935
  %v937 = vrot.slane %v86, 1
  %v938 = vrot.slane %v87, 1
  %v939 = vsel %vm836, %v937, %v938
  %v940 = vrot.slane %v88, 1
  %v941 = vsel %vm836, %v938, %v940
  %v942 = vrot.slane %v89, 1
  %v943 = vrot.slane %v90, 1
  %v944 = vsel %vm836, %v942, %v943
  %v945 = vrot.slane %v91, 1
  %v946 = vsel %vm836, %v943, %v945
  %v947 = vrot.slane %v92, 1
  %v948 = vrot.slane %v93, 1
  %v949 = vsel %vm836, %v947, %v948
  %v950 = vrot.slane %v94, 1
  %v951 = vsel %vm836, %v948, %v950
  %v952 = vrot.slane %v95, 1
  %v953 = vrot.slane %v96, 1
  %v954 = vsel %vm836, %v952, %v953
  %v955 = vrot.slane %v97, 1
  %v956 = vsel %vm836, %v953, %v955
  %v957 = vrot.slane %v98, 1
  %v958 = vrot.slane %v99, 1
  %v959 = vsel %vm836, %v957, %v958
  %v960 = vrot.slane %v100, 1
  %v961 = vsel %vm836, %v958, %v960
  %v962 = vrot.slane %v101, 1
  %v963 = vrot.slane %v102, 1
  %v964 = vsel %vm836, %v962, %v963
  %v965 = vrot.slane %v103, 1
  %v966 = vsel %vm836, %v963, %v965
  %v967 = vrot.slane %v104, 1
  %v968 = vrot.slane %v105, 1
  %v969 = vsel %vm836, %v967, %v968
  %v970 = vrot.slane %v106, 1
  %v971 = vsel %vm836, %v968, %v970
  %v972 = vrot.slane %v107, 1
  %v973 = vrot.slane %v108, 1
  %v974 = vsel %vm836, %v972, %v973
  %v975 = vrot.slane %v109, 1
  %v976 = vsel %vm836, %v973, %v975
  %v977 = vrot.slane %v110, 1
  %v978 = vrot.slane %v111, 1
  %v979 = vsel %vm836, %v977, %v978
  %v980 = vrot.slane %v112, 1
  %v981 = vsel %vm836, %v978, %v980
  %v982 = vrot.slane %v113, 1
  %v983 = vrot.slane %v114, 1
  %v984 = vsel %vm836, %v982, %v983
  %v985 = vrot.slane %v115, 1
  %v986 = vsel %vm836, %v983, %v985
  %v987 = vrot.slane %v116, 1
  %v988 = vrot.slane %v117, 1
  %v989 = vsel %vm836, %v987, %v988
  %v990 = vrot.slane %v118, 1
  %v991 = vsel %vm836, %v988, %v990
  %v992 = vrot.slane %v119, 1
  %v993 = vrot.slane %v120, 1
  %v994 = vsel %vm836, %v992, %v993
  %v995 = vrot.slane %v121, 1
  %v996 = vsel %vm836, %v993, %v995
  %v997 = vrot.slane %v128, 1
  %v998 = vrot.slane %v129, 1
  %v999 = vsel %vm836, %v997, %v998
  %v1000 = vrot.slane %v130, 1
  %v1001 = vsel %vm836, %v998, %v1000
  %v1002 = vrot.slane %v131, 1
  %v1003 = vrot.slane %v132, 1
  %v1004 = vsel %vm836, %v1002, %v1003
  %v1005 = vrot.slane %v133, 1
  %v1006 = vsel %vm836, %v1003, %v1005
  %v1007 = vrot.slane %v134, 1
  %v1008 = vrot.slane %v135, 1
  %v1009 = vsel %vm836, %v1007, %v1008
  %v1010 = vrot.slane %v136, 1
  %v1011 = vsel %vm836, %v1008, %v1010
  %v1012 = vrot.slane %v137, 1
  %v1013 = vrot.slane %v138, 1
  %v1014 = vsel %vm836, %v1012, %v1013
  %v1015 = vrot.slane %v139, 1
  %v1016 = vsel %vm836, %v1013, %v1015
  %v1017 = vrot.slane %v140, 1
  %v1018 = vrot.slane %v141, 1
  %v1019 = vsel %vm836, %v1017, %v1018
  %v1020 = vrot.slane %v142, 1
  %v1021 = vsel %vm836, %v1018, %v1020
  %v1022 = vrot.slane %v143, 1
  %v1023 = vrot.slane %v144, 1
  %v1024 = vsel %vm836, %v1022, %v1023
  %v1025 = vrot.slane %v145, 1
  %v1026 = vsel %vm836, %v1023, %v1025
  %v1027 = vrot.slane %v146, 1
  %v1028 = vrot.slane %v147, 1
  %v1029 = vsel %vm836, %v1027, %v1028
  %v1030 = vrot.slane %v148, 1
  %v1031 = vsel %vm836, %v1028, %v1030
  %v1032 = vrot.slane %v149, 1
  %v1033 = vrot.slane %v150, 1
  %v1034 = vsel %vm836, %v1032, %v1033
  %v1035 = vrot.slane %v151, 1
  %v1036 = vsel %vm836, %v1033, %v1035
  %v1037 = vrot.slane %v152, 1
  %v1038 = vrot.slane %v153, 1
  %v1039 = vsel %vm836, %v1037, %v1038
  %v1040 = vrot.slane %v154, 1
  %v1041 = vsel %vm836, %v1038, %v1040
  %v1042 = vrot.slane %v155, 1
  %v1043 = vrot.slane %v156, 1
  %v1044 = vsel %vm836, %v1042, %v1043
  %v1045 = vrot.slane %v157, 1
  %v1046 = vsel %vm836, %v1043, %v1045
  %v1047 = vrot.slane %v158, 1
  %v1048 = vrot.slane %v159, 1
  %v1049 = vsel %vm836, %v1047, %v1048
  %v1050 = vrot.slane %v160, 1
  %v1051 = vsel %vm836, %v1048, %v1050
  %v1052 = vrot.slane %v161, 1
  %v1053 = vrot.slane %v162, 1
  %v1054 = vsel %vm836, %v1052, %v1053
  %v1055 = vrot.slane %v163, 1
  %v1056 = vsel %vm836, %v1053, %v1055
  %v1057 = vrot.slane %v164, 1
  %v1058 = vrot.slane %v165, 1
  %v1059 = vsel %vm836, %v1057, %v1058
  %v1060 = vrot.slane %v166, 1
  %v1061 = vsel %vm836, %v1058, %v1060
  %v1062 = vrot.slane %v167, 1
  %v1063 = vrot.slane %v168, 1
  %v1064 = vsel %vm836, %v1062, %v1063
  %v1065 = vrot.slane %v169, 1
  %v1066 = vsel %vm836, %v1063, %v1065
  %v1067 = vrot.slane %v170, 1
  %v1068 = vrot.slane %v171, 1
  %v1069 = vsel %vm836, %v1067, %v1068
  %v1070 = vrot.slane %v172, 1
  %v1071 = vsel %vm836, %v1068, %v1070
  %v1072 = vrot.slane %v173, 1
  %v1073 = vrot.slane %v174, 1
  %v1074 = vsel %vm836, %v1072, %v1073
  %v1075 = vrot.slane %v175, 1
  %v1076 = vsel %vm836, %v1073, %v1075
  %v1077 = vrot.slane %v182, 1
  %v1078 = vrot.slane %v183, 1
  %v1079 = vsel %vm836, %v1077, %v1078
  %v1080 = vrot.slane %v184, 1
  %v1081 = vsel %vm836, %v1078, %v1080
  %v1082 = vrot.slane %v185, 1
  %v1083 = vrot.slane %v186, 1
  %v1084 = vsel %vm836, %v1082, %v1083
  %v1085 = vrot.slane %v187, 1
  %v1086 = vsel %vm836, %v1083, %v1085
  %v1087 = vrot.slane %v188, 1
  %v1088 = vrot.slane %v189, 1
  %v1089 = vsel %vm836, %v1087, %v1088
  %v1090 = vrot.slane %v190, 1
  %v1091 = vsel %vm836, %v1088, %v1090
  %v1092 = vrot.slane %v191, 1
  %v1093 = vrot.slane %v192, 1
  %v1094 = vsel %vm836, %v1092, %v1093
  %v1095 = vrot.slane %v193, 1
  %v1096 = vsel %vm836, %v1093, %v1095
  %v1097 = vrot.slane %v194, 1
  %v1098 = vrot.slane %v195, 1
  %v1099 = vsel %vm836, %v1097, %v1098
  %v1100 = vrot.slane %v196, 1
  %v1101 = vsel %vm836, %v1098, %v1100
  %v1102 = vrot.slane %v197, 1
  %v1103 = vrot.slane %v198, 1
  %v1104 = vsel %vm836, %v1102, %v1103
  %v1105 = vrot.slane %v199, 1
  %v1106 = vsel %vm836, %v1103, %v1105
  %v1107 = vrot.slane %v200, 1
  %v1108 = vrot.slane %v201, 1
  %v1109 = vsel %vm836, %v1107, %v1108
  %v1110 = vrot.slane %v202, 1
  %v1111 = vsel %vm836, %v1108, %v1110
  %v1112 = vrot.slane %v203, 1
  %v1113 = vrot.slane %v204, 1
  %v1114 = vsel %vm836, %v1112, %v1113
  %v1115 = vrot.slane %v205, 1
  %v1116 = vsel %vm836, %v1113, %v1115
  %v1117 = vrot.slane %v206, 1
  %v1118 = vrot.slane %v207, 1
  %v1119 = vsel %vm836, %v1117, %v1118
  %v1120 = vrot.slane %v208, 1
  %v1121 = vsel %vm836, %v1118, %v1120
  %v1122 = vrot.slane %v209, 1
  %v1123 = vrot.slane %v210, 1
  %v1124 = vsel %vm836, %v1122, %v1123
  %v1125 = vrot.slane %v211, 1
  %v1126 = vsel %vm836, %v1123, %v1125
  %v1127 = vrot.slane %v212, 1
  %v1128 = vrot.slane %v213, 1
  %v1129 = vsel %vm836, %v1127, %v1128
  %v1130 = vrot.slane %v214, 1
  %v1131 = vsel %vm836, %v1128, %v1130
  %v1132 = vrot.slane %v215, 1
  %v1133 = vrot.slane %v216, 1
  %v1134 = vsel %vm836, %v1132, %v1133
  %v1135 = vrot.slane %v217, 1
  %v1136 = vsel %vm836, %v1133, %v1135
  %v1137 = vrot.slane %v218, 1
  %v1138 = vrot.slane %v219, 1
  %v1139 = vsel %vm836, %v1137, %v1138
  %v1140 = vrot.slane %v220, 1
  %v1141 = vsel %vm836, %v1138, %v1140
  %v1142 = vrot.slane %v221, 1
  %v1143 = vrot.slane %v222, 1
  %v1144 = vsel %vm836, %v1142, %v1143
  %v1145 = vrot.slane %v223, 1
  %v1146 = vsel %vm836, %v1143, %v1145
  %v1147 = vrot.slane %v224, 1
  %v1148 = vrot.slane %v225, 1
  %v1149 = vsel %vm836, %v1147, %v1148
  %v1150 = vrot.slane %v226, 1
  %v1151 = vsel %vm836, %v1148, %v1150
  %v1152 = vrot.slane %v227, 1
  %v1153 = vrot.slane %v228, 1
  %v1154 = vsel %vm836, %v1152, %v1153
  %v1155 = vrot.slane %v229, 1
  %v1156 = vsel %vm836, %v1153, %v1155
  %v1157 = vrot.slane %v236, 1
  %v1158 = vrot.slane %v237, 1
  %v1159 = vsel %vm836, %v1157, %v1158
  %v1160 = vrot.slane %v238, 1
  %v1161 = vsel %vm836, %v1158, %v1160
  %v1162 = vrot.slane %v239, 1
  %v1163 = vrot.slane %v240, 1
  %v1164 = vsel %vm836, %v1162, %v1163
  %v1165 = vrot.slane %v241, 1
  %v1166 = vsel %vm836, %v1163, %v1165
  %v1167 = vrot.slane %v242, 1
  %v1168 = vrot.slane %v243, 1
  %v1169 = vsel %vm836, %v1167, %v1168
  %v1170 = vrot.slane %v244, 1
  %v1171 = vsel %vm836, %v1168, %v1170
  %v1172 = vrot.slane %v245, 1
  %v1173 = vrot.slane %v246, 1
  %v1174 = vsel %vm836, %v1172, %v1173
  %v1175 = vrot.slane %v247, 1
  %v1176 = vsel %vm836, %v1173, %v1175
  %v1177 = vrot.slane %v248, 1
  %v1178 = vrot.slane %v249, 1
  %v1179 = vsel %vm836, %v1177, %v1178
  %v1180 = vrot.slane %v250, 1
  %v1181 = vsel %vm836, %v1178, %v1180
  %v1182 = vrot.slane %v251, 1
  %v1183 = vrot.slane %v252, 1
  %v1184 = vsel %vm836, %v1182, %v1183
  %v1185 = vrot.slane %v253, 1
  %v1186 = vsel %vm836, %v1183, %v1185
  %v1187 = vrot.slane %v254, 1
  %v1188 = vrot.slane %v255, 1
  %v1189 = vsel %vm836, %v1187, %v1188
  %v1190 = vrot.slane %v256, 1
  %v1191 = vsel %vm836, %v1188, %v1190
  %v1192 = vrot.slane %v257, 1
  %v1193 = vrot.slane %v258, 1
  %v1194 = vsel %vm836, %v1192, %v1193
  %v1195 = vrot.slane %v259, 1
  %v1196 = vsel %vm836, %v1193, %v1195
  %v1197 = vrot.slane %v260, 1
  %v1198 = vrot.slane %v261, 1
  %v1199 = vsel %vm836, %v1197, %v1198
  %v1200 = vrot.slane %v262, 1
  %v1201 = vsel %vm836, %v1198, %v1200
  %v1202 = vrot.slane %v263, 1
  %v1203 = vrot.slane %v264, 1
  %v1204 = vsel %vm836, %v1202, %v1203
  %v1205 = vrot.slane %v265, 1
  %v1206 = vsel %vm836, %v1203, %v1205
  %v1207 = vrot.slane %v266, 1
  %v1208 = vrot.slane %v267, 1
  %v1209 = vsel %vm836, %v1207, %v1208
  %v1210 = vrot.slane %v268, 1
  %v1211 = vsel %vm836, %v1208, %v1210
  %v1212 = vrot.slane %v269, 1
  %v1213 = vrot.slane %v270, 1
  %v1214 = vsel %vm836, %v1212, %v1213
  %v1215 = vrot.slane %v271, 1
  %v1216 = vsel %vm836, %v1213, %v1215
  %v1217 = vrot.slane %v272, 1
  %v1218 = vrot.slane %v273, 1
  %v1219 = vsel %vm836, %v1217, %v1218
  %v1220 = vrot.slane %v274, 1
  %v1221 = vsel %vm836, %v1218, %v1220
  %v1222 = vrot.slane %v275, 1
  %v1223 = vrot.slane %v276, 1
  %v1224 = vsel %vm836, %v1222, %v1223
  %v1225 = vrot.slane %v277, 1
  %v1226 = vsel %vm836, %v1223, %v1225
  %v1227 = vrot.slane %v278, 1
  %v1228 = vrot.slane %v279, 1
  %v1229 = vsel %vm836, %v1227, %v1228
  %v1230 = vrot.slane %v280, 1
  %v1231 = vsel %vm836, %v1228, %v1230
  %v1232 = vrot.slane %v281, 1
  %v1233 = vrot.slane %v282, 1
  %v1234 = vsel %vm836, %v1232, %v1233
  %v1235 = vrot.slane %v283, 1
  %v1236 = vsel %vm836, %v1233, %v1235
  %v1237 = vrot.slane %v290, 1
  %v1238 = vrot.slane %v291, 1
  %v1239 = vsel %vm836, %v1237, %v1238
  %v1240 = vrot.slane %v292, 1
  %v1241 = vsel %vm836, %v1238, %v1240
  %v1242 = vrot.slane %v293, 1
  %v1243 = vrot.slane %v294, 1
  %v1244 = vsel %vm836, %v1242, %v1243
  %v1245 = vrot.slane %v295, 1
  %v1246 = vsel %vm836, %v1243, %v1245
  %v1247 = vrot.slane %v296, 1
  %v1248 = vrot.slane %v297, 1
  %v1249 = vsel %vm836, %v1247, %v1248
  %v1250 = vrot.slane %v298, 1
  %v1251 = vsel %vm836, %v1248, %v1250
  %v1252 = vrot.slane %v299, 1
  %v1253 = vrot.slane %v300, 1
  %v1254 = vsel %vm836, %v1252, %v1253
  %v1255 = vrot.slane %v301, 1
  %v1256 = vsel %vm836, %v1253, %v1255
  %v1257 = vrot.slane %v302, 1
  %v1258 = vrot.slane %v303, 1
  %v1259 = vsel %vm836, %v1257, %v1258
  %v1260 = vrot.slane %v304, 1
  %v1261 = vsel %vm836, %v1258, %v1260
  %v1262 = vrot.slane %v305, 1
  %v1263 = vrot.slane %v306, 1
  %v1264 = vsel %vm836, %v1262, %v1263
  %v1265 = vrot.slane %v307, 1
  %v1266 = vsel %vm836, %v1263, %v1265
  %v1267 = vrot.slane %v308, 1
  %v1268 = vrot.slane %v309, 1
  %v1269 = vsel %vm836, %v1267, %v1268
  %v1270 = vrot.slane %v310, 1
  %v1271 = vsel %vm836, %v1268, %v1270
  %v1272 = vrot.slane %v311, 1
  %v1273 = vrot.slane %v312, 1
  %v1274 = vsel %vm836, %v1272, %v1273
  %v1275 = vrot.slane %v313, 1
  %v1276 = vsel %vm836, %v1273, %v1275
  %v1277 = vrot.slane %v314, 1
  %v1278 = vrot.slane %v315, 1
  %v1279 = vsel %vm836, %v1277, %v1278
  %v1280 = vrot.slane %v316, 1
  %v1281 = vsel %vm836, %v1278, %v1280
  %v1282 = vrot.slane %v317, 1
  %v1283 = vrot.slane %v318, 1
  %v1284 = vsel %vm836, %v1282, %v1283
  %v1285 = vrot.slane %v319, 1
  %v1286 = vsel %vm836, %v1283, %v1285
  %v1287 = vrot.slane %v320, 1
  %v1288 = vrot.slane %v321, 1
  %v1289 = vsel %vm836, %v1287, %v1288
  %v1290 = vrot.slane %v322, 1
  %v1291 = vsel %vm836, %v1288, %v1290
  %v1292 = vrot.slane %v323, 1
  %v1293 = vrot.slane %v324, 1
  %v1294 = vsel %vm836, %v1292, %v1293
  %v1295 = vrot.slane %v325, 1
  %v1296 = vsel %vm836, %v1293, %v1295
  %v1297 = vrot.slane %v326, 1
  %v1298 = vrot.slane %v327, 1
  %v1299 = vsel %vm836, %v1297, %v1298
  %v1300 = vrot.slane %v328, 1
  %v1301 = vsel %vm836, %v1298, %v1300
  %v1302 = vrot.slane %v329, 1
  %v1303 = vrot.slane %v330, 1
  %v1304 = vsel %vm836, %v1302, %v1303
  %v1305 = vrot.slane %v331, 1
  %v1306 = vsel %vm836, %v1303, %v1305
  %v1307 = vrot.slane %v332, 1
  %v1308 = vrot.slane %v333, 1
  %v1309 = vsel %vm836, %v1307, %v1308
  %v1310 = vrot.slane %v334, 1
  %v1311 = vsel %vm836, %v1308, %v1310
  %v1312 = vrot.slane %v335, 1
  %v1313 = vrot.slane %v336, 1
  %v1314 = vsel %vm836, %v1312, %v1313
  %v1315 = vrot.slane %v337, 1
  %v1316 = vsel %vm836, %v1313, %v1315
  %v1317 = vrot.slane %v344, 1
  %v1318 = vrot.slane %v345, 1
  %v1319 = vsel %vm836, %v1317, %v1318
  %v1320 = vrot.slane %v346, 1
  %v1321 = vsel %vm836, %v1318, %v1320
  %v1322 = vrot.slane %v347, 1
  %v1323 = vrot.slane %v348, 1
  %v1324 = vsel %vm836, %v1322, %v1323
  %v1325 = vrot.slane %v349, 1
  %v1326 = vsel %vm836, %v1323, %v1325
  %v1327 = vrot.slane %v350, 1
  %v1328 = vrot.slane %v351, 1
  %v1329 = vsel %vm836, %v1327, %v1328
  %v1330 = vrot.slane %v352, 1
  %v1331 = vsel %vm836, %v1328, %v1330
  %v1332 = vrot.slane %v353, 1
  %v1333 = vrot.slane %v354, 1
  %v1334 = vsel %vm836, %v1332, %v1333
  %v1335 = vrot.slane %v355, 1
  %v1336 = vsel %vm836, %v1333, %v1335
  %v1337 = vrot.slane %v356, 1
  %v1338 = vrot.slane %v357, 1
  %v1339 = vsel %vm836, %v1337, %v1338
  %v1340 = vrot.slane %v358, 1
  %v1341 = vsel %vm836, %v1338, %v1340
  %v1342 = vrot.slane %v359, 1
  %v1343 = vrot.slane %v360, 1
  %v1344 = vsel %vm836, %v1342, %v1343
  %v1345 = vrot.slane %v361, 1
  %v1346 = vsel %vm836, %v1343, %v1345
  %v1347 = vrot.slane %v362, 1
  %v1348 = vrot.slane %v363, 1
  %v1349 = vsel %vm836, %v1347, %v1348
  %v1350 = vrot.slane %v364, 1
  %v1351 = vsel %vm836, %v1348, %v1350
  %v1352 = vrot.slane %v365, 1
  %v1353 = vrot.slane %v366, 1
  %v1354 = vsel %vm836, %v1352, %v1353
  %v1355 = vrot.slane %v367, 1
  %v1356 = vsel %vm836, %v1353, %v1355
  %v1357 = vrot.slane %v368, 1
  %v1358 = vrot.slane %v369, 1
  %v1359 = vsel %vm836, %v1357, %v1358
  %v1360 = vrot.slane %v370, 1
  %v1361 = vsel %vm836, %v1358, %v1360
  %v1362 = vrot.slane %v371, 1
  %v1363 = vrot.slane %v372, 1
  %v1364 = vsel %vm836, %v1362, %v1363
  %v1365 = vrot.slane %v373, 1
  %v1366 = vsel %vm836, %v1363, %v1365
  %v1367 = vrot.slane %v374, 1
  %v1368 = vrot.slane %v375, 1
  %v1369 = vsel %vm836, %v1367, %v1368
  %v1370 = vrot.slane %v376, 1
  %v1371 = vsel %vm836, %v1368, %v1370
  %v1372 = vrot.slane %v377, 1
  %v1373 = vrot.slane %v378, 1
  %v1374 = vsel %vm836, %v1372, %v1373
  %v1375 = vrot.slane %v379, 1
  %v1376 = vsel %vm836, %v1373, %v1375
  %v1377 = vrot.slane %v380, 1
  %v1378 = vrot.slane %v381, 1
  %v1379 = vsel %vm836, %v1377, %v1378
  %v1380 = vrot.slane %v382, 1
  %v1381 = vsel %vm836, %v1378, %v1380
  %v1382 = vrot.slane %v383, 1
  %v1383 = vrot.slane %v384, 1
  %v1384 = vsel %vm836, %v1382, %v1383
  %v1385 = vrot.slane %v385, 1
  %v1386 = vsel %vm836, %v1383, %v1385
  %v1387 = vrot.slane %v386, 1
  %v1388 = vrot.slane %v387, 1
  %v1389 = vsel %vm836, %v1387, %v1388
  %v1390 = vrot.slane %v388, 1
  %v1391 = vsel %vm836, %v1388, %v1390
  %v1392 = vrot.slane %v389, 1
  %v1393 = vrot.slane %v390, 1
  %v1394 = vsel %vm836, %v1392, %v1393
  %v1395 = vrot.slane %v391, 1
  %v1396 = vsel %vm836, %v1393, %v1395
  %v1397 = vrot.slane %v398, 1
  %v1398 = vrot.slane %v399, 1
  %v1399 = vsel %vm836, %v1397, %v1398
  %v1400 = vrot.slane %v400, 1
  %v1401 = vsel %vm836, %v1398, %v1400
  %v1402 = vrot.slane %v401, 1
  %v1403 = vrot.slane %v402, 1
  %v1404 = vsel %vm836, %v1402, %v1403
  %v1405 = vrot.slane %v403, 1
  %v1406 = vsel %vm836, %v1403, %v1405
  %v1407 = vrot.slane %v404, 1
  %v1408 = vrot.slane %v405, 1
  %v1409 = vsel %vm836, %v1407, %v1408
  %v1410 = vrot.slane %v406, 1
  %v1411 = vsel %vm836, %v1408, %v1410
  %v1412 = vrot.slane %v407, 1
  %v1413 = vrot.slane %v408, 1
  %v1414 = vsel %vm836, %v1412, %v1413
  %v1415 = vrot.slane %v409, 1
  %v1416 = vsel %vm836, %v1413, %v1415
  %v1417 = vrot.slane %v410, 1
  %v1418 = vrot.slane %v411, 1
  %v1419 = vsel %vm836, %v1417, %v1418
  %v1420 = vrot.slane %v412, 1
  %v1421 = vsel %vm836, %v1418, %v1420
  %v1422 = vrot.slane %v413, 1
  %v1423 = vrot.slane %v414, 1
  %v1424 = vsel %vm836, %v1422, %v1423
  %v1425 = vrot.slane %v415, 1
  %v1426 = vsel %vm836, %v1423, %v1425
  %v1427 = vrot.slane %v416, 1
  %v1428 = vrot.slane %v417, 1
  %v1429 = vsel %vm836, %v1427, %v1428
  %v1430 = vrot.slane %v418, 1
  %v1431 = vsel %vm836, %v1428, %v1430
  %v1432 = vrot.slane %v419, 1
  %v1433 = vrot.slane %v420, 1
  %v1434 = vsel %vm836, %v1432, %v1433
  %v1435 = vrot.slane %v421, 1
  %v1436 = vsel %vm836, %v1433, %v1435
  %v1437 = vrot.slane %v422, 1
  %v1438 = vrot.slane %v423, 1
  %v1439 = vsel %vm836, %v1437, %v1438
  %v1440 = vrot.slane %v424, 1
  %v1441 = vsel %vm836, %v1438, %v1440
  %v1442 = vrot.slane %v425, 1
  %v1443 = vrot.slane %v426, 1
  %v1444 = vsel %vm836, %v1442, %v1443
  %v1445 = vrot.slane %v427, 1
  %v1446 = vsel %vm836, %v1443, %v1445
  %v1447 = vrot.slane %v428, 1
  %v1448 = vrot.slane %v429, 1
  %v1449 = vsel %vm836, %v1447, %v1448
  %v1450 = vrot.slane %v430, 1
  %v1451 = vsel %vm836, %v1448, %v1450
  %v1452 = vrot.slane %v431, 1
  %v1453 = vrot.slane %v432, 1
  %v1454 = vsel %vm836, %v1452, %v1453
  %v1455 = vrot.slane %v433, 1
  %v1456 = vsel %vm836, %v1453, %v1455
  %v1457 = vrot.slane %v434, 1
  %v1458 = vrot.slane %v435, 1
  %v1459 = vsel %vm836, %v1457, %v1458
  %v1460 = vrot.slane %v436, 1
  %v1461 = vsel %vm836, %v1458, %v1460
  %v1462 = vrot.slane %v437, 1
  %v1463 = vrot.slane %v438, 1
  %v1464 = vsel %vm836, %v1462, %v1463
  %v1465 = vrot.slane %v439, 1
  %v1466 = vsel %vm836, %v1463, %v1465
  %v1467 = vrot.slane %v440, 1
  %v1468 = vrot.slane %v441, 1
  %v1469 = vsel %vm836, %v1467, %v1468
  %v1470 = vrot.slane %v442, 1
  %v1471 = vsel %vm836, %v1468, %v1470
  %v1472 = vrot.slane %v443, 1
  %v1473 = vrot.slane %v444, 1
  %v1474 = vsel %vm836, %v1472, %v1473
  %v1475 = vrot.slane %v445, 1
  %v1476 = vsel %vm836, %v1473, %v1475
  %1477 = vrot.lane.b32.xlu0 %v839, 3
  %v1478 = vpop.permute.xlu0 %1477
  %1479 = vrot.lane.b32.xlu0 %v841, 3
  %v1480 = vpop.permute.xlu0 %1479
  %1481 = vrot.lane.b32.xlu0 %v844, 3
  %v1482 = vpop.permute.xlu0 %1481
  %1483 = vrot.lane.b32.xlu0 %v846, 3
  %v1484 = vpop.permute.xlu0 %1483
  %1485 = vrot.lane.b32.xlu0 %v849, 3
  %v1486 = vpop.permute.xlu0 %1485
  %1487 = vrot.lane.b32.xlu0 %v851, 3
  %v1488 = vpop.permute.xlu0 %1487
  %1489 = vrot.lane.b32.xlu0 %v854, 3
  %v1490 = vpop.permute.xlu0 %1489
  %1491 = vrot.lane.b32.xlu0 %v856, 3
  %v1492 = vpop.permute.xlu0 %1491
  %1493 = vrot.lane.b32.xlu0 %v859, 3
  %v1494 = vpop.permute.xlu0 %1493
  %1495 = vrot.lane.b32.xlu0 %v861, 3
  %v1496 = vpop.permute.xlu0 %1495
  %1497 = vrot.lane.b32.xlu0 %v864, 3
  %v1498 = vpop.permute.xlu0 %1497
  %1499 = vrot.lane.b32.xlu0 %v866, 3
  %v1500 = vpop.permute.xlu0 %1499
  %1501 = vrot.lane.b32.xlu0 %v869, 3
  %v1502 = vpop.permute.xlu0 %1501
  %1503 = vrot.lane.b32.xlu0 %v871, 3
  %v1504 = vpop.permute.xlu0 %1503
  %1505 = vrot.lane.b32.xlu0 %v874, 3
  %v1506 = vpop.permute.xlu0 %1505
  %1507 = vrot.lane.b32.xlu0 %v876, 3
  %v1508 = vpop.permute.xlu0 %1507
  %1509 = vrot.lane.b32.xlu0 %v879, 3
  %v1510 = vpop.permute.xlu0 %1509
  %1511 = vrot.lane.b32.xlu0 %v881, 3
  %v1512 = vpop.permute.xlu0 %1511
  %1513 = vrot.lane.b32.xlu0 %v884, 3
  %v1514 = vpop.permute.xlu0 %1513
  %1515 = vrot.lane.b32.xlu0 %v886, 3
  %v1516 = vpop.permute.xlu0 %1515
  %1517 = vrot.lane.b32.xlu0 %v889, 3
  %v1518 = vpop.permute.xlu0 %1517
  %1519 = vrot.lane.b32.xlu0 %v891, 3
  %v1520 = vpop.permute.xlu0 %1519
  %1521 = vrot.lane.b32.xlu0 %v894, 3
  %v1522 = vpop.permute.xlu0 %1521
  %1523 = vrot.lane.b32.xlu0 %v896, 3
  %v1524 = vpop.permute.xlu0 %1523
  %1525 = vrot.lane.b32.xlu0 %v899, 3
  %v1526 = vpop.permute.xlu0 %1525
  %1527 = vrot.lane.b32.xlu0 %v901, 3
  %v1528 = vpop.permute.xlu0 %1527
  %1529 = vrot.lane.b32.xlu0 %v904, 3
  %v1530 = vpop.permute.xlu0 %1529
  %1531 = vrot.lane.b32.xlu0 %v906, 3
  %v1532 = vpop.permute.xlu0 %1531
  %1533 = vrot.lane.b32.xlu0 %v909, 3
  %v1534 = vpop.permute.xlu0 %1533
  %1535 = vrot.lane.b32.xlu0 %v911, 3
  %v1536 = vpop.permute.xlu0 %1535
  %1537 = vrot.lane.b32.xlu0 %v914, 3
  %v1538 = vpop.permute.xlu0 %1537
  %1539 = vrot.lane.b32.xlu0 %v916, 3
  %v1540 = vpop.permute.xlu0 %1539
  %1541 = vrot.lane.b32.xlu0 %v919, 3
  %v1542 = vpop.permute.xlu0 %1541
  %1543 = vrot.lane.b32.xlu0 %v921, 3
  %v1544 = vpop.permute.xlu0 %1543
  %1545 = vrot.lane.b32.xlu0 %v924, 3
  %v1546 = vpop.permute.xlu0 %1545
  %1547 = vrot.lane.b32.xlu0 %v926, 3
  %v1548 = vpop.permute.xlu0 %1547
  %1549 = vrot.lane.b32.xlu0 %v929, 3
  %v1550 = vpop.permute.xlu0 %1549
  %1551 = vrot.lane.b32.xlu0 %v931, 3
  %v1552 = vpop.permute.xlu0 %1551
  %1553 = vrot.lane.b32.xlu0 %v934, 3
  %v1554 = vpop.permute.xlu0 %1553
  %1555 = vrot.lane.b32.xlu0 %v936, 3
  %v1556 = vpop.permute.xlu0 %1555
  %1557 = vrot.lane.b32.xlu0 %v939, 3
  %v1558 = vpop.permute.xlu0 %1557
  %1559 = vrot.lane.b32.xlu0 %v941, 3
  %v1560 = vpop.permute.xlu0 %1559
  %1561 = vrot.lane.b32.xlu0 %v944, 3
  %v1562 = vpop.permute.xlu0 %1561
  %1563 = vrot.lane.b32.xlu0 %v946, 3
  %v1564 = vpop.permute.xlu0 %1563
  %1565 = vrot.lane.b32.xlu0 %v949, 3
  %v1566 = vpop.permute.xlu0 %1565
  %1567 = vrot.lane.b32.xlu0 %v951, 3
  %v1568 = vpop.permute.xlu0 %1567
  %1569 = vrot.lane.b32.xlu0 %v954, 3
  %v1570 = vpop.permute.xlu0 %1569
  %1571 = vrot.lane.b32.xlu0 %v956, 3
  %v1572 = vpop.permute.xlu0 %1571
  %1573 = vrot.lane.b32.xlu0 %v959, 3
  %v1574 = vpop.permute.xlu0 %1573
  %1575 = vrot.lane.b32.xlu0 %v961, 3
  %v1576 = vpop.permute.xlu0 %1575
  %1577 = vrot.lane.b32.xlu0 %v964, 3
  %v1578 = vpop.permute.xlu0 %1577
  %1579 = vrot.lane.b32.xlu0 %v966, 3
  %v1580 = vpop.permute.xlu0 %1579
  %1581 = vrot.lane.b32.xlu0 %v969, 3
  %v1582 = vpop.permute.xlu0 %1581
  %1583 = vrot.lane.b32.xlu0 %v971, 3
  %v1584 = vpop.permute.xlu0 %1583
  %1585 = vrot.lane.b32.xlu0 %v974, 3
  %v1586 = vpop.permute.xlu0 %1585
  %1587 = vrot.lane.b32.xlu0 %v976, 3
  %v1588 = vpop.permute.xlu0 %1587
  %1589 = vrot.lane.b32.xlu0 %v979, 3
  %v1590 = vpop.permute.xlu0 %1589
  %1591 = vrot.lane.b32.xlu0 %v981, 3
  %v1592 = vpop.permute.xlu0 %1591
  %1593 = vrot.lane.b32.xlu0 %v984, 3
  %v1594 = vpop.permute.xlu0 %1593
  %1595 = vrot.lane.b32.xlu0 %v986, 3
  %v1596 = vpop.permute.xlu0 %1595
  %1597 = vrot.lane.b32.xlu0 %v989, 3
  %v1598 = vpop.permute.xlu0 %1597
  %1599 = vrot.lane.b32.xlu0 %v991, 3
  %v1600 = vpop.permute.xlu0 %1599
  %1601 = vrot.lane.b32.xlu0 %v994, 3
  %v1602 = vpop.permute.xlu0 %1601
  %1603 = vrot.lane.b32.xlu0 %v996, 3
  %v1604 = vpop.permute.xlu0 %1603
  %1605 = vrot.lane.b32.xlu0 %v999, 3
  %v1606 = vpop.permute.xlu0 %1605
  %1607 = vrot.lane.b32.xlu0 %v1001, 3
  %v1608 = vpop.permute.xlu0 %1607
  %1609 = vrot.lane.b32.xlu0 %v1004, 3
  %v1610 = vpop.permute.xlu0 %1609
  %1611 = vrot.lane.b32.xlu0 %v1006, 3
  %v1612 = vpop.permute.xlu0 %1611
  %1613 = vrot.lane.b32.xlu0 %v1009, 3
  %v1614 = vpop.permute.xlu0 %1613
  %1615 = vrot.lane.b32.xlu0 %v1011, 3
  %v1616 = vpop.permute.xlu0 %1615
  %1617 = vrot.lane.b32.xlu0 %v1014, 3
  %v1618 = vpop.permute.xlu0 %1617
  %1619 = vrot.lane.b32.xlu0 %v1016, 3
  %v1620 = vpop.permute.xlu0 %1619
  %1621 = vrot.lane.b32.xlu0 %v1019, 3
  %v1622 = vpop.permute.xlu0 %1621
  %1623 = vrot.lane.b32.xlu0 %v1021, 3
  %v1624 = vpop.permute.xlu0 %1623
  %1625 = vrot.lane.b32.xlu0 %v1024, 3
  %v1626 = vpop.permute.xlu0 %1625
  %1627 = vrot.lane.b32.xlu0 %v1026, 3
  %v1628 = vpop.permute.xlu0 %1627
  %1629 = vrot.lane.b32.xlu0 %v1029, 3
  %v1630 = vpop.permute.xlu0 %1629
  %1631 = vrot.lane.b32.xlu0 %v1031, 3
  %v1632 = vpop.permute.xlu0 %1631
  %1633 = vrot.lane.b32.xlu0 %v1034, 3
  %v1634 = vpop.permute.xlu0 %1633
  %1635 = vrot.lane.b32.xlu0 %v1036, 3
  %v1636 = vpop.permute.xlu0 %1635
  %1637 = vrot.lane.b32.xlu0 %v1039, 3
  %v1638 = vpop.permute.xlu0 %1637
  %1639 = vrot.lane.b32.xlu0 %v1041, 3
  %v1640 = vpop.permute.xlu0 %1639
  %1641 = vrot.lane.b32.xlu0 %v1044, 3
  %v1642 = vpop.permute.xlu0 %1641
  %1643 = vrot.lane.b32.xlu0 %v1046, 3
  %v1644 = vpop.permute.xlu0 %1643
  %1645 = vrot.lane.b32.xlu0 %v1049, 3
  %v1646 = vpop.permute.xlu0 %1645
  %1647 = vrot.lane.b32.xlu0 %v1051, 3
  %v1648 = vpop.permute.xlu0 %1647
  %1649 = vrot.lane.b32.xlu0 %v1054, 3
  %v1650 = vpop.permute.xlu0 %1649
  %1651 = vrot.lane.b32.xlu0 %v1056, 3
  %v1652 = vpop.permute.xlu0 %1651
  %1653 = vrot.lane.b32.xlu0 %v1059, 3
  %v1654 = vpop.permute.xlu0 %1653
  %1655 = vrot.lane.b32.xlu0 %v1061, 3
  %v1656 = vpop.permute.xlu0 %1655
  %1657 = vrot.lane.b32.xlu0 %v1064, 3
  %v1658 = vpop.permute.xlu0 %1657
  %1659 = vrot.lane.b32.xlu0 %v1066, 3
  %v1660 = vpop.permute.xlu0 %1659
  %1661 = vrot.lane.b32.xlu0 %v1069, 3
  %v1662 = vpop.permute.xlu0 %1661
  %1663 = vrot.lane.b32.xlu0 %v1071, 3
  %v1664 = vpop.permute.xlu0 %1663
  %1665 = vrot.lane.b32.xlu0 %v1074, 3
  %v1666 = vpop.permute.xlu0 %1665
  %1667 = vrot.lane.b32.xlu0 %v1076, 3
  %v1668 = vpop.permute.xlu0 %1667
  %1669 = vrot.lane.b32.xlu0 %v1079, 3
  %v1670 = vpop.permute.xlu0 %1669
  %1671 = vrot.lane.b32.xlu0 %v1081, 3
  %v1672 = vpop.permute.xlu0 %1671
  %1673 = vrot.lane.b32.xlu0 %v1084, 3
  %v1674 = vpop.permute.xlu0 %1673
  %1675 = vrot.lane.b32.xlu0 %v1086, 3
  %v1676 = vpop.permute.xlu0 %1675
  %1677 = vrot.lane.b32.xlu0 %v1089, 3
  %v1678 = vpop.permute.xlu0 %1677
  %1679 = vrot.lane.b32.xlu0 %v1091, 3
  %v1680 = vpop.permute.xlu0 %1679
  %1681 = vrot.lane.b32.xlu0 %v1094, 3
  %v1682 = vpop.permute.xlu0 %1681
  %1683 = vrot.lane.b32.xlu0 %v1096, 3
  %v1684 = vpop.permute.xlu0 %1683
  %1685 = vrot.lane.b32.xlu0 %v1099, 3
  %v1686 = vpop.permute.xlu0 %1685
  %1687 = vrot.lane.b32.xlu0 %v1101, 3
  %v1688 = vpop.permute.xlu0 %1687
  %1689 = vrot.lane.b32.xlu0 %v1104, 3
  %v1690 = vpop.permute.xlu0 %1689
  %1691 = vrot.lane.b32.xlu0 %v1106, 3
  %v1692 = vpop.permute.xlu0 %1691
  %1693 = vrot.lane.b32.xlu0 %v1109, 3
  %v1694 = vpop.permute.xlu0 %1693
  %1695 = vrot.lane.b32.xlu0 %v1111, 3
  %v1696 = vpop.permute.xlu0 %1695
  %1697 = vrot.lane.b32.xlu0 %v1114, 3
  %v1698 = vpop.permute.xlu0 %1697
  %1699 = vrot.lane.b32.xlu0 %v1116, 3
  %v1700 = vpop.permute.xlu0 %1699
  %1701 = vrot.lane.b32.xlu0 %v1119, 3
  %v1702 = vpop.permute.xlu0 %1701
  %1703 = vrot.lane.b32.xlu0 %v1121, 3
  %v1704 = vpop.permute.xlu0 %1703
  %1705 = vrot.lane.b32.xlu0 %v1124, 3
  %v1706 = vpop.permute.xlu0 %1705
  %1707 = vrot.lane.b32.xlu0 %v1126, 3
  %v1708 = vpop.permute.xlu0 %1707
  %1709 = vrot.lane.b32.xlu0 %v1129, 3
  %v1710 = vpop.permute.xlu0 %1709
  %1711 = vrot.lane.b32.xlu0 %v1131, 3
  %v1712 = vpop.permute.xlu0 %1711
  %1713 = vrot.lane.b32.xlu0 %v1134, 3
  %v1714 = vpop.permute.xlu0 %1713
  %1715 = vrot.lane.b32.xlu0 %v1136, 3
  %v1716 = vpop.permute.xlu0 %1715
  %1717 = vrot.lane.b32.xlu0 %v1139, 3
  %v1718 = vpop.permute.xlu0 %1717
  %1719 = vrot.lane.b32.xlu0 %v1141, 3
  %v1720 = vpop.permute.xlu0 %1719
  %1721 = vrot.lane.b32.xlu0 %v1144, 3
  %v1722 = vpop.permute.xlu0 %1721
  %1723 = vrot.lane.b32.xlu0 %v1146, 3
  %v1724 = vpop.permute.xlu0 %1723
  %1725 = vrot.lane.b32.xlu0 %v1149, 3
  %v1726 = vpop.permute.xlu0 %1725
  %1727 = vrot.lane.b32.xlu0 %v1151, 3
  %v1728 = vpop.permute.xlu0 %1727
  %1729 = vrot.lane.b32.xlu0 %v1154, 3
  %v1730 = vpop.permute.xlu0 %1729
  %1731 = vrot.lane.b32.xlu0 %v1156, 3
  %v1732 = vpop.permute.xlu0 %1731
  %1733 = vrot.lane.b32.xlu0 %v1159, 3
  %v1734 = vpop.permute.xlu0 %1733
  %1735 = vrot.lane.b32.xlu0 %v1161, 3
  %v1736 = vpop.permute.xlu0 %1735
  %1737 = vrot.lane.b32.xlu0 %v1164, 3
  %v1738 = vpop.permute.xlu0 %1737
  %1739 = vrot.lane.b32.xlu0 %v1166, 3
  %v1740 = vpop.permute.xlu0 %1739
  %1741 = vrot.lane.b32.xlu0 %v1169, 3
  %v1742 = vpop.permute.xlu0 %1741
  %1743 = vrot.lane.b32.xlu0 %v1171, 3
  %v1744 = vpop.permute.xlu0 %1743
  %1745 = vrot.lane.b32.xlu0 %v1174, 3
  %v1746 = vpop.permute.xlu0 %1745
  %1747 = vrot.lane.b32.xlu0 %v1176, 3
  %v1748 = vpop.permute.xlu0 %1747
  %1749 = vrot.lane.b32.xlu0 %v1179, 3
  %v1750 = vpop.permute.xlu0 %1749
  %1751 = vrot.lane.b32.xlu0 %v1181, 3
  %v1752 = vpop.permute.xlu0 %1751
  %1753 = vrot.lane.b32.xlu0 %v1184, 3
  %v1754 = vpop.permute.xlu0 %1753
  %1755 = vrot.lane.b32.xlu0 %v1186, 3
  %v1756 = vpop.permute.xlu0 %1755
  %1757 = vrot.lane.b32.xlu0 %v1189, 3
  %v1758 = vpop.permute.xlu0 %1757
  %1759 = vrot.lane.b32.xlu0 %v1191, 3
  %v1760 = vpop.permute.xlu0 %1759
  %1761 = vrot.lane.b32.xlu0 %v1194, 3
  %v1762 = vpop.permute.xlu0 %1761
  %1763 = vrot.lane.b32.xlu0 %v1196, 3
  %v1764 = vpop.permute.xlu0 %1763
  %1765 = vrot.lane.b32.xlu0 %v1199, 3
  %v1766 = vpop.permute.xlu0 %1765
  %1767 = vrot.lane.b32.xlu0 %v1201, 3
  %v1768 = vpop.permute.xlu0 %1767
  %1769 = vrot.lane.b32.xlu0 %v1204, 3
  %v1770 = vpop.permute.xlu0 %1769
  %1771 = vrot.lane.b32.xlu0 %v1206, 3
  %v1772 = vpop.permute.xlu0 %1771
  %1773 = vrot.lane.b32.xlu0 %v1209, 3
  %v1774 = vpop.permute.xlu0 %1773
  %1775 = vrot.lane.b32.xlu0 %v1211, 3
  %v1776 = vpop.permute.xlu0 %1775
  %1777 = vrot.lane.b32.xlu0 %v1214, 3
  %v1778 = vpop.permute.xlu0 %1777
  %1779 = vrot.lane.b32.xlu0 %v1216, 3
  %v1780 = vpop.permute.xlu0 %1779
  %1781 = vrot.lane.b32.xlu0 %v1219, 3
  %v1782 = vpop.permute.xlu0 %1781
  %1783 = vrot.lane.b32.xlu0 %v1221, 3
  %v1784 = vpop.permute.xlu0 %1783
  %1785 = vrot.lane.b32.xlu0 %v1224, 3
  %v1786 = vpop.permute.xlu0 %1785
  %1787 = vrot.lane.b32.xlu0 %v1226, 3
  %v1788 = vpop.permute.xlu0 %1787
  %1789 = vrot.lane.b32.xlu0 %v1229, 3
  %v1790 = vpop.permute.xlu0 %1789
  %1791 = vrot.lane.b32.xlu0 %v1231, 3
  %v1792 = vpop.permute.xlu0 %1791
  %1793 = vrot.lane.b32.xlu0 %v1234, 3
  %v1794 = vpop.permute.xlu0 %1793
  %1795 = vrot.lane.b32.xlu0 %v1236, 3
  %v1796 = vpop.permute.xlu0 %1795
  %1797 = vrot.lane.b32.xlu0 %v1239, 3
  %v1798 = vpop.permute.xlu0 %1797
  %1799 = vrot.lane.b32.xlu0 %v1241, 3
  %v1800 = vpop.permute.xlu0 %1799
  %1801 = vrot.lane.b32.xlu0 %v1244, 3
  %v1802 = vpop.permute.xlu0 %1801
  %1803 = vrot.lane.b32.xlu0 %v1246, 3
  %v1804 = vpop.permute.xlu0 %1803
  %1805 = vrot.lane.b32.xlu0 %v1249, 3
  %v1806 = vpop.permute.xlu0 %1805
  %1807 = vrot.lane.b32.xlu0 %v1251, 3
  %v1808 = vpop.permute.xlu0 %1807
  %1809 = vrot.lane.b32.xlu0 %v1254, 3
  %v1810 = vpop.permute.xlu0 %1809
  %1811 = vrot.lane.b32.xlu0 %v1256, 3
  %v1812 = vpop.permute.xlu0 %1811
  %1813 = vrot.lane.b32.xlu0 %v1259, 3
  %v1814 = vpop.permute.xlu0 %1813
  %1815 = vrot.lane.b32.xlu0 %v1261, 3
  %v1816 = vpop.permute.xlu0 %1815
  %1817 = vrot.lane.b32.xlu0 %v1264, 3
  %v1818 = vpop.permute.xlu0 %1817
  %1819 = vrot.lane.b32.xlu0 %v1266, 3
  %v1820 = vpop.permute.xlu0 %1819
  %1821 = vrot.lane.b32.xlu0 %v1269, 3
  %v1822 = vpop.permute.xlu0 %1821
  %1823 = vrot.lane.b32.xlu0 %v1271, 3
  %v1824 = vpop.permute.xlu0 %1823
  %1825 = vrot.lane.b32.xlu0 %v1274, 3
  %v1826 = vpop.permute.xlu0 %1825
  %1827 = vrot.lane.b32.xlu0 %v1276, 3
  %v1828 = vpop.permute.xlu0 %1827
  %1829 = vrot.lane.b32.xlu0 %v1279, 3
  %v1830 = vpop.permute.xlu0 %1829
  %1831 = vrot.lane.b32.xlu0 %v1281, 3
  %v1832 = vpop.permute.xlu0 %1831
  %1833 = vrot.lane.b32.xlu0 %v1284, 3
  %v1834 = vpop.permute.xlu0 %1833
  %1835 = vrot.lane.b32.xlu0 %v1286, 3
  %v1836 = vpop.permute.xlu0 %1835
  %1837 = vrot.lane.b32.xlu0 %v1289, 3
  %v1838 = vpop.permute.xlu0 %1837
  %1839 = vrot.lane.b32.xlu0 %v1291, 3
  %v1840 = vpop.permute.xlu0 %1839
  %1841 = vrot.lane.b32.xlu0 %v1294, 3
  %v1842 = vpop.permute.xlu0 %1841
  %1843 = vrot.lane.b32.xlu0 %v1296, 3
  %v1844 = vpop.permute.xlu0 %1843
  %1845 = vrot.lane.b32.xlu0 %v1299, 3
  %v1846 = vpop.permute.xlu0 %1845
  %1847 = vrot.lane.b32.xlu0 %v1301, 3
  %v1848 = vpop.permute.xlu0 %1847
  %1849 = vrot.lane.b32.xlu0 %v1304, 3
  %v1850 = vpop.permute.xlu0 %1849
  %1851 = vrot.lane.b32.xlu0 %v1306, 3
  %v1852 = vpop.permute.xlu0 %1851
  %1853 = vrot.lane.b32.xlu0 %v1309, 3
  %v1854 = vpop.permute.xlu0 %1853
  %1855 = vrot.lane.b32.xlu0 %v1311, 3
  %v1856 = vpop.permute.xlu0 %1855
  %1857 = vrot.lane.b32.xlu0 %v1314, 3
  %v1858 = vpop.permute.xlu0 %1857
  %1859 = vrot.lane.b32.xlu0 %v1316, 3
  %v1860 = vpop.permute.xlu0 %1859
  %1861 = vrot.lane.b32.xlu0 %v1319, 3
  %v1862 = vpop.permute.xlu0 %1861
  %1863 = vrot.lane.b32.xlu0 %v1321, 3
  %v1864 = vpop.permute.xlu0 %1863
  %1865 = vrot.lane.b32.xlu0 %v1324, 3
  %v1866 = vpop.permute.xlu0 %1865
  %1867 = vrot.lane.b32.xlu0 %v1326, 3
  %v1868 = vpop.permute.xlu0 %1867
  %1869 = vrot.lane.b32.xlu0 %v1329, 3
  %v1870 = vpop.permute.xlu0 %1869
  %1871 = vrot.lane.b32.xlu0 %v1331, 3
  %v1872 = vpop.permute.xlu0 %1871
  %1873 = vrot.lane.b32.xlu0 %v1334, 3
  %v1874 = vpop.permute.xlu0 %1873
  %1875 = vrot.lane.b32.xlu0 %v1336, 3
  %v1876 = vpop.permute.xlu0 %1875
  %1877 = vrot.lane.b32.xlu0 %v1339, 3
  %v1878 = vpop.permute.xlu0 %1877
  %1879 = vrot.lane.b32.xlu0 %v1341, 3
  %v1880 = vpop.permute.xlu0 %1879
  %1881 = vrot.lane.b32.xlu0 %v1344, 3
  %v1882 = vpop.permute.xlu0 %1881
  %1883 = vrot.lane.b32.xlu0 %v1346, 3
  %v1884 = vpop.permute.xlu0 %1883
  %1885 = vrot.lane.b32.xlu0 %v1349, 3
  %v1886 = vpop.permute.xlu0 %1885
  %1887 = vrot.lane.b32.xlu0 %v1351, 3
  %v1888 = vpop.permute.xlu0 %1887
  %1889 = vrot.lane.b32.xlu0 %v1354, 3
  %v1890 = vpop.permute.xlu0 %1889
  %1891 = vrot.lane.b32.xlu0 %v1356, 3
  %v1892 = vpop.permute.xlu0 %1891
  %1893 = vrot.lane.b32.xlu0 %v1359, 3
  %v1894 = vpop.permute.xlu0 %1893
  %1895 = vrot.lane.b32.xlu0 %v1361, 3
  %v1896 = vpop.permute.xlu0 %1895
  %1897 = vrot.lane.b32.xlu0 %v1364, 3
  %v1898 = vpop.permute.xlu0 %1897
  %1899 = vrot.lane.b32.xlu0 %v1366, 3
  %v1900 = vpop.permute.xlu0 %1899
  %1901 = vrot.lane.b32.xlu0 %v1369, 3
  %v1902 = vpop.permute.xlu0 %1901
  %1903 = vrot.lane.b32.xlu0 %v1371, 3
  %v1904 = vpop.permute.xlu0 %1903
  %1905 = vrot.lane.b32.xlu0 %v1374, 3
  %v1906 = vpop.permute.xlu0 %1905
  %1907 = vrot.lane.b32.xlu0 %v1376, 3
  %v1908 = vpop.permute.xlu0 %1907
  %1909 = vrot.lane.b32.xlu0 %v1379, 3
  %v1910 = vpop.permute.xlu0 %1909
  %1911 = vrot.lane.b32.xlu0 %v1381, 3
  %v1912 = vpop.permute.xlu0 %1911
  %1913 = vrot.lane.b32.xlu0 %v1384, 3
  %v1914 = vpop.permute.xlu0 %1913
  %1915 = vrot.lane.b32.xlu0 %v1386, 3
  %v1916 = vpop.permute.xlu0 %1915
  %1917 = vrot.lane.b32.xlu0 %v1389, 3
  %v1918 = vpop.permute.xlu0 %1917
  %1919 = vrot.lane.b32.xlu0 %v1391, 3
  %v1920 = vpop.permute.xlu0 %1919
  %1921 = vrot.lane.b32.xlu0 %v1394, 3
  %v1922 = vpop.permute.xlu0 %1921
  %1923 = vrot.lane.b32.xlu0 %v1396, 3
  %v1924 = vpop.permute.xlu0 %1923
  %1925 = vrot.lane.b32.xlu0 %v1399, 3
  %v1926 = vpop.permute.xlu0 %1925
  %1927 = vrot.lane.b32.xlu0 %v1401, 3
  %v1928 = vpop.permute.xlu0 %1927
  %1929 = vrot.lane.b32.xlu0 %v1404, 3
  %v1930 = vpop.permute.xlu0 %1929
  %1931 = vrot.lane.b32.xlu0 %v1406, 3
  %v1932 = vpop.permute.xlu0 %1931
  %1933 = vrot.lane.b32.xlu0 %v1409, 3
  %v1934 = vpop.permute.xlu0 %1933
  %1935 = vrot.lane.b32.xlu0 %v1411, 3
  %v1936 = vpop.permute.xlu0 %1935
  %1937 = vrot.lane.b32.xlu0 %v1414, 3
  %v1938 = vpop.permute.xlu0 %1937
  %1939 = vrot.lane.b32.xlu0 %v1416, 3
  %v1940 = vpop.permute.xlu0 %1939
  %1941 = vrot.lane.b32.xlu0 %v1419, 3
  %v1942 = vpop.permute.xlu0 %1941
  %1943 = vrot.lane.b32.xlu0 %v1421, 3
  %v1944 = vpop.permute.xlu0 %1943
  %1945 = vrot.lane.b32.xlu0 %v1424, 3
  %v1946 = vpop.permute.xlu0 %1945
  %1947 = vrot.lane.b32.xlu0 %v1426, 3
  %v1948 = vpop.permute.xlu0 %1947
  %1949 = vrot.lane.b32.xlu0 %v1429, 3
  %v1950 = vpop.permute.xlu0 %1949
  %1951 = vrot.lane.b32.xlu0 %v1431, 3
  %v1952 = vpop.permute.xlu0 %1951
  %1953 = vrot.lane.b32.xlu0 %v1434, 3
  %v1954 = vpop.permute.xlu0 %1953
  %1955 = vrot.lane.b32.xlu0 %v1436, 3
  %v1956 = vpop.permute.xlu0 %1955
  %1957 = vrot.lane.b32.xlu0 %v1439, 3
  %v1958 = vpop.permute.xlu0 %1957
  %1959 = vrot.lane.b32.xlu0 %v1441, 3
  %v1960 = vpop.permute.xlu0 %1959
  %1961 = vrot.lane.b32.xlu0 %v1444, 3
  %v1962 = vpop.permute.xlu0 %1961
  %1963 = vrot.lane.b32.xlu0 %v1446, 3
  %v1964 = vpop.permute.xlu0 %1963
  %1965 = vrot.lane.b32.xlu0 %v1449, 3
  %v1966 = vpop.permute.xlu0 %1965
  %1967 = vrot.lane.b32.xlu0 %v1451, 3
  %v1968 = vpop.permute.xlu0 %1967
  %1969 = vrot.lane.b32.xlu0 %v1454, 3
  %v1970 = vpop.permute.xlu0 %1969
  %1971 = vrot.lane.b32.xlu0 %v1456, 3
  %v1972 = vpop.permute.xlu0 %1971
  %1973 = vrot.lane.b32.xlu0 %v1459, 3
  %v1974 = vpop.permute.xlu0 %1973
  %1975 = vrot.lane.b32.xlu0 %v1461, 3
  %v1976 = vpop.permute.xlu0 %1975
  %1977 = vrot.lane.b32.xlu0 %v1464, 3
  %v1978 = vpop.permute.xlu0 %1977
  %1979 = vrot.lane.b32.xlu0 %v1466, 3
  %v1980 = vpop.permute.xlu0 %1979
  %1981 = vrot.lane.b32.xlu0 %v1469, 3
  %v1982 = vpop.permute.xlu0 %1981
  %1983 = vrot.lane.b32.xlu0 %v1471, 3
  %v1984 = vpop.permute.xlu0 %1983
  %1985 = vrot.lane.b32.xlu0 %v1474, 3
  %v1986 = vpop.permute.xlu0 %1985
  %1987 = vrot.lane.b32.xlu0 %v1476, 3
  %v1988 = vpop.permute.xlu0 %1987
  %vm2245 = vcmask 1045504
  %v2246 = vrot.slane %v20, 2
  %v2247 = vrot.slane %v21, 2
  %v2248 = vsel %vm2245, %v2246, %v2247
  %v2249 = vrot.slane %v22, 2
  %v2250 = vsel %vm2245, %v2247, %v2249
  %v2251 = vrot.slane %v23, 2
  %v2252 = vrot.slane %v24, 2
  %v2253 = vsel %vm2245, %v2251, %v2252
  %v2254 = vrot.slane %v25, 2
  %v2255 = vsel %vm2245, %v2252, %v2254
  %v2256 = vrot.slane %v26, 2
  %v2257 = vrot.slane %v27, 2
  %v2258 = vsel %vm2245, %v2256, %v2257
  %v2259 = vrot.slane %v28, 2
  %v2260 = vsel %vm2245, %v2257, %v2259
  %v2261 = vrot.slane %v29, 2
  %v2262 = vrot.slane %v30, 2
  %v2263 = vsel %vm2245, %v2261, %v2262
  %v2264 = vrot.slane %v31, 2
  %v2265 = vsel %vm2245, %v2262, %v2264
  %v2266 = vrot.slane %v32, 2
  %v2267 = vrot.slane %v33, 2
  %v2268 = vsel %vm2245, %v2266, %v2267
  %v2269 = vrot.slane %v34, 2
  %v2270 = vsel %vm2245, %v2267, %v2269
  %v2271 = vrot.slane %v35, 2
  %v2272 = vrot.slane %v36, 2
  %v2273 = vsel %vm2245, %v2271, %v2272
  %v2274 = vrot.slane %v37, 2
  %v2275 = vsel %vm2245, %v2272, %v2274
  %v2276 = vrot.slane %v38, 2
  %v2277 = vrot.slane %v39, 2
  %v2278 = vsel %vm2245, %v2276, %v2277
  %v2279 = vrot.slane %v40, 2
  %v2280 = vsel %vm2245, %v2277, %v2279
  %v2281 = vrot.slane %v41, 2
  %v2282 = vrot.slane %v42, 2
  %v2283 = vsel %vm2245, %v2281, %v2282
  %v2284 = vrot.slane %v43, 2
  %v2285 = vsel %vm2245, %v2282, %v2284
  %v2286 = vrot.slane %v44, 2
  %v2287 = vrot.slane %v45, 2
  %v2288 = vsel %vm2245, %v2286, %v2287
  %v2289 = vrot.slane %v46, 2
  %v2290 = vsel %vm2245, %v2287, %v2289
  %v2291 = vrot.slane %v47, 2
  %v2292 = vrot.slane %v48, 2
  %v2293 = vsel %vm2245, %v2291, %v2292
  %v2294 = vrot.slane %v49, 2
  %v2295 = vsel %vm2245, %v2292, %v2294
  %v2296 = vrot.slane %v50, 2
  %v2297 = vrot.slane %v51, 2
  %v2298 = vsel %vm2245, %v2296, %v2297
  %v2299 = vrot.slane %v52, 2
  %v2300 = vsel %vm2245, %v2297, %v2299
  %v2301 = vrot.slane %v53, 2
  %v2302 = vrot.slane %v54, 2
  %v2303 = vsel %vm2245, %v2301, %v2302
  %v2304 = vrot.slane %v55, 2
  %v2305 = vsel %vm2245, %v2302, %v2304
  %v2306 = vrot.slane %v56, 2
  %v2307 = vrot.slane %v57, 2
  %v2308 = vsel %vm2245, %v2306, %v2307
  %v2309 = vrot.slane %v58, 2
  %v2310 = vsel %vm2245, %v2307, %v2309
  %v2311 = vrot.slane %v59, 2
  %v2312 = vrot.slane %v60, 2
  %v2313 = vsel %vm2245, %v2311, %v2312
  %v2314 = vrot.slane %v61, 2
  %v2315 = vsel %vm2245, %v2312, %v2314
  %v2316 = vrot.slane %v62, 2
  %v2317 = vrot.slane %v63, 2
  %v2318 = vsel %vm2245, %v2316, %v2317
  %v2319 = vrot.slane %v64, 2
  %v2320 = vsel %vm2245, %v2317, %v2319
  %v2321 = vrot.slane %v65, 2
  %v2322 = vrot.slane %v66, 2
  %v2323 = vsel %vm2245, %v2321, %v2322
  %v2324 = vrot.slane %v67, 2
  %v2325 = vsel %vm2245, %v2322, %v2324
  %v2326 = vrot.slane %v74, 2
  %v2327 = vrot.slane %v75, 2
  %v2328 = vsel %vm2245, %v2326, %v2327
  %v2329 = vrot.slane %v76, 2
  %v2330 = vsel %vm2245, %v2327, %v2329
  %v2331 = vrot.slane %v77, 2
  %v2332 = vrot.slane %v78, 2
  %v2333 = vsel %vm2245, %v2331, %v2332
  %v2334 = vrot.slane %v79, 2
  %v2335 = vsel %vm2245, %v2332, %v2334
  %v2336 = vrot.slane %v80, 2
  %v2337 = vrot.slane %v81, 2
  %v2338 = vsel %vm2245, %v2336, %v2337
  %v2339 = vrot.slane %v82, 2
  %v2340 = vsel %vm2245, %v2337, %v2339
  %v2341 = vrot.slane %v83, 2
  %v2342 = vrot.slane %v84, 2
  %v2343 = vsel %vm2245, %v2341, %v2342
  %v2344 = vrot.slane %v85, 2
  %v2345 = vsel %vm2245, %v2342, %v2344
  %v2346 = vrot.slane %v86, 2
  %v2347 = vrot.slane %v87, 2
  %v2348 = vsel %vm2245, %v2346, %v2347
  %v2349 = vrot.slane %v88, 2
  %v2350 = vsel %vm2245, %v2347, %v2349
  %v2351 = vrot.slane %v89, 2
  %v2352 = vrot.slane %v90, 2
  %v2353 = vsel %vm2245, %v2351, %v2352
  %v2354 = vrot.slane %v91, 2
  %v2355 = vsel %vm2245, %v2352, %v2354
  %v2356 = vrot.slane %v92, 2
  %v2357 = vrot.slane %v93, 2
  %v2358 = vsel %vm2245, %v2356, %v2357
  %v2359 = vrot.slane %v94, 2
  %v2360 = vsel %vm2245, %v2357, %v2359
  %v2361 = vrot.slane %v95, 2
  %v2362 = vrot.slane %v96, 2
  %v2363 = vsel %vm2245, %v2361, %v2362
  %v2364 = vrot.slane %v97, 2
  %v2365 = vsel %vm2245, %v2362, %v2364
  %v2366 = vrot.slane %v98, 2
  %v2367 = vrot.slane %v99, 2
  %v2368 = vsel %vm2245, %v2366, %v2367
  %v2369 = vrot.slane %v100, 2
  %v2370 = vsel %vm2245, %v2367, %v2369
  %v2371 = vrot.slane %v101, 2
  %v2372 = vrot.slane %v102, 2
  %v2373 = vsel %vm2245, %v2371, %v2372
  %v2374 = vrot.slane %v103, 2
  %v2375 = vsel %vm2245, %v2372, %v2374
  %v2376 = vrot.slane %v104, 2
  %v2377 = vrot.slane %v105, 2
  %v2378 = vsel %vm2245, %v2376, %v2377
  %v2379 = vrot.slane %v106, 2
  %v2380 = vsel %vm2245, %v2377, %v2379
  %v2381 = vrot.slane %v107, 2
  %v2382 = vrot.slane %v108, 2
  %v2383 = vsel %vm2245, %v2381, %v2382
  %v2384 = vrot.slane %v109, 2
  %v2385 = vsel %vm2245, %v2382, %v2384
  %v2386 = vrot.slane %v110, 2
  %v2387 = vrot.slane %v111, 2
  %v2388 = vsel %vm2245, %v2386, %v2387
  %v2389 = vrot.slane %v112, 2
  %v2390 = vsel %vm2245, %v2387, %v2389
  %v2391 = vrot.slane %v113, 2
  %v2392 = vrot.slane %v114, 2
  %v2393 = vsel %vm2245, %v2391, %v2392
  %v2394 = vrot.slane %v115, 2
  %v2395 = vsel %vm2245, %v2392, %v2394
  %v2396 = vrot.slane %v116, 2
  %v2397 = vrot.slane %v117, 2
  %v2398 = vsel %vm2245, %v2396, %v2397
  %v2399 = vrot.slane %v118, 2
  %v2400 = vsel %vm2245, %v2397, %v2399
  %v2401 = vrot.slane %v119, 2
  %v2402 = vrot.slane %v120, 2
  %v2403 = vsel %vm2245, %v2401, %v2402
  %v2404 = vrot.slane %v121, 2
  %v2405 = vsel %vm2245, %v2402, %v2404
  %v2406 = vrot.slane %v128, 2
  %v2407 = vrot.slane %v129, 2
  %v2408 = vsel %vm2245, %v2406, %v2407
  %v2409 = vrot.slane %v130, 2
  %v2410 = vsel %vm2245, %v2407, %v2409
  %v2411 = vrot.slane %v131, 2
  %v2412 = vrot.slane %v132, 2
  %v2413 = vsel %vm2245, %v2411, %v2412
  %v2414 = vrot.slane %v133, 2
  %v2415 = vsel %vm2245, %v2412, %v2414
  %v2416 = vrot.slane %v134, 2
  %v2417 = vrot.slane %v135, 2
  %v2418 = vsel %vm2245, %v2416, %v2417
  %v2419 = vrot.slane %v136, 2
  %v2420 = vsel %vm2245, %v2417, %v2419
  %v2421 = vrot.slane %v137, 2
  %v2422 = vrot.slane %v138, 2
  %v2423 = vsel %vm2245, %v2421, %v2422
  %v2424 = vrot.slane %v139, 2
  %v2425 = vsel %vm2245, %v2422, %v2424
  %v2426 = vrot.slane %v140, 2
  %v2427 = vrot.slane %v141, 2
  %v2428 = vsel %vm2245, %v2426, %v2427
  %v2429 = vrot.slane %v142, 2
  %v2430 = vsel %vm2245, %v2427, %v2429
  %v2431 = vrot.slane %v143, 2
  %v2432 = vrot.slane %v144, 2
  %v2433 = vsel %vm2245, %v2431, %v2432
  %v2434 = vrot.slane %v145, 2
  %v2435 = vsel %vm2245, %v2432, %v2434
  %v2436 = vrot.slane %v146, 2
  %v2437 = vrot.slane %v147, 2
  %v2438 = vsel %vm2245, %v2436, %v2437
  %v2439 = vrot.slane %v148, 2
  %v2440 = vsel %vm2245, %v2437, %v2439
  %v2441 = vrot.slane %v149, 2
  %v2442 = vrot.slane %v150, 2
  %v2443 = vsel %vm2245, %v2441, %v2442
  %v2444 = vrot.slane %v151, 2
  %v2445 = vsel %vm2245, %v2442, %v2444
  %v2446 = vrot.slane %v152, 2
  %v2447 = vrot.slane %v153, 2
  %v2448 = vsel %vm2245, %v2446, %v2447
  %v2449 = vrot.slane %v154, 2
  %v2450 = vsel %vm2245, %v2447, %v2449
  %v2451 = vrot.slane %v155, 2
  %v2452 = vrot.slane %v156, 2
  %v2453 = vsel %vm2245, %v2451, %v2452
  %v2454 = vrot.slane %v157, 2
  %v2455 = vsel %vm2245, %v2452, %v2454
  %v2456 = vrot.slane %v158, 2
  %v2457 = vrot.slane %v159, 2
  %v2458 = vsel %vm2245, %v2456, %v2457
  %v2459 = vrot.slane %v160, 2
  %v2460 = vsel %vm2245, %v2457, %v2459
  %v2461 = vrot.slane %v161, 2
  %v2462 = vrot.slane %v162, 2
  %v2463 = vsel %vm2245, %v2461, %v2462
  %v2464 = vrot.slane %v163, 2
  %v2465 = vsel %vm2245, %v2462, %v2464
  %v2466 = vrot.slane %v164, 2
  %v2467 = vrot.slane %v165, 2
  %v2468 = vsel %vm2245, %v2466, %v2467
  %v2469 = vrot.slane %v166, 2
  %v2470 = vsel %vm2245, %v2467, %v2469
  %v2471 = vrot.slane %v167, 2
  %v2472 = vrot.slane %v168, 2
  %v2473 = vsel %vm2245, %v2471, %v2472
  %v2474 = vrot.slane %v169, 2
  %v2475 = vsel %vm2245, %v2472, %v2474
  %v2476 = vrot.slane %v170, 2
  %v2477 = vrot.slane %v171, 2
  %v2478 = vsel %vm2245, %v2476, %v2477
  %v2479 = vrot.slane %v172, 2
  %v2480 = vsel %vm2245, %v2477, %v2479
  %v2481 = vrot.slane %v173, 2
  %v2482 = vrot.slane %v174, 2
  %v2483 = vsel %vm2245, %v2481, %v2482
  %v2484 = vrot.slane %v175, 2
  %v2485 = vsel %vm2245, %v2482, %v2484
  %v2486 = vrot.slane %v182, 2
  %v2487 = vrot.slane %v183, 2
  %v2488 = vsel %vm2245, %v2486, %v2487
  %v2489 = vrot.slane %v184, 2
  %v2490 = vsel %vm2245, %v2487, %v2489
  %v2491 = vrot.slane %v185, 2
  %v2492 = vrot.slane %v186, 2
  %v2493 = vsel %vm2245, %v2491, %v2492
  %v2494 = vrot.slane %v187, 2
  %v2495 = vsel %vm2245, %v2492, %v2494
  %v2496 = vrot.slane %v188, 2
  %v2497 = vrot.slane %v189, 2
  %v2498 = vsel %vm2245, %v2496, %v2497
  %v2499 = vrot.slane %v190, 2
  %v2500 = vsel %vm2245, %v2497, %v2499
  %v2501 = vrot.slane %v191, 2
  %v2502 = vrot.slane %v192, 2
  %v2503 = vsel %vm2245, %v2501, %v2502
  %v2504 = vrot.slane %v193, 2
  %v2505 = vsel %vm2245, %v2502, %v2504
  %v2506 = vrot.slane %v194, 2
  %v2507 = vrot.slane %v195, 2
  %v2508 = vsel %vm2245, %v2506, %v2507
  %v2509 = vrot.slane %v196, 2
  %v2510 = vsel %vm2245, %v2507, %v2509
  %v2511 = vrot.slane %v197, 2
  %v2512 = vrot.slane %v198, 2
  %v2513 = vsel %vm2245, %v2511, %v2512
  %v2514 = vrot.slane %v199, 2
  %v2515 = vsel %vm2245, %v2512, %v2514
  %v2516 = vrot.slane %v200, 2
  %v2517 = vrot.slane %v201, 2
  %v2518 = vsel %vm2245, %v2516, %v2517
  %v2519 = vrot.slane %v202, 2
  %v2520 = vsel %vm2245, %v2517, %v2519
  %v2521 = vrot.slane %v203, 2
  %v2522 = vrot.slane %v204, 2
  %v2523 = vsel %vm2245, %v2521, %v2522
  %v2524 = vrot.slane %v205, 2
  %v2525 = vsel %vm2245, %v2522, %v2524
  %v2526 = vrot.slane %v206, 2
  %v2527 = vrot.slane %v207, 2
  %v2528 = vsel %vm2245, %v2526, %v2527
  %v2529 = vrot.slane %v208, 2
  %v2530 = vsel %vm2245, %v2527, %v2529
  %v2531 = vrot.slane %v209, 2
  %v2532 = vrot.slane %v210, 2
  %v2533 = vsel %vm2245, %v2531, %v2532
  %v2534 = vrot.slane %v211, 2
  %v2535 = vsel %vm2245, %v2532, %v2534
  %v2536 = vrot.slane %v212, 2
  %v2537 = vrot.slane %v213, 2
  %v2538 = vsel %vm2245, %v2536, %v2537
  %v2539 = vrot.slane %v214, 2
  %v2540 = vsel %vm2245, %v2537, %v2539
  %v2541 = vrot.slane %v215, 2
  %v2542 = vrot.slane %v216, 2
  %v2543 = vsel %vm2245, %v2541, %v2542
  %v2544 = vrot.slane %v217, 2
  %v2545 = vsel %vm2245, %v2542, %v2544
  %v2546 = vrot.slane %v218, 2
  %v2547 = vrot.slane %v219, 2
  %v2548 = vsel %vm2245, %v2546, %v2547
  %v2549 = vrot.slane %v220, 2
  %v2550 = vsel %vm2245, %v2547, %v2549
  %v2551 = vrot.slane %v221, 2
  %v2552 = vrot.slane %v222, 2
  %v2553 = vsel %vm2245, %v2551, %v2552
  %v2554 = vrot.slane %v223, 2
  %v2555 = vsel %vm2245, %v2552, %v2554
  %v2556 = vrot.slane %v224, 2
  %v2557 = vrot.slane %v225, 2
  %v2558 = vsel %vm2245, %v2556, %v2557
  %v2559 = vrot.slane %v226, 2
  %v2560 = vsel %vm2245, %v2557, %v2559
  %v2561 = vrot.slane %v227, 2
  %v2562 = vrot.slane %v228, 2
  %v2563 = vsel %vm2245, %v2561, %v2562
  %v2564 = vrot.slane %v229, 2
  %v2565 = vsel %vm2245, %v2562, %v2564
  %v2566 = vrot.slane %v236, 2
  %v2567 = vrot.slane %v237, 2
  %v2568 = vsel %vm2245, %v2566, %v2567
  %v2569 = vrot.slane %v238, 2
  %v2570 = vsel %vm2245, %v2567, %v2569
  %v2571 = vrot.slane %v239, 2
  %v2572 = vrot.slane %v240, 2
  %v2573 = vsel %vm2245, %v2571, %v2572
  %v2574 = vrot.slane %v241, 2
  %v2575 = vsel %vm2245, %v2572, %v2574
  %v2576 = vrot.slane %v242, 2
  %v2577 = vrot.slane %v243, 2
  %v2578 = vsel %vm2245, %v2576, %v2577
  %v2579 = vrot.slane %v244, 2
  %v2580 = vsel %vm2245, %v2577, %v2579
  %v2581 = vrot.slane %v245, 2
  %v2582 = vrot.slane %v246, 2
  %v2583 = vsel %vm2245, %v2581, %v2582
  %v2584 = vrot.slane %v247, 2
  %v2585 = vsel %vm2245, %v2582, %v2584
  %v2586 = vrot.slane %v248, 2
  %v2587 = vrot.slane %v249, 2
  %v2588 = vsel %vm2245, %v2586, %v2587
  %v2589 = vrot.slane %v250, 2
  %v2590 = vsel %vm2245, %v2587, %v2589
  %v2591 = vrot.slane %v251, 2
  %v2592 = vrot.slane %v252, 2
  %v2593 = vsel %vm2245, %v2591, %v2592
  %v2594 = vrot.slane %v253, 2
  %v2595 = vsel %vm2245, %v2592, %v2594
  %v2596 = vrot.slane %v254, 2
  %v2597 = vrot.slane %v255, 2
  %v2598 = vsel %vm2245, %v2596, %v2597
  %v2599 = vrot.slane %v256, 2
  %v2600 = vsel %vm2245, %v2597, %v2599
  %v2601 = vrot.slane %v257, 2
  %v2602 = vrot.slane %v258, 2
  %v2603 = vsel %vm2245, %v2601, %v2602
  %v2604 = vrot.slane %v259, 2
  %v2605 = vsel %vm2245, %v2602, %v2604
  %v2606 = vrot.slane %v260, 2
  %v2607 = vrot.slane %v261, 2
  %v2608 = vsel %vm2245, %v2606, %v2607
  %v2609 = vrot.slane %v262, 2
  %v2610 = vsel %vm2245, %v2607, %v2609
  %v2611 = vrot.slane %v263, 2
  %v2612 = vrot.slane %v264, 2
  %v2613 = vsel %vm2245, %v2611, %v2612
  %v2614 = vrot.slane %v265, 2
  %v2615 = vsel %vm2245, %v2612, %v2614
  %v2616 = vrot.slane %v266, 2
  %v2617 = vrot.slane %v267, 2
  %v2618 = vsel %vm2245, %v2616, %v2617
  %v2619 = vrot.slane %v268, 2
  %v2620 = vsel %vm2245, %v2617, %v2619
  %v2621 = vrot.slane %v269, 2
  %v2622 = vrot.slane %v270, 2
  %v2623 = vsel %vm2245, %v2621, %v2622
  %v2624 = vrot.slane %v271, 2
  %v2625 = vsel %vm2245, %v2622, %v2624
  %v2626 = vrot.slane %v272, 2
  %v2627 = vrot.slane %v273, 2
  %v2628 = vsel %vm2245, %v2626, %v2627
  %v2629 = vrot.slane %v274, 2
  %v2630 = vsel %vm2245, %v2627, %v2629
  %v2631 = vrot.slane %v275, 2
  %v2632 = vrot.slane %v276, 2
  %v2633 = vsel %vm2245, %v2631, %v2632
  %v2634 = vrot.slane %v277, 2
  %v2635 = vsel %vm2245, %v2632, %v2634
  %v2636 = vrot.slane %v278, 2
  %v2637 = vrot.slane %v279, 2
  %v2638 = vsel %vm2245, %v2636, %v2637
  %v2639 = vrot.slane %v280, 2
  %v2640 = vsel %vm2245, %v2637, %v2639
  %v2641 = vrot.slane %v281, 2
  %v2642 = vrot.slane %v282, 2
  %v2643 = vsel %vm2245, %v2641, %v2642
  %v2644 = vrot.slane %v283, 2
  %v2645 = vsel %vm2245, %v2642, %v2644
  %v2646 = vrot.slane %v290, 2
  %v2647 = vrot.slane %v291, 2
  %v2648 = vsel %vm2245, %v2646, %v2647
  %v2649 = vrot.slane %v292, 2
  %v2650 = vsel %vm2245, %v2647, %v2649
  %v2651 = vrot.slane %v293, 2
  %v2652 = vrot.slane %v294, 2
  %v2653 = vsel %vm2245, %v2651, %v2652
  %v2654 = vrot.slane %v295, 2
  %v2655 = vsel %vm2245, %v2652, %v2654
  %v2656 = vrot.slane %v296, 2
  %v2657 = vrot.slane %v297, 2
  %v2658 = vsel %vm2245, %v2656, %v2657
  %v2659 = vrot.slane %v298, 2
  %v2660 = vsel %vm2245, %v2657, %v2659
  %v2661 = vrot.slane %v299, 2
  %v2662 = vrot.slane %v300, 2
  %v2663 = vsel %vm2245, %v2661, %v2662
  %v2664 = vrot.slane %v301, 2
  %v2665 = vsel %vm2245, %v2662, %v2664
  %v2666 = vrot.slane %v302, 2
  %v2667 = vrot.slane %v303, 2
  %v2668 = vsel %vm2245, %v2666, %v2667
  %v2669 = vrot.slane %v304, 2
  %v2670 = vsel %vm2245, %v2667, %v2669
  %v2671 = vrot.slane %v305, 2
  %v2672 = vrot.slane %v306, 2
  %v2673 = vsel %vm2245, %v2671, %v2672
  %v2674 = vrot.slane %v307, 2
  %v2675 = vsel %vm2245, %v2672, %v2674
  %v2676 = vrot.slane %v308, 2
  %v2677 = vrot.slane %v309, 2
  %v2678 = vsel %vm2245, %v2676, %v2677
  %v2679 = vrot.slane %v310, 2
  %v2680 = vsel %vm2245, %v2677, %v2679
  %v2681 = vrot.slane %v311, 2
  %v2682 = vrot.slane %v312, 2
  %v2683 = vsel %vm2245, %v2681, %v2682
  %v2684 = vrot.slane %v313, 2
  %v2685 = vsel %vm2245, %v2682, %v2684
  %v2686 = vrot.slane %v314, 2
  %v2687 = vrot.slane %v315, 2
  %v2688 = vsel %vm2245, %v2686, %v2687
  %v2689 = vrot.slane %v316, 2
  %v2690 = vsel %vm2245, %v2687, %v2689
  %v2691 = vrot.slane %v317, 2
  %v2692 = vrot.slane %v318, 2
  %v2693 = vsel %vm2245, %v2691, %v2692
  %v2694 = vrot.slane %v319, 2
  %v2695 = vsel %vm2245, %v2692, %v2694
  %v2696 = vrot.slane %v320, 2
  %v2697 = vrot.slane %v321, 2
  %v2698 = vsel %vm2245, %v2696, %v2697
  %v2699 = vrot.slane %v322, 2
  %v2700 = vsel %vm2245, %v2697, %v2699
  %v2701 = vrot.slane %v323, 2
  %v2702 = vrot.slane %v324, 2
  %v2703 = vsel %vm2245, %v2701, %v2702
  %v2704 = vrot.slane %v325, 2
  %v2705 = vsel %vm2245, %v2702, %v2704
  %v2706 = vrot.slane %v326, 2
  %v2707 = vrot.slane %v327, 2
  %v2708 = vsel %vm2245, %v2706, %v2707
  %v2709 = vrot.slane %v328, 2
  %v2710 = vsel %vm2245, %v2707, %v2709
  %v2711 = vrot.slane %v329, 2
  %v2712 = vrot.slane %v330, 2
  %v2713 = vsel %vm2245, %v2711, %v2712
  %v2714 = vrot.slane %v331, 2
  %v2715 = vsel %vm2245, %v2712, %v2714
  %v2716 = vrot.slane %v332, 2
  %v2717 = vrot.slane %v333, 2
  %v2718 = vsel %vm2245, %v2716, %v2717
  %v2719 = vrot.slane %v334, 2
  %v2720 = vsel %vm2245, %v2717, %v2719
  %v2721 = vrot.slane %v335, 2
  %v2722 = vrot.slane %v336, 2
  %v2723 = vsel %vm2245, %v2721, %v2722
  %v2724 = vrot.slane %v337, 2
  %v2725 = vsel %vm2245, %v2722, %v2724
  %v2726 = vrot.slane %v344, 2
  %v2727 = vrot.slane %v345, 2
  %v2728 = vsel %vm2245, %v2726, %v2727
  %v2729 = vrot.slane %v346, 2
  %v2730 = vsel %vm2245, %v2727, %v2729
  %v2731 = vrot.slane %v347, 2
  %v2732 = vrot.slane %v348, 2
  %v2733 = vsel %vm2245, %v2731, %v2732
  %v2734 = vrot.slane %v349, 2
  %v2735 = vsel %vm2245, %v2732, %v2734
  %v2736 = vrot.slane %v350, 2
  %v2737 = vrot.slane %v351, 2
  %v2738 = vsel %vm2245, %v2736, %v2737
  %v2739 = vrot.slane %v352, 2
  %v2740 = vsel %vm2245, %v2737, %v2739
  %v2741 = vrot.slane %v353, 2
  %v2742 = vrot.slane %v354, 2
  %v2743 = vsel %vm2245, %v2741, %v2742
  %v2744 = vrot.slane %v355, 2
  %v2745 = vsel %vm2245, %v2742, %v2744
  %v2746 = vrot.slane %v356, 2
  %v2747 = vrot.slane %v357, 2
  %v2748 = vsel %vm2245, %v2746, %v2747
  %v2749 = vrot.slane %v358, 2
  %v2750 = vsel %vm2245, %v2747, %v2749
  %v2751 = vrot.slane %v359, 2
  %v2752 = vrot.slane %v360, 2
  %v2753 = vsel %vm2245, %v2751, %v2752
  %v2754 = vrot.slane %v361, 2
  %v2755 = vsel %vm2245, %v2752, %v2754
  %v2756 = vrot.slane %v362, 2
  %v2757 = vrot.slane %v363, 2
  %v2758 = vsel %vm2245, %v2756, %v2757
  %v2759 = vrot.slane %v364, 2
  %v2760 = vsel %vm2245, %v2757, %v2759
  %v2761 = vrot.slane %v365, 2
  %v2762 = vrot.slane %v366, 2
  %v2763 = vsel %vm2245, %v2761, %v2762
  %v2764 = vrot.slane %v367, 2
  %v2765 = vsel %vm2245, %v2762, %v2764
  %v2766 = vrot.slane %v368, 2
  %v2767 = vrot.slane %v369, 2
  %v2768 = vsel %vm2245, %v2766, %v2767
  %v2769 = vrot.slane %v370, 2
  %v2770 = vsel %vm2245, %v2767, %v2769
  %v2771 = vrot.slane %v371, 2
  %v2772 = vrot.slane %v372, 2
  %v2773 = vsel %vm2245, %v2771, %v2772
  %v2774 = vrot.slane %v373, 2
  %v2775 = vsel %vm2245, %v2772, %v2774
  %v2776 = vrot.slane %v374, 2
  %v2777 = vrot.slane %v375, 2
  %v2778 = vsel %vm2245, %v2776, %v2777
  %v2779 = vrot.slane %v376, 2
  %v2780 = vsel %vm2245, %v2777, %v2779
  %v2781 = vrot.slane %v377, 2
  %v2782 = vrot.slane %v378, 2
  %v2783 = vsel %vm2245, %v2781, %v2782
  %v2784 = vrot.slane %v379, 2
  %v2785 = vsel %vm2245, %v2782, %v2784
  %v2786 = vrot.slane %v380, 2
  %v2787 = vrot.slane %v381, 2
  %v2788 = vsel %vm2245, %v2786, %v2787
  %v2789 = vrot.slane %v382, 2
  %v2790 = vsel %vm2245, %v2787, %v2789
  %v2791 = vrot.slane %v383, 2
  %v2792 = vrot.slane %v384, 2
  %v2793 = vsel %vm2245, %v2791, %v2792
  %v2794 = vrot.slane %v385, 2
  %v2795 = vsel %vm2245, %v2792, %v2794
  %v2796 = vrot.slane %v386, 2
  %v2797 = vrot.slane %v387, 2
  %v2798 = vsel %vm2245, %v2796, %v2797
  %v2799 = vrot.slane %v388, 2
  %v2800 = vsel %vm2245, %v2797, %v2799
  %v2801 = vrot.slane %v389, 2
  %v2802 = vrot.slane %v390, 2
  %v2803 = vsel %vm2245, %v2801, %v2802
  %v2804 = vrot.slane %v391, 2
  %v2805 = vsel %vm2245, %v2802, %v2804
  %v2806 = vrot.slane %v398, 2
  %v2807 = vrot.slane %v399, 2
  %v2808 = vsel %vm2245, %v2806, %v2807
  %v2809 = vrot.slane %v400, 2
  %v2810 = vsel %vm2245, %v2807, %v2809
  %v2811 = vrot.slane %v401, 2
  %v2812 = vrot.slane %v402, 2
  %v2813 = vsel %vm2245, %v2811, %v2812
  %v2814 = vrot.slane %v403, 2
  %v2815 = vsel %vm2245, %v2812, %v2814
  %v2816 = vrot.slane %v404, 2
  %v2817 = vrot.slane %v405, 2
  %v2818 = vsel %vm2245, %v2816, %v2817
  %v2819 = vrot.slane %v406, 2
  %v2820 = vsel %vm2245, %v2817, %v2819
  %v2821 = vrot.slane %v407, 2
  %v2822 = vrot.slane %v408, 2
  %v2823 = vsel %vm2245, %v2821, %v2822
  %v2824 = vrot.slane %v409, 2
  %v2825 = vsel %vm2245, %v2822, %v2824
  %v2826 = vrot.slane %v410, 2
  %v2827 = vrot.slane %v411, 2
  %v2828 = vsel %vm2245, %v2826, %v2827
  %v2829 = vrot.slane %v412, 2
  %v2830 = vsel %vm2245, %v2827, %v2829
  %v2831 = vrot.slane %v413, 2
  %v2832 = vrot.slane %v414, 2
  %v2833 = vsel %vm2245, %v2831, %v2832
  %v2834 = vrot.slane %v415, 2
  %v2835 = vsel %vm2245, %v2832, %v2834
  %v2836 = vrot.slane %v416, 2
  %v2837 = vrot.slane %v417, 2
  %v2838 = vsel %vm2245, %v2836, %v2837
  %v2839 = vrot.slane %v418, 2
  %v2840 = vsel %vm2245, %v2837, %v2839
  %v2841 = vrot.slane %v419, 2
  %v2842 = vrot.slane %v420, 2
  %v2843 = vsel %vm2245, %v2841, %v2842
  %v2844 = vrot.slane %v421, 2
  %v2845 = vsel %vm2245, %v2842, %v2844
  %v2846 = vrot.slane %v422, 2
  %v2847 = vrot.slane %v423, 2
  %v2848 = vsel %vm2245, %v2846, %v2847
  %v2849 = vrot.slane %v424, 2
  %v2850 = vsel %vm2245, %v2847, %v2849
  %v2851 = vrot.slane %v425, 2
  %v2852 = vrot.slane %v426, 2
  %v2853 = vsel %vm2245, %v2851, %v2852
  %v2854 = vrot.slane %v427, 2
  %v2855 = vsel %vm2245, %v2852, %v2854
  %v2856 = vrot.slane %v428, 2
  %v2857 = vrot.slane %v429, 2
  %v2858 = vsel %vm2245, %v2856, %v2857
  %v2859 = vrot.slane %v430, 2
  %v2860 = vsel %vm2245, %v2857, %v2859
  %v2861 = vrot.slane %v431, 2
  %v2862 = vrot.slane %v432, 2
  %v2863 = vsel %vm2245, %v2861, %v2862
  %v2864 = vrot.slane %v433, 2
  %v2865 = vsel %vm2245, %v2862, %v2864
  %v2866 = vrot.slane %v434, 2
  %v2867 = vrot.slane %v435, 2
  %v2868 = vsel %vm2245, %v2866, %v2867
  %v2869 = vrot.slane %v436, 2
  %v2870 = vsel %vm2245, %v2867, %v2869
  %v2871 = vrot.slane %v437, 2
  %v2872 = vrot.slane %v438, 2
  %v2873 = vsel %vm2245, %v2871, %v2872
  %v2874 = vrot.slane %v439, 2
  %v2875 = vsel %vm2245, %v2872, %v2874
  %v2876 = vrot.slane %v440, 2
  %v2877 = vrot.slane %v441, 2
  %v2878 = vsel %vm2245, %v2876, %v2877
  %v2879 = vrot.slane %v442, 2
  %v2880 = vsel %vm2245, %v2877, %v2879
  %v2881 = vrot.slane %v443, 2
  %v2882 = vrot.slane %v444, 2
  %v2883 = vsel %vm2245, %v2881, %v2882
  %v2884 = vrot.slane %v445, 2
  %v2885 = vsel %vm2245, %v2882, %v2884
  %2886 = vrot.lane.b32.xlu0 %v2248, 6
  %v2887 = vpop.permute.xlu0 %2886
  %2888 = vrot.lane.b32.xlu0 %v2250, 6
  %v2889 = vpop.permute.xlu0 %2888
  %2890 = vrot.lane.b32.xlu0 %v2253, 6
  %v2891 = vpop.permute.xlu0 %2890
  %2892 = vrot.lane.b32.xlu0 %v2255, 6
  %v2893 = vpop.permute.xlu0 %2892
  %2894 = vrot.lane.b32.xlu0 %v2258, 6
  %v2895 = vpop.permute.xlu0 %2894
  %2896 = vrot.lane.b32.xlu0 %v2260, 6
  %v2897 = vpop.permute.xlu0 %2896
  %2898 = vrot.lane.b32.xlu0 %v2263, 6
  %v2899 = vpop.permute.xlu0 %2898
  %2900 = vrot.lane.b32.xlu0 %v2265, 6
  %v2901 = vpop.permute.xlu0 %2900
  %2902 = vrot.lane.b32.xlu0 %v2268, 6
  %v2903 = vpop.permute.xlu0 %2902
  %2904 = vrot.lane.b32.xlu0 %v2270, 6
  %v2905 = vpop.permute.xlu0 %2904
  %2906 = vrot.lane.b32.xlu0 %v2273, 6
  %v2907 = vpop.permute.xlu0 %2906
  %2908 = vrot.lane.b32.xlu0 %v2275, 6
  %v2909 = vpop.permute.xlu0 %2908
  %2910 = vrot.lane.b32.xlu0 %v2278, 6
  %v2911 = vpop.permute.xlu0 %2910
  %2912 = vrot.lane.b32.xlu0 %v2280, 6
  %v2913 = vpop.permute.xlu0 %2912
  %2914 = vrot.lane.b32.xlu0 %v2283, 6
  %v2915 = vpop.permute.xlu0 %2914
  %2916 = vrot.lane.b32.xlu0 %v2285, 6
  %v2917 = vpop.permute.xlu0 %2916
  %2918 = vrot.lane.b32.xlu0 %v2288, 6
  %v2919 = vpop.permute.xlu0 %2918
  %2920 = vrot.lane.b32.xlu0 %v2290, 6
  %v2921 = vpop.permute.xlu0 %2920
  %2922 = vrot.lane.b32.xlu0 %v2293, 6
  %v2923 = vpop.permute.xlu0 %2922
  %2924 = vrot.lane.b32.xlu0 %v2295, 6
  %v2925 = vpop.permute.xlu0 %2924
  %2926 = vrot.lane.b32.xlu0 %v2298, 6
  %v2927 = vpop.permute.xlu0 %2926
  %2928 = vrot.lane.b32.xlu0 %v2300, 6
  %v2929 = vpop.permute.xlu0 %2928
  %2930 = vrot.lane.b32.xlu0 %v2303, 6
  %v2931 = vpop.permute.xlu0 %2930
  %2932 = vrot.lane.b32.xlu0 %v2305, 6
  %v2933 = vpop.permute.xlu0 %2932
  %2934 = vrot.lane.b32.xlu0 %v2308, 6
  %v2935 = vpop.permute.xlu0 %2934
  %2936 = vrot.lane.b32.xlu0 %v2310, 6
  %v2937 = vpop.permute.xlu0 %2936
  %2938 = vrot.lane.b32.xlu0 %v2313, 6
  %v2939 = vpop.permute.xlu0 %2938
  %2940 = vrot.lane.b32.xlu0 %v2315, 6
  %v2941 = vpop.permute.xlu0 %2940
  %2942 = vrot.lane.b32.xlu0 %v2318, 6
  %v2943 = vpop.permute.xlu0 %2942
  %2944 = vrot.lane.b32.xlu0 %v2320, 6
  %v2945 = vpop.permute.xlu0 %2944
  %2946 = vrot.lane.b32.xlu0 %v2323, 6
  %v2947 = vpop.permute.xlu0 %2946
  %2948 = vrot.lane.b32.xlu0 %v2325, 6
  %v2949 = vpop.permute.xlu0 %2948
  %2950 = vrot.lane.b32.xlu0 %v2328, 6
  %v2951 = vpop.permute.xlu0 %2950
  %2952 = vrot.lane.b32.xlu0 %v2330, 6
  %v2953 = vpop.permute.xlu0 %2952
  %2954 = vrot.lane.b32.xlu0 %v2333, 6
  %v2955 = vpop.permute.xlu0 %2954
  %2956 = vrot.lane.b32.xlu0 %v2335, 6
  %v2957 = vpop.permute.xlu0 %2956
  %2958 = vrot.lane.b32.xlu0 %v2338, 6
  %v2959 = vpop.permute.xlu0 %2958
  %2960 = vrot.lane.b32.xlu0 %v2340, 6
  %v2961 = vpop.permute.xlu0 %2960
  %2962 = vrot.lane.b32.xlu0 %v2343, 6
  %v2963 = vpop.permute.xlu0 %2962
  %2964 = vrot.lane.b32.xlu0 %v2345, 6
  %v2965 = vpop.permute.xlu0 %2964
  %2966 = vrot.lane.b32.xlu0 %v2348, 6
  %v2967 = vpop.permute.xlu0 %2966
  %2968 = vrot.lane.b32.xlu0 %v2350, 6
  %v2969 = vpop.permute.xlu0 %2968
  %2970 = vrot.lane.b32.xlu0 %v2353, 6
  %v2971 = vpop.permute.xlu0 %2970
  %2972 = vrot.lane.b32.xlu0 %v2355, 6
  %v2973 = vpop.permute.xlu0 %2972
  %2974 = vrot.lane.b32.xlu0 %v2358, 6
  %v2975 = vpop.permute.xlu0 %2974
  %2976 = vrot.lane.b32.xlu0 %v2360, 6
  %v2977 = vpop.permute.xlu0 %2976
  %2978 = vrot.lane.b32.xlu0 %v2363, 6
  %v2979 = vpop.permute.xlu0 %2978
  %2980 = vrot.lane.b32.xlu0 %v2365, 6
  %v2981 = vpop.permute.xlu0 %2980
  %2982 = vrot.lane.b32.xlu0 %v2368, 6
  %v2983 = vpop.permute.xlu0 %2982
  %2984 = vrot.lane.b32.xlu0 %v2370, 6
  %v2985 = vpop.permute.xlu0 %2984
  %2986 = vrot.lane.b32.xlu0 %v2373, 6
  %v2987 = vpop.permute.xlu0 %2986
  %2988 = vrot.lane.b32.xlu0 %v2375, 6
  %v2989 = vpop.permute.xlu0 %2988
  %2990 = vrot.lane.b32.xlu0 %v2378, 6
  %v2991 = vpop.permute.xlu0 %2990
  %2992 = vrot.lane.b32.xlu0 %v2380, 6
  %v2993 = vpop.permute.xlu0 %2992
  %2994 = vrot.lane.b32.xlu0 %v2383, 6
  %v2995 = vpop.permute.xlu0 %2994
  %2996 = vrot.lane.b32.xlu0 %v2385, 6
  %v2997 = vpop.permute.xlu0 %2996
  %2998 = vrot.lane.b32.xlu0 %v2388, 6
  %v2999 = vpop.permute.xlu0 %2998
  %3000 = vrot.lane.b32.xlu0 %v2390, 6
  %v3001 = vpop.permute.xlu0 %3000
  %3002 = vrot.lane.b32.xlu0 %v2393, 6
  %v3003 = vpop.permute.xlu0 %3002
  %3004 = vrot.lane.b32.xlu0 %v2395, 6
  %v3005 = vpop.permute.xlu0 %3004
  %3006 = vrot.lane.b32.xlu0 %v2398, 6
  %v3007 = vpop.permute.xlu0 %3006
  %3008 = vrot.lane.b32.xlu0 %v2400, 6
  %v3009 = vpop.permute.xlu0 %3008
  %3010 = vrot.lane.b32.xlu0 %v2403, 6
  %v3011 = vpop.permute.xlu0 %3010
  %3012 = vrot.lane.b32.xlu0 %v2405, 6
  %v3013 = vpop.permute.xlu0 %3012
  %3014 = vrot.lane.b32.xlu0 %v2408, 6
  %v3015 = vpop.permute.xlu0 %3014
  %3016 = vrot.lane.b32.xlu0 %v2410, 6
  %v3017 = vpop.permute.xlu0 %3016
  %3018 = vrot.lane.b32.xlu0 %v2413, 6
  %v3019 = vpop.permute.xlu0 %3018
  %3020 = vrot.lane.b32.xlu0 %v2415, 6
  %v3021 = vpop.permute.xlu0 %3020
  %3022 = vrot.lane.b32.xlu0 %v2418, 6
  %v3023 = vpop.permute.xlu0 %3022
  %3024 = vrot.lane.b32.xlu0 %v2420, 6
  %v3025 = vpop.permute.xlu0 %3024
  %3026 = vrot.lane.b32.xlu0 %v2423, 6
  %v3027 = vpop.permute.xlu0 %3026
  %3028 = vrot.lane.b32.xlu0 %v2425, 6
  %v3029 = vpop.permute.xlu0 %3028
  %3030 = vrot.lane.b32.xlu0 %v2428, 6
  %v3031 = vpop.permute.xlu0 %3030
  %3032 = vrot.lane.b32.xlu0 %v2430, 6
  %v3033 = vpop.permute.xlu0 %3032
  %3034 = vrot.lane.b32.xlu0 %v2433, 6
  %v3035 = vpop.permute.xlu0 %3034
  %3036 = vrot.lane.b32.xlu0 %v2435, 6
  %v3037 = vpop.permute.xlu0 %3036
  %3038 = vrot.lane.b32.xlu0 %v2438, 6
  %v3039 = vpop.permute.xlu0 %3038
  %3040 = vrot.lane.b32.xlu0 %v2440, 6
  %v3041 = vpop.permute.xlu0 %3040
  %3042 = vrot.lane.b32.xlu0 %v2443, 6
  %v3043 = vpop.permute.xlu0 %3042
  %3044 = vrot.lane.b32.xlu0 %v2445, 6
  %v3045 = vpop.permute.xlu0 %3044
  %3046 = vrot.lane.b32.xlu0 %v2448, 6
  %v3047 = vpop.permute.xlu0 %3046
  %3048 = vrot.lane.b32.xlu0 %v2450, 6
  %v3049 = vpop.permute.xlu0 %3048
  %3050 = vrot.lane.b32.xlu0 %v2453, 6
  %v3051 = vpop.permute.xlu0 %3050
  %3052 = vrot.lane.b32.xlu0 %v2455, 6
  %v3053 = vpop.permute.xlu0 %3052
  %3054 = vrot.lane.b32.xlu0 %v2458, 6
  %v3055 = vpop.permute.xlu0 %3054
  %3056 = vrot.lane.b32.xlu0 %v2460, 6
  %v3057 = vpop.permute.xlu0 %3056
  %3058 = vrot.lane.b32.xlu0 %v2463, 6
  %v3059 = vpop.permute.xlu0 %3058
  %3060 = vrot.lane.b32.xlu0 %v2465, 6
  %v3061 = vpop.permute.xlu0 %3060
  %3062 = vrot.lane.b32.xlu0 %v2468, 6
  %v3063 = vpop.permute.xlu0 %3062
  %3064 = vrot.lane.b32.xlu0 %v2470, 6
  %v3065 = vpop.permute.xlu0 %3064
  %3066 = vrot.lane.b32.xlu0 %v2473, 6
  %v3067 = vpop.permute.xlu0 %3066
  %3068 = vrot.lane.b32.xlu0 %v2475, 6
  %v3069 = vpop.permute.xlu0 %3068
  %3070 = vrot.lane.b32.xlu0 %v2478, 6
  %v3071 = vpop.permute.xlu0 %3070
  %3072 = vrot.lane.b32.xlu0 %v2480, 6
  %v3073 = vpop.permute.xlu0 %3072
  %3074 = vrot.lane.b32.xlu0 %v2483, 6
  %v3075 = vpop.permute.xlu0 %3074
  %3076 = vrot.lane.b32.xlu0 %v2485, 6
  %v3077 = vpop.permute.xlu0 %3076
  %3078 = vrot.lane.b32.xlu0 %v2488, 6
  %v3079 = vpop.permute.xlu0 %3078
  %3080 = vrot.lane.b32.xlu0 %v2490, 6
  %v3081 = vpop.permute.xlu0 %3080
  %3082 = vrot.lane.b32.xlu0 %v2493, 6
  %v3083 = vpop.permute.xlu0 %3082
  %3084 = vrot.lane.b32.xlu0 %v2495, 6
  %v3085 = vpop.permute.xlu0 %3084
  %3086 = vrot.lane.b32.xlu0 %v2498, 6
  %v3087 = vpop.permute.xlu0 %3086
  %3088 = vrot.lane.b32.xlu0 %v2500, 6
  %v3089 = vpop.permute.xlu0 %3088
  %3090 = vrot.lane.b32.xlu0 %v2503, 6
  %v3091 = vpop.permute.xlu0 %3090
  %3092 = vrot.lane.b32.xlu0 %v2505, 6
  %v3093 = vpop.permute.xlu0 %3092
  %3094 = vrot.lane.b32.xlu0 %v2508, 6
  %v3095 = vpop.permute.xlu0 %3094
  %3096 = vrot.lane.b32.xlu0 %v2510, 6
  %v3097 = vpop.permute.xlu0 %3096
  %3098 = vrot.lane.b32.xlu0 %v2513, 6
  %v3099 = vpop.permute.xlu0 %3098
  %3100 = vrot.lane.b32.xlu0 %v2515, 6
  %v3101 = vpop.permute.xlu0 %3100
  %3102 = vrot.lane.b32.xlu0 %v2518, 6
  %v3103 = vpop.permute.xlu0 %3102
  %3104 = vrot.lane.b32.xlu0 %v2520, 6
  %v3105 = vpop.permute.xlu0 %3104
  %3106 = vrot.lane.b32.xlu0 %v2523, 6
  %v3107 = vpop.permute.xlu0 %3106
  %3108 = vrot.lane.b32.xlu0 %v2525, 6
  %v3109 = vpop.permute.xlu0 %3108
  %3110 = vrot.lane.b32.xlu0 %v2528, 6
  %v3111 = vpop.permute.xlu0 %3110
  %3112 = vrot.lane.b32.xlu0 %v2530, 6
  %v3113 = vpop.permute.xlu0 %3112
  %3114 = vrot.lane.b32.xlu0 %v2533, 6
  %v3115 = vpop.permute.xlu0 %3114
  %3116 = vrot.lane.b32.xlu0 %v2535, 6
  %v3117 = vpop.permute.xlu0 %3116
  %3118 = vrot.lane.b32.xlu0 %v2538, 6
  %v3119 = vpop.permute.xlu0 %3118
  %3120 = vrot.lane.b32.xlu0 %v2540, 6
  %v3121 = vpop.permute.xlu0 %3120
  %3122 = vrot.lane.b32.xlu0 %v2543, 6
  %v3123 = vpop.permute.xlu0 %3122
  %3124 = vrot.lane.b32.xlu0 %v2545, 6
  %v3125 = vpop.permute.xlu0 %3124
  %3126 = vrot.lane.b32.xlu0 %v2548, 6
  %v3127 = vpop.permute.xlu0 %3126
  %3128 = vrot.lane.b32.xlu0 %v2550, 6
  %v3129 = vpop.permute.xlu0 %3128
  %3130 = vrot.lane.b32.xlu0 %v2553, 6
  %v3131 = vpop.permute.xlu0 %3130
  %3132 = vrot.lane.b32.xlu0 %v2555, 6
  %v3133 = vpop.permute.xlu0 %3132
  %3134 = vrot.lane.b32.xlu0 %v2558, 6
  %v3135 = vpop.permute.xlu0 %3134
  %3136 = vrot.lane.b32.xlu0 %v2560, 6
  %v3137 = vpop.permute.xlu0 %3136
  %3138 = vrot.lane.b32.xlu0 %v2563, 6
  %v3139 = vpop.permute.xlu0 %3138
  %3140 = vrot.lane.b32.xlu0 %v2565, 6
  %v3141 = vpop.permute.xlu0 %3140
  %3142 = vrot.lane.b32.xlu0 %v2568, 6
  %v3143 = vpop.permute.xlu0 %3142
  %3144 = vrot.lane.b32.xlu0 %v2570, 6
  %v3145 = vpop.permute.xlu0 %3144
  %3146 = vrot.lane.b32.xlu0 %v2573, 6
  %v3147 = vpop.permute.xlu0 %3146
  %3148 = vrot.lane.b32.xlu0 %v2575, 6
  %v3149 = vpop.permute.xlu0 %3148
  %3150 = vrot.lane.b32.xlu0 %v2578, 6
  %v3151 = vpop.permute.xlu0 %3150
  %3152 = vrot.lane.b32.xlu0 %v2580, 6
  %v3153 = vpop.permute.xlu0 %3152
  %3154 = vrot.lane.b32.xlu0 %v2583, 6
  %v3155 = vpop.permute.xlu0 %3154
  %3156 = vrot.lane.b32.xlu0 %v2585, 6
  %v3157 = vpop.permute.xlu0 %3156
  %3158 = vrot.lane.b32.xlu0 %v2588, 6
  %v3159 = vpop.permute.xlu0 %3158
  %3160 = vrot.lane.b32.xlu0 %v2590, 6
  %v3161 = vpop.permute.xlu0 %3160
  %3162 = vrot.lane.b32.xlu0 %v2593, 6
  %v3163 = vpop.permute.xlu0 %3162
  %3164 = vrot.lane.b32.xlu0 %v2595, 6
  %v3165 = vpop.permute.xlu0 %3164
  %3166 = vrot.lane.b32.xlu0 %v2598, 6
  %v3167 = vpop.permute.xlu0 %3166
  %3168 = vrot.lane.b32.xlu0 %v2600, 6
  %v3169 = vpop.permute.xlu0 %3168
  %3170 = vrot.lane.b32.xlu0 %v2603, 6
  %v3171 = vpop.permute.xlu0 %3170
  %3172 = vrot.lane.b32.xlu0 %v2605, 6
  %v3173 = vpop.permute.xlu0 %3172
  %3174 = vrot.lane.b32.xlu0 %v2608, 6
  %v3175 = vpop.permute.xlu0 %3174
  %3176 = vrot.lane.b32.xlu0 %v2610, 6
  %v3177 = vpop.permute.xlu0 %3176
  %3178 = vrot.lane.b32.xlu0 %v2613, 6
  %v3179 = vpop.permute.xlu0 %3178
  %3180 = vrot.lane.b32.xlu0 %v2615, 6
  %v3181 = vpop.permute.xlu0 %3180
  %3182 = vrot.lane.b32.xlu0 %v2618, 6
  %v3183 = vpop.permute.xlu0 %3182
  %3184 = vrot.lane.b32.xlu0 %v2620, 6
  %v3185 = vpop.permute.xlu0 %3184
  %3186 = vrot.lane.b32.xlu0 %v2623, 6
  %v3187 = vpop.permute.xlu0 %3186
  %3188 = vrot.lane.b32.xlu0 %v2625, 6
  %v3189 = vpop.permute.xlu0 %3188
  %3190 = vrot.lane.b32.xlu0 %v2628, 6
  %v3191 = vpop.permute.xlu0 %3190
  %3192 = vrot.lane.b32.xlu0 %v2630, 6
  %v3193 = vpop.permute.xlu0 %3192
  %3194 = vrot.lane.b32.xlu0 %v2633, 6
  %v3195 = vpop.permute.xlu0 %3194
  %3196 = vrot.lane.b32.xlu0 %v2635, 6
  %v3197 = vpop.permute.xlu0 %3196
  %3198 = vrot.lane.b32.xlu0 %v2638, 6
  %v3199 = vpop.permute.xlu0 %3198
  %3200 = vrot.lane.b32.xlu0 %v2640, 6
  %v3201 = vpop.permute.xlu0 %3200
  %3202 = vrot.lane.b32.xlu0 %v2643, 6
  %v3203 = vpop.permute.xlu0 %3202
  %3204 = vrot.lane.b32.xlu0 %v2645, 6
  %v3205 = vpop.permute.xlu0 %3204
  %3206 = vrot.lane.b32.xlu0 %v2648, 6
  %v3207 = vpop.permute.xlu0 %3206
  %3208 = vrot.lane.b32.xlu0 %v2650, 6
  %v3209 = vpop.permute.xlu0 %3208
  %3210 = vrot.lane.b32.xlu0 %v2653, 6
  %v3211 = vpop.permute.xlu0 %3210
  %3212 = vrot.lane.b32.xlu0 %v2655, 6
  %v3213 = vpop.permute.xlu0 %3212
  %3214 = vrot.lane.b32.xlu0 %v2658, 6
  %v3215 = vpop.permute.xlu0 %3214
  %3216 = vrot.lane.b32.xlu0 %v2660, 6
  %v3217 = vpop.permute.xlu0 %3216
  %3218 = vrot.lane.b32.xlu0 %v2663, 6
  %v3219 = vpop.permute.xlu0 %3218
  %3220 = vrot.lane.b32.xlu0 %v2665, 6
  %v3221 = vpop.permute.xlu0 %3220
  %3222 = vrot.lane.b32.xlu0 %v2668, 6
  %v3223 = vpop.permute.xlu0 %3222
  %3224 = vrot.lane.b32.xlu0 %v2670, 6
  %v3225 = vpop.permute.xlu0 %3224
  %3226 = vrot.lane.b32.xlu0 %v2673, 6
  %v3227 = vpop.permute.xlu0 %3226
  %3228 = vrot.lane.b32.xlu0 %v2675, 6
  %v3229 = vpop.permute.xlu0 %3228
  %3230 = vrot.lane.b32.xlu0 %v2678, 6
  %v3231 = vpop.permute.xlu0 %3230
  %3232 = vrot.lane.b32.xlu0 %v2680, 6
  %v3233 = vpop.permute.xlu0 %3232
  %3234 = vrot.lane.b32.xlu0 %v2683, 6
  %v3235 = vpop.permute.xlu0 %3234
  %3236 = vrot.lane.b32.xlu0 %v2685, 6
  %v3237 = vpop.permute.xlu0 %3236
  %3238 = vrot.lane.b32.xlu0 %v2688, 6
  %v3239 = vpop.permute.xlu0 %3238
  %3240 = vrot.lane.b32.xlu0 %v2690, 6
  %v3241 = vpop.permute.xlu0 %3240
  %3242 = vrot.lane.b32.xlu0 %v2693, 6
  %v3243 = vpop.permute.xlu0 %3242
  %3244 = vrot.lane.b32.xlu0 %v2695, 6
  %v3245 = vpop.permute.xlu0 %3244
  %3246 = vrot.lane.b32.xlu0 %v2698, 6
  %v3247 = vpop.permute.xlu0 %3246
  %3248 = vrot.lane.b32.xlu0 %v2700, 6
  %v3249 = vpop.permute.xlu0 %3248
  %3250 = vrot.lane.b32.xlu0 %v2703, 6
  %v3251 = vpop.permute.xlu0 %3250
  %3252 = vrot.lane.b32.xlu0 %v2705, 6
  %v3253 = vpop.permute.xlu0 %3252
  %3254 = vrot.lane.b32.xlu0 %v2708, 6
  %v3255 = vpop.permute.xlu0 %3254
  %3256 = vrot.lane.b32.xlu0 %v2710, 6
  %v3257 = vpop.permute.xlu0 %3256
  %3258 = vrot.lane.b32.xlu0 %v2713, 6
  %v3259 = vpop.permute.xlu0 %3258
  %3260 = vrot.lane.b32.xlu0 %v2715, 6
  %v3261 = vpop.permute.xlu0 %3260
  %3262 = vrot.lane.b32.xlu0 %v2718, 6
  %v3263 = vpop.permute.xlu0 %3262
  %3264 = vrot.lane.b32.xlu0 %v2720, 6
  %v3265 = vpop.permute.xlu0 %3264
  %3266 = vrot.lane.b32.xlu0 %v2723, 6
  %v3267 = vpop.permute.xlu0 %3266
  %3268 = vrot.lane.b32.xlu0 %v2725, 6
  %v3269 = vpop.permute.xlu0 %3268
  %3270 = vrot.lane.b32.xlu0 %v2728, 6
  %v3271 = vpop.permute.xlu0 %3270
  %3272 = vrot.lane.b32.xlu0 %v2730, 6
  %v3273 = vpop.permute.xlu0 %3272
  %3274 = vrot.lane.b32.xlu0 %v2733, 6
  %v3275 = vpop.permute.xlu0 %3274
  %3276 = vrot.lane.b32.xlu0 %v2735, 6
  %v3277 = vpop.permute.xlu0 %3276
  %3278 = vrot.lane.b32.xlu0 %v2738, 6
  %v3279 = vpop.permute.xlu0 %3278
  %3280 = vrot.lane.b32.xlu0 %v2740, 6
  %v3281 = vpop.permute.xlu0 %3280
  %3282 = vrot.lane.b32.xlu0 %v2743, 6
  %v3283 = vpop.permute.xlu0 %3282
  %3284 = vrot.lane.b32.xlu0 %v2745, 6
  %v3285 = vpop.permute.xlu0 %3284
  %3286 = vrot.lane.b32.xlu0 %v2748, 6
  %v3287 = vpop.permute.xlu0 %3286
  %3288 = vrot.lane.b32.xlu0 %v2750, 6
  %v3289 = vpop.permute.xlu0 %3288
  %3290 = vrot.lane.b32.xlu0 %v2753, 6
  %v3291 = vpop.permute.xlu0 %3290
  %3292 = vrot.lane.b32.xlu0 %v2755, 6
  %v3293 = vpop.permute.xlu0 %3292
  %3294 = vrot.lane.b32.xlu0 %v2758, 6
  %v3295 = vpop.permute.xlu0 %3294
  %3296 = vrot.lane.b32.xlu0 %v2760, 6
  %v3297 = vpop.permute.xlu0 %3296
  %3298 = vrot.lane.b32.xlu0 %v2763, 6
  %v3299 = vpop.permute.xlu0 %3298
  %3300 = vrot.lane.b32.xlu0 %v2765, 6
  %v3301 = vpop.permute.xlu0 %3300
  %3302 = vrot.lane.b32.xlu0 %v2768, 6
  %v3303 = vpop.permute.xlu0 %3302
  %3304 = vrot.lane.b32.xlu0 %v2770, 6
  %v3305 = vpop.permute.xlu0 %3304
  %3306 = vrot.lane.b32.xlu0 %v2773, 6
  %v3307 = vpop.permute.xlu0 %3306
  %3308 = vrot.lane.b32.xlu0 %v2775, 6
  %v3309 = vpop.permute.xlu0 %3308
  %3310 = vrot.lane.b32.xlu0 %v2778, 6
  %v3311 = vpop.permute.xlu0 %3310
  %3312 = vrot.lane.b32.xlu0 %v2780, 6
  %v3313 = vpop.permute.xlu0 %3312
  %3314 = vrot.lane.b32.xlu0 %v2783, 6
  %v3315 = vpop.permute.xlu0 %3314
  %3316 = vrot.lane.b32.xlu0 %v2785, 6
  %v3317 = vpop.permute.xlu0 %3316
  %3318 = vrot.lane.b32.xlu0 %v2788, 6
  %v3319 = vpop.permute.xlu0 %3318
  %3320 = vrot.lane.b32.xlu0 %v2790, 6
  %v3321 = vpop.permute.xlu0 %3320
  %3322 = vrot.lane.b32.xlu0 %v2793, 6
  %v3323 = vpop.permute.xlu0 %3322
  %3324 = vrot.lane.b32.xlu0 %v2795, 6
  %v3325 = vpop.permute.xlu0 %3324
  %3326 = vrot.lane.b32.xlu0 %v2798, 6
  %v3327 = vpop.permute.xlu0 %3326
  %3328 = vrot.lane.b32.xlu0 %v2800, 6
  %v3329 = vpop.permute.xlu0 %3328
  %3330 = vrot.lane.b32.xlu0 %v2803, 6
  %v3331 = vpop.permute.xlu0 %3330
  %3332 = vrot.lane.b32.xlu0 %v2805, 6
  %v3333 = vpop.permute.xlu0 %3332
  %3334 = vrot.lane.b32.xlu0 %v2808, 6
  %v3335 = vpop.permute.xlu0 %3334
  %3336 = vrot.lane.b32.xlu0 %v2810, 6
  %v3337 = vpop.permute.xlu0 %3336
  %3338 = vrot.lane.b32.xlu0 %v2813, 6
  %v3339 = vpop.permute.xlu0 %3338
  %3340 = vrot.lane.b32.xlu0 %v2815, 6
  %v3341 = vpop.permute.xlu0 %3340
  %3342 = vrot.lane.b32.xlu0 %v2818, 6
  %v3343 = vpop.permute.xlu0 %3342
  %3344 = vrot.lane.b32.xlu0 %v2820, 6
  %v3345 = vpop.permute.xlu0 %3344
  %3346 = vrot.lane.b32.xlu0 %v2823, 6
  %v3347 = vpop.permute.xlu0 %3346
  %3348 = vrot.lane.b32.xlu0 %v2825, 6
  %v3349 = vpop.permute.xlu0 %3348
  %3350 = vrot.lane.b32.xlu0 %v2828, 6
  %v3351 = vpop.permute.xlu0 %3350
  %3352 = vrot.lane.b32.xlu0 %v2830, 6
  %v3353 = vpop.permute.xlu0 %3352
  %3354 = vrot.lane.b32.xlu0 %v2833, 6
  %v3355 = vpop.permute.xlu0 %3354
  %3356 = vrot.lane.b32.xlu0 %v2835, 6
  %v3357 = vpop.permute.xlu0 %3356
  %3358 = vrot.lane.b32.xlu0 %v2838, 6
  %v3359 = vpop.permute.xlu0 %3358
  %3360 = vrot.lane.b32.xlu0 %v2840, 6
  %v3361 = vpop.permute.xlu0 %3360
  %3362 = vrot.lane.b32.xlu0 %v2843, 6
  %v3363 = vpop.permute.xlu0 %3362
  %3364 = vrot.lane.b32.xlu0 %v2845, 6
  %v3365 = vpop.permute.xlu0 %3364
  %3366 = vrot.lane.b32.xlu0 %v2848, 6
  %v3367 = vpop.permute.xlu0 %3366
  %3368 = vrot.lane.b32.xlu0 %v2850, 6
  %v3369 = vpop.permute.xlu0 %3368
  %3370 = vrot.lane.b32.xlu0 %v2853, 6
  %v3371 = vpop.permute.xlu0 %3370
  %3372 = vrot.lane.b32.xlu0 %v2855, 6
  %v3373 = vpop.permute.xlu0 %3372
  %3374 = vrot.lane.b32.xlu0 %v2858, 6
  %v3375 = vpop.permute.xlu0 %3374
  %3376 = vrot.lane.b32.xlu0 %v2860, 6
  %v3377 = vpop.permute.xlu0 %3376
  %3378 = vrot.lane.b32.xlu0 %v2863, 6
  %v3379 = vpop.permute.xlu0 %3378
  %3380 = vrot.lane.b32.xlu0 %v2865, 6
  %v3381 = vpop.permute.xlu0 %3380
  %3382 = vrot.lane.b32.xlu0 %v2868, 6
  %v3383 = vpop.permute.xlu0 %3382
  %3384 = vrot.lane.b32.xlu0 %v2870, 6
  %v3385 = vpop.permute.xlu0 %3384
  %3386 = vrot.lane.b32.xlu0 %v2873, 6
  %v3387 = vpop.permute.xlu0 %3386
  %3388 = vrot.lane.b32.xlu0 %v2875, 6
  %v3389 = vpop.permute.xlu0 %3388
  %3390 = vrot.lane.b32.xlu0 %v2878, 6
  %v3391 = vpop.permute.xlu0 %3390
  %3392 = vrot.lane.b32.xlu0 %v2880, 6
  %v3393 = vpop.permute.xlu0 %3392
  %3394 = vrot.lane.b32.xlu0 %v2883, 6
  %v3395 = vpop.permute.xlu0 %3394
  %3396 = vrot.lane.b32.xlu0 %v2885, 6
  %v3397 = vpop.permute.xlu0 %3396
  %3670 = vrot.lane.b32.xlu0 %v23, 9
  %v3671 = vpop.permute.xlu0 %3670
  %3672 = vrot.lane.b32.xlu0 %v24, 9
  %v3673 = vpop.permute.xlu0 %3672
  %3674 = vrot.lane.b32.xlu0 %v26, 9
  %v3675 = vpop.permute.xlu0 %3674
  %3676 = vrot.lane.b32.xlu0 %v27, 9
  %v3677 = vpop.permute.xlu0 %3676
  %3678 = vrot.lane.b32.xlu0 %v29, 9
  %v3679 = vpop.permute.xlu0 %3678
  %3680 = vrot.lane.b32.xlu0 %v30, 9
  %v3681 = vpop.permute.xlu0 %3680
  %3682 = vrot.lane.b32.xlu0 %v32, 9
  %v3683 = vpop.permute.xlu0 %3682
  %3684 = vrot.lane.b32.xlu0 %v33, 9
  %v3685 = vpop.permute.xlu0 %3684
  %3686 = vrot.lane.b32.xlu0 %v35, 9
  %v3687 = vpop.permute.xlu0 %3686
  %3688 = vrot.lane.b32.xlu0 %v36, 9
  %v3689 = vpop.permute.xlu0 %3688
  %3690 = vrot.lane.b32.xlu0 %v38, 9
  %v3691 = vpop.permute.xlu0 %3690
  %3692 = vrot.lane.b32.xlu0 %v39, 9
  %v3693 = vpop.permute.xlu0 %3692
  %3694 = vrot.lane.b32.xlu0 %v41, 9
  %v3695 = vpop.permute.xlu0 %3694
  %3696 = vrot.lane.b32.xlu0 %v42, 9
  %v3697 = vpop.permute.xlu0 %3696
  %3698 = vrot.lane.b32.xlu0 %v44, 9
  %v3699 = vpop.permute.xlu0 %3698
  %3700 = vrot.lane.b32.xlu0 %v45, 9
  %v3701 = vpop.permute.xlu0 %3700
  %3702 = vrot.lane.b32.xlu0 %v47, 9
  %v3703 = vpop.permute.xlu0 %3702
  %3704 = vrot.lane.b32.xlu0 %v48, 9
  %v3705 = vpop.permute.xlu0 %3704
  %3706 = vrot.lane.b32.xlu0 %v50, 9
  %v3707 = vpop.permute.xlu0 %3706
  %3708 = vrot.lane.b32.xlu0 %v51, 9
  %v3709 = vpop.permute.xlu0 %3708
  %3710 = vrot.lane.b32.xlu0 %v53, 9
  %v3711 = vpop.permute.xlu0 %3710
  %3712 = vrot.lane.b32.xlu0 %v54, 9
  %v3713 = vpop.permute.xlu0 %3712
  %3714 = vrot.lane.b32.xlu0 %v56, 9
  %v3715 = vpop.permute.xlu0 %3714
  %3716 = vrot.lane.b32.xlu0 %v57, 9
  %v3717 = vpop.permute.xlu0 %3716
  %3718 = vrot.lane.b32.xlu0 %v59, 9
  %v3719 = vpop.permute.xlu0 %3718
  %3720 = vrot.lane.b32.xlu0 %v60, 9
  %v3721 = vpop.permute.xlu0 %3720
  %3722 = vrot.lane.b32.xlu0 %v62, 9
  %v3723 = vpop.permute.xlu0 %3722
  %3724 = vrot.lane.b32.xlu0 %v63, 9
  %v3725 = vpop.permute.xlu0 %3724
  %3726 = vrot.lane.b32.xlu0 %v65, 9
  %v3727 = vpop.permute.xlu0 %3726
  %3728 = vrot.lane.b32.xlu0 %v66, 9
  %v3729 = vpop.permute.xlu0 %3728
  %3730 = vrot.lane.b32.xlu0 %v68, 9
  %v3731 = vpop.permute.xlu0 %3730
  %3732 = vrot.lane.b32.xlu0 %v69, 9
  %v3733 = vpop.permute.xlu0 %3732
  %3734 = vrot.lane.b32.xlu0 %v77, 9
  %v3735 = vpop.permute.xlu0 %3734
  %3736 = vrot.lane.b32.xlu0 %v78, 9
  %v3737 = vpop.permute.xlu0 %3736
  %3738 = vrot.lane.b32.xlu0 %v80, 9
  %v3739 = vpop.permute.xlu0 %3738
  %3740 = vrot.lane.b32.xlu0 %v81, 9
  %v3741 = vpop.permute.xlu0 %3740
  %3742 = vrot.lane.b32.xlu0 %v83, 9
  %v3743 = vpop.permute.xlu0 %3742
  %3744 = vrot.lane.b32.xlu0 %v84, 9
  %v3745 = vpop.permute.xlu0 %3744
  %3746 = vrot.lane.b32.xlu0 %v86, 9
  %v3747 = vpop.permute.xlu0 %3746
  %3748 = vrot.lane.b32.xlu0 %v87, 9
  %v3749 = vpop.permute.xlu0 %3748
  %3750 = vrot.lane.b32.xlu0 %v89, 9
  %v3751 = vpop.permute.xlu0 %3750
  %3752 = vrot.lane.b32.xlu0 %v90, 9
  %v3753 = vpop.permute.xlu0 %3752
  %3754 = vrot.lane.b32.xlu0 %v92, 9
  %v3755 = vpop.permute.xlu0 %3754
  %3756 = vrot.lane.b32.xlu0 %v93, 9
  %v3757 = vpop.permute.xlu0 %3756
  %3758 = vrot.lane.b32.xlu0 %v95, 9
  %v3759 = vpop.permute.xlu0 %3758
  %3760 = vrot.lane.b32.xlu0 %v96, 9
  %v3761 = vpop.permute.xlu0 %3760
  %3762 = vrot.lane.b32.xlu0 %v98, 9
  %v3763 = vpop.permute.xlu0 %3762
  %3764 = vrot.lane.b32.xlu0 %v99, 9
  %v3765 = vpop.permute.xlu0 %3764
  %3766 = vrot.lane.b32.xlu0 %v101, 9
  %v3767 = vpop.permute.xlu0 %3766
  %3768 = vrot.lane.b32.xlu0 %v102, 9
  %v3769 = vpop.permute.xlu0 %3768
  %3770 = vrot.lane.b32.xlu0 %v104, 9
  %v3771 = vpop.permute.xlu0 %3770
  %3772 = vrot.lane.b32.xlu0 %v105, 9
  %v3773 = vpop.permute.xlu0 %3772
  %3774 = vrot.lane.b32.xlu0 %v107, 9
  %v3775 = vpop.permute.xlu0 %3774
  %3776 = vrot.lane.b32.xlu0 %v108, 9
  %v3777 = vpop.permute.xlu0 %3776
  %3778 = vrot.lane.b32.xlu0 %v110, 9
  %v3779 = vpop.permute.xlu0 %3778
  %3780 = vrot.lane.b32.xlu0 %v111, 9
  %v3781 = vpop.permute.xlu0 %3780
  %3782 = vrot.lane.b32.xlu0 %v113, 9
  %v3783 = vpop.permute.xlu0 %3782
  %3784 = vrot.lane.b32.xlu0 %v114, 9
  %v3785 = vpop.permute.xlu0 %3784
  %3786 = vrot.lane.b32.xlu0 %v116, 9
  %v3787 = vpop.permute.xlu0 %3786
  %3788 = vrot.lane.b32.xlu0 %v117, 9
  %v3789 = vpop.permute.xlu0 %3788
  %3790 = vrot.lane.b32.xlu0 %v119, 9
  %v3791 = vpop.permute.xlu0 %3790
  %3792 = vrot.lane.b32.xlu0 %v120, 9
  %v3793 = vpop.permute.xlu0 %3792
  %3794 = vrot.lane.b32.xlu0 %v122, 9
  %v3795 = vpop.permute.xlu0 %3794
  %3796 = vrot.lane.b32.xlu0 %v123, 9
  %v3797 = vpop.permute.xlu0 %3796
  %3798 = vrot.lane.b32.xlu0 %v131, 9
  %v3799 = vpop.permute.xlu0 %3798
  %3800 = vrot.lane.b32.xlu0 %v132, 9
  %v3801 = vpop.permute.xlu0 %3800
  %3802 = vrot.lane.b32.xlu0 %v134, 9
  %v3803 = vpop.permute.xlu0 %3802
  %3804 = vrot.lane.b32.xlu0 %v135, 9
  %v3805 = vpop.permute.xlu0 %3804
  %3806 = vrot.lane.b32.xlu0 %v137, 9
  %v3807 = vpop.permute.xlu0 %3806
  %3808 = vrot.lane.b32.xlu0 %v138, 9
  %v3809 = vpop.permute.xlu0 %3808
  %3810 = vrot.lane.b32.xlu0 %v140, 9
  %v3811 = vpop.permute.xlu0 %3810
  %3812 = vrot.lane.b32.xlu0 %v141, 9
  %v3813 = vpop.permute.xlu0 %3812
  %3814 = vrot.lane.b32.xlu0 %v143, 9
  %v3815 = vpop.permute.xlu0 %3814
  %3816 = vrot.lane.b32.xlu0 %v144, 9
  %v3817 = vpop.permute.xlu0 %3816
  %3818 = vrot.lane.b32.xlu0 %v146, 9
  %v3819 = vpop.permute.xlu0 %3818
  %3820 = vrot.lane.b32.xlu0 %v147, 9
  %v3821 = vpop.permute.xlu0 %3820
  %3822 = vrot.lane.b32.xlu0 %v149, 9
  %v3823 = vpop.permute.xlu0 %3822
  %3824 = vrot.lane.b32.xlu0 %v150, 9
  %v3825 = vpop.permute.xlu0 %3824
  %3826 = vrot.lane.b32.xlu0 %v152, 9
  %v3827 = vpop.permute.xlu0 %3826
  %3828 = vrot.lane.b32.xlu0 %v153, 9
  %v3829 = vpop.permute.xlu0 %3828
  %3830 = vrot.lane.b32.xlu0 %v155, 9
  %v3831 = vpop.permute.xlu0 %3830
  %3832 = vrot.lane.b32.xlu0 %v156, 9
  %v3833 = vpop.permute.xlu0 %3832
  %3834 = vrot.lane.b32.xlu0 %v158, 9
  %v3835 = vpop.permute.xlu0 %3834
  %3836 = vrot.lane.b32.xlu0 %v159, 9
  %v3837 = vpop.permute.xlu0 %3836
  %3838 = vrot.lane.b32.xlu0 %v161, 9
  %v3839 = vpop.permute.xlu0 %3838
  %3840 = vrot.lane.b32.xlu0 %v162, 9
  %v3841 = vpop.permute.xlu0 %3840
  %3842 = vrot.lane.b32.xlu0 %v164, 9
  %v3843 = vpop.permute.xlu0 %3842
  %3844 = vrot.lane.b32.xlu0 %v165, 9
  %v3845 = vpop.permute.xlu0 %3844
  %3846 = vrot.lane.b32.xlu0 %v167, 9
  %v3847 = vpop.permute.xlu0 %3846
  %3848 = vrot.lane.b32.xlu0 %v168, 9
  %v3849 = vpop.permute.xlu0 %3848
  %3850 = vrot.lane.b32.xlu0 %v170, 9
  %v3851 = vpop.permute.xlu0 %3850
  %3852 = vrot.lane.b32.xlu0 %v171, 9
  %v3853 = vpop.permute.xlu0 %3852
  %3854 = vrot.lane.b32.xlu0 %v173, 9
  %v3855 = vpop.permute.xlu0 %3854
  %3856 = vrot.lane.b32.xlu0 %v174, 9
  %v3857 = vpop.permute.xlu0 %3856
  %3858 = vrot.lane.b32.xlu0 %v176, 9
  %v3859 = vpop.permute.xlu0 %3858
  %3860 = vrot.lane.b32.xlu0 %v177, 9
  %v3861 = vpop.permute.xlu0 %3860
  %3862 = vrot.lane.b32.xlu0 %v185, 9
  %v3863 = vpop.permute.xlu0 %3862
  %3864 = vrot.lane.b32.xlu0 %v186, 9
  %v3865 = vpop.permute.xlu0 %3864
  %3866 = vrot.lane.b32.xlu0 %v188, 9
  %v3867 = vpop.permute.xlu0 %3866
  %3868 = vrot.lane.b32.xlu0 %v189, 9
  %v3869 = vpop.permute.xlu0 %3868
  %3870 = vrot.lane.b32.xlu0 %v191, 9
  %v3871 = vpop.permute.xlu0 %3870
  %3872 = vrot.lane.b32.xlu0 %v192, 9
  %v3873 = vpop.permute.xlu0 %3872
  %3874 = vrot.lane.b32.xlu0 %v194, 9
  %v3875 = vpop.permute.xlu0 %3874
  %3876 = vrot.lane.b32.xlu0 %v195, 9
  %v3877 = vpop.permute.xlu0 %3876
  %3878 = vrot.lane.b32.xlu0 %v197, 9
  %v3879 = vpop.permute.xlu0 %3878
  %3880 = vrot.lane.b32.xlu0 %v198, 9
  %v3881 = vpop.permute.xlu0 %3880
  %3882 = vrot.lane.b32.xlu0 %v200, 9
  %v3883 = vpop.permute.xlu0 %3882
  %3884 = vrot.lane.b32.xlu0 %v201, 9
  %v3885 = vpop.permute.xlu0 %3884
  %3886 = vrot.lane.b32.xlu0 %v203, 9
  %v3887 = vpop.permute.xlu0 %3886
  %3888 = vrot.lane.b32.xlu0 %v204, 9
  %v3889 = vpop.permute.xlu0 %3888
  %3890 = vrot.lane.b32.xlu0 %v206, 9
  %v3891 = vpop.permute.xlu0 %3890
  %3892 = vrot.lane.b32.xlu0 %v207, 9
  %v3893 = vpop.permute.xlu0 %3892
  %3894 = vrot.lane.b32.xlu0 %v209, 9
  %v3895 = vpop.permute.xlu0 %3894
  %3896 = vrot.lane.b32.xlu0 %v210, 9
  %v3897 = vpop.permute.xlu0 %3896
  %3898 = vrot.lane.b32.xlu0 %v212, 9
  %v3899 = vpop.permute.xlu0 %3898
  %3900 = vrot.lane.b32.xlu0 %v213, 9
  %v3901 = vpop.permute.xlu0 %3900
  %3902 = vrot.lane.b32.xlu0 %v215, 9
  %v3903 = vpop.permute.xlu0 %3902
  %3904 = vrot.lane.b32.xlu0 %v216, 9
  %v3905 = vpop.permute.xlu0 %3904
  %3906 = vrot.lane.b32.xlu0 %v218, 9
  %v3907 = vpop.permute.xlu0 %3906
  %3908 = vrot.lane.b32.xlu0 %v219, 9
  %v3909 = vpop.permute.xlu0 %3908
  %3910 = vrot.lane.b32.xlu0 %v221, 9
  %v3911 = vpop.permute.xlu0 %3910
  %3912 = vrot.lane.b32.xlu0 %v222, 9
  %v3913 = vpop.permute.xlu0 %3912
  %3914 = vrot.lane.b32.xlu0 %v224, 9
  %v3915 = vpop.permute.xlu0 %3914
  %3916 = vrot.lane.b32.xlu0 %v225, 9
  %v3917 = vpop.permute.xlu0 %3916
  %3918 = vrot.lane.b32.xlu0 %v227, 9
  %v3919 = vpop.permute.xlu0 %3918
  %3920 = vrot.lane.b32.xlu0 %v228, 9
  %v3921 = vpop.permute.xlu0 %3920
  %3922 = vrot.lane.b32.xlu0 %v230, 9
  %v3923 = vpop.permute.xlu0 %3922
  %3924 = vrot.lane.b32.xlu0 %v231, 9
  %v3925 = vpop.permute.xlu0 %3924
  %3926 = vrot.lane.b32.xlu0 %v239, 9
  %v3927 = vpop.permute.xlu0 %3926
  %3928 = vrot.lane.b32.xlu0 %v240, 9
  %v3929 = vpop.permute.xlu0 %3928
  %3930 = vrot.lane.b32.xlu0 %v242, 9
  %v3931 = vpop.permute.xlu0 %3930
  %3932 = vrot.lane.b32.xlu0 %v243, 9
  %v3933 = vpop.permute.xlu0 %3932
  %3934 = vrot.lane.b32.xlu0 %v245, 9
  %v3935 = vpop.permute.xlu0 %3934
  %3936 = vrot.lane.b32.xlu0 %v246, 9
  %v3937 = vpop.permute.xlu0 %3936
  %3938 = vrot.lane.b32.xlu0 %v248, 9
  %v3939 = vpop.permute.xlu0 %3938
  %3940 = vrot.lane.b32.xlu0 %v249, 9
  %v3941 = vpop.permute.xlu0 %3940
  %3942 = vrot.lane.b32.xlu0 %v251, 9
  %v3943 = vpop.permute.xlu0 %3942
  %3944 = vrot.lane.b32.xlu0 %v252, 9
  %v3945 = vpop.permute.xlu0 %3944
  %3946 = vrot.lane.b32.xlu0 %v254, 9
  %v3947 = vpop.permute.xlu0 %3946
  %3948 = vrot.lane.b32.xlu0 %v255, 9
  %v3949 = vpop.permute.xlu0 %3948
  %3950 = vrot.lane.b32.xlu0 %v257, 9
  %v3951 = vpop.permute.xlu0 %3950
  %3952 = vrot.lane.b32.xlu0 %v258, 9
  %v3953 = vpop.permute.xlu0 %3952
  %3954 = vrot.lane.b32.xlu0 %v260, 9
  %v3955 = vpop.permute.xlu0 %3954
  %3956 = vrot.lane.b32.xlu0 %v261, 9
  %v3957 = vpop.permute.xlu0 %3956
  %3958 = vrot.lane.b32.xlu0 %v263, 9
  %v3959 = vpop.permute.xlu0 %3958
  %3960 = vrot.lane.b32.xlu0 %v264, 9
  %v3961 = vpop.permute.xlu0 %3960
  %3962 = vrot.lane.b32.xlu0 %v266, 9
  %v3963 = vpop.permute.xlu0 %3962
  %3964 = vrot.lane.b32.xlu0 %v267, 9
  %v3965 = vpop.permute.xlu0 %3964
  %3966 = vrot.lane.b32.xlu0 %v269, 9
  %v3967 = vpop.permute.xlu0 %3966
  %3968 = vrot.lane.b32.xlu0 %v270, 9
  %v3969 = vpop.permute.xlu0 %3968
  %3970 = vrot.lane.b32.xlu0 %v272, 9
  %v3971 = vpop.permute.xlu0 %3970
  %3972 = vrot.lane.b32.xlu0 %v273, 9
  %v3973 = vpop.permute.xlu0 %3972
  %3974 = vrot.lane.b32.xlu0 %v275, 9
  %v3975 = vpop.permute.xlu0 %3974
  %3976 = vrot.lane.b32.xlu0 %v276, 9
  %v3977 = vpop.permute.xlu0 %3976
  %3978 = vrot.lane.b32.xlu0 %v278, 9
  %v3979 = vpop.permute.xlu0 %3978
  %3980 = vrot.lane.b32.xlu0 %v279, 9
  %v3981 = vpop.permute.xlu0 %3980
  %3982 = vrot.lane.b32.xlu0 %v281, 9
  %v3983 = vpop.permute.xlu0 %3982
  %3984 = vrot.lane.b32.xlu0 %v282, 9
  %v3985 = vpop.permute.xlu0 %3984
  %3986 = vrot.lane.b32.xlu0 %v284, 9
  %v3987 = vpop.permute.xlu0 %3986
  %3988 = vrot.lane.b32.xlu0 %v285, 9
  %v3989 = vpop.permute.xlu0 %3988
  %3990 = vrot.lane.b32.xlu0 %v293, 9
  %v3991 = vpop.permute.xlu0 %3990
  %3992 = vrot.lane.b32.xlu0 %v294, 9
  %v3993 = vpop.permute.xlu0 %3992
  %3994 = vrot.lane.b32.xlu0 %v296, 9
  %v3995 = vpop.permute.xlu0 %3994
  %3996 = vrot.lane.b32.xlu0 %v297, 9
  %v3997 = vpop.permute.xlu0 %3996
  %3998 = vrot.lane.b32.xlu0 %v299, 9
  %v3999 = vpop.permute.xlu0 %3998
  %4000 = vrot.lane.b32.xlu0 %v300, 9
  %v4001 = vpop.permute.xlu0 %4000
  %4002 = vrot.lane.b32.xlu0 %v302, 9
  %v4003 = vpop.permute.xlu0 %4002
  %4004 = vrot.lane.b32.xlu0 %v303, 9
  %v4005 = vpop.permute.xlu0 %4004
  %4006 = vrot.lane.b32.xlu0 %v305, 9
  %v4007 = vpop.permute.xlu0 %4006
  %4008 = vrot.lane.b32.xlu0 %v306, 9
  %v4009 = vpop.permute.xlu0 %4008
  %4010 = vrot.lane.b32.xlu0 %v308, 9
  %v4011 = vpop.permute.xlu0 %4010
  %4012 = vrot.lane.b32.xlu0 %v309, 9
  %v4013 = vpop.permute.xlu0 %4012
  %4014 = vrot.lane.b32.xlu0 %v311, 9
  %v4015 = vpop.permute.xlu0 %4014
  %4016 = vrot.lane.b32.xlu0 %v312, 9
  %v4017 = vpop.permute.xlu0 %4016
  %4018 = vrot.lane.b32.xlu0 %v314, 9
  %v4019 = vpop.permute.xlu0 %4018
  %4020 = vrot.lane.b32.xlu0 %v315, 9
  %v4021 = vpop.permute.xlu0 %4020
  %4022 = vrot.lane.b32.xlu0 %v317, 9
  %v4023 = vpop.permute.xlu0 %4022
  %4024 = vrot.lane.b32.xlu0 %v318, 9
  %v4025 = vpop.permute.xlu0 %4024
  %4026 = vrot.lane.b32.xlu0 %v320, 9
  %v4027 = vpop.permute.xlu0 %4026
  %4028 = vrot.lane.b32.xlu0 %v321, 9
  %v4029 = vpop.permute.xlu0 %4028
  %4030 = vrot.lane.b32.xlu0 %v323, 9
  %v4031 = vpop.permute.xlu0 %4030
  %4032 = vrot.lane.b32.xlu0 %v324, 9
  %v4033 = vpop.permute.xlu0 %4032
  %4034 = vrot.lane.b32.xlu0 %v326, 9
  %v4035 = vpop.permute.xlu0 %4034
  %4036 = vrot.lane.b32.xlu0 %v327, 9
  %v4037 = vpop.permute.xlu0 %4036
  %4038 = vrot.lane.b32.xlu0 %v329, 9
  %v4039 = vpop.permute.xlu0 %4038
  %4040 = vrot.lane.b32.xlu0 %v330, 9
  %v4041 = vpop.permute.xlu0 %4040
  %4042 = vrot.lane.b32.xlu0 %v332, 9
  %v4043 = vpop.permute.xlu0 %4042
  %4044 = vrot.lane.b32.xlu0 %v333, 9
  %v4045 = vpop.permute.xlu0 %4044
  %4046 = vrot.lane.b32.xlu0 %v335, 9
  %v4047 = vpop.permute.xlu0 %4046
  %4048 = vrot.lane.b32.xlu0 %v336, 9
  %v4049 = vpop.permute.xlu0 %4048
  %4050 = vrot.lane.b32.xlu0 %v338, 9
  %v4051 = vpop.permute.xlu0 %4050
  %4052 = vrot.lane.b32.xlu0 %v339, 9
  %v4053 = vpop.permute.xlu0 %4052
  %4054 = vrot.lane.b32.xlu0 %v347, 9
  %v4055 = vpop.permute.xlu0 %4054
  %4056 = vrot.lane.b32.xlu0 %v348, 9
  %v4057 = vpop.permute.xlu0 %4056
  %4058 = vrot.lane.b32.xlu0 %v350, 9
  %v4059 = vpop.permute.xlu0 %4058
  %4060 = vrot.lane.b32.xlu0 %v351, 9
  %v4061 = vpop.permute.xlu0 %4060
  %4062 = vrot.lane.b32.xlu0 %v353, 9
  %v4063 = vpop.permute.xlu0 %4062
  %4064 = vrot.lane.b32.xlu0 %v354, 9
  %v4065 = vpop.permute.xlu0 %4064
  %4066 = vrot.lane.b32.xlu0 %v356, 9
  %v4067 = vpop.permute.xlu0 %4066
  %4068 = vrot.lane.b32.xlu0 %v357, 9
  %v4069 = vpop.permute.xlu0 %4068
  %4070 = vrot.lane.b32.xlu0 %v359, 9
  %v4071 = vpop.permute.xlu0 %4070
  %4072 = vrot.lane.b32.xlu0 %v360, 9
  %v4073 = vpop.permute.xlu0 %4072
  %4074 = vrot.lane.b32.xlu0 %v362, 9
  %v4075 = vpop.permute.xlu0 %4074
  %4076 = vrot.lane.b32.xlu0 %v363, 9
  %v4077 = vpop.permute.xlu0 %4076
  %4078 = vrot.lane.b32.xlu0 %v365, 9
  %v4079 = vpop.permute.xlu0 %4078
  %4080 = vrot.lane.b32.xlu0 %v366, 9
  %v4081 = vpop.permute.xlu0 %4080
  %4082 = vrot.lane.b32.xlu0 %v368, 9
  %v4083 = vpop.permute.xlu0 %4082
  %4084 = vrot.lane.b32.xlu0 %v369, 9
  %v4085 = vpop.permute.xlu0 %4084
  %4086 = vrot.lane.b32.xlu0 %v371, 9
  %v4087 = vpop.permute.xlu0 %4086
  %4088 = vrot.lane.b32.xlu0 %v372, 9
  %v4089 = vpop.permute.xlu0 %4088
  %4090 = vrot.lane.b32.xlu0 %v374, 9
  %v4091 = vpop.permute.xlu0 %4090
  %4092 = vrot.lane.b32.xlu0 %v375, 9
  %v4093 = vpop.permute.xlu0 %4092
  %4094 = vrot.lane.b32.xlu0 %v377, 9
  %v4095 = vpop.permute.xlu0 %4094
  %4096 = vrot.lane.b32.xlu0 %v378, 9
  %v4097 = vpop.permute.xlu0 %4096
  %4098 = vrot.lane.b32.xlu0 %v380, 9
  %v4099 = vpop.permute.xlu0 %4098
  %4100 = vrot.lane.b32.xlu0 %v381, 9
  %v4101 = vpop.permute.xlu0 %4100
  %4102 = vrot.lane.b32.xlu0 %v383, 9
  %v4103 = vpop.permute.xlu0 %4102
  %4104 = vrot.lane.b32.xlu0 %v384, 9
  %v4105 = vpop.permute.xlu0 %4104
  %4106 = vrot.lane.b32.xlu0 %v386, 9
  %v4107 = vpop.permute.xlu0 %4106
  %4108 = vrot.lane.b32.xlu0 %v387, 9
  %v4109 = vpop.permute.xlu0 %4108
  %4110 = vrot.lane.b32.xlu0 %v389, 9
  %v4111 = vpop.permute.xlu0 %4110
  %4112 = vrot.lane.b32.xlu0 %v390, 9
  %v4113 = vpop.permute.xlu0 %4112
  %4114 = vrot.lane.b32.xlu0 %v392, 9
  %v4115 = vpop.permute.xlu0 %4114
  %4116 = vrot.lane.b32.xlu0 %v393, 9
  %v4117 = vpop.permute.xlu0 %4116
  %4118 = vrot.lane.b32.xlu0 %v401, 9
  %v4119 = vpop.permute.xlu0 %4118
  %4120 = vrot.lane.b32.xlu0 %v402, 9
  %v4121 = vpop.permute.xlu0 %4120
  %4122 = vrot.lane.b32.xlu0 %v404, 9
  %v4123 = vpop.permute.xlu0 %4122
  %4124 = vrot.lane.b32.xlu0 %v405, 9
  %v4125 = vpop.permute.xlu0 %4124
  %4126 = vrot.lane.b32.xlu0 %v407, 9
  %v4127 = vpop.permute.xlu0 %4126
  %4128 = vrot.lane.b32.xlu0 %v408, 9
  %v4129 = vpop.permute.xlu0 %4128
  %4130 = vrot.lane.b32.xlu0 %v410, 9
  %v4131 = vpop.permute.xlu0 %4130
  %4132 = vrot.lane.b32.xlu0 %v411, 9
  %v4133 = vpop.permute.xlu0 %4132
  %4134 = vrot.lane.b32.xlu0 %v413, 9
  %v4135 = vpop.permute.xlu0 %4134
  %4136 = vrot.lane.b32.xlu0 %v414, 9
  %v4137 = vpop.permute.xlu0 %4136
  %4138 = vrot.lane.b32.xlu0 %v416, 9
  %v4139 = vpop.permute.xlu0 %4138
  %4140 = vrot.lane.b32.xlu0 %v417, 9
  %v4141 = vpop.permute.xlu0 %4140
  %4142 = vrot.lane.b32.xlu0 %v419, 9
  %v4143 = vpop.permute.xlu0 %4142
  %4144 = vrot.lane.b32.xlu0 %v420, 9
  %v4145 = vpop.permute.xlu0 %4144
  %4146 = vrot.lane.b32.xlu0 %v422, 9
  %v4147 = vpop.permute.xlu0 %4146
  %4148 = vrot.lane.b32.xlu0 %v423, 9
  %v4149 = vpop.permute.xlu0 %4148
  %4150 = vrot.lane.b32.xlu0 %v425, 9
  %v4151 = vpop.permute.xlu0 %4150
  %4152 = vrot.lane.b32.xlu0 %v426, 9
  %v4153 = vpop.permute.xlu0 %4152
  %4154 = vrot.lane.b32.xlu0 %v428, 9
  %v4155 = vpop.permute.xlu0 %4154
  %4156 = vrot.lane.b32.xlu0 %v429, 9
  %v4157 = vpop.permute.xlu0 %4156
  %4158 = vrot.lane.b32.xlu0 %v431, 9
  %v4159 = vpop.permute.xlu0 %4158
  %4160 = vrot.lane.b32.xlu0 %v432, 9
  %v4161 = vpop.permute.xlu0 %4160
  %4162 = vrot.lane.b32.xlu0 %v434, 9
  %v4163 = vpop.permute.xlu0 %4162
  %4164 = vrot.lane.b32.xlu0 %v435, 9
  %v4165 = vpop.permute.xlu0 %4164
  %4166 = vrot.lane.b32.xlu0 %v437, 9
  %v4167 = vpop.permute.xlu0 %4166
  %4168 = vrot.lane.b32.xlu0 %v438, 9
  %v4169 = vpop.permute.xlu0 %4168
  %4170 = vrot.lane.b32.xlu0 %v440, 9
  %v4171 = vpop.permute.xlu0 %4170
  %4172 = vrot.lane.b32.xlu0 %v441, 9
  %v4173 = vpop.permute.xlu0 %4172
  %4174 = vrot.lane.b32.xlu0 %v443, 9
  %v4175 = vpop.permute.xlu0 %4174
  %4176 = vrot.lane.b32.xlu0 %v444, 9
  %v4177 = vpop.permute.xlu0 %4176
  %4178 = vrot.lane.b32.xlu0 %v446, 9
  %v4179 = vpop.permute.xlu0 %4178
  %4180 = vrot.lane.b32.xlu0 %v447, 9
  %v4181 = vpop.permute.xlu0 %4180
  %v4446 = vrot.slane %v68, 1
  %v4447 = vrot.slane %v69, 1
  %v4448 = vsel %vm836, %v4446, %v4447
  %v4449 = vrot.slane %v70, 1
  %v4450 = vsel %vm836, %v4447, %v4449
  %v4451 = vrot.slane %v122, 1
  %v4452 = vrot.slane %v123, 1
  %v4453 = vsel %vm836, %v4451, %v4452
  %v4454 = vrot.slane %v124, 1
  %v4455 = vsel %vm836, %v4452, %v4454
  %v4456 = vrot.slane %v176, 1
  %v4457 = vrot.slane %v177, 1
  %v4458 = vsel %vm836, %v4456, %v4457
  %v4459 = vrot.slane %v178, 1
  %v4460 = vsel %vm836, %v4457, %v4459
  %v4461 = vrot.slane %v230, 1
  %v4462 = vrot.slane %v231, 1
  %v4463 = vsel %vm836, %v4461, %v4462
  %v4464 = vrot.slane %v232, 1
  %v4465 = vsel %vm836, %v4462, %v4464
  %v4466 = vrot.slane %v284, 1
  %v4467 = vrot.slane %v285, 1
  %v4468 = vsel %vm836, %v4466, %v4467
  %v4469 = vrot.slane %v286, 1
  %v4470 = vsel %vm836, %v4467, %v4469
  %v4471 = vrot.slane %v338, 1
  %v4472 = vrot.slane %v339, 1
  %v4473 = vsel %vm836, %v4471, %v4472
  %v4474 = vrot.slane %v340, 1
  %v4475 = vsel %vm836, %v4472, %v4474
  %v4476 = vrot.slane %v392, 1
  %v4477 = vrot.slane %v393, 1
  %v4478 = vsel %vm836, %v4476, %v4477
  %v4479 = vrot.slane %v394, 1
  %v4480 = vsel %vm836, %v4477, %v4479
  %v4481 = vrot.slane %v446, 1
  %v4482 = vrot.slane %v447, 1
  %v4483 = vsel %vm836, %v4481, %v4482
  %v4484 = vrot.slane %v448, 1
  %v4485 = vsel %vm836, %v4482, %v4484
  %4486 = vrot.lane.b32.xlu0 %v844, 12
  %v4487 = vpop.permute.xlu0 %4486
  %4488 = vrot.lane.b32.xlu0 %v846, 12
  %v4489 = vpop.permute.xlu0 %4488
  %4490 = vrot.lane.b32.xlu0 %v849, 12
  %v4491 = vpop.permute.xlu0 %4490
  %4492 = vrot.lane.b32.xlu0 %v851, 12
  %v4493 = vpop.permute.xlu0 %4492
  %4494 = vrot.lane.b32.xlu0 %v854, 12
  %v4495 = vpop.permute.xlu0 %4494
  %4496 = vrot.lane.b32.xlu0 %v856, 12
  %v4497 = vpop.permute.xlu0 %4496
  %4498 = vrot.lane.b32.xlu0 %v859, 12
  %v4499 = vpop.permute.xlu0 %4498
  %4500 = vrot.lane.b32.xlu0 %v861, 12
  %v4501 = vpop.permute.xlu0 %4500
  %4502 = vrot.lane.b32.xlu0 %v864, 12
  %v4503 = vpop.permute.xlu0 %4502
  %4504 = vrot.lane.b32.xlu0 %v866, 12
  %v4505 = vpop.permute.xlu0 %4504
  %4506 = vrot.lane.b32.xlu0 %v869, 12
  %v4507 = vpop.permute.xlu0 %4506
  %4508 = vrot.lane.b32.xlu0 %v871, 12
  %v4509 = vpop.permute.xlu0 %4508
  %4510 = vrot.lane.b32.xlu0 %v874, 12
  %v4511 = vpop.permute.xlu0 %4510
  %4512 = vrot.lane.b32.xlu0 %v876, 12
  %v4513 = vpop.permute.xlu0 %4512
  %4514 = vrot.lane.b32.xlu0 %v879, 12
  %v4515 = vpop.permute.xlu0 %4514
  %4516 = vrot.lane.b32.xlu0 %v881, 12
  %v4517 = vpop.permute.xlu0 %4516
  %4518 = vrot.lane.b32.xlu0 %v884, 12
  %v4519 = vpop.permute.xlu0 %4518
  %4520 = vrot.lane.b32.xlu0 %v886, 12
  %v4521 = vpop.permute.xlu0 %4520
  %4522 = vrot.lane.b32.xlu0 %v889, 12
  %v4523 = vpop.permute.xlu0 %4522
  %4524 = vrot.lane.b32.xlu0 %v891, 12
  %v4525 = vpop.permute.xlu0 %4524
  %4526 = vrot.lane.b32.xlu0 %v894, 12
  %v4527 = vpop.permute.xlu0 %4526
  %4528 = vrot.lane.b32.xlu0 %v896, 12
  %v4529 = vpop.permute.xlu0 %4528
  %4530 = vrot.lane.b32.xlu0 %v899, 12
  %v4531 = vpop.permute.xlu0 %4530
  %4532 = vrot.lane.b32.xlu0 %v901, 12
  %v4533 = vpop.permute.xlu0 %4532
  %4534 = vrot.lane.b32.xlu0 %v904, 12
  %v4535 = vpop.permute.xlu0 %4534
  %4536 = vrot.lane.b32.xlu0 %v906, 12
  %v4537 = vpop.permute.xlu0 %4536
  %4538 = vrot.lane.b32.xlu0 %v909, 12
  %v4539 = vpop.permute.xlu0 %4538
  %4540 = vrot.lane.b32.xlu0 %v911, 12
  %v4541 = vpop.permute.xlu0 %4540
  %4542 = vrot.lane.b32.xlu0 %v914, 12
  %v4543 = vpop.permute.xlu0 %4542
  %4544 = vrot.lane.b32.xlu0 %v916, 12
  %v4545 = vpop.permute.xlu0 %4544
  %4546 = vrot.lane.b32.xlu0 %v4448, 12
  %v4547 = vpop.permute.xlu0 %4546
  %4548 = vrot.lane.b32.xlu0 %v4450, 12
  %v4549 = vpop.permute.xlu0 %4548
  %4550 = vrot.lane.b32.xlu0 %v924, 12
  %v4551 = vpop.permute.xlu0 %4550
  %4552 = vrot.lane.b32.xlu0 %v926, 12
  %v4553 = vpop.permute.xlu0 %4552
  %4554 = vrot.lane.b32.xlu0 %v929, 12
  %v4555 = vpop.permute.xlu0 %4554
  %4556 = vrot.lane.b32.xlu0 %v931, 12
  %v4557 = vpop.permute.xlu0 %4556
  %4558 = vrot.lane.b32.xlu0 %v934, 12
  %v4559 = vpop.permute.xlu0 %4558
  %4560 = vrot.lane.b32.xlu0 %v936, 12
  %v4561 = vpop.permute.xlu0 %4560
  %4562 = vrot.lane.b32.xlu0 %v939, 12
  %v4563 = vpop.permute.xlu0 %4562
  %4564 = vrot.lane.b32.xlu0 %v941, 12
  %v4565 = vpop.permute.xlu0 %4564
  %4566 = vrot.lane.b32.xlu0 %v944, 12
  %v4567 = vpop.permute.xlu0 %4566
  %4568 = vrot.lane.b32.xlu0 %v946, 12
  %v4569 = vpop.permute.xlu0 %4568
  %4570 = vrot.lane.b32.xlu0 %v949, 12
  %v4571 = vpop.permute.xlu0 %4570
  %4572 = vrot.lane.b32.xlu0 %v951, 12
  %v4573 = vpop.permute.xlu0 %4572
  %4574 = vrot.lane.b32.xlu0 %v954, 12
  %v4575 = vpop.permute.xlu0 %4574
  %4576 = vrot.lane.b32.xlu0 %v956, 12
  %v4577 = vpop.permute.xlu0 %4576
  %4578 = vrot.lane.b32.xlu0 %v959, 12
  %v4579 = vpop.permute.xlu0 %4578
  %4580 = vrot.lane.b32.xlu0 %v961, 12
  %v4581 = vpop.permute.xlu0 %4580
  %4582 = vrot.lane.b32.xlu0 %v964, 12
  %v4583 = vpop.permute.xlu0 %4582
  %4584 = vrot.lane.b32.xlu0 %v966, 12
  %v4585 = vpop.permute.xlu0 %4584
  %4586 = vrot.lane.b32.xlu0 %v969, 12
  %v4587 = vpop.permute.xlu0 %4586
  %4588 = vrot.lane.b32.xlu0 %v971, 12
  %v4589 = vpop.permute.xlu0 %4588
  %4590 = vrot.lane.b32.xlu0 %v974, 12
  %v4591 = vpop.permute.xlu0 %4590
  %4592 = vrot.lane.b32.xlu0 %v976, 12
  %v4593 = vpop.permute.xlu0 %4592
  %4594 = vrot.lane.b32.xlu0 %v979, 12
  %v4595 = vpop.permute.xlu0 %4594
  %4596 = vrot.lane.b32.xlu0 %v981, 12
  %v4597 = vpop.permute.xlu0 %4596
  %4598 = vrot.lane.b32.xlu0 %v984, 12
  %v4599 = vpop.permute.xlu0 %4598
  %4600 = vrot.lane.b32.xlu0 %v986, 12
  %v4601 = vpop.permute.xlu0 %4600
  %4602 = vrot.lane.b32.xlu0 %v989, 12
  %v4603 = vpop.permute.xlu0 %4602
  %4604 = vrot.lane.b32.xlu0 %v991, 12
  %v4605 = vpop.permute.xlu0 %4604
  %4606 = vrot.lane.b32.xlu0 %v994, 12
  %v4607 = vpop.permute.xlu0 %4606
  %4608 = vrot.lane.b32.xlu0 %v996, 12
  %v4609 = vpop.permute.xlu0 %4608
  %4610 = vrot.lane.b32.xlu0 %v4453, 12
  %v4611 = vpop.permute.xlu0 %4610
  %4612 = vrot.lane.b32.xlu0 %v4455, 12
  %v4613 = vpop.permute.xlu0 %4612
  %4614 = vrot.lane.b32.xlu0 %v1004, 12
  %v4615 = vpop.permute.xlu0 %4614
  %4616 = vrot.lane.b32.xlu0 %v1006, 12
  %v4617 = vpop.permute.xlu0 %4616
  %4618 = vrot.lane.b32.xlu0 %v1009, 12
  %v4619 = vpop.permute.xlu0 %4618
  %4620 = vrot.lane.b32.xlu0 %v1011, 12
  %v4621 = vpop.permute.xlu0 %4620
  %4622 = vrot.lane.b32.xlu0 %v1014, 12
  %v4623 = vpop.permute.xlu0 %4622
  %4624 = vrot.lane.b32.xlu0 %v1016, 12
  %v4625 = vpop.permute.xlu0 %4624
  %4626 = vrot.lane.b32.xlu0 %v1019, 12
  %v4627 = vpop.permute.xlu0 %4626
  %4628 = vrot.lane.b32.xlu0 %v1021, 12
  %v4629 = vpop.permute.xlu0 %4628
  %4630 = vrot.lane.b32.xlu0 %v1024, 12
  %v4631 = vpop.permute.xlu0 %4630
  %4632 = vrot.lane.b32.xlu0 %v1026, 12
  %v4633 = vpop.permute.xlu0 %4632
  %4634 = vrot.lane.b32.xlu0 %v1029, 12
  %v4635 = vpop.permute.xlu0 %4634
  %4636 = vrot.lane.b32.xlu0 %v1031, 12
  %v4637 = vpop.permute.xlu0 %4636
  %4638 = vrot.lane.b32.xlu0 %v1034, 12
  %v4639 = vpop.permute.xlu0 %4638
  %4640 = vrot.lane.b32.xlu0 %v1036, 12
  %v4641 = vpop.permute.xlu0 %4640
  %4642 = vrot.lane.b32.xlu0 %v1039, 12
  %v4643 = vpop.permute.xlu0 %4642
  %4644 = vrot.lane.b32.xlu0 %v1041, 12
  %v4645 = vpop.permute.xlu0 %4644
  %4646 = vrot.lane.b32.xlu0 %v1044, 12
  %v4647 = vpop.permute.xlu0 %4646
  %4648 = vrot.lane.b32.xlu0 %v1046, 12
  %v4649 = vpop.permute.xlu0 %4648
  %4650 = vrot.lane.b32.xlu0 %v1049, 12
  %v4651 = vpop.permute.xlu0 %4650
  %4652 = vrot.lane.b32.xlu0 %v1051, 12
  %v4653 = vpop.permute.xlu0 %4652
  %4654 = vrot.lane.b32.xlu0 %v1054, 12
  %v4655 = vpop.permute.xlu0 %4654
  %4656 = vrot.lane.b32.xlu0 %v1056, 12
  %v4657 = vpop.permute.xlu0 %4656
  %4658 = vrot.lane.b32.xlu0 %v1059, 12
  %v4659 = vpop.permute.xlu0 %4658
  %4660 = vrot.lane.b32.xlu0 %v1061, 12
  %v4661 = vpop.permute.xlu0 %4660
  %4662 = vrot.lane.b32.xlu0 %v1064, 12
  %v4663 = vpop.permute.xlu0 %4662
  %4664 = vrot.lane.b32.xlu0 %v1066, 12
  %v4665 = vpop.permute.xlu0 %4664
  %4666 = vrot.lane.b32.xlu0 %v1069, 12
  %v4667 = vpop.permute.xlu0 %4666
  %4668 = vrot.lane.b32.xlu0 %v1071, 12
  %v4669 = vpop.permute.xlu0 %4668
  %4670 = vrot.lane.b32.xlu0 %v1074, 12
  %v4671 = vpop.permute.xlu0 %4670
  %4672 = vrot.lane.b32.xlu0 %v1076, 12
  %v4673 = vpop.permute.xlu0 %4672
  %4674 = vrot.lane.b32.xlu0 %v4458, 12
  %v4675 = vpop.permute.xlu0 %4674
  %4676 = vrot.lane.b32.xlu0 %v4460, 12
  %v4677 = vpop.permute.xlu0 %4676
  %4678 = vrot.lane.b32.xlu0 %v1084, 12
  %v4679 = vpop.permute.xlu0 %4678
  %4680 = vrot.lane.b32.xlu0 %v1086, 12
  %v4681 = vpop.permute.xlu0 %4680
  %4682 = vrot.lane.b32.xlu0 %v1089, 12
  %v4683 = vpop.permute.xlu0 %4682
  %4684 = vrot.lane.b32.xlu0 %v1091, 12
  %v4685 = vpop.permute.xlu0 %4684
  %4686 = vrot.lane.b32.xlu0 %v1094, 12
  %v4687 = vpop.permute.xlu0 %4686
  %4688 = vrot.lane.b32.xlu0 %v1096, 12
  %v4689 = vpop.permute.xlu0 %4688
  %4690 = vrot.lane.b32.xlu0 %v1099, 12
  %v4691 = vpop.permute.xlu0 %4690
  %4692 = vrot.lane.b32.xlu0 %v1101, 12
  %v4693 = vpop.permute.xlu0 %4692
  %4694 = vrot.lane.b32.xlu0 %v1104, 12
  %v4695 = vpop.permute.xlu0 %4694
  %4696 = vrot.lane.b32.xlu0 %v1106, 12
  %v4697 = vpop.permute.xlu0 %4696
  %4698 = vrot.lane.b32.xlu0 %v1109, 12
  %v4699 = vpop.permute.xlu0 %4698
  %4700 = vrot.lane.b32.xlu0 %v1111, 12
  %v4701 = vpop.permute.xlu0 %4700
  %4702 = vrot.lane.b32.xlu0 %v1114, 12
  %v4703 = vpop.permute.xlu0 %4702
  %4704 = vrot.lane.b32.xlu0 %v1116, 12
  %v4705 = vpop.permute.xlu0 %4704
  %4706 = vrot.lane.b32.xlu0 %v1119, 12
  %v4707 = vpop.permute.xlu0 %4706
  %4708 = vrot.lane.b32.xlu0 %v1121, 12
  %v4709 = vpop.permute.xlu0 %4708
  %4710 = vrot.lane.b32.xlu0 %v1124, 12
  %v4711 = vpop.permute.xlu0 %4710
  %4712 = vrot.lane.b32.xlu0 %v1126, 12
  %v4713 = vpop.permute.xlu0 %4712
  %4714 = vrot.lane.b32.xlu0 %v1129, 12
  %v4715 = vpop.permute.xlu0 %4714
  %4716 = vrot.lane.b32.xlu0 %v1131, 12
  %v4717 = vpop.permute.xlu0 %4716
  %4718 = vrot.lane.b32.xlu0 %v1134, 12
  %v4719 = vpop.permute.xlu0 %4718
  %4720 = vrot.lane.b32.xlu0 %v1136, 12
  %v4721 = vpop.permute.xlu0 %4720
  %4722 = vrot.lane.b32.xlu0 %v1139, 12
  %v4723 = vpop.permute.xlu0 %4722
  %4724 = vrot.lane.b32.xlu0 %v1141, 12
  %v4725 = vpop.permute.xlu0 %4724
  %4726 = vrot.lane.b32.xlu0 %v1144, 12
  %v4727 = vpop.permute.xlu0 %4726
  %4728 = vrot.lane.b32.xlu0 %v1146, 12
  %v4729 = vpop.permute.xlu0 %4728
  %4730 = vrot.lane.b32.xlu0 %v1149, 12
  %v4731 = vpop.permute.xlu0 %4730
  %4732 = vrot.lane.b32.xlu0 %v1151, 12
  %v4733 = vpop.permute.xlu0 %4732
  %4734 = vrot.lane.b32.xlu0 %v1154, 12
  %v4735 = vpop.permute.xlu0 %4734
  %4736 = vrot.lane.b32.xlu0 %v1156, 12
  %v4737 = vpop.permute.xlu0 %4736
  %4738 = vrot.lane.b32.xlu0 %v4463, 12
  %v4739 = vpop.permute.xlu0 %4738
  %4740 = vrot.lane.b32.xlu0 %v4465, 12
  %v4741 = vpop.permute.xlu0 %4740
  %4742 = vrot.lane.b32.xlu0 %v1164, 12
  %v4743 = vpop.permute.xlu0 %4742
  %4744 = vrot.lane.b32.xlu0 %v1166, 12
  %v4745 = vpop.permute.xlu0 %4744
  %4746 = vrot.lane.b32.xlu0 %v1169, 12
  %v4747 = vpop.permute.xlu0 %4746
  %4748 = vrot.lane.b32.xlu0 %v1171, 12
  %v4749 = vpop.permute.xlu0 %4748
  %4750 = vrot.lane.b32.xlu0 %v1174, 12
  %v4751 = vpop.permute.xlu0 %4750
  %4752 = vrot.lane.b32.xlu0 %v1176, 12
  %v4753 = vpop.permute.xlu0 %4752
  %4754 = vrot.lane.b32.xlu0 %v1179, 12
  %v4755 = vpop.permute.xlu0 %4754
  %4756 = vrot.lane.b32.xlu0 %v1181, 12
  %v4757 = vpop.permute.xlu0 %4756
  %4758 = vrot.lane.b32.xlu0 %v1184, 12
  %v4759 = vpop.permute.xlu0 %4758
  %4760 = vrot.lane.b32.xlu0 %v1186, 12
  %v4761 = vpop.permute.xlu0 %4760
  %4762 = vrot.lane.b32.xlu0 %v1189, 12
  %v4763 = vpop.permute.xlu0 %4762
  %4764 = vrot.lane.b32.xlu0 %v1191, 12
  %v4765 = vpop.permute.xlu0 %4764
  %4766 = vrot.lane.b32.xlu0 %v1194, 12
  %v4767 = vpop.permute.xlu0 %4766
  %4768 = vrot.lane.b32.xlu0 %v1196, 12
  %v4769 = vpop.permute.xlu0 %4768
  %4770 = vrot.lane.b32.xlu0 %v1199, 12
  %v4771 = vpop.permute.xlu0 %4770
  %4772 = vrot.lane.b32.xlu0 %v1201, 12
  %v4773 = vpop.permute.xlu0 %4772
  %4774 = vrot.lane.b32.xlu0 %v1204, 12
  %v4775 = vpop.permute.xlu0 %4774
  %4776 = vrot.lane.b32.xlu0 %v1206, 12
  %v4777 = vpop.permute.xlu0 %4776
  %4778 = vrot.lane.b32.xlu0 %v1209, 12
  %v4779 = vpop.permute.xlu0 %4778
  %4780 = vrot.lane.b32.xlu0 %v1211, 12
  %v4781 = vpop.permute.xlu0 %4780
  %4782 = vrot.lane.b32.xlu0 %v1214, 12
  %v4783 = vpop.permute.xlu0 %4782
  %4784 = vrot.lane.b32.xlu0 %v1216, 12
  %v4785 = vpop.permute.xlu0 %4784
  %4786 = vrot.lane.b32.xlu0 %v1219, 12
  %v4787 = vpop.permute.xlu0 %4786
  %4788 = vrot.lane.b32.xlu0 %v1221, 12
  %v4789 = vpop.permute.xlu0 %4788
  %4790 = vrot.lane.b32.xlu0 %v1224, 12
  %v4791 = vpop.permute.xlu0 %4790
  %4792 = vrot.lane.b32.xlu0 %v1226, 12
  %v4793 = vpop.permute.xlu0 %4792
  %4794 = vrot.lane.b32.xlu0 %v1229, 12
  %v4795 = vpop.permute.xlu0 %4794
  %4796 = vrot.lane.b32.xlu0 %v1231, 12
  %v4797 = vpop.permute.xlu0 %4796
  %4798 = vrot.lane.b32.xlu0 %v1234, 12
  %v4799 = vpop.permute.xlu0 %4798
  %4800 = vrot.lane.b32.xlu0 %v1236, 12
  %v4801 = vpop.permute.xlu0 %4800
  %4802 = vrot.lane.b32.xlu0 %v4468, 12
  %v4803 = vpop.permute.xlu0 %4802
  %4804 = vrot.lane.b32.xlu0 %v4470, 12
  %v4805 = vpop.permute.xlu0 %4804
  %4806 = vrot.lane.b32.xlu0 %v1244, 12
  %v4807 = vpop.permute.xlu0 %4806
  %4808 = vrot.lane.b32.xlu0 %v1246, 12
  %v4809 = vpop.permute.xlu0 %4808
  %4810 = vrot.lane.b32.xlu0 %v1249, 12
  %v4811 = vpop.permute.xlu0 %4810
  %4812 = vrot.lane.b32.xlu0 %v1251, 12
  %v4813 = vpop.permute.xlu0 %4812
  %4814 = vrot.lane.b32.xlu0 %v1254, 12
  %v4815 = vpop.permute.xlu0 %4814
  %4816 = vrot.lane.b32.xlu0 %v1256, 12
  %v4817 = vpop.permute.xlu0 %4816
  %4818 = vrot.lane.b32.xlu0 %v1259, 12
  %v4819 = vpop.permute.xlu0 %4818
  %4820 = vrot.lane.b32.xlu0 %v1261, 12
  %v4821 = vpop.permute.xlu0 %4820
  %4822 = vrot.lane.b32.xlu0 %v1264, 12
  %v4823 = vpop.permute.xlu0 %4822
  %4824 = vrot.lane.b32.xlu0 %v1266, 12
  %v4825 = vpop.permute.xlu0 %4824
  %4826 = vrot.lane.b32.xlu0 %v1269, 12
  %v4827 = vpop.permute.xlu0 %4826
  %4828 = vrot.lane.b32.xlu0 %v1271, 12
  %v4829 = vpop.permute.xlu0 %4828
  %4830 = vrot.lane.b32.xlu0 %v1274, 12
  %v4831 = vpop.permute.xlu0 %4830
  %4832 = vrot.lane.b32.xlu0 %v1276, 12
  %v4833 = vpop.permute.xlu0 %4832
  %4834 = vrot.lane.b32.xlu0 %v1279, 12
  %v4835 = vpop.permute.xlu0 %4834
  %4836 = vrot.lane.b32.xlu0 %v1281, 12
  %v4837 = vpop.permute.xlu0 %4836
  %4838 = vrot.lane.b32.xlu0 %v1284, 12
  %v4839 = vpop.permute.xlu0 %4838
  %4840 = vrot.lane.b32.xlu0 %v1286, 12
  %v4841 = vpop.permute.xlu0 %4840
  %4842 = vrot.lane.b32.xlu0 %v1289, 12
  %v4843 = vpop.permute.xlu0 %4842
  %4844 = vrot.lane.b32.xlu0 %v1291, 12
  %v4845 = vpop.permute.xlu0 %4844
  %4846 = vrot.lane.b32.xlu0 %v1294, 12
  %v4847 = vpop.permute.xlu0 %4846
  %4848 = vrot.lane.b32.xlu0 %v1296, 12
  %v4849 = vpop.permute.xlu0 %4848
  %4850 = vrot.lane.b32.xlu0 %v1299, 12
  %v4851 = vpop.permute.xlu0 %4850
  %4852 = vrot.lane.b32.xlu0 %v1301, 12
  %v4853 = vpop.permute.xlu0 %4852
  %4854 = vrot.lane.b32.xlu0 %v1304, 12
  %v4855 = vpop.permute.xlu0 %4854
  %4856 = vrot.lane.b32.xlu0 %v1306, 12
  %v4857 = vpop.permute.xlu0 %4856
  %4858 = vrot.lane.b32.xlu0 %v1309, 12
  %v4859 = vpop.permute.xlu0 %4858
  %4860 = vrot.lane.b32.xlu0 %v1311, 12
  %v4861 = vpop.permute.xlu0 %4860
  %4862 = vrot.lane.b32.xlu0 %v1314, 12
  %v4863 = vpop.permute.xlu0 %4862
  %4864 = vrot.lane.b32.xlu0 %v1316, 12
  %v4865 = vpop.permute.xlu0 %4864
  %4866 = vrot.lane.b32.xlu0 %v4473, 12
  %v4867 = vpop.permute.xlu0 %4866
  %4868 = vrot.lane.b32.xlu0 %v4475, 12
  %v4869 = vpop.permute.xlu0 %4868
  %4870 = vrot.lane.b32.xlu0 %v1324, 12
  %v4871 = vpop.permute.xlu0 %4870
  %4872 = vrot.lane.b32.xlu0 %v1326, 12
  %v4873 = vpop.permute.xlu0 %4872
  %4874 = vrot.lane.b32.xlu0 %v1329, 12
  %v4875 = vpop.permute.xlu0 %4874
  %4876 = vrot.lane.b32.xlu0 %v1331, 12
  %v4877 = vpop.permute.xlu0 %4876
  %4878 = vrot.lane.b32.xlu0 %v1334, 12
  %v4879 = vpop.permute.xlu0 %4878
  %4880 = vrot.lane.b32.xlu0 %v1336, 12
  %v4881 = vpop.permute.xlu0 %4880
  %4882 = vrot.lane.b32.xlu0 %v1339, 12
  %v4883 = vpop.permute.xlu0 %4882
  %4884 = vrot.lane.b32.xlu0 %v1341, 12
  %v4885 = vpop.permute.xlu0 %4884
  %4886 = vrot.lane.b32.xlu0 %v1344, 12
  %v4887 = vpop.permute.xlu0 %4886
  %4888 = vrot.lane.b32.xlu0 %v1346, 12
  %v4889 = vpop.permute.xlu0 %4888
  %4890 = vrot.lane.b32.xlu0 %v1349, 12
  %v4891 = vpop.permute.xlu0 %4890
  %4892 = vrot.lane.b32.xlu0 %v1351, 12
  %v4893 = vpop.permute.xlu0 %4892
  %4894 = vrot.lane.b32.xlu0 %v1354, 12
  %v4895 = vpop.permute.xlu0 %4894
  %4896 = vrot.lane.b32.xlu0 %v1356, 12
  %v4897 = vpop.permute.xlu0 %4896
  %4898 = vrot.lane.b32.xlu0 %v1359, 12
  %v4899 = vpop.permute.xlu0 %4898
  %4900 = vrot.lane.b32.xlu0 %v1361, 12
  %v4901 = vpop.permute.xlu0 %4900
  %4902 = vrot.lane.b32.xlu0 %v1364, 12
  %v4903 = vpop.permute.xlu0 %4902
  %4904 = vrot.lane.b32.xlu0 %v1366, 12
  %v4905 = vpop.permute.xlu0 %4904
  %4906 = vrot.lane.b32.xlu0 %v1369, 12
  %v4907 = vpop.permute.xlu0 %4906
  %4908 = vrot.lane.b32.xlu0 %v1371, 12
  %v4909 = vpop.permute.xlu0 %4908
  %4910 = vrot.lane.b32.xlu0 %v1374, 12
  %v4911 = vpop.permute.xlu0 %4910
  %4912 = vrot.lane.b32.xlu0 %v1376, 12
  %v4913 = vpop.permute.xlu0 %4912
  %4914 = vrot.lane.b32.xlu0 %v1379, 12
  %v4915 = vpop.permute.xlu0 %4914
  %4916 = vrot.lane.b32.xlu0 %v1381, 12
  %v4917 = vpop.permute.xlu0 %4916
  %4918 = vrot.lane.b32.xlu0 %v1384, 12
  %v4919 = vpop.permute.xlu0 %4918
  %4920 = vrot.lane.b32.xlu0 %v1386, 12
  %v4921 = vpop.permute.xlu0 %4920
  %4922 = vrot.lane.b32.xlu0 %v1389, 12
  %v4923 = vpop.permute.xlu0 %4922
  %4924 = vrot.lane.b32.xlu0 %v1391, 12
  %v4925 = vpop.permute.xlu0 %4924
  %4926 = vrot.lane.b32.xlu0 %v1394, 12
  %v4927 = vpop.permute.xlu0 %4926
  %4928 = vrot.lane.b32.xlu0 %v1396, 12
  %v4929 = vpop.permute.xlu0 %4928
  %4930 = vrot.lane.b32.xlu0 %v4478, 12
  %v4931 = vpop.permute.xlu0 %4930
  %4932 = vrot.lane.b32.xlu0 %v4480, 12
  %v4933 = vpop.permute.xlu0 %4932
  %4934 = vrot.lane.b32.xlu0 %v1404, 12
  %v4935 = vpop.permute.xlu0 %4934
  %4936 = vrot.lane.b32.xlu0 %v1406, 12
  %v4937 = vpop.permute.xlu0 %4936
  %4938 = vrot.lane.b32.xlu0 %v1409, 12
  %v4939 = vpop.permute.xlu0 %4938
  %4940 = vrot.lane.b32.xlu0 %v1411, 12
  %v4941 = vpop.permute.xlu0 %4940
  %4942 = vrot.lane.b32.xlu0 %v1414, 12
  %v4943 = vpop.permute.xlu0 %4942
  %4944 = vrot.lane.b32.xlu0 %v1416, 12
  %v4945 = vpop.permute.xlu0 %4944
  %4946 = vrot.lane.b32.xlu0 %v1419, 12
  %v4947 = vpop.permute.xlu0 %4946
  %4948 = vrot.lane.b32.xlu0 %v1421, 12
  %v4949 = vpop.permute.xlu0 %4948
  %4950 = vrot.lane.b32.xlu0 %v1424, 12
  %v4951 = vpop.permute.xlu0 %4950
  %4952 = vrot.lane.b32.xlu0 %v1426, 12
  %v4953 = vpop.permute.xlu0 %4952
  %4954 = vrot.lane.b32.xlu0 %v1429, 12
  %v4955 = vpop.permute.xlu0 %4954
  %4956 = vrot.lane.b32.xlu0 %v1431, 12
  %v4957 = vpop.permute.xlu0 %4956
  %4958 = vrot.lane.b32.xlu0 %v1434, 12
  %v4959 = vpop.permute.xlu0 %4958
  %4960 = vrot.lane.b32.xlu0 %v1436, 12
  %v4961 = vpop.permute.xlu0 %4960
  %4962 = vrot.lane.b32.xlu0 %v1439, 12
  %v4963 = vpop.permute.xlu0 %4962
  %4964 = vrot.lane.b32.xlu0 %v1441, 12
  %v4965 = vpop.permute.xlu0 %4964
  %4966 = vrot.lane.b32.xlu0 %v1444, 12
  %v4967 = vpop.permute.xlu0 %4966
  %4968 = vrot.lane.b32.xlu0 %v1446, 12
  %v4969 = vpop.permute.xlu0 %4968
  %4970 = vrot.lane.b32.xlu0 %v1449, 12
  %v4971 = vpop.permute.xlu0 %4970
  %4972 = vrot.lane.b32.xlu0 %v1451, 12
  %v4973 = vpop.permute.xlu0 %4972
  %4974 = vrot.lane.b32.xlu0 %v1454, 12
  %v4975 = vpop.permute.xlu0 %4974
  %4976 = vrot.lane.b32.xlu0 %v1456, 12
  %v4977 = vpop.permute.xlu0 %4976
  %4978 = vrot.lane.b32.xlu0 %v1459, 12
  %v4979 = vpop.permute.xlu0 %4978
  %4980 = vrot.lane.b32.xlu0 %v1461, 12
  %v4981 = vpop.permute.xlu0 %4980
  %4982 = vrot.lane.b32.xlu0 %v1464, 12
  %v4983 = vpop.permute.xlu0 %4982
  %4984 = vrot.lane.b32.xlu0 %v1466, 12
  %v4985 = vpop.permute.xlu0 %4984
  %4986 = vrot.lane.b32.xlu0 %v1469, 12
  %v4987 = vpop.permute.xlu0 %4986
  %4988 = vrot.lane.b32.xlu0 %v1471, 12
  %v4989 = vpop.permute.xlu0 %4988
  %4990 = vrot.lane.b32.xlu0 %v1474, 12
  %v4991 = vpop.permute.xlu0 %4990
  %4992 = vrot.lane.b32.xlu0 %v1476, 12
  %v4993 = vpop.permute.xlu0 %4992
  %4994 = vrot.lane.b32.xlu0 %v4483, 12
  %v4995 = vpop.permute.xlu0 %4994
  %4996 = vrot.lane.b32.xlu0 %v4485, 12
  %v4997 = vpop.permute.xlu0 %4996
  %v5254 = vrot.slane %v68, 2
  %v5255 = vrot.slane %v69, 2
  %v5256 = vsel %vm2245, %v5254, %v5255
  %v5257 = vrot.slane %v70, 2
  %v5258 = vsel %vm2245, %v5255, %v5257
  %v5259 = vrot.slane %v122, 2
  %v5260 = vrot.slane %v123, 2
  %v5261 = vsel %vm2245, %v5259, %v5260
  %v5262 = vrot.slane %v124, 2
  %v5263 = vsel %vm2245, %v5260, %v5262
  %v5264 = vrot.slane %v176, 2
  %v5265 = vrot.slane %v177, 2
  %v5266 = vsel %vm2245, %v5264, %v5265
  %v5267 = vrot.slane %v178, 2
  %v5268 = vsel %vm2245, %v5265, %v5267
  %v5269 = vrot.slane %v230, 2
  %v5270 = vrot.slane %v231, 2
  %v5271 = vsel %vm2245, %v5269, %v5270
  %v5272 = vrot.slane %v232, 2
  %v5273 = vsel %vm2245, %v5270, %v5272
  %v5274 = vrot.slane %v284, 2
  %v5275 = vrot.slane %v285, 2
  %v5276 = vsel %vm2245, %v5274, %v5275
  %v5277 = vrot.slane %v286, 2
  %v5278 = vsel %vm2245, %v5275, %v5277
  %v5279 = vrot.slane %v338, 2
  %v5280 = vrot.slane %v339, 2
  %v5281 = vsel %vm2245, %v5279, %v5280
  %v5282 = vrot.slane %v340, 2
  %v5283 = vsel %vm2245, %v5280, %v5282
  %v5284 = vrot.slane %v392, 2
  %v5285 = vrot.slane %v393, 2
  %v5286 = vsel %vm2245, %v5284, %v5285
  %v5287 = vrot.slane %v394, 2
  %v5288 = vsel %vm2245, %v5285, %v5287
  %v5289 = vrot.slane %v446, 2
  %v5290 = vrot.slane %v447, 2
  %v5291 = vsel %vm2245, %v5289, %v5290
  %v5292 = vrot.slane %v448, 2
  %v5293 = vsel %vm2245, %v5290, %v5292
  %5294 = vrot.lane.b32.xlu0 %v2253, 15
  %v5295 = vpop.permute.xlu0 %5294
  %5296 = vrot.lane.b32.xlu0 %v2255, 15
  %v5297 = vpop.permute.xlu0 %5296
  %5298 = vrot.lane.b32.xlu0 %v2258, 15
  %v5299 = vpop.permute.xlu0 %5298
  %5300 = vrot.lane.b32.xlu0 %v2260, 15
  %v5301 = vpop.permute.xlu0 %5300
  %5302 = vrot.lane.b32.xlu0 %v2263, 15
  %v5303 = vpop.permute.xlu0 %5302
  %5304 = vrot.lane.b32.xlu0 %v2265, 15
  %v5305 = vpop.permute.xlu0 %5304
  %5306 = vrot.lane.b32.xlu0 %v2268, 15
  %v5307 = vpop.permute.xlu0 %5306
  %5308 = vrot.lane.b32.xlu0 %v2270, 15
  %v5309 = vpop.permute.xlu0 %5308
  %5310 = vrot.lane.b32.xlu0 %v2273, 15
  %v5311 = vpop.permute.xlu0 %5310
  %5312 = vrot.lane.b32.xlu0 %v2275, 15
  %v5313 = vpop.permute.xlu0 %5312
  %5314 = vrot.lane.b32.xlu0 %v2278, 15
  %v5315 = vpop.permute.xlu0 %5314
  %5316 = vrot.lane.b32.xlu0 %v2280, 15
  %v5317 = vpop.permute.xlu0 %5316
  %5318 = vrot.lane.b32.xlu0 %v2283, 15
  %v5319 = vpop.permute.xlu0 %5318
  %5320 = vrot.lane.b32.xlu0 %v2285, 15
  %v5321 = vpop.permute.xlu0 %5320
  %5322 = vrot.lane.b32.xlu0 %v2288, 15
  %v5323 = vpop.permute.xlu0 %5322
  %5324 = vrot.lane.b32.xlu0 %v2290, 15
  %v5325 = vpop.permute.xlu0 %5324
  %5326 = vrot.lane.b32.xlu0 %v2293, 15
  %v5327 = vpop.permute.xlu0 %5326
  %5328 = vrot.lane.b32.xlu0 %v2295, 15
  %v5329 = vpop.permute.xlu0 %5328
  %5330 = vrot.lane.b32.xlu0 %v2298, 15
  %v5331 = vpop.permute.xlu0 %5330
  %5332 = vrot.lane.b32.xlu0 %v2300, 15
  %v5333 = vpop.permute.xlu0 %5332
  %5334 = vrot.lane.b32.xlu0 %v2303, 15
  %v5335 = vpop.permute.xlu0 %5334
  %5336 = vrot.lane.b32.xlu0 %v2305, 15
  %v5337 = vpop.permute.xlu0 %5336
  %5338 = vrot.lane.b32.xlu0 %v2308, 15
  %v5339 = vpop.permute.xlu0 %5338
  %5340 = vrot.lane.b32.xlu0 %v2310, 15
  %v5341 = vpop.permute.xlu0 %5340
  %5342 = vrot.lane.b32.xlu0 %v2313, 15
  %v5343 = vpop.permute.xlu0 %5342
  %5344 = vrot.lane.b32.xlu0 %v2315, 15
  %v5345 = vpop.permute.xlu0 %5344
  %5346 = vrot.lane.b32.xlu0 %v2318, 15
  %v5347 = vpop.permute.xlu0 %5346
  %5348 = vrot.lane.b32.xlu0 %v2320, 15
  %v5349 = vpop.permute.xlu0 %5348
  %5350 = vrot.lane.b32.xlu0 %v2323, 15
  %v5351 = vpop.permute.xlu0 %5350
  %5352 = vrot.lane.b32.xlu0 %v2325, 15
  %v5353 = vpop.permute.xlu0 %5352
  %5354 = vrot.lane.b32.xlu0 %v5256, 15
  %v5355 = vpop.permute.xlu0 %5354
  %5356 = vrot.lane.b32.xlu0 %v5258, 15
  %v5357 = vpop.permute.xlu0 %5356
  %5358 = vrot.lane.b32.xlu0 %v2333, 15
  %v5359 = vpop.permute.xlu0 %5358
  %5360 = vrot.lane.b32.xlu0 %v2335, 15
  %v5361 = vpop.permute.xlu0 %5360
  %5362 = vrot.lane.b32.xlu0 %v2338, 15
  %v5363 = vpop.permute.xlu0 %5362
  %5364 = vrot.lane.b32.xlu0 %v2340, 15
  %v5365 = vpop.permute.xlu0 %5364
  %5366 = vrot.lane.b32.xlu0 %v2343, 15
  %v5367 = vpop.permute.xlu0 %5366
  %5368 = vrot.lane.b32.xlu0 %v2345, 15
  %v5369 = vpop.permute.xlu0 %5368
  %5370 = vrot.lane.b32.xlu0 %v2348, 15
  %v5371 = vpop.permute.xlu0 %5370
  %5372 = vrot.lane.b32.xlu0 %v2350, 15
  %v5373 = vpop.permute.xlu0 %5372
  %5374 = vrot.lane.b32.xlu0 %v2353, 15
  %v5375 = vpop.permute.xlu0 %5374
  %5376 = vrot.lane.b32.xlu0 %v2355, 15
  %v5377 = vpop.permute.xlu0 %5376
  %5378 = vrot.lane.b32.xlu0 %v2358, 15
  %v5379 = vpop.permute.xlu0 %5378
  %5380 = vrot.lane.b32.xlu0 %v2360, 15
  %v5381 = vpop.permute.xlu0 %5380
  %5382 = vrot.lane.b32.xlu0 %v2363, 15
  %v5383 = vpop.permute.xlu0 %5382
  %5384 = vrot.lane.b32.xlu0 %v2365, 15
  %v5385 = vpop.permute.xlu0 %5384
  %5386 = vrot.lane.b32.xlu0 %v2368, 15
  %v5387 = vpop.permute.xlu0 %5386
  %5388 = vrot.lane.b32.xlu0 %v2370, 15
  %v5389 = vpop.permute.xlu0 %5388
  %5390 = vrot.lane.b32.xlu0 %v2373, 15
  %v5391 = vpop.permute.xlu0 %5390
  %5392 = vrot.lane.b32.xlu0 %v2375, 15
  %v5393 = vpop.permute.xlu0 %5392
  %5394 = vrot.lane.b32.xlu0 %v2378, 15
  %v5395 = vpop.permute.xlu0 %5394
  %5396 = vrot.lane.b32.xlu0 %v2380, 15
  %v5397 = vpop.permute.xlu0 %5396
  %5398 = vrot.lane.b32.xlu0 %v2383, 15
  %v5399 = vpop.permute.xlu0 %5398
  %5400 = vrot.lane.b32.xlu0 %v2385, 15
  %v5401 = vpop.permute.xlu0 %5400
  %5402 = vrot.lane.b32.xlu0 %v2388, 15
  %v5403 = vpop.permute.xlu0 %5402
  %5404 = vrot.lane.b32.xlu0 %v2390, 15
  %v5405 = vpop.permute.xlu0 %5404
  %5406 = vrot.lane.b32.xlu0 %v2393, 15
  %v5407 = vpop.permute.xlu0 %5406
  %5408 = vrot.lane.b32.xlu0 %v2395, 15
  %v5409 = vpop.permute.xlu0 %5408
  %5410 = vrot.lane.b32.xlu0 %v2398, 15
  %v5411 = vpop.permute.xlu0 %5410
  %5412 = vrot.lane.b32.xlu0 %v2400, 15
  %v5413 = vpop.permute.xlu0 %5412
  %5414 = vrot.lane.b32.xlu0 %v2403, 15
  %v5415 = vpop.permute.xlu0 %5414
  %5416 = vrot.lane.b32.xlu0 %v2405, 15
  %v5417 = vpop.permute.xlu0 %5416
  %5418 = vrot.lane.b32.xlu0 %v5261, 15
  %v5419 = vpop.permute.xlu0 %5418
  %5420 = vrot.lane.b32.xlu0 %v5263, 15
  %v5421 = vpop.permute.xlu0 %5420
  %5422 = vrot.lane.b32.xlu0 %v2413, 15
  %v5423 = vpop.permute.xlu0 %5422
  %5424 = vrot.lane.b32.xlu0 %v2415, 15
  %v5425 = vpop.permute.xlu0 %5424
  %5426 = vrot.lane.b32.xlu0 %v2418, 15
  %v5427 = vpop.permute.xlu0 %5426
  %5428 = vrot.lane.b32.xlu0 %v2420, 15
  %v5429 = vpop.permute.xlu0 %5428
  %5430 = vrot.lane.b32.xlu0 %v2423, 15
  %v5431 = vpop.permute.xlu0 %5430
  %5432 = vrot.lane.b32.xlu0 %v2425, 15
  %v5433 = vpop.permute.xlu0 %5432
  %5434 = vrot.lane.b32.xlu0 %v2428, 15
  %v5435 = vpop.permute.xlu0 %5434
  %5436 = vrot.lane.b32.xlu0 %v2430, 15
  %v5437 = vpop.permute.xlu0 %5436
  %5438 = vrot.lane.b32.xlu0 %v2433, 15
  %v5439 = vpop.permute.xlu0 %5438
  %5440 = vrot.lane.b32.xlu0 %v2435, 15
  %v5441 = vpop.permute.xlu0 %5440
  %5442 = vrot.lane.b32.xlu0 %v2438, 15
  %v5443 = vpop.permute.xlu0 %5442
  %5444 = vrot.lane.b32.xlu0 %v2440, 15
  %v5445 = vpop.permute.xlu0 %5444
  %5446 = vrot.lane.b32.xlu0 %v2443, 15
  %v5447 = vpop.permute.xlu0 %5446
  %5448 = vrot.lane.b32.xlu0 %v2445, 15
  %v5449 = vpop.permute.xlu0 %5448
  %5450 = vrot.lane.b32.xlu0 %v2448, 15
  %v5451 = vpop.permute.xlu0 %5450
  %5452 = vrot.lane.b32.xlu0 %v2450, 15
  %v5453 = vpop.permute.xlu0 %5452
  %5454 = vrot.lane.b32.xlu0 %v2453, 15
  %v5455 = vpop.permute.xlu0 %5454
  %5456 = vrot.lane.b32.xlu0 %v2455, 15
  %v5457 = vpop.permute.xlu0 %5456
  %5458 = vrot.lane.b32.xlu0 %v2458, 15
  %v5459 = vpop.permute.xlu0 %5458
  %5460 = vrot.lane.b32.xlu0 %v2460, 15
  %v5461 = vpop.permute.xlu0 %5460
  %5462 = vrot.lane.b32.xlu0 %v2463, 15
  %v5463 = vpop.permute.xlu0 %5462
  %5464 = vrot.lane.b32.xlu0 %v2465, 15
  %v5465 = vpop.permute.xlu0 %5464
  %5466 = vrot.lane.b32.xlu0 %v2468, 15
  %v5467 = vpop.permute.xlu0 %5466
  %5468 = vrot.lane.b32.xlu0 %v2470, 15
  %v5469 = vpop.permute.xlu0 %5468
  %5470 = vrot.lane.b32.xlu0 %v2473, 15
  %v5471 = vpop.permute.xlu0 %5470
  %5472 = vrot.lane.b32.xlu0 %v2475, 15
  %v5473 = vpop.permute.xlu0 %5472
  %5474 = vrot.lane.b32.xlu0 %v2478, 15
  %v5475 = vpop.permute.xlu0 %5474
  %5476 = vrot.lane.b32.xlu0 %v2480, 15
  %v5477 = vpop.permute.xlu0 %5476
  %5478 = vrot.lane.b32.xlu0 %v2483, 15
  %v5479 = vpop.permute.xlu0 %5478
  %5480 = vrot.lane.b32.xlu0 %v2485, 15
  %v5481 = vpop.permute.xlu0 %5480
  %5482 = vrot.lane.b32.xlu0 %v5266, 15
  %v5483 = vpop.permute.xlu0 %5482
  %5484 = vrot.lane.b32.xlu0 %v5268, 15
  %v5485 = vpop.permute.xlu0 %5484
  %5486 = vrot.lane.b32.xlu0 %v2493, 15
  %v5487 = vpop.permute.xlu0 %5486
  %5488 = vrot.lane.b32.xlu0 %v2495, 15
  %v5489 = vpop.permute.xlu0 %5488
  %5490 = vrot.lane.b32.xlu0 %v2498, 15
  %v5491 = vpop.permute.xlu0 %5490
  %5492 = vrot.lane.b32.xlu0 %v2500, 15
  %v5493 = vpop.permute.xlu0 %5492
  %5494 = vrot.lane.b32.xlu0 %v2503, 15
  %v5495 = vpop.permute.xlu0 %5494
  %5496 = vrot.lane.b32.xlu0 %v2505, 15
  %v5497 = vpop.permute.xlu0 %5496
  %5498 = vrot.lane.b32.xlu0 %v2508, 15
  %v5499 = vpop.permute.xlu0 %5498
  %5500 = vrot.lane.b32.xlu0 %v2510, 15
  %v5501 = vpop.permute.xlu0 %5500
  %5502 = vrot.lane.b32.xlu0 %v2513, 15
  %v5503 = vpop.permute.xlu0 %5502
  %5504 = vrot.lane.b32.xlu0 %v2515, 15
  %v5505 = vpop.permute.xlu0 %5504
  %5506 = vrot.lane.b32.xlu0 %v2518, 15
  %v5507 = vpop.permute.xlu0 %5506
  %5508 = vrot.lane.b32.xlu0 %v2520, 15
  %v5509 = vpop.permute.xlu0 %5508
  %5510 = vrot.lane.b32.xlu0 %v2523, 15
  %v5511 = vpop.permute.xlu0 %5510
  %5512 = vrot.lane.b32.xlu0 %v2525, 15
  %v5513 = vpop.permute.xlu0 %5512
  %5514 = vrot.lane.b32.xlu0 %v2528, 15
  %v5515 = vpop.permute.xlu0 %5514
  %5516 = vrot.lane.b32.xlu0 %v2530, 15
  %v5517 = vpop.permute.xlu0 %5516
  %5518 = vrot.lane.b32.xlu0 %v2533, 15
  %v5519 = vpop.permute.xlu0 %5518
  %5520 = vrot.lane.b32.xlu0 %v2535, 15
  %v5521 = vpop.permute.xlu0 %5520
  %5522 = vrot.lane.b32.xlu0 %v2538, 15
  %v5523 = vpop.permute.xlu0 %5522
  %5524 = vrot.lane.b32.xlu0 %v2540, 15
  %v5525 = vpop.permute.xlu0 %5524
  %5526 = vrot.lane.b32.xlu0 %v2543, 15
  %v5527 = vpop.permute.xlu0 %5526
  %5528 = vrot.lane.b32.xlu0 %v2545, 15
  %v5529 = vpop.permute.xlu0 %5528
  %5530 = vrot.lane.b32.xlu0 %v2548, 15
  %v5531 = vpop.permute.xlu0 %5530
  %5532 = vrot.lane.b32.xlu0 %v2550, 15
  %v5533 = vpop.permute.xlu0 %5532
  %5534 = vrot.lane.b32.xlu0 %v2553, 15
  %v5535 = vpop.permute.xlu0 %5534
  %5536 = vrot.lane.b32.xlu0 %v2555, 15
  %v5537 = vpop.permute.xlu0 %5536
  %5538 = vrot.lane.b32.xlu0 %v2558, 15
  %v5539 = vpop.permute.xlu0 %5538
  %5540 = vrot.lane.b32.xlu0 %v2560, 15
  %v5541 = vpop.permute.xlu0 %5540
  %5542 = vrot.lane.b32.xlu0 %v2563, 15
  %v5543 = vpop.permute.xlu0 %5542
  %5544 = vrot.lane.b32.xlu0 %v2565, 15
  %v5545 = vpop.permute.xlu0 %5544
  %5546 = vrot.lane.b32.xlu0 %v5271, 15
  %v5547 = vpop.permute.xlu0 %5546
  %5548 = vrot.lane.b32.xlu0 %v5273, 15
  %v5549 = vpop.permute.xlu0 %5548
  %5550 = vrot.lane.b32.xlu0 %v2573, 15
  %v5551 = vpop.permute.xlu0 %5550
  %5552 = vrot.lane.b32.xlu0 %v2575, 15
  %v5553 = vpop.permute.xlu0 %5552
  %5554 = vrot.lane.b32.xlu0 %v2578, 15
  %v5555 = vpop.permute.xlu0 %5554
  %5556 = vrot.lane.b32.xlu0 %v2580, 15
  %v5557 = vpop.permute.xlu0 %5556
  %5558 = vrot.lane.b32.xlu0 %v2583, 15
  %v5559 = vpop.permute.xlu0 %5558
  %5560 = vrot.lane.b32.xlu0 %v2585, 15
  %v5561 = vpop.permute.xlu0 %5560
  %5562 = vrot.lane.b32.xlu0 %v2588, 15
  %v5563 = vpop.permute.xlu0 %5562
  %5564 = vrot.lane.b32.xlu0 %v2590, 15
  %v5565 = vpop.permute.xlu0 %5564
  %5566 = vrot.lane.b32.xlu0 %v2593, 15
  %v5567 = vpop.permute.xlu0 %5566
  %5568 = vrot.lane.b32.xlu0 %v2595, 15
  %v5569 = vpop.permute.xlu0 %5568
  %5570 = vrot.lane.b32.xlu0 %v2598, 15
  %v5571 = vpop.permute.xlu0 %5570
  %5572 = vrot.lane.b32.xlu0 %v2600, 15
  %v5573 = vpop.permute.xlu0 %5572
  %5574 = vrot.lane.b32.xlu0 %v2603, 15
  %v5575 = vpop.permute.xlu0 %5574
  %5576 = vrot.lane.b32.xlu0 %v2605, 15
  %v5577 = vpop.permute.xlu0 %5576
  %5578 = vrot.lane.b32.xlu0 %v2608, 15
  %v5579 = vpop.permute.xlu0 %5578
  %5580 = vrot.lane.b32.xlu0 %v2610, 15
  %v5581 = vpop.permute.xlu0 %5580
  %5582 = vrot.lane.b32.xlu0 %v2613, 15
  %v5583 = vpop.permute.xlu0 %5582
  %5584 = vrot.lane.b32.xlu0 %v2615, 15
  %v5585 = vpop.permute.xlu0 %5584
  %5586 = vrot.lane.b32.xlu0 %v2618, 15
  %v5587 = vpop.permute.xlu0 %5586
  %5588 = vrot.lane.b32.xlu0 %v2620, 15
  %v5589 = vpop.permute.xlu0 %5588
  %5590 = vrot.lane.b32.xlu0 %v2623, 15
  %v5591 = vpop.permute.xlu0 %5590
  %5592 = vrot.lane.b32.xlu0 %v2625, 15
  %v5593 = vpop.permute.xlu0 %5592
  %5594 = vrot.lane.b32.xlu0 %v2628, 15
  %v5595 = vpop.permute.xlu0 %5594
  %5596 = vrot.lane.b32.xlu0 %v2630, 15
  %v5597 = vpop.permute.xlu0 %5596
  %5598 = vrot.lane.b32.xlu0 %v2633, 15
  %v5599 = vpop.permute.xlu0 %5598
  %5600 = vrot.lane.b32.xlu0 %v2635, 15
  %v5601 = vpop.permute.xlu0 %5600
  %5602 = vrot.lane.b32.xlu0 %v2638, 15
  %v5603 = vpop.permute.xlu0 %5602
  %5604 = vrot.lane.b32.xlu0 %v2640, 15
  %v5605 = vpop.permute.xlu0 %5604
  %5606 = vrot.lane.b32.xlu0 %v2643, 15
  %v5607 = vpop.permute.xlu0 %5606
  %5608 = vrot.lane.b32.xlu0 %v2645, 15
  %v5609 = vpop.permute.xlu0 %5608
  %5610 = vrot.lane.b32.xlu0 %v5276, 15
  %v5611 = vpop.permute.xlu0 %5610
  %5612 = vrot.lane.b32.xlu0 %v5278, 15
  %v5613 = vpop.permute.xlu0 %5612
  %5614 = vrot.lane.b32.xlu0 %v2653, 15
  %v5615 = vpop.permute.xlu0 %5614
  %5616 = vrot.lane.b32.xlu0 %v2655, 15
  %v5617 = vpop.permute.xlu0 %5616
  %5618 = vrot.lane.b32.xlu0 %v2658, 15
  %v5619 = vpop.permute.xlu0 %5618
  %5620 = vrot.lane.b32.xlu0 %v2660, 15
  %v5621 = vpop.permute.xlu0 %5620
  %5622 = vrot.lane.b32.xlu0 %v2663, 15
  %v5623 = vpop.permute.xlu0 %5622
  %5624 = vrot.lane.b32.xlu0 %v2665, 15
  %v5625 = vpop.permute.xlu0 %5624
  %5626 = vrot.lane.b32.xlu0 %v2668, 15
  %v5627 = vpop.permute.xlu0 %5626
  %5628 = vrot.lane.b32.xlu0 %v2670, 15
  %v5629 = vpop.permute.xlu0 %5628
  %5630 = vrot.lane.b32.xlu0 %v2673, 15
  %v5631 = vpop.permute.xlu0 %5630
  %5632 = vrot.lane.b32.xlu0 %v2675, 15
  %v5633 = vpop.permute.xlu0 %5632
  %5634 = vrot.lane.b32.xlu0 %v2678, 15
  %v5635 = vpop.permute.xlu0 %5634
  %5636 = vrot.lane.b32.xlu0 %v2680, 15
  %v5637 = vpop.permute.xlu0 %5636
  %5638 = vrot.lane.b32.xlu0 %v2683, 15
  %v5639 = vpop.permute.xlu0 %5638
  %5640 = vrot.lane.b32.xlu0 %v2685, 15
  %v5641 = vpop.permute.xlu0 %5640
  %5642 = vrot.lane.b32.xlu0 %v2688, 15
  %v5643 = vpop.permute.xlu0 %5642
  %5644 = vrot.lane.b32.xlu0 %v2690, 15
  %v5645 = vpop.permute.xlu0 %5644
  %5646 = vrot.lane.b32.xlu0 %v2693, 15
  %v5647 = vpop.permute.xlu0 %5646
  %5648 = vrot.lane.b32.xlu0 %v2695, 15
  %v5649 = vpop.permute.xlu0 %5648
  %5650 = vrot.lane.b32.xlu0 %v2698, 15
  %v5651 = vpop.permute.xlu0 %5650
  %5652 = vrot.lane.b32.xlu0 %v2700, 15
  %v5653 = vpop.permute.xlu0 %5652
  %5654 = vrot.lane.b32.xlu0 %v2703, 15
  %v5655 = vpop.permute.xlu0 %5654
  %5656 = vrot.lane.b32.xlu0 %v2705, 15
  %v5657 = vpop.permute.xlu0 %5656
  %5658 = vrot.lane.b32.xlu0 %v2708, 15
  %v5659 = vpop.permute.xlu0 %5658
  %5660 = vrot.lane.b32.xlu0 %v2710, 15
  %v5661 = vpop.permute.xlu0 %5660
  %5662 = vrot.lane.b32.xlu0 %v2713, 15
  %v5663 = vpop.permute.xlu0 %5662
  %5664 = vrot.lane.b32.xlu0 %v2715, 15
  %v5665 = vpop.permute.xlu0 %5664
  %5666 = vrot.lane.b32.xlu0 %v2718, 15
  %v5667 = vpop.permute.xlu0 %5666
  %5668 = vrot.lane.b32.xlu0 %v2720, 15
  %v5669 = vpop.permute.xlu0 %5668
  %5670 = vrot.lane.b32.xlu0 %v2723, 15
  %v5671 = vpop.permute.xlu0 %5670
  %5672 = vrot.lane.b32.xlu0 %v2725, 15
  %v5673 = vpop.permute.xlu0 %5672
  %5674 = vrot.lane.b32.xlu0 %v5281, 15
  %v5675 = vpop.permute.xlu0 %5674
  %5676 = vrot.lane.b32.xlu0 %v5283, 15
  %v5677 = vpop.permute.xlu0 %5676
  %5678 = vrot.lane.b32.xlu0 %v2733, 15
  %v5679 = vpop.permute.xlu0 %5678
  %5680 = vrot.lane.b32.xlu0 %v2735, 15
  %v5681 = vpop.permute.xlu0 %5680
  %5682 = vrot.lane.b32.xlu0 %v2738, 15
  %v5683 = vpop.permute.xlu0 %5682
  %5684 = vrot.lane.b32.xlu0 %v2740, 15
  %v5685 = vpop.permute.xlu0 %5684
  %5686 = vrot.lane.b32.xlu0 %v2743, 15
  %v5687 = vpop.permute.xlu0 %5686
  %5688 = vrot.lane.b32.xlu0 %v2745, 15
  %v5689 = vpop.permute.xlu0 %5688
  %5690 = vrot.lane.b32.xlu0 %v2748, 15
  %v5691 = vpop.permute.xlu0 %5690
  %5692 = vrot.lane.b32.xlu0 %v2750, 15
  %v5693 = vpop.permute.xlu0 %5692
  %5694 = vrot.lane.b32.xlu0 %v2753, 15
  %v5695 = vpop.permute.xlu0 %5694
  %5696 = vrot.lane.b32.xlu0 %v2755, 15
  %v5697 = vpop.permute.xlu0 %5696
  %5698 = vrot.lane.b32.xlu0 %v2758, 15
  %v5699 = vpop.permute.xlu0 %5698
  %5700 = vrot.lane.b32.xlu0 %v2760, 15
  %v5701 = vpop.permute.xlu0 %5700
  %5702 = vrot.lane.b32.xlu0 %v2763, 15
  %v5703 = vpop.permute.xlu0 %5702
  %5704 = vrot.lane.b32.xlu0 %v2765, 15
  %v5705 = vpop.permute.xlu0 %5704
  %5706 = vrot.lane.b32.xlu0 %v2768, 15
  %v5707 = vpop.permute.xlu0 %5706
  %5708 = vrot.lane.b32.xlu0 %v2770, 15
  %v5709 = vpop.permute.xlu0 %5708
  %5710 = vrot.lane.b32.xlu0 %v2773, 15
  %v5711 = vpop.permute.xlu0 %5710
  %5712 = vrot.lane.b32.xlu0 %v2775, 15
  %v5713 = vpop.permute.xlu0 %5712
  %5714 = vrot.lane.b32.xlu0 %v2778, 15
  %v5715 = vpop.permute.xlu0 %5714
  %5716 = vrot.lane.b32.xlu0 %v2780, 15
  %v5717 = vpop.permute.xlu0 %5716
  %5718 = vrot.lane.b32.xlu0 %v2783, 15
  %v5719 = vpop.permute.xlu0 %5718
  %5720 = vrot.lane.b32.xlu0 %v2785, 15
  %v5721 = vpop.permute.xlu0 %5720
  %5722 = vrot.lane.b32.xlu0 %v2788, 15
  %v5723 = vpop.permute.xlu0 %5722
  %5724 = vrot.lane.b32.xlu0 %v2790, 15
  %v5725 = vpop.permute.xlu0 %5724
  %5726 = vrot.lane.b32.xlu0 %v2793, 15
  %v5727 = vpop.permute.xlu0 %5726
  %5728 = vrot.lane.b32.xlu0 %v2795, 15
  %v5729 = vpop.permute.xlu0 %5728
  %5730 = vrot.lane.b32.xlu0 %v2798, 15
  %v5731 = vpop.permute.xlu0 %5730
  %5732 = vrot.lane.b32.xlu0 %v2800, 15
  %v5733 = vpop.permute.xlu0 %5732
  %5734 = vrot.lane.b32.xlu0 %v2803, 15
  %v5735 = vpop.permute.xlu0 %5734
  %5736 = vrot.lane.b32.xlu0 %v2805, 15
  %v5737 = vpop.permute.xlu0 %5736
  %5738 = vrot.lane.b32.xlu0 %v5286, 15
  %v5739 = vpop.permute.xlu0 %5738
  %5740 = vrot.lane.b32.xlu0 %v5288, 15
  %v5741 = vpop.permute.xlu0 %5740
  %5742 = vrot.lane.b32.xlu0 %v2813, 15
  %v5743 = vpop.permute.xlu0 %5742
  %5744 = vrot.lane.b32.xlu0 %v2815, 15
  %v5745 = vpop.permute.xlu0 %5744
  %5746 = vrot.lane.b32.xlu0 %v2818, 15
  %v5747 = vpop.permute.xlu0 %5746
  %5748 = vrot.lane.b32.xlu0 %v2820, 15
  %v5749 = vpop.permute.xlu0 %5748
  %5750 = vrot.lane.b32.xlu0 %v2823, 15
  %v5751 = vpop.permute.xlu0 %5750
  %5752 = vrot.lane.b32.xlu0 %v2825, 15
  %v5753 = vpop.permute.xlu0 %5752
  %5754 = vrot.lane.b32.xlu0 %v2828, 15
  %v5755 = vpop.permute.xlu0 %5754
  %5756 = vrot.lane.b32.xlu0 %v2830, 15
  %v5757 = vpop.permute.xlu0 %5756
  %5758 = vrot.lane.b32.xlu0 %v2833, 15
  %v5759 = vpop.permute.xlu0 %5758
  %5760 = vrot.lane.b32.xlu0 %v2835, 15
  %v5761 = vpop.permute.xlu0 %5760
  %5762 = vrot.lane.b32.xlu0 %v2838, 15
  %v5763 = vpop.permute.xlu0 %5762
  %5764 = vrot.lane.b32.xlu0 %v2840, 15
  %v5765 = vpop.permute.xlu0 %5764
  %5766 = vrot.lane.b32.xlu0 %v2843, 15
  %v5767 = vpop.permute.xlu0 %5766
  %5768 = vrot.lane.b32.xlu0 %v2845, 15
  %v5769 = vpop.permute.xlu0 %5768
  %5770 = vrot.lane.b32.xlu0 %v2848, 15
  %v5771 = vpop.permute.xlu0 %5770
  %5772 = vrot.lane.b32.xlu0 %v2850, 15
  %v5773 = vpop.permute.xlu0 %5772
  %5774 = vrot.lane.b32.xlu0 %v2853, 15
  %v5775 = vpop.permute.xlu0 %5774
  %5776 = vrot.lane.b32.xlu0 %v2855, 15
  %v5777 = vpop.permute.xlu0 %5776
  %5778 = vrot.lane.b32.xlu0 %v2858, 15
  %v5779 = vpop.permute.xlu0 %5778
  %5780 = vrot.lane.b32.xlu0 %v2860, 15
  %v5781 = vpop.permute.xlu0 %5780
  %5782 = vrot.lane.b32.xlu0 %v2863, 15
  %v5783 = vpop.permute.xlu0 %5782
  %5784 = vrot.lane.b32.xlu0 %v2865, 15
  %v5785 = vpop.permute.xlu0 %5784
  %5786 = vrot.lane.b32.xlu0 %v2868, 15
  %v5787 = vpop.permute.xlu0 %5786
  %5788 = vrot.lane.b32.xlu0 %v2870, 15
  %v5789 = vpop.permute.xlu0 %5788
  %5790 = vrot.lane.b32.xlu0 %v2873, 15
  %v5791 = vpop.permute.xlu0 %5790
  %5792 = vrot.lane.b32.xlu0 %v2875, 15
  %v5793 = vpop.permute.xlu0 %5792
  %5794 = vrot.lane.b32.xlu0 %v2878, 15
  %v5795 = vpop.permute.xlu0 %5794
  %5796 = vrot.lane.b32.xlu0 %v2880, 15
  %v5797 = vpop.permute.xlu0 %5796
  %5798 = vrot.lane.b32.xlu0 %v2883, 15
  %v5799 = vpop.permute.xlu0 %5798
  %5800 = vrot.lane.b32.xlu0 %v2885, 15
  %v5801 = vpop.permute.xlu0 %5800
  %5802 = vrot.lane.b32.xlu0 %v5291, 15
  %v5803 = vpop.permute.xlu0 %5802
  %5804 = vrot.lane.b32.xlu0 %v5293, 15
  %v5805 = vpop.permute.xlu0 %5804
  %6078 = vrot.lane.b32.xlu0 %v26, 18
  %v6079 = vpop.permute.xlu0 %6078
  %6080 = vrot.lane.b32.xlu0 %v27, 18
  %v6081 = vpop.permute.xlu0 %6080
  %6082 = vrot.lane.b32.xlu0 %v29, 18
  %v6083 = vpop.permute.xlu0 %6082
  %6084 = vrot.lane.b32.xlu0 %v30, 18
  %v6085 = vpop.permute.xlu0 %6084
  %6086 = vrot.lane.b32.xlu0 %v32, 18
  %v6087 = vpop.permute.xlu0 %6086
  %6088 = vrot.lane.b32.xlu0 %v33, 18
  %v6089 = vpop.permute.xlu0 %6088
  %6090 = vrot.lane.b32.xlu0 %v35, 18
  %v6091 = vpop.permute.xlu0 %6090
  %6092 = vrot.lane.b32.xlu0 %v36, 18
  %v6093 = vpop.permute.xlu0 %6092
  %6094 = vrot.lane.b32.xlu0 %v38, 18
  %v6095 = vpop.permute.xlu0 %6094
  %6096 = vrot.lane.b32.xlu0 %v39, 18
  %v6097 = vpop.permute.xlu0 %6096
  %6098 = vrot.lane.b32.xlu0 %v41, 18
  %v6099 = vpop.permute.xlu0 %6098
  %6100 = vrot.lane.b32.xlu0 %v42, 18
  %v6101 = vpop.permute.xlu0 %6100
  %6102 = vrot.lane.b32.xlu0 %v44, 18
  %v6103 = vpop.permute.xlu0 %6102
  %6104 = vrot.lane.b32.xlu0 %v45, 18
  %v6105 = vpop.permute.xlu0 %6104
  %6106 = vrot.lane.b32.xlu0 %v47, 18
  %v6107 = vpop.permute.xlu0 %6106
  %6108 = vrot.lane.b32.xlu0 %v48, 18
  %v6109 = vpop.permute.xlu0 %6108
  %6110 = vrot.lane.b32.xlu0 %v50, 18
  %v6111 = vpop.permute.xlu0 %6110
  %6112 = vrot.lane.b32.xlu0 %v51, 18
  %v6113 = vpop.permute.xlu0 %6112
  %6114 = vrot.lane.b32.xlu0 %v53, 18
  %v6115 = vpop.permute.xlu0 %6114
  %6116 = vrot.lane.b32.xlu0 %v54, 18
  %v6117 = vpop.permute.xlu0 %6116
  %6118 = vrot.lane.b32.xlu0 %v56, 18
  %v6119 = vpop.permute.xlu0 %6118
  %6120 = vrot.lane.b32.xlu0 %v57, 18
  %v6121 = vpop.permute.xlu0 %6120
  %6122 = vrot.lane.b32.xlu0 %v59, 18
  %v6123 = vpop.permute.xlu0 %6122
  %6124 = vrot.lane.b32.xlu0 %v60, 18
  %v6125 = vpop.permute.xlu0 %6124
  %6126 = vrot.lane.b32.xlu0 %v62, 18
  %v6127 = vpop.permute.xlu0 %6126
  %6128 = vrot.lane.b32.xlu0 %v63, 18
  %v6129 = vpop.permute.xlu0 %6128
  %6130 = vrot.lane.b32.xlu0 %v65, 18
  %v6131 = vpop.permute.xlu0 %6130
  %6132 = vrot.lane.b32.xlu0 %v66, 18
  %v6133 = vpop.permute.xlu0 %6132
  %6134 = vrot.lane.b32.xlu0 %v68, 18
  %v6135 = vpop.permute.xlu0 %6134
  %6136 = vrot.lane.b32.xlu0 %v69, 18
  %v6137 = vpop.permute.xlu0 %6136
  %6138 = vrot.lane.b32.xlu0 %v71, 18
  %v6139 = vpop.permute.xlu0 %6138
  %6140 = vrot.lane.b32.xlu0 %v72, 18
  %v6141 = vpop.permute.xlu0 %6140
  %6142 = vrot.lane.b32.xlu0 %v80, 18
  %v6143 = vpop.permute.xlu0 %6142
  %6144 = vrot.lane.b32.xlu0 %v81, 18
  %v6145 = vpop.permute.xlu0 %6144
  %6146 = vrot.lane.b32.xlu0 %v83, 18
  %v6147 = vpop.permute.xlu0 %6146
  %6148 = vrot.lane.b32.xlu0 %v84, 18
  %v6149 = vpop.permute.xlu0 %6148
  %6150 = vrot.lane.b32.xlu0 %v86, 18
  %v6151 = vpop.permute.xlu0 %6150
  %6152 = vrot.lane.b32.xlu0 %v87, 18
  %v6153 = vpop.permute.xlu0 %6152
  %6154 = vrot.lane.b32.xlu0 %v89, 18
  %v6155 = vpop.permute.xlu0 %6154
  %6156 = vrot.lane.b32.xlu0 %v90, 18
  %v6157 = vpop.permute.xlu0 %6156
  %6158 = vrot.lane.b32.xlu0 %v92, 18
  %v6159 = vpop.permute.xlu0 %6158
  %6160 = vrot.lane.b32.xlu0 %v93, 18
  %v6161 = vpop.permute.xlu0 %6160
  %6162 = vrot.lane.b32.xlu0 %v95, 18
  %v6163 = vpop.permute.xlu0 %6162
  %6164 = vrot.lane.b32.xlu0 %v96, 18
  %v6165 = vpop.permute.xlu0 %6164
  %6166 = vrot.lane.b32.xlu0 %v98, 18
  %v6167 = vpop.permute.xlu0 %6166
  %6168 = vrot.lane.b32.xlu0 %v99, 18
  %v6169 = vpop.permute.xlu0 %6168
  %6170 = vrot.lane.b32.xlu0 %v101, 18
  %v6171 = vpop.permute.xlu0 %6170
  %6172 = vrot.lane.b32.xlu0 %v102, 18
  %v6173 = vpop.permute.xlu0 %6172
  %6174 = vrot.lane.b32.xlu0 %v104, 18
  %v6175 = vpop.permute.xlu0 %6174
  %6176 = vrot.lane.b32.xlu0 %v105, 18
  %v6177 = vpop.permute.xlu0 %6176
  %6178 = vrot.lane.b32.xlu0 %v107, 18
  %v6179 = vpop.permute.xlu0 %6178
  %6180 = vrot.lane.b32.xlu0 %v108, 18
  %v6181 = vpop.permute.xlu0 %6180
  %6182 = vrot.lane.b32.xlu0 %v110, 18
  %v6183 = vpop.permute.xlu0 %6182
  %6184 = vrot.lane.b32.xlu0 %v111, 18
  %v6185 = vpop.permute.xlu0 %6184
  %6186 = vrot.lane.b32.xlu0 %v113, 18
  %v6187 = vpop.permute.xlu0 %6186
  %6188 = vrot.lane.b32.xlu0 %v114, 18
  %v6189 = vpop.permute.xlu0 %6188
  %6190 = vrot.lane.b32.xlu0 %v116, 18
  %v6191 = vpop.permute.xlu0 %6190
  %6192 = vrot.lane.b32.xlu0 %v117, 18
  %v6193 = vpop.permute.xlu0 %6192
  %6194 = vrot.lane.b32.xlu0 %v119, 18
  %v6195 = vpop.permute.xlu0 %6194
  %6196 = vrot.lane.b32.xlu0 %v120, 18
  %v6197 = vpop.permute.xlu0 %6196
  %6198 = vrot.lane.b32.xlu0 %v122, 18
  %v6199 = vpop.permute.xlu0 %6198
  %6200 = vrot.lane.b32.xlu0 %v123, 18
  %v6201 = vpop.permute.xlu0 %6200
  %6202 = vrot.lane.b32.xlu0 %v125, 18
  %v6203 = vpop.permute.xlu0 %6202
  %6204 = vrot.lane.b32.xlu0 %v126, 18
  %v6205 = vpop.permute.xlu0 %6204
  %6206 = vrot.lane.b32.xlu0 %v134, 18
  %v6207 = vpop.permute.xlu0 %6206
  %6208 = vrot.lane.b32.xlu0 %v135, 18
  %v6209 = vpop.permute.xlu0 %6208
  %6210 = vrot.lane.b32.xlu0 %v137, 18
  %v6211 = vpop.permute.xlu0 %6210
  %6212 = vrot.lane.b32.xlu0 %v138, 18
  %v6213 = vpop.permute.xlu0 %6212
  %6214 = vrot.lane.b32.xlu0 %v140, 18
  %v6215 = vpop.permute.xlu0 %6214
  %6216 = vrot.lane.b32.xlu0 %v141, 18
  %v6217 = vpop.permute.xlu0 %6216
  %6218 = vrot.lane.b32.xlu0 %v143, 18
  %v6219 = vpop.permute.xlu0 %6218
  %6220 = vrot.lane.b32.xlu0 %v144, 18
  %v6221 = vpop.permute.xlu0 %6220
  %6222 = vrot.lane.b32.xlu0 %v146, 18
  %v6223 = vpop.permute.xlu0 %6222
  %6224 = vrot.lane.b32.xlu0 %v147, 18
  %v6225 = vpop.permute.xlu0 %6224
  %6226 = vrot.lane.b32.xlu0 %v149, 18
  %v6227 = vpop.permute.xlu0 %6226
  %6228 = vrot.lane.b32.xlu0 %v150, 18
  %v6229 = vpop.permute.xlu0 %6228
  %6230 = vrot.lane.b32.xlu0 %v152, 18
  %v6231 = vpop.permute.xlu0 %6230
  %6232 = vrot.lane.b32.xlu0 %v153, 18
  %v6233 = vpop.permute.xlu0 %6232
  %6234 = vrot.lane.b32.xlu0 %v155, 18
  %v6235 = vpop.permute.xlu0 %6234
  %6236 = vrot.lane.b32.xlu0 %v156, 18
  %v6237 = vpop.permute.xlu0 %6236
  %6238 = vrot.lane.b32.xlu0 %v158, 18
  %v6239 = vpop.permute.xlu0 %6238
  %6240 = vrot.lane.b32.xlu0 %v159, 18
  %v6241 = vpop.permute.xlu0 %6240
  %6242 = vrot.lane.b32.xlu0 %v161, 18
  %v6243 = vpop.permute.xlu0 %6242
  %6244 = vrot.lane.b32.xlu0 %v162, 18
  %v6245 = vpop.permute.xlu0 %6244
  %6246 = vrot.lane.b32.xlu0 %v164, 18
  %v6247 = vpop.permute.xlu0 %6246
  %6248 = vrot.lane.b32.xlu0 %v165, 18
  %v6249 = vpop.permute.xlu0 %6248
  %6250 = vrot.lane.b32.xlu0 %v167, 18
  %v6251 = vpop.permute.xlu0 %6250
  %6252 = vrot.lane.b32.xlu0 %v168, 18
  %v6253 = vpop.permute.xlu0 %6252
  %6254 = vrot.lane.b32.xlu0 %v170, 18
  %v6255 = vpop.permute.xlu0 %6254
  %6256 = vrot.lane.b32.xlu0 %v171, 18
  %v6257 = vpop.permute.xlu0 %6256
  %6258 = vrot.lane.b32.xlu0 %v173, 18
  %v6259 = vpop.permute.xlu0 %6258
  %6260 = vrot.lane.b32.xlu0 %v174, 18
  %v6261 = vpop.permute.xlu0 %6260
  %6262 = vrot.lane.b32.xlu0 %v176, 18
  %v6263 = vpop.permute.xlu0 %6262
  %6264 = vrot.lane.b32.xlu0 %v177, 18
  %v6265 = vpop.permute.xlu0 %6264
  %6266 = vrot.lane.b32.xlu0 %v179, 18
  %v6267 = vpop.permute.xlu0 %6266
  %6268 = vrot.lane.b32.xlu0 %v180, 18
  %v6269 = vpop.permute.xlu0 %6268
  %6270 = vrot.lane.b32.xlu0 %v188, 18
  %v6271 = vpop.permute.xlu0 %6270
  %6272 = vrot.lane.b32.xlu0 %v189, 18
  %v6273 = vpop.permute.xlu0 %6272
  %6274 = vrot.lane.b32.xlu0 %v191, 18
  %v6275 = vpop.permute.xlu0 %6274
  %6276 = vrot.lane.b32.xlu0 %v192, 18
  %v6277 = vpop.permute.xlu0 %6276
  %6278 = vrot.lane.b32.xlu0 %v194, 18
  %v6279 = vpop.permute.xlu0 %6278
  %6280 = vrot.lane.b32.xlu0 %v195, 18
  %v6281 = vpop.permute.xlu0 %6280
  %6282 = vrot.lane.b32.xlu0 %v197, 18
  %v6283 = vpop.permute.xlu0 %6282
  %6284 = vrot.lane.b32.xlu0 %v198, 18
  %v6285 = vpop.permute.xlu0 %6284
  %6286 = vrot.lane.b32.xlu0 %v200, 18
  %v6287 = vpop.permute.xlu0 %6286
  %6288 = vrot.lane.b32.xlu0 %v201, 18
  %v6289 = vpop.permute.xlu0 %6288
  %6290 = vrot.lane.b32.xlu0 %v203, 18
  %v6291 = vpop.permute.xlu0 %6290
  %6292 = vrot.lane.b32.xlu0 %v204, 18
  %v6293 = vpop.permute.xlu0 %6292
  %6294 = vrot.lane.b32.xlu0 %v206, 18
  %v6295 = vpop.permute.xlu0 %6294
  %6296 = vrot.lane.b32.xlu0 %v207, 18
  %v6297 = vpop.permute.xlu0 %6296
  %6298 = vrot.lane.b32.xlu0 %v209, 18
  %v6299 = vpop.permute.xlu0 %6298
  %6300 = vrot.lane.b32.xlu0 %v210, 18
  %v6301 = vpop.permute.xlu0 %6300
  %6302 = vrot.lane.b32.xlu0 %v212, 18
  %v6303 = vpop.permute.xlu0 %6302
  %6304 = vrot.lane.b32.xlu0 %v213, 18
  %v6305 = vpop.permute.xlu0 %6304
  %6306 = vrot.lane.b32.xlu0 %v215, 18
  %v6307 = vpop.permute.xlu0 %6306
  %6308 = vrot.lane.b32.xlu0 %v216, 18
  %v6309 = vpop.permute.xlu0 %6308
  %6310 = vrot.lane.b32.xlu0 %v218, 18
  %v6311 = vpop.permute.xlu0 %6310
  %6312 = vrot.lane.b32.xlu0 %v219, 18
  %v6313 = vpop.permute.xlu0 %6312
  %6314 = vrot.lane.b32.xlu0 %v221, 18
  %v6315 = vpop.permute.xlu0 %6314
  %6316 = vrot.lane.b32.xlu0 %v222, 18
  %v6317 = vpop.permute.xlu0 %6316
  %6318 = vrot.lane.b32.xlu0 %v224, 18
  %v6319 = vpop.permute.xlu0 %6318
  %6320 = vrot.lane.b32.xlu0 %v225, 18
  %v6321 = vpop.permute.xlu0 %6320
  %6322 = vrot.lane.b32.xlu0 %v227, 18
  %v6323 = vpop.permute.xlu0 %6322
  %6324 = vrot.lane.b32.xlu0 %v228, 18
  %v6325 = vpop.permute.xlu0 %6324
  %6326 = vrot.lane.b32.xlu0 %v230, 18
  %v6327 = vpop.permute.xlu0 %6326
  %6328 = vrot.lane.b32.xlu0 %v231, 18
  %v6329 = vpop.permute.xlu0 %6328
  %6330 = vrot.lane.b32.xlu0 %v233, 18
  %v6331 = vpop.permute.xlu0 %6330
  %6332 = vrot.lane.b32.xlu0 %v234, 18
  %v6333 = vpop.permute.xlu0 %6332
  %6334 = vrot.lane.b32.xlu0 %v242, 18
  %v6335 = vpop.permute.xlu0 %6334
  %6336 = vrot.lane.b32.xlu0 %v243, 18
  %v6337 = vpop.permute.xlu0 %6336
  %6338 = vrot.lane.b32.xlu0 %v245, 18
  %v6339 = vpop.permute.xlu0 %6338
  %6340 = vrot.lane.b32.xlu0 %v246, 18
  %v6341 = vpop.permute.xlu0 %6340
  %6342 = vrot.lane.b32.xlu0 %v248, 18
  %v6343 = vpop.permute.xlu0 %6342
  %6344 = vrot.lane.b32.xlu0 %v249, 18
  %v6345 = vpop.permute.xlu0 %6344
  %6346 = vrot.lane.b32.xlu0 %v251, 18
  %v6347 = vpop.permute.xlu0 %6346
  %6348 = vrot.lane.b32.xlu0 %v252, 18
  %v6349 = vpop.permute.xlu0 %6348
  %6350 = vrot.lane.b32.xlu0 %v254, 18
  %v6351 = vpop.permute.xlu0 %6350
  %6352 = vrot.lane.b32.xlu0 %v255, 18
  %v6353 = vpop.permute.xlu0 %6352
  %6354 = vrot.lane.b32.xlu0 %v257, 18
  %v6355 = vpop.permute.xlu0 %6354
  %6356 = vrot.lane.b32.xlu0 %v258, 18
  %v6357 = vpop.permute.xlu0 %6356
  %6358 = vrot.lane.b32.xlu0 %v260, 18
  %v6359 = vpop.permute.xlu0 %6358
  %6360 = vrot.lane.b32.xlu0 %v261, 18
  %v6361 = vpop.permute.xlu0 %6360
  %6362 = vrot.lane.b32.xlu0 %v263, 18
  %v6363 = vpop.permute.xlu0 %6362
  %6364 = vrot.lane.b32.xlu0 %v264, 18
  %v6365 = vpop.permute.xlu0 %6364
  %6366 = vrot.lane.b32.xlu0 %v266, 18
  %v6367 = vpop.permute.xlu0 %6366
  %6368 = vrot.lane.b32.xlu0 %v267, 18
  %v6369 = vpop.permute.xlu0 %6368
  %6370 = vrot.lane.b32.xlu0 %v269, 18
  %v6371 = vpop.permute.xlu0 %6370
  %6372 = vrot.lane.b32.xlu0 %v270, 18
  %v6373 = vpop.permute.xlu0 %6372
  %6374 = vrot.lane.b32.xlu0 %v272, 18
  %v6375 = vpop.permute.xlu0 %6374
  %6376 = vrot.lane.b32.xlu0 %v273, 18
  %v6377 = vpop.permute.xlu0 %6376
  %6378 = vrot.lane.b32.xlu0 %v275, 18
  %v6379 = vpop.permute.xlu0 %6378
  %6380 = vrot.lane.b32.xlu0 %v276, 18
  %v6381 = vpop.permute.xlu0 %6380
  %6382 = vrot.lane.b32.xlu0 %v278, 18
  %v6383 = vpop.permute.xlu0 %6382
  %6384 = vrot.lane.b32.xlu0 %v279, 18
  %v6385 = vpop.permute.xlu0 %6384
  %6386 = vrot.lane.b32.xlu0 %v281, 18
  %v6387 = vpop.permute.xlu0 %6386
  %6388 = vrot.lane.b32.xlu0 %v282, 18
  %v6389 = vpop.permute.xlu0 %6388
  %6390 = vrot.lane.b32.xlu0 %v284, 18
  %v6391 = vpop.permute.xlu0 %6390
  %6392 = vrot.lane.b32.xlu0 %v285, 18
  %v6393 = vpop.permute.xlu0 %6392
  %6394 = vrot.lane.b32.xlu0 %v287, 18
  %v6395 = vpop.permute.xlu0 %6394
  %6396 = vrot.lane.b32.xlu0 %v288, 18
  %v6397 = vpop.permute.xlu0 %6396
  %6398 = vrot.lane.b32.xlu0 %v296, 18
  %v6399 = vpop.permute.xlu0 %6398
  %6400 = vrot.lane.b32.xlu0 %v297, 18
  %v6401 = vpop.permute.xlu0 %6400
  %6402 = vrot.lane.b32.xlu0 %v299, 18
  %v6403 = vpop.permute.xlu0 %6402
  %6404 = vrot.lane.b32.xlu0 %v300, 18
  %v6405 = vpop.permute.xlu0 %6404
  %6406 = vrot.lane.b32.xlu0 %v302, 18
  %v6407 = vpop.permute.xlu0 %6406
  %6408 = vrot.lane.b32.xlu0 %v303, 18
  %v6409 = vpop.permute.xlu0 %6408
  %6410 = vrot.lane.b32.xlu0 %v305, 18
  %v6411 = vpop.permute.xlu0 %6410
  %6412 = vrot.lane.b32.xlu0 %v306, 18
  %v6413 = vpop.permute.xlu0 %6412
  %6414 = vrot.lane.b32.xlu0 %v308, 18
  %v6415 = vpop.permute.xlu0 %6414
  %6416 = vrot.lane.b32.xlu0 %v309, 18
  %v6417 = vpop.permute.xlu0 %6416
  %6418 = vrot.lane.b32.xlu0 %v311, 18
  %v6419 = vpop.permute.xlu0 %6418
  %6420 = vrot.lane.b32.xlu0 %v312, 18
  %v6421 = vpop.permute.xlu0 %6420
  %6422 = vrot.lane.b32.xlu0 %v314, 18
  %v6423 = vpop.permute.xlu0 %6422
  %6424 = vrot.lane.b32.xlu0 %v315, 18
  %v6425 = vpop.permute.xlu0 %6424
  %6426 = vrot.lane.b32.xlu0 %v317, 18
  %v6427 = vpop.permute.xlu0 %6426
  %6428 = vrot.lane.b32.xlu0 %v318, 18
  %v6429 = vpop.permute.xlu0 %6428
  %6430 = vrot.lane.b32.xlu0 %v320, 18
  %v6431 = vpop.permute.xlu0 %6430
  %6432 = vrot.lane.b32.xlu0 %v321, 18
  %v6433 = vpop.permute.xlu0 %6432
  %6434 = vrot.lane.b32.xlu0 %v323, 18
  %v6435 = vpop.permute.xlu0 %6434
  %6436 = vrot.lane.b32.xlu0 %v324, 18
  %v6437 = vpop.permute.xlu0 %6436
  %6438 = vrot.lane.b32.xlu0 %v326, 18
  %v6439 = vpop.permute.xlu0 %6438
  %6440 = vrot.lane.b32.xlu0 %v327, 18
  %v6441 = vpop.permute.xlu0 %6440
  %6442 = vrot.lane.b32.xlu0 %v329, 18
  %v6443 = vpop.permute.xlu0 %6442
  %6444 = vrot.lane.b32.xlu0 %v330, 18
  %v6445 = vpop.permute.xlu0 %6444
  %6446 = vrot.lane.b32.xlu0 %v332, 18
  %v6447 = vpop.permute.xlu0 %6446
  %6448 = vrot.lane.b32.xlu0 %v333, 18
  %v6449 = vpop.permute.xlu0 %6448
  %6450 = vrot.lane.b32.xlu0 %v335, 18
  %v6451 = vpop.permute.xlu0 %6450
  %6452 = vrot.lane.b32.xlu0 %v336, 18
  %v6453 = vpop.permute.xlu0 %6452
  %6454 = vrot.lane.b32.xlu0 %v338, 18
  %v6455 = vpop.permute.xlu0 %6454
  %6456 = vrot.lane.b32.xlu0 %v339, 18
  %v6457 = vpop.permute.xlu0 %6456
  %6458 = vrot.lane.b32.xlu0 %v341, 18
  %v6459 = vpop.permute.xlu0 %6458
  %6460 = vrot.lane.b32.xlu0 %v342, 18
  %v6461 = vpop.permute.xlu0 %6460
  %6462 = vrot.lane.b32.xlu0 %v350, 18
  %v6463 = vpop.permute.xlu0 %6462
  %6464 = vrot.lane.b32.xlu0 %v351, 18
  %v6465 = vpop.permute.xlu0 %6464
  %6466 = vrot.lane.b32.xlu0 %v353, 18
  %v6467 = vpop.permute.xlu0 %6466
  %6468 = vrot.lane.b32.xlu0 %v354, 18
  %v6469 = vpop.permute.xlu0 %6468
  %6470 = vrot.lane.b32.xlu0 %v356, 18
  %v6471 = vpop.permute.xlu0 %6470
  %6472 = vrot.lane.b32.xlu0 %v357, 18
  %v6473 = vpop.permute.xlu0 %6472
  %6474 = vrot.lane.b32.xlu0 %v359, 18
  %v6475 = vpop.permute.xlu0 %6474
  %6476 = vrot.lane.b32.xlu0 %v360, 18
  %v6477 = vpop.permute.xlu0 %6476
  %6478 = vrot.lane.b32.xlu0 %v362, 18
  %v6479 = vpop.permute.xlu0 %6478
  %6480 = vrot.lane.b32.xlu0 %v363, 18
  %v6481 = vpop.permute.xlu0 %6480
  %6482 = vrot.lane.b32.xlu0 %v365, 18
  %v6483 = vpop.permute.xlu0 %6482
  %6484 = vrot.lane.b32.xlu0 %v366, 18
  %v6485 = vpop.permute.xlu0 %6484
  %6486 = vrot.lane.b32.xlu0 %v368, 18
  %v6487 = vpop.permute.xlu0 %6486
  %6488 = vrot.lane.b32.xlu0 %v369, 18
  %v6489 = vpop.permute.xlu0 %6488
  %6490 = vrot.lane.b32.xlu0 %v371, 18
  %v6491 = vpop.permute.xlu0 %6490
  %6492 = vrot.lane.b32.xlu0 %v372, 18
  %v6493 = vpop.permute.xlu0 %6492
  %6494 = vrot.lane.b32.xlu0 %v374, 18
  %v6495 = vpop.permute.xlu0 %6494
  %6496 = vrot.lane.b32.xlu0 %v375, 18
  %v6497 = vpop.permute.xlu0 %6496
  %6498 = vrot.lane.b32.xlu0 %v377, 18
  %v6499 = vpop.permute.xlu0 %6498
  %6500 = vrot.lane.b32.xlu0 %v378, 18
  %v6501 = vpop.permute.xlu0 %6500
  %6502 = vrot.lane.b32.xlu0 %v380, 18
  %v6503 = vpop.permute.xlu0 %6502
  %6504 = vrot.lane.b32.xlu0 %v381, 18
  %v6505 = vpop.permute.xlu0 %6504
  %6506 = vrot.lane.b32.xlu0 %v383, 18
  %v6507 = vpop.permute.xlu0 %6506
  %6508 = vrot.lane.b32.xlu0 %v384, 18
  %v6509 = vpop.permute.xlu0 %6508
  %6510 = vrot.lane.b32.xlu0 %v386, 18
  %v6511 = vpop.permute.xlu0 %6510
  %6512 = vrot.lane.b32.xlu0 %v387, 18
  %v6513 = vpop.permute.xlu0 %6512
  %6514 = vrot.lane.b32.xlu0 %v389, 18
  %v6515 = vpop.permute.xlu0 %6514
  %6516 = vrot.lane.b32.xlu0 %v390, 18
  %v6517 = vpop.permute.xlu0 %6516
  %6518 = vrot.lane.b32.xlu0 %v392, 18
  %v6519 = vpop.permute.xlu0 %6518
  %6520 = vrot.lane.b32.xlu0 %v393, 18
  %v6521 = vpop.permute.xlu0 %6520
  %6522 = vrot.lane.b32.xlu0 %v395, 18
  %v6523 = vpop.permute.xlu0 %6522
  %6524 = vrot.lane.b32.xlu0 %v396, 18
  %v6525 = vpop.permute.xlu0 %6524
  %6526 = vrot.lane.b32.xlu0 %v404, 18
  %v6527 = vpop.permute.xlu0 %6526
  %6528 = vrot.lane.b32.xlu0 %v405, 18
  %v6529 = vpop.permute.xlu0 %6528
  %6530 = vrot.lane.b32.xlu0 %v407, 18
  %v6531 = vpop.permute.xlu0 %6530
  %6532 = vrot.lane.b32.xlu0 %v408, 18
  %v6533 = vpop.permute.xlu0 %6532
  %6534 = vrot.lane.b32.xlu0 %v410, 18
  %v6535 = vpop.permute.xlu0 %6534
  %6536 = vrot.lane.b32.xlu0 %v411, 18
  %v6537 = vpop.permute.xlu0 %6536
  %6538 = vrot.lane.b32.xlu0 %v413, 18
  %v6539 = vpop.permute.xlu0 %6538
  %6540 = vrot.lane.b32.xlu0 %v414, 18
  %v6541 = vpop.permute.xlu0 %6540
  %6542 = vrot.lane.b32.xlu0 %v416, 18
  %v6543 = vpop.permute.xlu0 %6542
  %6544 = vrot.lane.b32.xlu0 %v417, 18
  %v6545 = vpop.permute.xlu0 %6544
  %6546 = vrot.lane.b32.xlu0 %v419, 18
  %v6547 = vpop.permute.xlu0 %6546
  %6548 = vrot.lane.b32.xlu0 %v420, 18
  %v6549 = vpop.permute.xlu0 %6548
  %6550 = vrot.lane.b32.xlu0 %v422, 18
  %v6551 = vpop.permute.xlu0 %6550
  %6552 = vrot.lane.b32.xlu0 %v423, 18
  %v6553 = vpop.permute.xlu0 %6552
  %6554 = vrot.lane.b32.xlu0 %v425, 18
  %v6555 = vpop.permute.xlu0 %6554
  %6556 = vrot.lane.b32.xlu0 %v426, 18
  %v6557 = vpop.permute.xlu0 %6556
  %6558 = vrot.lane.b32.xlu0 %v428, 18
  %v6559 = vpop.permute.xlu0 %6558
  %6560 = vrot.lane.b32.xlu0 %v429, 18
  %v6561 = vpop.permute.xlu0 %6560
  %6562 = vrot.lane.b32.xlu0 %v431, 18
  %v6563 = vpop.permute.xlu0 %6562
  %6564 = vrot.lane.b32.xlu0 %v432, 18
  %v6565 = vpop.permute.xlu0 %6564
  %6566 = vrot.lane.b32.xlu0 %v434, 18
  %v6567 = vpop.permute.xlu0 %6566
  %6568 = vrot.lane.b32.xlu0 %v435, 18
  %v6569 = vpop.permute.xlu0 %6568
  %6570 = vrot.lane.b32.xlu0 %v437, 18
  %v6571 = vpop.permute.xlu0 %6570
  %6572 = vrot.lane.b32.xlu0 %v438, 18
  %v6573 = vpop.permute.xlu0 %6572
  %6574 = vrot.lane.b32.xlu0 %v440, 18
  %v6575 = vpop.permute.xlu0 %6574
  %6576 = vrot.lane.b32.xlu0 %v441, 18
  %v6577 = vpop.permute.xlu0 %6576
  %6578 = vrot.lane.b32.xlu0 %v443, 18
  %v6579 = vpop.permute.xlu0 %6578
  %6580 = vrot.lane.b32.xlu0 %v444, 18
  %v6581 = vpop.permute.xlu0 %6580
  %6582 = vrot.lane.b32.xlu0 %v446, 18
  %v6583 = vpop.permute.xlu0 %6582
  %6584 = vrot.lane.b32.xlu0 %v447, 18
  %v6585 = vpop.permute.xlu0 %6584
  %6586 = vrot.lane.b32.xlu0 %v449, 18
  %v6587 = vpop.permute.xlu0 %6586
  %6588 = vrot.lane.b32.xlu0 %v450, 18
  %v6589 = vpop.permute.xlu0 %6588
  %v6854 = vrot.slane %v71, 1
  %v6855 = vrot.slane %v72, 1
  %v6856 = vsel %vm836, %v6854, %v6855
  %v6857 = vrot.slane %v73, 1
  %v6858 = vsel %vm836, %v6855, %v6857
  %v6859 = vrot.slane %v125, 1
  %v6860 = vrot.slane %v126, 1
  %v6861 = vsel %vm836, %v6859, %v6860
  %v6862 = vrot.slane %v127, 1
  %v6863 = vsel %vm836, %v6860, %v6862
  %v6864 = vrot.slane %v179, 1
  %v6865 = vrot.slane %v180, 1
  %v6866 = vsel %vm836, %v6864, %v6865
  %v6867 = vrot.slane %v181, 1
  %v6868 = vsel %vm836, %v6865, %v6867
  %v6869 = vrot.slane %v233, 1
  %v6870 = vrot.slane %v234, 1
  %v6871 = vsel %vm836, %v6869, %v6870
  %v6872 = vrot.slane %v235, 1
  %v6873 = vsel %vm836, %v6870, %v6872
  %v6874 = vrot.slane %v287, 1
  %v6875 = vrot.slane %v288, 1
  %v6876 = vsel %vm836, %v6874, %v6875
  %v6877 = vrot.slane %v289, 1
  %v6878 = vsel %vm836, %v6875, %v6877
  %v6879 = vrot.slane %v341, 1
  %v6880 = vrot.slane %v342, 1
  %v6881 = vsel %vm836, %v6879, %v6880
  %v6882 = vrot.slane %v343, 1
  %v6883 = vsel %vm836, %v6880, %v6882
  %v6884 = vrot.slane %v395, 1
  %v6885 = vrot.slane %v396, 1
  %v6886 = vsel %vm836, %v6884, %v6885
  %v6887 = vrot.slane %v397, 1
  %v6888 = vsel %vm836, %v6885, %v6887
  %v6889 = vrot.slane %v449, 1
  %v6890 = vrot.slane %v450, 1
  %v6891 = vsel %vm836, %v6889, %v6890
  %v6892 = vrot.slane %v451, 1
  %v6893 = vsel %vm836, %v6890, %v6892
  %6894 = vrot.lane.b32.xlu0 %v849, 21
  %v6895 = vpop.permute.xlu0 %6894
  %6896 = vrot.lane.b32.xlu0 %v851, 21
  %v6897 = vpop.permute.xlu0 %6896
  %6898 = vrot.lane.b32.xlu0 %v854, 21
  %v6899 = vpop.permute.xlu0 %6898
  %6900 = vrot.lane.b32.xlu0 %v856, 21
  %v6901 = vpop.permute.xlu0 %6900
  %6902 = vrot.lane.b32.xlu0 %v859, 21
  %v6903 = vpop.permute.xlu0 %6902
  %6904 = vrot.lane.b32.xlu0 %v861, 21
  %v6905 = vpop.permute.xlu0 %6904
  %6906 = vrot.lane.b32.xlu0 %v864, 21
  %v6907 = vpop.permute.xlu0 %6906
  %6908 = vrot.lane.b32.xlu0 %v866, 21
  %v6909 = vpop.permute.xlu0 %6908
  %6910 = vrot.lane.b32.xlu0 %v869, 21
  %v6911 = vpop.permute.xlu0 %6910
  %6912 = vrot.lane.b32.xlu0 %v871, 21
  %v6913 = vpop.permute.xlu0 %6912
  %6914 = vrot.lane.b32.xlu0 %v874, 21
  %v6915 = vpop.permute.xlu0 %6914
  %6916 = vrot.lane.b32.xlu0 %v876, 21
  %v6917 = vpop.permute.xlu0 %6916
  %6918 = vrot.lane.b32.xlu0 %v879, 21
  %v6919 = vpop.permute.xlu0 %6918
  %6920 = vrot.lane.b32.xlu0 %v881, 21
  %v6921 = vpop.permute.xlu0 %6920
  %6922 = vrot.lane.b32.xlu0 %v884, 21
  %v6923 = vpop.permute.xlu0 %6922
  %6924 = vrot.lane.b32.xlu0 %v886, 21
  %v6925 = vpop.permute.xlu0 %6924
  %6926 = vrot.lane.b32.xlu0 %v889, 21
  %v6927 = vpop.permute.xlu0 %6926
  %6928 = vrot.lane.b32.xlu0 %v891, 21
  %v6929 = vpop.permute.xlu0 %6928
  %6930 = vrot.lane.b32.xlu0 %v894, 21
  %v6931 = vpop.permute.xlu0 %6930
  %6932 = vrot.lane.b32.xlu0 %v896, 21
  %v6933 = vpop.permute.xlu0 %6932
  %6934 = vrot.lane.b32.xlu0 %v899, 21
  %v6935 = vpop.permute.xlu0 %6934
  %6936 = vrot.lane.b32.xlu0 %v901, 21
  %v6937 = vpop.permute.xlu0 %6936
  %6938 = vrot.lane.b32.xlu0 %v904, 21
  %v6939 = vpop.permute.xlu0 %6938
  %6940 = vrot.lane.b32.xlu0 %v906, 21
  %v6941 = vpop.permute.xlu0 %6940
  %6942 = vrot.lane.b32.xlu0 %v909, 21
  %v6943 = vpop.permute.xlu0 %6942
  %6944 = vrot.lane.b32.xlu0 %v911, 21
  %v6945 = vpop.permute.xlu0 %6944
  %6946 = vrot.lane.b32.xlu0 %v914, 21
  %v6947 = vpop.permute.xlu0 %6946
  %6948 = vrot.lane.b32.xlu0 %v916, 21
  %v6949 = vpop.permute.xlu0 %6948
  %6950 = vrot.lane.b32.xlu0 %v4448, 21
  %v6951 = vpop.permute.xlu0 %6950
  %6952 = vrot.lane.b32.xlu0 %v4450, 21
  %v6953 = vpop.permute.xlu0 %6952
  %6954 = vrot.lane.b32.xlu0 %v6856, 21
  %v6955 = vpop.permute.xlu0 %6954
  %6956 = vrot.lane.b32.xlu0 %v6858, 21
  %v6957 = vpop.permute.xlu0 %6956
  %6958 = vrot.lane.b32.xlu0 %v929, 21
  %v6959 = vpop.permute.xlu0 %6958
  %6960 = vrot.lane.b32.xlu0 %v931, 21
  %v6961 = vpop.permute.xlu0 %6960
  %6962 = vrot.lane.b32.xlu0 %v934, 21
  %v6963 = vpop.permute.xlu0 %6962
  %6964 = vrot.lane.b32.xlu0 %v936, 21
  %v6965 = vpop.permute.xlu0 %6964
  %6966 = vrot.lane.b32.xlu0 %v939, 21
  %v6967 = vpop.permute.xlu0 %6966
  %6968 = vrot.lane.b32.xlu0 %v941, 21
  %v6969 = vpop.permute.xlu0 %6968
  %6970 = vrot.lane.b32.xlu0 %v944, 21
  %v6971 = vpop.permute.xlu0 %6970
  %6972 = vrot.lane.b32.xlu0 %v946, 21
  %v6973 = vpop.permute.xlu0 %6972
  %6974 = vrot.lane.b32.xlu0 %v949, 21
  %v6975 = vpop.permute.xlu0 %6974
  %6976 = vrot.lane.b32.xlu0 %v951, 21
  %v6977 = vpop.permute.xlu0 %6976
  %6978 = vrot.lane.b32.xlu0 %v954, 21
  %v6979 = vpop.permute.xlu0 %6978
  %6980 = vrot.lane.b32.xlu0 %v956, 21
  %v6981 = vpop.permute.xlu0 %6980
  %6982 = vrot.lane.b32.xlu0 %v959, 21
  %v6983 = vpop.permute.xlu0 %6982
  %6984 = vrot.lane.b32.xlu0 %v961, 21
  %v6985 = vpop.permute.xlu0 %6984
  %6986 = vrot.lane.b32.xlu0 %v964, 21
  %v6987 = vpop.permute.xlu0 %6986
  %6988 = vrot.lane.b32.xlu0 %v966, 21
  %v6989 = vpop.permute.xlu0 %6988
  %6990 = vrot.lane.b32.xlu0 %v969, 21
  %v6991 = vpop.permute.xlu0 %6990
  %6992 = vrot.lane.b32.xlu0 %v971, 21
  %v6993 = vpop.permute.xlu0 %6992
  %6994 = vrot.lane.b32.xlu0 %v974, 21
  %v6995 = vpop.permute.xlu0 %6994
  %6996 = vrot.lane.b32.xlu0 %v976, 21
  %v6997 = vpop.permute.xlu0 %6996
  %6998 = vrot.lane.b32.xlu0 %v979, 21
  %v6999 = vpop.permute.xlu0 %6998
  %7000 = vrot.lane.b32.xlu0 %v981, 21
  %v7001 = vpop.permute.xlu0 %7000
  %7002 = vrot.lane.b32.xlu0 %v984, 21
  %v7003 = vpop.permute.xlu0 %7002
  %7004 = vrot.lane.b32.xlu0 %v986, 21
  %v7005 = vpop.permute.xlu0 %7004
  %7006 = vrot.lane.b32.xlu0 %v989, 21
  %v7007 = vpop.permute.xlu0 %7006
  %7008 = vrot.lane.b32.xlu0 %v991, 21
  %v7009 = vpop.permute.xlu0 %7008
  %7010 = vrot.lane.b32.xlu0 %v994, 21
  %v7011 = vpop.permute.xlu0 %7010
  %7012 = vrot.lane.b32.xlu0 %v996, 21
  %v7013 = vpop.permute.xlu0 %7012
  %7014 = vrot.lane.b32.xlu0 %v4453, 21
  %v7015 = vpop.permute.xlu0 %7014
  %7016 = vrot.lane.b32.xlu0 %v4455, 21
  %v7017 = vpop.permute.xlu0 %7016
  %7018 = vrot.lane.b32.xlu0 %v6861, 21
  %v7019 = vpop.permute.xlu0 %7018
  %7020 = vrot.lane.b32.xlu0 %v6863, 21
  %v7021 = vpop.permute.xlu0 %7020
  %7022 = vrot.lane.b32.xlu0 %v1009, 21
  %v7023 = vpop.permute.xlu0 %7022
  %7024 = vrot.lane.b32.xlu0 %v1011, 21
  %v7025 = vpop.permute.xlu0 %7024
  %7026 = vrot.lane.b32.xlu0 %v1014, 21
  %v7027 = vpop.permute.xlu0 %7026
  %7028 = vrot.lane.b32.xlu0 %v1016, 21
  %v7029 = vpop.permute.xlu0 %7028
  %7030 = vrot.lane.b32.xlu0 %v1019, 21
  %v7031 = vpop.permute.xlu0 %7030
  %7032 = vrot.lane.b32.xlu0 %v1021, 21
  %v7033 = vpop.permute.xlu0 %7032
  %7034 = vrot.lane.b32.xlu0 %v1024, 21
  %v7035 = vpop.permute.xlu0 %7034
  %7036 = vrot.lane.b32.xlu0 %v1026, 21
  %v7037 = vpop.permute.xlu0 %7036
  %7038 = vrot.lane.b32.xlu0 %v1029, 21
  %v7039 = vpop.permute.xlu0 %7038
  %7040 = vrot.lane.b32.xlu0 %v1031, 21
  %v7041 = vpop.permute.xlu0 %7040
  %7042 = vrot.lane.b32.xlu0 %v1034, 21
  %v7043 = vpop.permute.xlu0 %7042
  %7044 = vrot.lane.b32.xlu0 %v1036, 21
  %v7045 = vpop.permute.xlu0 %7044
  %7046 = vrot.lane.b32.xlu0 %v1039, 21
  %v7047 = vpop.permute.xlu0 %7046
  %7048 = vrot.lane.b32.xlu0 %v1041, 21
  %v7049 = vpop.permute.xlu0 %7048
  %7050 = vrot.lane.b32.xlu0 %v1044, 21
  %v7051 = vpop.permute.xlu0 %7050
  %7052 = vrot.lane.b32.xlu0 %v1046, 21
  %v7053 = vpop.permute.xlu0 %7052
  %7054 = vrot.lane.b32.xlu0 %v1049, 21
  %v7055 = vpop.permute.xlu0 %7054
  %7056 = vrot.lane.b32.xlu0 %v1051, 21
  %v7057 = vpop.permute.xlu0 %7056
  %7058 = vrot.lane.b32.xlu0 %v1054, 21
  %v7059 = vpop.permute.xlu0 %7058
  %7060 = vrot.lane.b32.xlu0 %v1056, 21
  %v7061 = vpop.permute.xlu0 %7060
  %7062 = vrot.lane.b32.xlu0 %v1059, 21
  %v7063 = vpop.permute.xlu0 %7062
  %7064 = vrot.lane.b32.xlu0 %v1061, 21
  %v7065 = vpop.permute.xlu0 %7064
  %7066 = vrot.lane.b32.xlu0 %v1064, 21
  %v7067 = vpop.permute.xlu0 %7066
  %7068 = vrot.lane.b32.xlu0 %v1066, 21
  %v7069 = vpop.permute.xlu0 %7068
  %7070 = vrot.lane.b32.xlu0 %v1069, 21
  %v7071 = vpop.permute.xlu0 %7070
  %7072 = vrot.lane.b32.xlu0 %v1071, 21
  %v7073 = vpop.permute.xlu0 %7072
  %7074 = vrot.lane.b32.xlu0 %v1074, 21
  %v7075 = vpop.permute.xlu0 %7074
  %7076 = vrot.lane.b32.xlu0 %v1076, 21
  %v7077 = vpop.permute.xlu0 %7076
  %7078 = vrot.lane.b32.xlu0 %v4458, 21
  %v7079 = vpop.permute.xlu0 %7078
  %7080 = vrot.lane.b32.xlu0 %v4460, 21
  %v7081 = vpop.permute.xlu0 %7080
  %7082 = vrot.lane.b32.xlu0 %v6866, 21
  %v7083 = vpop.permute.xlu0 %7082
  %7084 = vrot.lane.b32.xlu0 %v6868, 21
  %v7085 = vpop.permute.xlu0 %7084
  %7086 = vrot.lane.b32.xlu0 %v1089, 21
  %v7087 = vpop.permute.xlu0 %7086
  %7088 = vrot.lane.b32.xlu0 %v1091, 21
  %v7089 = vpop.permute.xlu0 %7088
  %7090 = vrot.lane.b32.xlu0 %v1094, 21
  %v7091 = vpop.permute.xlu0 %7090
  %7092 = vrot.lane.b32.xlu0 %v1096, 21
  %v7093 = vpop.permute.xlu0 %7092
  %7094 = vrot.lane.b32.xlu0 %v1099, 21
  %v7095 = vpop.permute.xlu0 %7094
  %7096 = vrot.lane.b32.xlu0 %v1101, 21
  %v7097 = vpop.permute.xlu0 %7096
  %7098 = vrot.lane.b32.xlu0 %v1104, 21
  %v7099 = vpop.permute.xlu0 %7098
  %7100 = vrot.lane.b32.xlu0 %v1106, 21
  %v7101 = vpop.permute.xlu0 %7100
  %7102 = vrot.lane.b32.xlu0 %v1109, 21
  %v7103 = vpop.permute.xlu0 %7102
  %7104 = vrot.lane.b32.xlu0 %v1111, 21
  %v7105 = vpop.permute.xlu0 %7104
  %7106 = vrot.lane.b32.xlu0 %v1114, 21
  %v7107 = vpop.permute.xlu0 %7106
  %7108 = vrot.lane.b32.xlu0 %v1116, 21
  %v7109 = vpop.permute.xlu0 %7108
  %7110 = vrot.lane.b32.xlu0 %v1119, 21
  %v7111 = vpop.permute.xlu0 %7110
  %7112 = vrot.lane.b32.xlu0 %v1121, 21
  %v7113 = vpop.permute.xlu0 %7112
  %7114 = vrot.lane.b32.xlu0 %v1124, 21
  %v7115 = vpop.permute.xlu0 %7114
  %7116 = vrot.lane.b32.xlu0 %v1126, 21
  %v7117 = vpop.permute.xlu0 %7116
  %7118 = vrot.lane.b32.xlu0 %v1129, 21
  %v7119 = vpop.permute.xlu0 %7118
  %7120 = vrot.lane.b32.xlu0 %v1131, 21
  %v7121 = vpop.permute.xlu0 %7120
  %7122 = vrot.lane.b32.xlu0 %v1134, 21
  %v7123 = vpop.permute.xlu0 %7122
  %7124 = vrot.lane.b32.xlu0 %v1136, 21
  %v7125 = vpop.permute.xlu0 %7124
  %7126 = vrot.lane.b32.xlu0 %v1139, 21
  %v7127 = vpop.permute.xlu0 %7126
  %7128 = vrot.lane.b32.xlu0 %v1141, 21
  %v7129 = vpop.permute.xlu0 %7128
  %7130 = vrot.lane.b32.xlu0 %v1144, 21
  %v7131 = vpop.permute.xlu0 %7130
  %7132 = vrot.lane.b32.xlu0 %v1146, 21
  %v7133 = vpop.permute.xlu0 %7132
  %7134 = vrot.lane.b32.xlu0 %v1149, 21
  %v7135 = vpop.permute.xlu0 %7134
  %7136 = vrot.lane.b32.xlu0 %v1151, 21
  %v7137 = vpop.permute.xlu0 %7136
  %7138 = vrot.lane.b32.xlu0 %v1154, 21
  %v7139 = vpop.permute.xlu0 %7138
  %7140 = vrot.lane.b32.xlu0 %v1156, 21
  %v7141 = vpop.permute.xlu0 %7140
  %7142 = vrot.lane.b32.xlu0 %v4463, 21
  %v7143 = vpop.permute.xlu0 %7142
  %7144 = vrot.lane.b32.xlu0 %v4465, 21
  %v7145 = vpop.permute.xlu0 %7144
  %7146 = vrot.lane.b32.xlu0 %v6871, 21
  %v7147 = vpop.permute.xlu0 %7146
  %7148 = vrot.lane.b32.xlu0 %v6873, 21
  %v7149 = vpop.permute.xlu0 %7148
  %7150 = vrot.lane.b32.xlu0 %v1169, 21
  %v7151 = vpop.permute.xlu0 %7150
  %7152 = vrot.lane.b32.xlu0 %v1171, 21
  %v7153 = vpop.permute.xlu0 %7152
  %7154 = vrot.lane.b32.xlu0 %v1174, 21
  %v7155 = vpop.permute.xlu0 %7154
  %7156 = vrot.lane.b32.xlu0 %v1176, 21
  %v7157 = vpop.permute.xlu0 %7156
  %7158 = vrot.lane.b32.xlu0 %v1179, 21
  %v7159 = vpop.permute.xlu0 %7158
  %7160 = vrot.lane.b32.xlu0 %v1181, 21
  %v7161 = vpop.permute.xlu0 %7160
  %7162 = vrot.lane.b32.xlu0 %v1184, 21
  %v7163 = vpop.permute.xlu0 %7162
  %7164 = vrot.lane.b32.xlu0 %v1186, 21
  %v7165 = vpop.permute.xlu0 %7164
  %7166 = vrot.lane.b32.xlu0 %v1189, 21
  %v7167 = vpop.permute.xlu0 %7166
  %7168 = vrot.lane.b32.xlu0 %v1191, 21
  %v7169 = vpop.permute.xlu0 %7168
  %7170 = vrot.lane.b32.xlu0 %v1194, 21
  %v7171 = vpop.permute.xlu0 %7170
  %7172 = vrot.lane.b32.xlu0 %v1196, 21
  %v7173 = vpop.permute.xlu0 %7172
  %7174 = vrot.lane.b32.xlu0 %v1199, 21
  %v7175 = vpop.permute.xlu0 %7174
  %7176 = vrot.lane.b32.xlu0 %v1201, 21
  %v7177 = vpop.permute.xlu0 %7176
  %7178 = vrot.lane.b32.xlu0 %v1204, 21
  %v7179 = vpop.permute.xlu0 %7178
  %7180 = vrot.lane.b32.xlu0 %v1206, 21
  %v7181 = vpop.permute.xlu0 %7180
  %7182 = vrot.lane.b32.xlu0 %v1209, 21
  %v7183 = vpop.permute.xlu0 %7182
  %7184 = vrot.lane.b32.xlu0 %v1211, 21
  %v7185 = vpop.permute.xlu0 %7184
  %7186 = vrot.lane.b32.xlu0 %v1214, 21
  %v7187 = vpop.permute.xlu0 %7186
  %7188 = vrot.lane.b32.xlu0 %v1216, 21
  %v7189 = vpop.permute.xlu0 %7188
  %7190 = vrot.lane.b32.xlu0 %v1219, 21
  %v7191 = vpop.permute.xlu0 %7190
  %7192 = vrot.lane.b32.xlu0 %v1221, 21
  %v7193 = vpop.permute.xlu0 %7192
  %7194 = vrot.lane.b32.xlu0 %v1224, 21
  %v7195 = vpop.permute.xlu0 %7194
  %7196 = vrot.lane.b32.xlu0 %v1226, 21
  %v7197 = vpop.permute.xlu0 %7196
  %7198 = vrot.lane.b32.xlu0 %v1229, 21
  %v7199 = vpop.permute.xlu0 %7198
  %7200 = vrot.lane.b32.xlu0 %v1231, 21
  %v7201 = vpop.permute.xlu0 %7200
  %7202 = vrot.lane.b32.xlu0 %v1234, 21
  %v7203 = vpop.permute.xlu0 %7202
  %7204 = vrot.lane.b32.xlu0 %v1236, 21
  %v7205 = vpop.permute.xlu0 %7204
  %7206 = vrot.lane.b32.xlu0 %v4468, 21
  %v7207 = vpop.permute.xlu0 %7206
  %7208 = vrot.lane.b32.xlu0 %v4470, 21
  %v7209 = vpop.permute.xlu0 %7208
  %7210 = vrot.lane.b32.xlu0 %v6876, 21
  %v7211 = vpop.permute.xlu0 %7210
  %7212 = vrot.lane.b32.xlu0 %v6878, 21
  %v7213 = vpop.permute.xlu0 %7212
  %7214 = vrot.lane.b32.xlu0 %v1249, 21
  %v7215 = vpop.permute.xlu0 %7214
  %7216 = vrot.lane.b32.xlu0 %v1251, 21
  %v7217 = vpop.permute.xlu0 %7216
  %7218 = vrot.lane.b32.xlu0 %v1254, 21
  %v7219 = vpop.permute.xlu0 %7218
  %7220 = vrot.lane.b32.xlu0 %v1256, 21
  %v7221 = vpop.permute.xlu0 %7220
  %7222 = vrot.lane.b32.xlu0 %v1259, 21
  %v7223 = vpop.permute.xlu0 %7222
  %7224 = vrot.lane.b32.xlu0 %v1261, 21
  %v7225 = vpop.permute.xlu0 %7224
  %7226 = vrot.lane.b32.xlu0 %v1264, 21
  %v7227 = vpop.permute.xlu0 %7226
  %7228 = vrot.lane.b32.xlu0 %v1266, 21
  %v7229 = vpop.permute.xlu0 %7228
  %7230 = vrot.lane.b32.xlu0 %v1269, 21
  %v7231 = vpop.permute.xlu0 %7230
  %7232 = vrot.lane.b32.xlu0 %v1271, 21
  %v7233 = vpop.permute.xlu0 %7232
  %7234 = vrot.lane.b32.xlu0 %v1274, 21
  %v7235 = vpop.permute.xlu0 %7234
  %7236 = vrot.lane.b32.xlu0 %v1276, 21
  %v7237 = vpop.permute.xlu0 %7236
  %7238 = vrot.lane.b32.xlu0 %v1279, 21
  %v7239 = vpop.permute.xlu0 %7238
  %7240 = vrot.lane.b32.xlu0 %v1281, 21
  %v7241 = vpop.permute.xlu0 %7240
  %7242 = vrot.lane.b32.xlu0 %v1284, 21
  %v7243 = vpop.permute.xlu0 %7242
  %7244 = vrot.lane.b32.xlu0 %v1286, 21
  %v7245 = vpop.permute.xlu0 %7244
  %7246 = vrot.lane.b32.xlu0 %v1289, 21
  %v7247 = vpop.permute.xlu0 %7246
  %7248 = vrot.lane.b32.xlu0 %v1291, 21
  %v7249 = vpop.permute.xlu0 %7248
  %7250 = vrot.lane.b32.xlu0 %v1294, 21
  %v7251 = vpop.permute.xlu0 %7250
  %7252 = vrot.lane.b32.xlu0 %v1296, 21
  %v7253 = vpop.permute.xlu0 %7252
  %7254 = vrot.lane.b32.xlu0 %v1299, 21
  %v7255 = vpop.permute.xlu0 %7254
  %7256 = vrot.lane.b32.xlu0 %v1301, 21
  %v7257 = vpop.permute.xlu0 %7256
  %7258 = vrot.lane.b32.xlu0 %v1304, 21
  %v7259 = vpop.permute.xlu0 %7258
  %7260 = vrot.lane.b32.xlu0 %v1306, 21
  %v7261 = vpop.permute.xlu0 %7260
  %7262 = vrot.lane.b32.xlu0 %v1309, 21
  %v7263 = vpop.permute.xlu0 %7262
  %7264 = vrot.lane.b32.xlu0 %v1311, 21
  %v7265 = vpop.permute.xlu0 %7264
  %7266 = vrot.lane.b32.xlu0 %v1314, 21
  %v7267 = vpop.permute.xlu0 %7266
  %7268 = vrot.lane.b32.xlu0 %v1316, 21
  %v7269 = vpop.permute.xlu0 %7268
  %7270 = vrot.lane.b32.xlu0 %v4473, 21
  %v7271 = vpop.permute.xlu0 %7270
  %7272 = vrot.lane.b32.xlu0 %v4475, 21
  %v7273 = vpop.permute.xlu0 %7272
  %7274 = vrot.lane.b32.xlu0 %v6881, 21
  %v7275 = vpop.permute.xlu0 %7274
  %7276 = vrot.lane.b32.xlu0 %v6883, 21
  %v7277 = vpop.permute.xlu0 %7276
  %7278 = vrot.lane.b32.xlu0 %v1329, 21
  %v7279 = vpop.permute.xlu0 %7278
  %7280 = vrot.lane.b32.xlu0 %v1331, 21
  %v7281 = vpop.permute.xlu0 %7280
  %7282 = vrot.lane.b32.xlu0 %v1334, 21
  %v7283 = vpop.permute.xlu0 %7282
  %7284 = vrot.lane.b32.xlu0 %v1336, 21
  %v7285 = vpop.permute.xlu0 %7284
  %7286 = vrot.lane.b32.xlu0 %v1339, 21
  %v7287 = vpop.permute.xlu0 %7286
  %7288 = vrot.lane.b32.xlu0 %v1341, 21
  %v7289 = vpop.permute.xlu0 %7288
  %7290 = vrot.lane.b32.xlu0 %v1344, 21
  %v7291 = vpop.permute.xlu0 %7290
  %7292 = vrot.lane.b32.xlu0 %v1346, 21
  %v7293 = vpop.permute.xlu0 %7292
  %7294 = vrot.lane.b32.xlu0 %v1349, 21
  %v7295 = vpop.permute.xlu0 %7294
  %7296 = vrot.lane.b32.xlu0 %v1351, 21
  %v7297 = vpop.permute.xlu0 %7296
  %7298 = vrot.lane.b32.xlu0 %v1354, 21
  %v7299 = vpop.permute.xlu0 %7298
  %7300 = vrot.lane.b32.xlu0 %v1356, 21
  %v7301 = vpop.permute.xlu0 %7300
  %7302 = vrot.lane.b32.xlu0 %v1359, 21
  %v7303 = vpop.permute.xlu0 %7302
  %7304 = vrot.lane.b32.xlu0 %v1361, 21
  %v7305 = vpop.permute.xlu0 %7304
  %7306 = vrot.lane.b32.xlu0 %v1364, 21
  %v7307 = vpop.permute.xlu0 %7306
  %7308 = vrot.lane.b32.xlu0 %v1366, 21
  %v7309 = vpop.permute.xlu0 %7308
  %7310 = vrot.lane.b32.xlu0 %v1369, 21
  %v7311 = vpop.permute.xlu0 %7310
  %7312 = vrot.lane.b32.xlu0 %v1371, 21
  %v7313 = vpop.permute.xlu0 %7312
  %7314 = vrot.lane.b32.xlu0 %v1374, 21
  %v7315 = vpop.permute.xlu0 %7314
  %7316 = vrot.lane.b32.xlu0 %v1376, 21
  %v7317 = vpop.permute.xlu0 %7316
  %7318 = vrot.lane.b32.xlu0 %v1379, 21
  %v7319 = vpop.permute.xlu0 %7318
  %7320 = vrot.lane.b32.xlu0 %v1381, 21
  %v7321 = vpop.permute.xlu0 %7320
  %7322 = vrot.lane.b32.xlu0 %v1384, 21
  %v7323 = vpop.permute.xlu0 %7322
  %7324 = vrot.lane.b32.xlu0 %v1386, 21
  %v7325 = vpop.permute.xlu0 %7324
  %7326 = vrot.lane.b32.xlu0 %v1389, 21
  %v7327 = vpop.permute.xlu0 %7326
  %7328 = vrot.lane.b32.xlu0 %v1391, 21
  %v7329 = vpop.permute.xlu0 %7328
  %7330 = vrot.lane.b32.xlu0 %v1394, 21
  %v7331 = vpop.permute.xlu0 %7330
  %7332 = vrot.lane.b32.xlu0 %v1396, 21
  %v7333 = vpop.permute.xlu0 %7332
  %7334 = vrot.lane.b32.xlu0 %v4478, 21
  %v7335 = vpop.permute.xlu0 %7334
  %7336 = vrot.lane.b32.xlu0 %v4480, 21
  %v7337 = vpop.permute.xlu0 %7336
  %7338 = vrot.lane.b32.xlu0 %v6886, 21
  %v7339 = vpop.permute.xlu0 %7338
  %7340 = vrot.lane.b32.xlu0 %v6888, 21
  %v7341 = vpop.permute.xlu0 %7340
  %7342 = vrot.lane.b32.xlu0 %v1409, 21
  %v7343 = vpop.permute.xlu0 %7342
  %7344 = vrot.lane.b32.xlu0 %v1411, 21
  %v7345 = vpop.permute.xlu0 %7344
  %7346 = vrot.lane.b32.xlu0 %v1414, 21
  %v7347 = vpop.permute.xlu0 %7346
  %7348 = vrot.lane.b32.xlu0 %v1416, 21
  %v7349 = vpop.permute.xlu0 %7348
  %7350 = vrot.lane.b32.xlu0 %v1419, 21
  %v7351 = vpop.permute.xlu0 %7350
  %7352 = vrot.lane.b32.xlu0 %v1421, 21
  %v7353 = vpop.permute.xlu0 %7352
  %7354 = vrot.lane.b32.xlu0 %v1424, 21
  %v7355 = vpop.permute.xlu0 %7354
  %7356 = vrot.lane.b32.xlu0 %v1426, 21
  %v7357 = vpop.permute.xlu0 %7356
  %7358 = vrot.lane.b32.xlu0 %v1429, 21
  %v7359 = vpop.permute.xlu0 %7358
  %7360 = vrot.lane.b32.xlu0 %v1431, 21
  %v7361 = vpop.permute.xlu0 %7360
  %7362 = vrot.lane.b32.xlu0 %v1434, 21
  %v7363 = vpop.permute.xlu0 %7362
  %7364 = vrot.lane.b32.xlu0 %v1436, 21
  %v7365 = vpop.permute.xlu0 %7364
  %7366 = vrot.lane.b32.xlu0 %v1439, 21
  %v7367 = vpop.permute.xlu0 %7366
  %7368 = vrot.lane.b32.xlu0 %v1441, 21
  %v7369 = vpop.permute.xlu0 %7368
  %7370 = vrot.lane.b32.xlu0 %v1444, 21
  %v7371 = vpop.permute.xlu0 %7370
  %7372 = vrot.lane.b32.xlu0 %v1446, 21
  %v7373 = vpop.permute.xlu0 %7372
  %7374 = vrot.lane.b32.xlu0 %v1449, 21
  %v7375 = vpop.permute.xlu0 %7374
  %7376 = vrot.lane.b32.xlu0 %v1451, 21
  %v7377 = vpop.permute.xlu0 %7376
  %7378 = vrot.lane.b32.xlu0 %v1454, 21
  %v7379 = vpop.permute.xlu0 %7378
  %7380 = vrot.lane.b32.xlu0 %v1456, 21
  %v7381 = vpop.permute.xlu0 %7380
  %7382 = vrot.lane.b32.xlu0 %v1459, 21
  %v7383 = vpop.permute.xlu0 %7382
  %7384 = vrot.lane.b32.xlu0 %v1461, 21
  %v7385 = vpop.permute.xlu0 %7384
  %7386 = vrot.lane.b32.xlu0 %v1464, 21
  %v7387 = vpop.permute.xlu0 %7386
  %7388 = vrot.lane.b32.xlu0 %v1466, 21
  %v7389 = vpop.permute.xlu0 %7388
  %7390 = vrot.lane.b32.xlu0 %v1469, 21
  %v7391 = vpop.permute.xlu0 %7390
  %7392 = vrot.lane.b32.xlu0 %v1471, 21
  %v7393 = vpop.permute.xlu0 %7392
  %7394 = vrot.lane.b32.xlu0 %v1474, 21
  %v7395 = vpop.permute.xlu0 %7394
  %7396 = vrot.lane.b32.xlu0 %v1476, 21
  %v7397 = vpop.permute.xlu0 %7396
  %7398 = vrot.lane.b32.xlu0 %v4483, 21
  %v7399 = vpop.permute.xlu0 %7398
  %7400 = vrot.lane.b32.xlu0 %v4485, 21
  %v7401 = vpop.permute.xlu0 %7400
  %7402 = vrot.lane.b32.xlu0 %v6891, 21
  %v7403 = vpop.permute.xlu0 %7402
  %7404 = vrot.lane.b32.xlu0 %v6893, 21
  %v7405 = vpop.permute.xlu0 %7404
  %v7662 = vrot.slane %v71, 2
  %v7663 = vrot.slane %v72, 2
  %v7664 = vsel %vm2245, %v7662, %v7663
  %v7665 = vrot.slane %v73, 2
  %v7666 = vsel %vm2245, %v7663, %v7665
  %v7667 = vrot.slane %v125, 2
  %v7668 = vrot.slane %v126, 2
  %v7669 = vsel %vm2245, %v7667, %v7668
  %v7670 = vrot.slane %v127, 2
  %v7671 = vsel %vm2245, %v7668, %v7670
  %v7672 = vrot.slane %v179, 2
  %v7673 = vrot.slane %v180, 2
  %v7674 = vsel %vm2245, %v7672, %v7673
  %v7675 = vrot.slane %v181, 2
  %v7676 = vsel %vm2245, %v7673, %v7675
  %v7677 = vrot.slane %v233, 2
  %v7678 = vrot.slane %v234, 2
  %v7679 = vsel %vm2245, %v7677, %v7678
  %v7680 = vrot.slane %v235, 2
  %v7681 = vsel %vm2245, %v7678, %v7680
  %v7682 = vrot.slane %v287, 2
  %v7683 = vrot.slane %v288, 2
  %v7684 = vsel %vm2245, %v7682, %v7683
  %v7685 = vrot.slane %v289, 2
  %v7686 = vsel %vm2245, %v7683, %v7685
  %v7687 = vrot.slane %v341, 2
  %v7688 = vrot.slane %v342, 2
  %v7689 = vsel %vm2245, %v7687, %v7688
  %v7690 = vrot.slane %v343, 2
  %v7691 = vsel %vm2245, %v7688, %v7690
  %v7692 = vrot.slane %v395, 2
  %v7693 = vrot.slane %v396, 2
  %v7694 = vsel %vm2245, %v7692, %v7693
  %v7695 = vrot.slane %v397, 2
  %v7696 = vsel %vm2245, %v7693, %v7695
  %v7697 = vrot.slane %v449, 2
  %v7698 = vrot.slane %v450, 2
  %v7699 = vsel %vm2245, %v7697, %v7698
  %v7700 = vrot.slane %v451, 2
  %v7701 = vsel %vm2245, %v7698, %v7700
  %7702 = vrot.lane.b32.xlu0 %v2258, 24
  %v7703 = vpop.permute.xlu0 %7702
  %7704 = vrot.lane.b32.xlu0 %v2260, 24
  %v7705 = vpop.permute.xlu0 %7704
  %7706 = vrot.lane.b32.xlu0 %v2263, 24
  %v7707 = vpop.permute.xlu0 %7706
  %7708 = vrot.lane.b32.xlu0 %v2265, 24
  %v7709 = vpop.permute.xlu0 %7708
  %7710 = vrot.lane.b32.xlu0 %v2268, 24
  %v7711 = vpop.permute.xlu0 %7710
  %7712 = vrot.lane.b32.xlu0 %v2270, 24
  %v7713 = vpop.permute.xlu0 %7712
  %7714 = vrot.lane.b32.xlu0 %v2273, 24
  %v7715 = vpop.permute.xlu0 %7714
  %7716 = vrot.lane.b32.xlu0 %v2275, 24
  %v7717 = vpop.permute.xlu0 %7716
  %7718 = vrot.lane.b32.xlu0 %v2278, 24
  %v7719 = vpop.permute.xlu0 %7718
  %7720 = vrot.lane.b32.xlu0 %v2280, 24
  %v7721 = vpop.permute.xlu0 %7720
  %7722 = vrot.lane.b32.xlu0 %v2283, 24
  %v7723 = vpop.permute.xlu0 %7722
  %7724 = vrot.lane.b32.xlu0 %v2285, 24
  %v7725 = vpop.permute.xlu0 %7724
  %7726 = vrot.lane.b32.xlu0 %v2288, 24
  %v7727 = vpop.permute.xlu0 %7726
  %7728 = vrot.lane.b32.xlu0 %v2290, 24
  %v7729 = vpop.permute.xlu0 %7728
  %7730 = vrot.lane.b32.xlu0 %v2293, 24
  %v7731 = vpop.permute.xlu0 %7730
  %7732 = vrot.lane.b32.xlu0 %v2295, 24
  %v7733 = vpop.permute.xlu0 %7732
  %7734 = vrot.lane.b32.xlu0 %v2298, 24
  %v7735 = vpop.permute.xlu0 %7734
  %7736 = vrot.lane.b32.xlu0 %v2300, 24
  %v7737 = vpop.permute.xlu0 %7736
  %7738 = vrot.lane.b32.xlu0 %v2303, 24
  %v7739 = vpop.permute.xlu0 %7738
  %7740 = vrot.lane.b32.xlu0 %v2305, 24
  %v7741 = vpop.permute.xlu0 %7740
  %7742 = vrot.lane.b32.xlu0 %v2308, 24
  %v7743 = vpop.permute.xlu0 %7742
  %7744 = vrot.lane.b32.xlu0 %v2310, 24
  %v7745 = vpop.permute.xlu0 %7744
  %7746 = vrot.lane.b32.xlu0 %v2313, 24
  %v7747 = vpop.permute.xlu0 %7746
  %7748 = vrot.lane.b32.xlu0 %v2315, 24
  %v7749 = vpop.permute.xlu0 %7748
  %7750 = vrot.lane.b32.xlu0 %v2318, 24
  %v7751 = vpop.permute.xlu0 %7750
  %7752 = vrot.lane.b32.xlu0 %v2320, 24
  %v7753 = vpop.permute.xlu0 %7752
  %7754 = vrot.lane.b32.xlu0 %v2323, 24
  %v7755 = vpop.permute.xlu0 %7754
  %7756 = vrot.lane.b32.xlu0 %v2325, 24
  %v7757 = vpop.permute.xlu0 %7756
  %7758 = vrot.lane.b32.xlu0 %v5256, 24
  %v7759 = vpop.permute.xlu0 %7758
  %7760 = vrot.lane.b32.xlu0 %v5258, 24
  %v7761 = vpop.permute.xlu0 %7760
  %7762 = vrot.lane.b32.xlu0 %v7664, 24
  %v7763 = vpop.permute.xlu0 %7762
  %7764 = vrot.lane.b32.xlu0 %v7666, 24
  %v7765 = vpop.permute.xlu0 %7764
  %7766 = vrot.lane.b32.xlu0 %v2338, 24
  %v7767 = vpop.permute.xlu0 %7766
  %7768 = vrot.lane.b32.xlu0 %v2340, 24
  %v7769 = vpop.permute.xlu0 %7768
  %7770 = vrot.lane.b32.xlu0 %v2343, 24
  %v7771 = vpop.permute.xlu0 %7770
  %7772 = vrot.lane.b32.xlu0 %v2345, 24
  %v7773 = vpop.permute.xlu0 %7772
  %7774 = vrot.lane.b32.xlu0 %v2348, 24
  %v7775 = vpop.permute.xlu0 %7774
  %7776 = vrot.lane.b32.xlu0 %v2350, 24
  %v7777 = vpop.permute.xlu0 %7776
  %7778 = vrot.lane.b32.xlu0 %v2353, 24
  %v7779 = vpop.permute.xlu0 %7778
  %7780 = vrot.lane.b32.xlu0 %v2355, 24
  %v7781 = vpop.permute.xlu0 %7780
  %7782 = vrot.lane.b32.xlu0 %v2358, 24
  %v7783 = vpop.permute.xlu0 %7782
  %7784 = vrot.lane.b32.xlu0 %v2360, 24
  %v7785 = vpop.permute.xlu0 %7784
  %7786 = vrot.lane.b32.xlu0 %v2363, 24
  %v7787 = vpop.permute.xlu0 %7786
  %7788 = vrot.lane.b32.xlu0 %v2365, 24
  %v7789 = vpop.permute.xlu0 %7788
  %7790 = vrot.lane.b32.xlu0 %v2368, 24
  %v7791 = vpop.permute.xlu0 %7790
  %7792 = vrot.lane.b32.xlu0 %v2370, 24
  %v7793 = vpop.permute.xlu0 %7792
  %7794 = vrot.lane.b32.xlu0 %v2373, 24
  %v7795 = vpop.permute.xlu0 %7794
  %7796 = vrot.lane.b32.xlu0 %v2375, 24
  %v7797 = vpop.permute.xlu0 %7796
  %7798 = vrot.lane.b32.xlu0 %v2378, 24
  %v7799 = vpop.permute.xlu0 %7798
  %7800 = vrot.lane.b32.xlu0 %v2380, 24
  %v7801 = vpop.permute.xlu0 %7800
  %7802 = vrot.lane.b32.xlu0 %v2383, 24
  %v7803 = vpop.permute.xlu0 %7802
  %7804 = vrot.lane.b32.xlu0 %v2385, 24
  %v7805 = vpop.permute.xlu0 %7804
  %7806 = vrot.lane.b32.xlu0 %v2388, 24
  %v7807 = vpop.permute.xlu0 %7806
  %7808 = vrot.lane.b32.xlu0 %v2390, 24
  %v7809 = vpop.permute.xlu0 %7808
  %7810 = vrot.lane.b32.xlu0 %v2393, 24
  %v7811 = vpop.permute.xlu0 %7810
  %7812 = vrot.lane.b32.xlu0 %v2395, 24
  %v7813 = vpop.permute.xlu0 %7812
  %7814 = vrot.lane.b32.xlu0 %v2398, 24
  %v7815 = vpop.permute.xlu0 %7814
  %7816 = vrot.lane.b32.xlu0 %v2400, 24
  %v7817 = vpop.permute.xlu0 %7816
  %7818 = vrot.lane.b32.xlu0 %v2403, 24
  %v7819 = vpop.permute.xlu0 %7818
  %7820 = vrot.lane.b32.xlu0 %v2405, 24
  %v7821 = vpop.permute.xlu0 %7820
  %7822 = vrot.lane.b32.xlu0 %v5261, 24
  %v7823 = vpop.permute.xlu0 %7822
  %7824 = vrot.lane.b32.xlu0 %v5263, 24
  %v7825 = vpop.permute.xlu0 %7824
  %7826 = vrot.lane.b32.xlu0 %v7669, 24
  %v7827 = vpop.permute.xlu0 %7826
  %7828 = vrot.lane.b32.xlu0 %v7671, 24
  %v7829 = vpop.permute.xlu0 %7828
  %7830 = vrot.lane.b32.xlu0 %v2418, 24
  %v7831 = vpop.permute.xlu0 %7830
  %7832 = vrot.lane.b32.xlu0 %v2420, 24
  %v7833 = vpop.permute.xlu0 %7832
  %7834 = vrot.lane.b32.xlu0 %v2423, 24
  %v7835 = vpop.permute.xlu0 %7834
  %7836 = vrot.lane.b32.xlu0 %v2425, 24
  %v7837 = vpop.permute.xlu0 %7836
  %7838 = vrot.lane.b32.xlu0 %v2428, 24
  %v7839 = vpop.permute.xlu0 %7838
  %7840 = vrot.lane.b32.xlu0 %v2430, 24
  %v7841 = vpop.permute.xlu0 %7840
  %7842 = vrot.lane.b32.xlu0 %v2433, 24
  %v7843 = vpop.permute.xlu0 %7842
  %7844 = vrot.lane.b32.xlu0 %v2435, 24
  %v7845 = vpop.permute.xlu0 %7844
  %7846 = vrot.lane.b32.xlu0 %v2438, 24
  %v7847 = vpop.permute.xlu0 %7846
  %7848 = vrot.lane.b32.xlu0 %v2440, 24
  %v7849 = vpop.permute.xlu0 %7848
  %7850 = vrot.lane.b32.xlu0 %v2443, 24
  %v7851 = vpop.permute.xlu0 %7850
  %7852 = vrot.lane.b32.xlu0 %v2445, 24
  %v7853 = vpop.permute.xlu0 %7852
  %7854 = vrot.lane.b32.xlu0 %v2448, 24
  %v7855 = vpop.permute.xlu0 %7854
  %7856 = vrot.lane.b32.xlu0 %v2450, 24
  %v7857 = vpop.permute.xlu0 %7856
  %7858 = vrot.lane.b32.xlu0 %v2453, 24
  %v7859 = vpop.permute.xlu0 %7858
  %7860 = vrot.lane.b32.xlu0 %v2455, 24
  %v7861 = vpop.permute.xlu0 %7860
  %7862 = vrot.lane.b32.xlu0 %v2458, 24
  %v7863 = vpop.permute.xlu0 %7862
  %7864 = vrot.lane.b32.xlu0 %v2460, 24
  %v7865 = vpop.permute.xlu0 %7864
  %7866 = vrot.lane.b32.xlu0 %v2463, 24
  %v7867 = vpop.permute.xlu0 %7866
  %7868 = vrot.lane.b32.xlu0 %v2465, 24
  %v7869 = vpop.permute.xlu0 %7868
  %7870 = vrot.lane.b32.xlu0 %v2468, 24
  %v7871 = vpop.permute.xlu0 %7870
  %7872 = vrot.lane.b32.xlu0 %v2470, 24
  %v7873 = vpop.permute.xlu0 %7872
  %7874 = vrot.lane.b32.xlu0 %v2473, 24
  %v7875 = vpop.permute.xlu0 %7874
  %7876 = vrot.lane.b32.xlu0 %v2475, 24
  %v7877 = vpop.permute.xlu0 %7876
  %7878 = vrot.lane.b32.xlu0 %v2478, 24
  %v7879 = vpop.permute.xlu0 %7878
  %7880 = vrot.lane.b32.xlu0 %v2480, 24
  %v7881 = vpop.permute.xlu0 %7880
  %7882 = vrot.lane.b32.xlu0 %v2483, 24
  %v7883 = vpop.permute.xlu0 %7882
  %7884 = vrot.lane.b32.xlu0 %v2485, 24
  %v7885 = vpop.permute.xlu0 %7884
  %7886 = vrot.lane.b32.xlu0 %v5266, 24
  %v7887 = vpop.permute.xlu0 %7886
  %7888 = vrot.lane.b32.xlu0 %v5268, 24
  %v7889 = vpop.permute.xlu0 %7888
  %7890 = vrot.lane.b32.xlu0 %v7674, 24
  %v7891 = vpop.permute.xlu0 %7890
  %7892 = vrot.lane.b32.xlu0 %v7676, 24
  %v7893 = vpop.permute.xlu0 %7892
  %7894 = vrot.lane.b32.xlu0 %v2498, 24
  %v7895 = vpop.permute.xlu0 %7894
  %7896 = vrot.lane.b32.xlu0 %v2500, 24
  %v7897 = vpop.permute.xlu0 %7896
  %7898 = vrot.lane.b32.xlu0 %v2503, 24
  %v7899 = vpop.permute.xlu0 %7898
  %7900 = vrot.lane.b32.xlu0 %v2505, 24
  %v7901 = vpop.permute.xlu0 %7900
  %7902 = vrot.lane.b32.xlu0 %v2508, 24
  %v7903 = vpop.permute.xlu0 %7902
  %7904 = vrot.lane.b32.xlu0 %v2510, 24
  %v7905 = vpop.permute.xlu0 %7904
  %7906 = vrot.lane.b32.xlu0 %v2513, 24
  %v7907 = vpop.permute.xlu0 %7906
  %7908 = vrot.lane.b32.xlu0 %v2515, 24
  %v7909 = vpop.permute.xlu0 %7908
  %7910 = vrot.lane.b32.xlu0 %v2518, 24
  %v7911 = vpop.permute.xlu0 %7910
  %7912 = vrot.lane.b32.xlu0 %v2520, 24
  %v7913 = vpop.permute.xlu0 %7912
  %7914 = vrot.lane.b32.xlu0 %v2523, 24
  %v7915 = vpop.permute.xlu0 %7914
  %7916 = vrot.lane.b32.xlu0 %v2525, 24
  %v7917 = vpop.permute.xlu0 %7916
  %7918 = vrot.lane.b32.xlu0 %v2528, 24
  %v7919 = vpop.permute.xlu0 %7918
  %7920 = vrot.lane.b32.xlu0 %v2530, 24
  %v7921 = vpop.permute.xlu0 %7920
  %7922 = vrot.lane.b32.xlu0 %v2533, 24
  %v7923 = vpop.permute.xlu0 %7922
  %7924 = vrot.lane.b32.xlu0 %v2535, 24
  %v7925 = vpop.permute.xlu0 %7924
  %7926 = vrot.lane.b32.xlu0 %v2538, 24
  %v7927 = vpop.permute.xlu0 %7926
  %7928 = vrot.lane.b32.xlu0 %v2540, 24
  %v7929 = vpop.permute.xlu0 %7928
  %7930 = vrot.lane.b32.xlu0 %v2543, 24
  %v7931 = vpop.permute.xlu0 %7930
  %7932 = vrot.lane.b32.xlu0 %v2545, 24
  %v7933 = vpop.permute.xlu0 %7932
  %7934 = vrot.lane.b32.xlu0 %v2548, 24
  %v7935 = vpop.permute.xlu0 %7934
  %7936 = vrot.lane.b32.xlu0 %v2550, 24
  %v7937 = vpop.permute.xlu0 %7936
  %7938 = vrot.lane.b32.xlu0 %v2553, 24
  %v7939 = vpop.permute.xlu0 %7938
  %7940 = vrot.lane.b32.xlu0 %v2555, 24
  %v7941 = vpop.permute.xlu0 %7940
  %7942 = vrot.lane.b32.xlu0 %v2558, 24
  %v7943 = vpop.permute.xlu0 %7942
  %7944 = vrot.lane.b32.xlu0 %v2560, 24
  %v7945 = vpop.permute.xlu0 %7944
  %7946 = vrot.lane.b32.xlu0 %v2563, 24
  %v7947 = vpop.permute.xlu0 %7946
  %7948 = vrot.lane.b32.xlu0 %v2565, 24
  %v7949 = vpop.permute.xlu0 %7948
  %7950 = vrot.lane.b32.xlu0 %v5271, 24
  %v7951 = vpop.permute.xlu0 %7950
  %7952 = vrot.lane.b32.xlu0 %v5273, 24
  %v7953 = vpop.permute.xlu0 %7952
  %7954 = vrot.lane.b32.xlu0 %v7679, 24
  %v7955 = vpop.permute.xlu0 %7954
  %7956 = vrot.lane.b32.xlu0 %v7681, 24
  %v7957 = vpop.permute.xlu0 %7956
  %7958 = vrot.lane.b32.xlu0 %v2578, 24
  %v7959 = vpop.permute.xlu0 %7958
  %7960 = vrot.lane.b32.xlu0 %v2580, 24
  %v7961 = vpop.permute.xlu0 %7960
  %7962 = vrot.lane.b32.xlu0 %v2583, 24
  %v7963 = vpop.permute.xlu0 %7962
  %7964 = vrot.lane.b32.xlu0 %v2585, 24
  %v7965 = vpop.permute.xlu0 %7964
  %7966 = vrot.lane.b32.xlu0 %v2588, 24
  %v7967 = vpop.permute.xlu0 %7966
  %7968 = vrot.lane.b32.xlu0 %v2590, 24
  %v7969 = vpop.permute.xlu0 %7968
  %7970 = vrot.lane.b32.xlu0 %v2593, 24
  %v7971 = vpop.permute.xlu0 %7970
  %7972 = vrot.lane.b32.xlu0 %v2595, 24
  %v7973 = vpop.permute.xlu0 %7972
  %7974 = vrot.lane.b32.xlu0 %v2598, 24
  %v7975 = vpop.permute.xlu0 %7974
  %7976 = vrot.lane.b32.xlu0 %v2600, 24
  %v7977 = vpop.permute.xlu0 %7976
  %7978 = vrot.lane.b32.xlu0 %v2603, 24
  %v7979 = vpop.permute.xlu0 %7978
  %7980 = vrot.lane.b32.xlu0 %v2605, 24
  %v7981 = vpop.permute.xlu0 %7980
  %7982 = vrot.lane.b32.xlu0 %v2608, 24
  %v7983 = vpop.permute.xlu0 %7982
  %7984 = vrot.lane.b32.xlu0 %v2610, 24
  %v7985 = vpop.permute.xlu0 %7984
  %7986 = vrot.lane.b32.xlu0 %v2613, 24
  %v7987 = vpop.permute.xlu0 %7986
  %7988 = vrot.lane.b32.xlu0 %v2615, 24
  %v7989 = vpop.permute.xlu0 %7988
  %7990 = vrot.lane.b32.xlu0 %v2618, 24
  %v7991 = vpop.permute.xlu0 %7990
  %7992 = vrot.lane.b32.xlu0 %v2620, 24
  %v7993 = vpop.permute.xlu0 %7992
  %7994 = vrot.lane.b32.xlu0 %v2623, 24
  %v7995 = vpop.permute.xlu0 %7994
  %7996 = vrot.lane.b32.xlu0 %v2625, 24
  %v7997 = vpop.permute.xlu0 %7996
  %7998 = vrot.lane.b32.xlu0 %v2628, 24
  %v7999 = vpop.permute.xlu0 %7998
  %8000 = vrot.lane.b32.xlu0 %v2630, 24
  %v8001 = vpop.permute.xlu0 %8000
  %8002 = vrot.lane.b32.xlu0 %v2633, 24
  %v8003 = vpop.permute.xlu0 %8002
  %8004 = vrot.lane.b32.xlu0 %v2635, 24
  %v8005 = vpop.permute.xlu0 %8004
  %8006 = vrot.lane.b32.xlu0 %v2638, 24
  %v8007 = vpop.permute.xlu0 %8006
  %8008 = vrot.lane.b32.xlu0 %v2640, 24
  %v8009 = vpop.permute.xlu0 %8008
  %8010 = vrot.lane.b32.xlu0 %v2643, 24
  %v8011 = vpop.permute.xlu0 %8010
  %8012 = vrot.lane.b32.xlu0 %v2645, 24
  %v8013 = vpop.permute.xlu0 %8012
  %8014 = vrot.lane.b32.xlu0 %v5276, 24
  %v8015 = vpop.permute.xlu0 %8014
  %8016 = vrot.lane.b32.xlu0 %v5278, 24
  %v8017 = vpop.permute.xlu0 %8016
  %8018 = vrot.lane.b32.xlu0 %v7684, 24
  %v8019 = vpop.permute.xlu0 %8018
  %8020 = vrot.lane.b32.xlu0 %v7686, 24
  %v8021 = vpop.permute.xlu0 %8020
  %8022 = vrot.lane.b32.xlu0 %v2658, 24
  %v8023 = vpop.permute.xlu0 %8022
  %8024 = vrot.lane.b32.xlu0 %v2660, 24
  %v8025 = vpop.permute.xlu0 %8024
  %8026 = vrot.lane.b32.xlu0 %v2663, 24
  %v8027 = vpop.permute.xlu0 %8026
  %8028 = vrot.lane.b32.xlu0 %v2665, 24
  %v8029 = vpop.permute.xlu0 %8028
  %8030 = vrot.lane.b32.xlu0 %v2668, 24
  %v8031 = vpop.permute.xlu0 %8030
  %8032 = vrot.lane.b32.xlu0 %v2670, 24
  %v8033 = vpop.permute.xlu0 %8032
  %8034 = vrot.lane.b32.xlu0 %v2673, 24
  %v8035 = vpop.permute.xlu0 %8034
  %8036 = vrot.lane.b32.xlu0 %v2675, 24
  %v8037 = vpop.permute.xlu0 %8036
  %8038 = vrot.lane.b32.xlu0 %v2678, 24
  %v8039 = vpop.permute.xlu0 %8038
  %8040 = vrot.lane.b32.xlu0 %v2680, 24
  %v8041 = vpop.permute.xlu0 %8040
  %8042 = vrot.lane.b32.xlu0 %v2683, 24
  %v8043 = vpop.permute.xlu0 %8042
  %8044 = vrot.lane.b32.xlu0 %v2685, 24
  %v8045 = vpop.permute.xlu0 %8044
  %8046 = vrot.lane.b32.xlu0 %v2688, 24
  %v8047 = vpop.permute.xlu0 %8046
  %8048 = vrot.lane.b32.xlu0 %v2690, 24
  %v8049 = vpop.permute.xlu0 %8048
  %8050 = vrot.lane.b32.xlu0 %v2693, 24
  %v8051 = vpop.permute.xlu0 %8050
  %8052 = vrot.lane.b32.xlu0 %v2695, 24
  %v8053 = vpop.permute.xlu0 %8052
  %8054 = vrot.lane.b32.xlu0 %v2698, 24
  %v8055 = vpop.permute.xlu0 %8054
  %8056 = vrot.lane.b32.xlu0 %v2700, 24
  %v8057 = vpop.permute.xlu0 %8056
  %8058 = vrot.lane.b32.xlu0 %v2703, 24
  %v8059 = vpop.permute.xlu0 %8058
  %8060 = vrot.lane.b32.xlu0 %v2705, 24
  %v8061 = vpop.permute.xlu0 %8060
  %8062 = vrot.lane.b32.xlu0 %v2708, 24
  %v8063 = vpop.permute.xlu0 %8062
  %8064 = vrot.lane.b32.xlu0 %v2710, 24
  %v8065 = vpop.permute.xlu0 %8064
  %8066 = vrot.lane.b32.xlu0 %v2713, 24
  %v8067 = vpop.permute.xlu0 %8066
  %8068 = vrot.lane.b32.xlu0 %v2715, 24
  %v8069 = vpop.permute.xlu0 %8068
  %8070 = vrot.lane.b32.xlu0 %v2718, 24
  %v8071 = vpop.permute.xlu0 %8070
  %8072 = vrot.lane.b32.xlu0 %v2720, 24
  %v8073 = vpop.permute.xlu0 %8072
  %8074 = vrot.lane.b32.xlu0 %v2723, 24
  %v8075 = vpop.permute.xlu0 %8074
  %8076 = vrot.lane.b32.xlu0 %v2725, 24
  %v8077 = vpop.permute.xlu0 %8076
  %8078 = vrot.lane.b32.xlu0 %v5281, 24
  %v8079 = vpop.permute.xlu0 %8078
  %8080 = vrot.lane.b32.xlu0 %v5283, 24
  %v8081 = vpop.permute.xlu0 %8080
  %8082 = vrot.lane.b32.xlu0 %v7689, 24
  %v8083 = vpop.permute.xlu0 %8082
  %8084 = vrot.lane.b32.xlu0 %v7691, 24
  %v8085 = vpop.permute.xlu0 %8084
  %8086 = vrot.lane.b32.xlu0 %v2738, 24
  %v8087 = vpop.permute.xlu0 %8086
  %8088 = vrot.lane.b32.xlu0 %v2740, 24
  %v8089 = vpop.permute.xlu0 %8088
  %8090 = vrot.lane.b32.xlu0 %v2743, 24
  %v8091 = vpop.permute.xlu0 %8090
  %8092 = vrot.lane.b32.xlu0 %v2745, 24
  %v8093 = vpop.permute.xlu0 %8092
  %8094 = vrot.lane.b32.xlu0 %v2748, 24
  %v8095 = vpop.permute.xlu0 %8094
  %8096 = vrot.lane.b32.xlu0 %v2750, 24
  %v8097 = vpop.permute.xlu0 %8096
  %8098 = vrot.lane.b32.xlu0 %v2753, 24
  %v8099 = vpop.permute.xlu0 %8098
  %8100 = vrot.lane.b32.xlu0 %v2755, 24
  %v8101 = vpop.permute.xlu0 %8100
  %8102 = vrot.lane.b32.xlu0 %v2758, 24
  %v8103 = vpop.permute.xlu0 %8102
  %8104 = vrot.lane.b32.xlu0 %v2760, 24
  %v8105 = vpop.permute.xlu0 %8104
  %8106 = vrot.lane.b32.xlu0 %v2763, 24
  %v8107 = vpop.permute.xlu0 %8106
  %8108 = vrot.lane.b32.xlu0 %v2765, 24
  %v8109 = vpop.permute.xlu0 %8108
  %8110 = vrot.lane.b32.xlu0 %v2768, 24
  %v8111 = vpop.permute.xlu0 %8110
  %8112 = vrot.lane.b32.xlu0 %v2770, 24
  %v8113 = vpop.permute.xlu0 %8112
  %8114 = vrot.lane.b32.xlu0 %v2773, 24
  %v8115 = vpop.permute.xlu0 %8114
  %8116 = vrot.lane.b32.xlu0 %v2775, 24
  %v8117 = vpop.permute.xlu0 %8116
  %8118 = vrot.lane.b32.xlu0 %v2778, 24
  %v8119 = vpop.permute.xlu0 %8118
  %8120 = vrot.lane.b32.xlu0 %v2780, 24
  %v8121 = vpop.permute.xlu0 %8120
  %8122 = vrot.lane.b32.xlu0 %v2783, 24
  %v8123 = vpop.permute.xlu0 %8122
  %8124 = vrot.lane.b32.xlu0 %v2785, 24
  %v8125 = vpop.permute.xlu0 %8124
  %8126 = vrot.lane.b32.xlu0 %v2788, 24
  %v8127 = vpop.permute.xlu0 %8126
  %8128 = vrot.lane.b32.xlu0 %v2790, 24
  %v8129 = vpop.permute.xlu0 %8128
  %8130 = vrot.lane.b32.xlu0 %v2793, 24
  %v8131 = vpop.permute.xlu0 %8130
  %8132 = vrot.lane.b32.xlu0 %v2795, 24
  %v8133 = vpop.permute.xlu0 %8132
  %8134 = vrot.lane.b32.xlu0 %v2798, 24
  %v8135 = vpop.permute.xlu0 %8134
  %8136 = vrot.lane.b32.xlu0 %v2800, 24
  %v8137 = vpop.permute.xlu0 %8136
  %8138 = vrot.lane.b32.xlu0 %v2803, 24
  %v8139 = vpop.permute.xlu0 %8138
  %8140 = vrot.lane.b32.xlu0 %v2805, 24
  %v8141 = vpop.permute.xlu0 %8140
  %8142 = vrot.lane.b32.xlu0 %v5286, 24
  %v8143 = vpop.permute.xlu0 %8142
  %8144 = vrot.lane.b32.xlu0 %v5288, 24
  %v8145 = vpop.permute.xlu0 %8144
  %8146 = vrot.lane.b32.xlu0 %v7694, 24
  %v8147 = vpop.permute.xlu0 %8146
  %8148 = vrot.lane.b32.xlu0 %v7696, 24
  %v8149 = vpop.permute.xlu0 %8148
  %8150 = vrot.lane.b32.xlu0 %v2818, 24
  %v8151 = vpop.permute.xlu0 %8150
  %8152 = vrot.lane.b32.xlu0 %v2820, 24
  %v8153 = vpop.permute.xlu0 %8152
  %8154 = vrot.lane.b32.xlu0 %v2823, 24
  %v8155 = vpop.permute.xlu0 %8154
  %8156 = vrot.lane.b32.xlu0 %v2825, 24
  %v8157 = vpop.permute.xlu0 %8156
  %8158 = vrot.lane.b32.xlu0 %v2828, 24
  %v8159 = vpop.permute.xlu0 %8158
  %8160 = vrot.lane.b32.xlu0 %v2830, 24
  %v8161 = vpop.permute.xlu0 %8160
  %8162 = vrot.lane.b32.xlu0 %v2833, 24
  %v8163 = vpop.permute.xlu0 %8162
  %8164 = vrot.lane.b32.xlu0 %v2835, 24
  %v8165 = vpop.permute.xlu0 %8164
  %8166 = vrot.lane.b32.xlu0 %v2838, 24
  %v8167 = vpop.permute.xlu0 %8166
  %8168 = vrot.lane.b32.xlu0 %v2840, 24
  %v8169 = vpop.permute.xlu0 %8168
  %8170 = vrot.lane.b32.xlu0 %v2843, 24
  %v8171 = vpop.permute.xlu0 %8170
  %8172 = vrot.lane.b32.xlu0 %v2845, 24
  %v8173 = vpop.permute.xlu0 %8172
  %8174 = vrot.lane.b32.xlu0 %v2848, 24
  %v8175 = vpop.permute.xlu0 %8174
  %8176 = vrot.lane.b32.xlu0 %v2850, 24
  %v8177 = vpop.permute.xlu0 %8176
  %8178 = vrot.lane.b32.xlu0 %v2853, 24
  %v8179 = vpop.permute.xlu0 %8178
  %8180 = vrot.lane.b32.xlu0 %v2855, 24
  %v8181 = vpop.permute.xlu0 %8180
  %8182 = vrot.lane.b32.xlu0 %v2858, 24
  %v8183 = vpop.permute.xlu0 %8182
  %8184 = vrot.lane.b32.xlu0 %v2860, 24
  %v8185 = vpop.permute.xlu0 %8184
  %8186 = vrot.lane.b32.xlu0 %v2863, 24
  %v8187 = vpop.permute.xlu0 %8186
  %8188 = vrot.lane.b32.xlu0 %v2865, 24
  %v8189 = vpop.permute.xlu0 %8188
  %8190 = vrot.lane.b32.xlu0 %v2868, 24
  %v8191 = vpop.permute.xlu0 %8190
  %8192 = vrot.lane.b32.xlu0 %v2870, 24
  %v8193 = vpop.permute.xlu0 %8192
  %8194 = vrot.lane.b32.xlu0 %v2873, 24
  %v8195 = vpop.permute.xlu0 %8194
  %8196 = vrot.lane.b32.xlu0 %v2875, 24
  %v8197 = vpop.permute.xlu0 %8196
  %8198 = vrot.lane.b32.xlu0 %v2878, 24
  %v8199 = vpop.permute.xlu0 %8198
  %8200 = vrot.lane.b32.xlu0 %v2880, 24
  %v8201 = vpop.permute.xlu0 %8200
  %8202 = vrot.lane.b32.xlu0 %v2883, 24
  %v8203 = vpop.permute.xlu0 %8202
  %8204 = vrot.lane.b32.xlu0 %v2885, 24
  %v8205 = vpop.permute.xlu0 %8204
  %8206 = vrot.lane.b32.xlu0 %v5291, 24
  %v8207 = vpop.permute.xlu0 %8206
  %8208 = vrot.lane.b32.xlu0 %v5293, 24
  %v8209 = vpop.permute.xlu0 %8208
  %8210 = vrot.lane.b32.xlu0 %v7699, 24
  %v8211 = vpop.permute.xlu0 %8210
  %8212 = vrot.lane.b32.xlu0 %v7701, 24
  %v8213 = vpop.permute.xlu0 %8212
  %vm8470 = vcmask 23552
  %v8471 = vsel %vm8470, %v20, %v1478
  %v8472 = vsel %vm8470, %v21, %v1480
  %v8473 = vsel %vm8470, %v23, %v1482
  %v8474 = vsel %vm8470, %v24, %v1484
  %v8475 = vsel %vm8470, %v26, %v1486
  %v8476 = vsel %vm8470, %v27, %v1488
  %v8477 = vsel %vm8470, %v29, %v1490
  %v8478 = vsel %vm8470, %v30, %v1492
  %v8479 = vsel %vm8470, %v32, %v1494
  %v8480 = vsel %vm8470, %v33, %v1496
  %v8481 = vsel %vm8470, %v35, %v1498
  %v8482 = vsel %vm8470, %v36, %v1500
  %v8483 = vsel %vm8470, %v38, %v1502
  %v8484 = vsel %vm8470, %v39, %v1504
  %v8485 = vsel %vm8470, %v41, %v1506
  %v8486 = vsel %vm8470, %v42, %v1508
  %v8487 = vsel %vm8470, %v44, %v1510
  %v8488 = vsel %vm8470, %v45, %v1512
  %v8489 = vsel %vm8470, %v47, %v1514
  %v8490 = vsel %vm8470, %v48, %v1516
  %v8491 = vsel %vm8470, %v50, %v1518
  %v8492 = vsel %vm8470, %v51, %v1520
  %v8493 = vsel %vm8470, %v53, %v1522
  %v8494 = vsel %vm8470, %v54, %v1524
  %v8495 = vsel %vm8470, %v56, %v1526
  %v8496 = vsel %vm8470, %v57, %v1528
  %v8497 = vsel %vm8470, %v59, %v1530
  %v8498 = vsel %vm8470, %v60, %v1532
  %v8499 = vsel %vm8470, %v62, %v1534
  %v8500 = vsel %vm8470, %v63, %v1536
  %v8501 = vsel %vm8470, %v65, %v1538
  %v8502 = vsel %vm8470, %v66, %v1540
  %v8503 = vsel %vm8470, %v74, %v1542
  %v8504 = vsel %vm8470, %v75, %v1544
  %v8505 = vsel %vm8470, %v77, %v1546
  %v8506 = vsel %vm8470, %v78, %v1548
  %v8507 = vsel %vm8470, %v80, %v1550
  %v8508 = vsel %vm8470, %v81, %v1552
  %v8509 = vsel %vm8470, %v83, %v1554
  %v8510 = vsel %vm8470, %v84, %v1556
  %v8511 = vsel %vm8470, %v86, %v1558
  %v8512 = vsel %vm8470, %v87, %v1560
  %v8513 = vsel %vm8470, %v89, %v1562
  %v8514 = vsel %vm8470, %v90, %v1564
  %v8515 = vsel %vm8470, %v92, %v1566
  %v8516 = vsel %vm8470, %v93, %v1568
  %v8517 = vsel %vm8470, %v95, %v1570
  %v8518 = vsel %vm8470, %v96, %v1572
  %v8519 = vsel %vm8470, %v98, %v1574
  %v8520 = vsel %vm8470, %v99, %v1576
  %v8521 = vsel %vm8470, %v101, %v1578
  %v8522 = vsel %vm8470, %v102, %v1580
  %v8523 = vsel %vm8470, %v104, %v1582
  %v8524 = vsel %vm8470, %v105, %v1584
  %v8525 = vsel %vm8470, %v107, %v1586
  %v8526 = vsel %vm8470, %v108, %v1588
  %v8527 = vsel %vm8470, %v110, %v1590
  %v8528 = vsel %vm8470, %v111, %v1592
  %v8529 = vsel %vm8470, %v113, %v1594
  %v8530 = vsel %vm8470, %v114, %v1596
  %v8531 = vsel %vm8470, %v116, %v1598
  %v8532 = vsel %vm8470, %v117, %v1600
  %v8533 = vsel %vm8470, %v119, %v1602
  %v8534 = vsel %vm8470, %v120, %v1604
  %v8535 = vsel %vm8470, %v128, %v1606
  %v8536 = vsel %vm8470, %v129, %v1608
  %v8537 = vsel %vm8470, %v131, %v1610
  %v8538 = vsel %vm8470, %v132, %v1612
  %v8539 = vsel %vm8470, %v134, %v1614
  %v8540 = vsel %vm8470, %v135, %v1616
  %v8541 = vsel %vm8470, %v137, %v1618
  %v8542 = vsel %vm8470, %v138, %v1620
  %v8543 = vsel %vm8470, %v140, %v1622
  %v8544 = vsel %vm8470, %v141, %v1624
  %v8545 = vsel %vm8470, %v143, %v1626
  %v8546 = vsel %vm8470, %v144, %v1628
  %v8547 = vsel %vm8470, %v146, %v1630
  %v8548 = vsel %vm8470, %v147, %v1632
  %v8549 = vsel %vm8470, %v149, %v1634
  %v8550 = vsel %vm8470, %v150, %v1636
  %v8551 = vsel %vm8470, %v152, %v1638
  %v8552 = vsel %vm8470, %v153, %v1640
  %v8553 = vsel %vm8470, %v155, %v1642
  %v8554 = vsel %vm8470, %v156, %v1644
  %v8555 = vsel %vm8470, %v158, %v1646
  %v8556 = vsel %vm8470, %v159, %v1648
  %v8557 = vsel %vm8470, %v161, %v1650
  %v8558 = vsel %vm8470, %v162, %v1652
  %v8559 = vsel %vm8470, %v164, %v1654
  %v8560 = vsel %vm8470, %v165, %v1656
  %v8561 = vsel %vm8470, %v167, %v1658
  %v8562 = vsel %vm8470, %v168, %v1660
  %v8563 = vsel %vm8470, %v170, %v1662
  %v8564 = vsel %vm8470, %v171, %v1664
  %v8565 = vsel %vm8470, %v173, %v1666
  %v8566 = vsel %vm8470, %v174, %v1668
  %v8567 = vsel %vm8470, %v182, %v1670
  %v8568 = vsel %vm8470, %v183, %v1672
  %v8569 = vsel %vm8470, %v185, %v1674
  %v8570 = vsel %vm8470, %v186, %v1676
  %v8571 = vsel %vm8470, %v188, %v1678
  %v8572 = vsel %vm8470, %v189, %v1680
  %v8573 = vsel %vm8470, %v191, %v1682
  %v8574 = vsel %vm8470, %v192, %v1684
  %v8575 = vsel %vm8470, %v194, %v1686
  %v8576 = vsel %vm8470, %v195, %v1688
  %v8577 = vsel %vm8470, %v197, %v1690
  %v8578 = vsel %vm8470, %v198, %v1692
  %v8579 = vsel %vm8470, %v200, %v1694
  %v8580 = vsel %vm8470, %v201, %v1696
  %v8581 = vsel %vm8470, %v203, %v1698
  %v8582 = vsel %vm8470, %v204, %v1700
  %v8583 = vsel %vm8470, %v206, %v1702
  %v8584 = vsel %vm8470, %v207, %v1704
  %v8585 = vsel %vm8470, %v209, %v1706
  %v8586 = vsel %vm8470, %v210, %v1708
  %v8587 = vsel %vm8470, %v212, %v1710
  %v8588 = vsel %vm8470, %v213, %v1712
  %v8589 = vsel %vm8470, %v215, %v1714
  %v8590 = vsel %vm8470, %v216, %v1716
  %v8591 = vsel %vm8470, %v218, %v1718
  %v8592 = vsel %vm8470, %v219, %v1720
  %v8593 = vsel %vm8470, %v221, %v1722
  %v8594 = vsel %vm8470, %v222, %v1724
  %v8595 = vsel %vm8470, %v224, %v1726
  %v8596 = vsel %vm8470, %v225, %v1728
  %v8597 = vsel %vm8470, %v227, %v1730
  %v8598 = vsel %vm8470, %v228, %v1732
  %v8599 = vsel %vm8470, %v236, %v1734
  %v8600 = vsel %vm8470, %v237, %v1736
  %v8601 = vsel %vm8470, %v239, %v1738
  %v8602 = vsel %vm8470, %v240, %v1740
  %v8603 = vsel %vm8470, %v242, %v1742
  %v8604 = vsel %vm8470, %v243, %v1744
  %v8605 = vsel %vm8470, %v245, %v1746
  %v8606 = vsel %vm8470, %v246, %v1748
  %v8607 = vsel %vm8470, %v248, %v1750
  %v8608 = vsel %vm8470, %v249, %v1752
  %v8609 = vsel %vm8470, %v251, %v1754
  %v8610 = vsel %vm8470, %v252, %v1756
  %v8611 = vsel %vm8470, %v254, %v1758
  %v8612 = vsel %vm8470, %v255, %v1760
  %v8613 = vsel %vm8470, %v257, %v1762
  %v8614 = vsel %vm8470, %v258, %v1764
  %v8615 = vsel %vm8470, %v260, %v1766
  %v8616 = vsel %vm8470, %v261, %v1768
  %v8617 = vsel %vm8470, %v263, %v1770
  %v8618 = vsel %vm8470, %v264, %v1772
  %v8619 = vsel %vm8470, %v266, %v1774
  %v8620 = vsel %vm8470, %v267, %v1776
  %v8621 = vsel %vm8470, %v269, %v1778
  %v8622 = vsel %vm8470, %v270, %v1780
  %v8623 = vsel %vm8470, %v272, %v1782
  %v8624 = vsel %vm8470, %v273, %v1784
  %v8625 = vsel %vm8470, %v275, %v1786
  %v8626 = vsel %vm8470, %v276, %v1788
  %v8627 = vsel %vm8470, %v278, %v1790
  %v8628 = vsel %vm8470, %v279, %v1792
  %v8629 = vsel %vm8470, %v281, %v1794
  %v8630 = vsel %vm8470, %v282, %v1796
  %v8631 = vsel %vm8470, %v290, %v1798
  %v8632 = vsel %vm8470, %v291, %v1800
  %v8633 = vsel %vm8470, %v293, %v1802
  %v8634 = vsel %vm8470, %v294, %v1804
  %v8635 = vsel %vm8470, %v296, %v1806
  %v8636 = vsel %vm8470, %v297, %v1808
  %v8637 = vsel %vm8470, %v299, %v1810
  %v8638 = vsel %vm8470, %v300, %v1812
  %v8639 = vsel %vm8470, %v302, %v1814
  %v8640 = vsel %vm8470, %v303, %v1816
  %v8641 = vsel %vm8470, %v305, %v1818
  %v8642 = vsel %vm8470, %v306, %v1820
  %v8643 = vsel %vm8470, %v308, %v1822
  %v8644 = vsel %vm8470, %v309, %v1824
  %v8645 = vsel %vm8470, %v311, %v1826
  %v8646 = vsel %vm8470, %v312, %v1828
  %v8647 = vsel %vm8470, %v314, %v1830
  %v8648 = vsel %vm8470, %v315, %v1832
  %v8649 = vsel %vm8470, %v317, %v1834
  %v8650 = vsel %vm8470, %v318, %v1836
  %v8651 = vsel %vm8470, %v320, %v1838
  %v8652 = vsel %vm8470, %v321, %v1840
  %v8653 = vsel %vm8470, %v323, %v1842
  %v8654 = vsel %vm8470, %v324, %v1844
  %v8655 = vsel %vm8470, %v326, %v1846
  %v8656 = vsel %vm8470, %v327, %v1848
  %v8657 = vsel %vm8470, %v329, %v1850
  %v8658 = vsel %vm8470, %v330, %v1852
  %v8659 = vsel %vm8470, %v332, %v1854
  %v8660 = vsel %vm8470, %v333, %v1856
  %v8661 = vsel %vm8470, %v335, %v1858
  %v8662 = vsel %vm8470, %v336, %v1860
  %v8663 = vsel %vm8470, %v344, %v1862
  %v8664 = vsel %vm8470, %v345, %v1864
  %v8665 = vsel %vm8470, %v347, %v1866
  %v8666 = vsel %vm8470, %v348, %v1868
  %v8667 = vsel %vm8470, %v350, %v1870
  %v8668 = vsel %vm8470, %v351, %v1872
  %v8669 = vsel %vm8470, %v353, %v1874
  %v8670 = vsel %vm8470, %v354, %v1876
  %v8671 = vsel %vm8470, %v356, %v1878
  %v8672 = vsel %vm8470, %v357, %v1880
  %v8673 = vsel %vm8470, %v359, %v1882
  %v8674 = vsel %vm8470, %v360, %v1884
  %v8675 = vsel %vm8470, %v362, %v1886
  %v8676 = vsel %vm8470, %v363, %v1888
  %v8677 = vsel %vm8470, %v365, %v1890
  %v8678 = vsel %vm8470, %v366, %v1892
  %v8679 = vsel %vm8470, %v368, %v1894
  %v8680 = vsel %vm8470, %v369, %v1896
  %v8681 = vsel %vm8470, %v371, %v1898
  %v8682 = vsel %vm8470, %v372, %v1900
  %v8683 = vsel %vm8470, %v374, %v1902
  %v8684 = vsel %vm8470, %v375, %v1904
  %v8685 = vsel %vm8470, %v377, %v1906
  %v8686 = vsel %vm8470, %v378, %v1908
  %v8687 = vsel %vm8470, %v380, %v1910
  %v8688 = vsel %vm8470, %v381, %v1912
  %v8689 = vsel %vm8470, %v383, %v1914
  %v8690 = vsel %vm8470, %v384, %v1916
  %v8691 = vsel %vm8470, %v386, %v1918
  %v8692 = vsel %vm8470, %v387, %v1920
  %v8693 = vsel %vm8470, %v389, %v1922
  %v8694 = vsel %vm8470, %v390, %v1924
  %v8695 = vsel %vm8470, %v398, %v1926
  %v8696 = vsel %vm8470, %v399, %v1928
  %v8697 = vsel %vm8470, %v401, %v1930
  %v8698 = vsel %vm8470, %v402, %v1932
  %v8699 = vsel %vm8470, %v404, %v1934
  %v8700 = vsel %vm8470, %v405, %v1936
  %v8701 = vsel %vm8470, %v407, %v1938
  %v8702 = vsel %vm8470, %v408, %v1940
  %v8703 = vsel %vm8470, %v410, %v1942
  %v8704 = vsel %vm8470, %v411, %v1944
  %v8705 = vsel %vm8470, %v413, %v1946
  %v8706 = vsel %vm8470, %v414, %v1948
  %v8707 = vsel %vm8470, %v416, %v1950
  %v8708 = vsel %vm8470, %v417, %v1952
  %v8709 = vsel %vm8470, %v419, %v1954
  %v8710 = vsel %vm8470, %v420, %v1956
  %v8711 = vsel %vm8470, %v422, %v1958
  %v8712 = vsel %vm8470, %v423, %v1960
  %v8713 = vsel %vm8470, %v425, %v1962
  %v8714 = vsel %vm8470, %v426, %v1964
  %v8715 = vsel %vm8470, %v428, %v1966
  %v8716 = vsel %vm8470, %v429, %v1968
  %v8717 = vsel %vm8470, %v431, %v1970
  %v8718 = vsel %vm8470, %v432, %v1972
  %v8719 = vsel %vm8470, %v434, %v1974
  %v8720 = vsel %vm8470, %v435, %v1976
  %v8721 = vsel %vm8470, %v437, %v1978
  %v8722 = vsel %vm8470, %v438, %v1980
  %v8723 = vsel %vm8470, %v440, %v1982
  %v8724 = vsel %vm8470, %v441, %v1984
  %v8725 = vsel %vm8470, %v443, %v1986
  %v8726 = vsel %vm8470, %v444, %v1988
  %vm8727 = vcmask 48128
  %v8728 = vsel %vm8727, %v8471, %v2887
  %v8729 = vsel %vm8727, %v8472, %v2889
  %v8730 = vsel %vm8727, %v8473, %v2891
  %v8731 = vsel %vm8727, %v8474, %v2893
  %v8732 = vsel %vm8727, %v8475, %v2895
  %v8733 = vsel %vm8727, %v8476, %v2897
  %v8734 = vsel %vm8727, %v8477, %v2899
  %v8735 = vsel %vm8727, %v8478, %v2901
  %v8736 = vsel %vm8727, %v8479, %v2903
  %v8737 = vsel %vm8727, %v8480, %v2905
  %v8738 = vsel %vm8727, %v8481, %v2907
  %v8739 = vsel %vm8727, %v8482, %v2909
  %v8740 = vsel %vm8727, %v8483, %v2911
  %v8741 = vsel %vm8727, %v8484, %v2913
  %v8742 = vsel %vm8727, %v8485, %v2915
  %v8743 = vsel %vm8727, %v8486, %v2917
  %v8744 = vsel %vm8727, %v8487, %v2919
  %v8745 = vsel %vm8727, %v8488, %v2921
  %v8746 = vsel %vm8727, %v8489, %v2923
  %v8747 = vsel %vm8727, %v8490, %v2925
  %v8748 = vsel %vm8727, %v8491, %v2927
  %v8749 = vsel %vm8727, %v8492, %v2929
  %v8750 = vsel %vm8727, %v8493, %v2931
  %v8751 = vsel %vm8727, %v8494, %v2933
  %v8752 = vsel %vm8727, %v8495, %v2935
  %v8753 = vsel %vm8727, %v8496, %v2937
  %v8754 = vsel %vm8727, %v8497, %v2939
  %v8755 = vsel %vm8727, %v8498, %v2941
  %v8756 = vsel %vm8727, %v8499, %v2943
  %v8757 = vsel %vm8727, %v8500, %v2945
  %v8758 = vsel %vm8727, %v8501, %v2947
  %v8759 = vsel %vm8727, %v8502, %v2949
  %v8760 = vsel %vm8727, %v8503, %v2951
  %v8761 = vsel %vm8727, %v8504, %v2953
  %v8762 = vsel %vm8727, %v8505, %v2955
  %v8763 = vsel %vm8727, %v8506, %v2957
  %v8764 = vsel %vm8727, %v8507, %v2959
  %v8765 = vsel %vm8727, %v8508, %v2961
  %v8766 = vsel %vm8727, %v8509, %v2963
  %v8767 = vsel %vm8727, %v8510, %v2965
  %v8768 = vsel %vm8727, %v8511, %v2967
  %v8769 = vsel %vm8727, %v8512, %v2969
  %v8770 = vsel %vm8727, %v8513, %v2971
  %v8771 = vsel %vm8727, %v8514, %v2973
  %v8772 = vsel %vm8727, %v8515, %v2975
  %v8773 = vsel %vm8727, %v8516, %v2977
  %v8774 = vsel %vm8727, %v8517, %v2979
  %v8775 = vsel %vm8727, %v8518, %v2981
  %v8776 = vsel %vm8727, %v8519, %v2983
  %v8777 = vsel %vm8727, %v8520, %v2985
  %v8778 = vsel %vm8727, %v8521, %v2987
  %v8779 = vsel %vm8727, %v8522, %v2989
  %v8780 = vsel %vm8727, %v8523, %v2991
  %v8781 = vsel %vm8727, %v8524, %v2993
  %v8782 = vsel %vm8727, %v8525, %v2995
  %v8783 = vsel %vm8727, %v8526, %v2997
  %v8784 = vsel %vm8727, %v8527, %v2999
  %v8785 = vsel %vm8727, %v8528, %v3001
  %v8786 = vsel %vm8727, %v8529, %v3003
  %v8787 = vsel %vm8727, %v8530, %v3005
  %v8788 = vsel %vm8727, %v8531, %v3007
  %v8789 = vsel %vm8727, %v8532, %v3009
  %v8790 = vsel %vm8727, %v8533, %v3011
  %v8791 = vsel %vm8727, %v8534, %v3013
  %v8792 = vsel %vm8727, %v8535, %v3015
  %v8793 = vsel %vm8727, %v8536, %v3017
  %v8794 = vsel %vm8727, %v8537, %v3019
  %v8795 = vsel %vm8727, %v8538, %v3021
  %v8796 = vsel %vm8727, %v8539, %v3023
  %v8797 = vsel %vm8727, %v8540, %v3025
  %v8798 = vsel %vm8727, %v8541, %v3027
  %v8799 = vsel %vm8727, %v8542, %v3029
  %v8800 = vsel %vm8727, %v8543, %v3031
  %v8801 = vsel %vm8727, %v8544, %v3033
  %v8802 = vsel %vm8727, %v8545, %v3035
  %v8803 = vsel %vm8727, %v8546, %v3037
  %v8804 = vsel %vm8727, %v8547, %v3039
  %v8805 = vsel %vm8727, %v8548, %v3041
  %v8806 = vsel %vm8727, %v8549, %v3043
  %v8807 = vsel %vm8727, %v8550, %v3045
  %v8808 = vsel %vm8727, %v8551, %v3047
  %v8809 = vsel %vm8727, %v8552, %v3049
  %v8810 = vsel %vm8727, %v8553, %v3051
  %v8811 = vsel %vm8727, %v8554, %v3053
  %v8812 = vsel %vm8727, %v8555, %v3055
  %v8813 = vsel %vm8727, %v8556, %v3057
  %v8814 = vsel %vm8727, %v8557, %v3059
  %v8815 = vsel %vm8727, %v8558, %v3061
  %v8816 = vsel %vm8727, %v8559, %v3063
  %v8817 = vsel %vm8727, %v8560, %v3065
  %v8818 = vsel %vm8727, %v8561, %v3067
  %v8819 = vsel %vm8727, %v8562, %v3069
  %v8820 = vsel %vm8727, %v8563, %v3071
  %v8821 = vsel %vm8727, %v8564, %v3073
  %v8822 = vsel %vm8727, %v8565, %v3075
  %v8823 = vsel %vm8727, %v8566, %v3077
  %v8824 = vsel %vm8727, %v8567, %v3079
  %v8825 = vsel %vm8727, %v8568, %v3081
  %v8826 = vsel %vm8727, %v8569, %v3083
  %v8827 = vsel %vm8727, %v8570, %v3085
  %v8828 = vsel %vm8727, %v8571, %v3087
  %v8829 = vsel %vm8727, %v8572, %v3089
  %v8830 = vsel %vm8727, %v8573, %v3091
  %v8831 = vsel %vm8727, %v8574, %v3093
  %v8832 = vsel %vm8727, %v8575, %v3095
  %v8833 = vsel %vm8727, %v8576, %v3097
  %v8834 = vsel %vm8727, %v8577, %v3099
  %v8835 = vsel %vm8727, %v8578, %v3101
  %v8836 = vsel %vm8727, %v8579, %v3103
  %v8837 = vsel %vm8727, %v8580, %v3105
  %v8838 = vsel %vm8727, %v8581, %v3107
  %v8839 = vsel %vm8727, %v8582, %v3109
  %v8840 = vsel %vm8727, %v8583, %v3111
  %v8841 = vsel %vm8727, %v8584, %v3113
  %v8842 = vsel %vm8727, %v8585, %v3115
  %v8843 = vsel %vm8727, %v8586, %v3117
  %v8844 = vsel %vm8727, %v8587, %v3119
  %v8845 = vsel %vm8727, %v8588, %v3121
  %v8846 = vsel %vm8727, %v8589, %v3123
  %v8847 = vsel %vm8727, %v8590, %v3125
  %v8848 = vsel %vm8727, %v8591, %v3127
  %v8849 = vsel %vm8727, %v8592, %v3129
  %v8850 = vsel %vm8727, %v8593, %v3131
  %v8851 = vsel %vm8727, %v8594, %v3133
  %v8852 = vsel %vm8727, %v8595, %v3135
  %v8853 = vsel %vm8727, %v8596, %v3137
  %v8854 = vsel %vm8727, %v8597, %v3139
  %v8855 = vsel %vm8727, %v8598, %v3141
  %v8856 = vsel %vm8727, %v8599, %v3143
  %v8857 = vsel %vm8727, %v8600, %v3145
  %v8858 = vsel %vm8727, %v8601, %v3147
  %v8859 = vsel %vm8727, %v8602, %v3149
  %v8860 = vsel %vm8727, %v8603, %v3151
  %v8861 = vsel %vm8727, %v8604, %v3153
  %v8862 = vsel %vm8727, %v8605, %v3155
  %v8863 = vsel %vm8727, %v8606, %v3157
  %v8864 = vsel %vm8727, %v8607, %v3159
  %v8865 = vsel %vm8727, %v8608, %v3161
  %v8866 = vsel %vm8727, %v8609, %v3163
  %v8867 = vsel %vm8727, %v8610, %v3165
  %v8868 = vsel %vm8727, %v8611, %v3167
  %v8869 = vsel %vm8727, %v8612, %v3169
  %v8870 = vsel %vm8727, %v8613, %v3171
  %v8871 = vsel %vm8727, %v8614, %v3173
  %v8872 = vsel %vm8727, %v8615, %v3175
  %v8873 = vsel %vm8727, %v8616, %v3177
  %v8874 = vsel %vm8727, %v8617, %v3179
  %v8875 = vsel %vm8727, %v8618, %v3181
  %v8876 = vsel %vm8727, %v8619, %v3183
  %v8877 = vsel %vm8727, %v8620, %v3185
  %v8878 = vsel %vm8727, %v8621, %v3187
  %v8879 = vsel %vm8727, %v8622, %v3189
  %v8880 = vsel %vm8727, %v8623, %v3191
  %v8881 = vsel %vm8727, %v8624, %v3193
  %v8882 = vsel %vm8727, %v8625, %v3195
  %v8883 = vsel %vm8727, %v8626, %v3197
  %v8884 = vsel %vm8727, %v8627, %v3199
  %v8885 = vsel %vm8727, %v8628, %v3201
  %v8886 = vsel %vm8727, %v8629, %v3203
  %v8887 = vsel %vm8727, %v8630, %v3205
  %v8888 = vsel %vm8727, %v8631, %v3207
  %v8889 = vsel %vm8727, %v8632, %v3209
  %v8890 = vsel %vm8727, %v8633, %v3211
  %v8891 = vsel %vm8727, %v8634, %v3213
  %v8892 = vsel %vm8727, %v8635, %v3215
  %v8893 = vsel %vm8727, %v8636, %v3217
  %v8894 = vsel %vm8727, %v8637, %v3219
  %v8895 = vsel %vm8727, %v8638, %v3221
  %v8896 = vsel %vm8727, %v8639, %v3223
  %v8897 = vsel %vm8727, %v8640, %v3225
  %v8898 = vsel %vm8727, %v8641, %v3227
  %v8899 = vsel %vm8727, %v8642, %v3229
  %v8900 = vsel %vm8727, %v8643, %v3231
  %v8901 = vsel %vm8727, %v8644, %v3233
  %v8902 = vsel %vm8727, %v8645, %v3235
  %v8903 = vsel %vm8727, %v8646, %v3237
  %v8904 = vsel %vm8727, %v8647, %v3239
  %v8905 = vsel %vm8727, %v8648, %v3241
  %v8906 = vsel %vm8727, %v8649, %v3243
  %v8907 = vsel %vm8727, %v8650, %v3245
  %v8908 = vsel %vm8727, %v8651, %v3247
  %v8909 = vsel %vm8727, %v8652, %v3249
  %v8910 = vsel %vm8727, %v8653, %v3251
  %v8911 = vsel %vm8727, %v8654, %v3253
  %v8912 = vsel %vm8727, %v8655, %v3255
  %v8913 = vsel %vm8727, %v8656, %v3257
  %v8914 = vsel %vm8727, %v8657, %v3259
  %v8915 = vsel %vm8727, %v8658, %v3261
  %v8916 = vsel %vm8727, %v8659, %v3263
  %v8917 = vsel %vm8727, %v8660, %v3265
  %v8918 = vsel %vm8727, %v8661, %v3267
  %v8919 = vsel %vm8727, %v8662, %v3269
  %v8920 = vsel %vm8727, %v8663, %v3271
  %v8921 = vsel %vm8727, %v8664, %v3273
  %v8922 = vsel %vm8727, %v8665, %v3275
  %v8923 = vsel %vm8727, %v8666, %v3277
  %v8924 = vsel %vm8727, %v8667, %v3279
  %v8925 = vsel %vm8727, %v8668, %v3281
  %v8926 = vsel %vm8727, %v8669, %v3283
  %v8927 = vsel %vm8727, %v8670, %v3285
  %v8928 = vsel %vm8727, %v8671, %v3287
  %v8929 = vsel %vm8727, %v8672, %v3289
  %v8930 = vsel %vm8727, %v8673, %v3291
  %v8931 = vsel %vm8727, %v8674, %v3293
  %v8932 = vsel %vm8727, %v8675, %v3295
  %v8933 = vsel %vm8727, %v8676, %v3297
  %v8934 = vsel %vm8727, %v8677, %v3299
  %v8935 = vsel %vm8727, %v8678, %v3301
  %v8936 = vsel %vm8727, %v8679, %v3303
  %v8937 = vsel %vm8727, %v8680, %v3305
  %v8938 = vsel %vm8727, %v8681, %v3307
  %v8939 = vsel %vm8727, %v8682, %v3309
  %v8940 = vsel %vm8727, %v8683, %v3311
  %v8941 = vsel %vm8727, %v8684, %v3313
  %v8942 = vsel %vm8727, %v8685, %v3315
  %v8943 = vsel %vm8727, %v8686, %v3317
  %v8944 = vsel %vm8727, %v8687, %v3319
  %v8945 = vsel %vm8727, %v8688, %v3321
  %v8946 = vsel %vm8727, %v8689, %v3323
  %v8947 = vsel %vm8727, %v8690, %v3325
  %v8948 = vsel %vm8727, %v8691, %v3327
  %v8949 = vsel %vm8727, %v8692, %v3329
  %v8950 = vsel %vm8727, %v8693, %v3331
  %v8951 = vsel %vm8727, %v8694, %v3333
  %v8952 = vsel %vm8727, %v8695, %v3335
  %v8953 = vsel %vm8727, %v8696, %v3337
  %v8954 = vsel %vm8727, %v8697, %v3339
  %v8955 = vsel %vm8727, %v8698, %v3341
  %v8956 = vsel %vm8727, %v8699, %v3343
  %v8957 = vsel %vm8727, %v8700, %v3345
  %v8958 = vsel %vm8727, %v8701, %v3347
  %v8959 = vsel %vm8727, %v8702, %v3349
  %v8960 = vsel %vm8727, %v8703, %v3351
  %v8961 = vsel %vm8727, %v8704, %v3353
  %v8962 = vsel %vm8727, %v8705, %v3355
  %v8963 = vsel %vm8727, %v8706, %v3357
  %v8964 = vsel %vm8727, %v8707, %v3359
  %v8965 = vsel %vm8727, %v8708, %v3361
  %v8966 = vsel %vm8727, %v8709, %v3363
  %v8967 = vsel %vm8727, %v8710, %v3365
  %v8968 = vsel %vm8727, %v8711, %v3367
  %v8969 = vsel %vm8727, %v8712, %v3369
  %v8970 = vsel %vm8727, %v8713, %v3371
  %v8971 = vsel %vm8727, %v8714, %v3373
  %v8972 = vsel %vm8727, %v8715, %v3375
  %v8973 = vsel %vm8727, %v8716, %v3377
  %v8974 = vsel %vm8727, %v8717, %v3379
  %v8975 = vsel %vm8727, %v8718, %v3381
  %v8976 = vsel %vm8727, %v8719, %v3383
  %v8977 = vsel %vm8727, %v8720, %v3385
  %v8978 = vsel %vm8727, %v8721, %v3387
  %v8979 = vsel %vm8727, %v8722, %v3389
  %v8980 = vsel %vm8727, %v8723, %v3391
  %v8981 = vsel %vm8727, %v8724, %v3393
  %v8982 = vsel %vm8727, %v8725, %v3395
  %v8983 = vsel %vm8727, %v8726, %v3397
  %vm8984 = vcmask 72704
  %v8985 = vsel %vm8984, %v8728, %v3671
  %v8986 = vsel %vm8984, %v8729, %v3673
  %v8987 = vsel %vm8984, %v8730, %v3675
  %v8988 = vsel %vm8984, %v8731, %v3677
  %v8989 = vsel %vm8984, %v8732, %v3679
  %v8990 = vsel %vm8984, %v8733, %v3681
  %v8991 = vsel %vm8984, %v8734, %v3683
  %v8992 = vsel %vm8984, %v8735, %v3685
  %v8993 = vsel %vm8984, %v8736, %v3687
  %v8994 = vsel %vm8984, %v8737, %v3689
  %v8995 = vsel %vm8984, %v8738, %v3691
  %v8996 = vsel %vm8984, %v8739, %v3693
  %v8997 = vsel %vm8984, %v8740, %v3695
  %v8998 = vsel %vm8984, %v8741, %v3697
  %v8999 = vsel %vm8984, %v8742, %v3699
  %v9000 = vsel %vm8984, %v8743, %v3701
  %v9001 = vsel %vm8984, %v8744, %v3703
  %v9002 = vsel %vm8984, %v8745, %v3705
  %v9003 = vsel %vm8984, %v8746, %v3707
  %v9004 = vsel %vm8984, %v8747, %v3709
  %v9005 = vsel %vm8984, %v8748, %v3711
  %v9006 = vsel %vm8984, %v8749, %v3713
  %v9007 = vsel %vm8984, %v8750, %v3715
  %v9008 = vsel %vm8984, %v8751, %v3717
  %v9009 = vsel %vm8984, %v8752, %v3719
  %v9010 = vsel %vm8984, %v8753, %v3721
  %v9011 = vsel %vm8984, %v8754, %v3723
  %v9012 = vsel %vm8984, %v8755, %v3725
  %v9013 = vsel %vm8984, %v8756, %v3727
  %v9014 = vsel %vm8984, %v8757, %v3729
  %v9015 = vsel %vm8984, %v8758, %v3731
  %v9016 = vsel %vm8984, %v8759, %v3733
  %v9017 = vsel %vm8984, %v8760, %v3735
  %v9018 = vsel %vm8984, %v8761, %v3737
  %v9019 = vsel %vm8984, %v8762, %v3739
  %v9020 = vsel %vm8984, %v8763, %v3741
  %v9021 = vsel %vm8984, %v8764, %v3743
  %v9022 = vsel %vm8984, %v8765, %v3745
  %v9023 = vsel %vm8984, %v8766, %v3747
  %v9024 = vsel %vm8984, %v8767, %v3749
  %v9025 = vsel %vm8984, %v8768, %v3751
  %v9026 = vsel %vm8984, %v8769, %v3753
  %v9027 = vsel %vm8984, %v8770, %v3755
  %v9028 = vsel %vm8984, %v8771, %v3757
  %v9029 = vsel %vm8984, %v8772, %v3759
  %v9030 = vsel %vm8984, %v8773, %v3761
  %v9031 = vsel %vm8984, %v8774, %v3763
  %v9032 = vsel %vm8984, %v8775, %v3765
  %v9033 = vsel %vm8984, %v8776, %v3767
  %v9034 = vsel %vm8984, %v8777, %v3769
  %v9035 = vsel %vm8984, %v8778, %v3771
  %v9036 = vsel %vm8984, %v8779, %v3773
  %v9037 = vsel %vm8984, %v8780, %v3775
  %v9038 = vsel %vm8984, %v8781, %v3777
  %v9039 = vsel %vm8984, %v8782, %v3779
  %v9040 = vsel %vm8984, %v8783, %v3781
  %v9041 = vsel %vm8984, %v8784, %v3783
  %v9042 = vsel %vm8984, %v8785, %v3785
  %v9043 = vsel %vm8984, %v8786, %v3787
  %v9044 = vsel %vm8984, %v8787, %v3789
  %v9045 = vsel %vm8984, %v8788, %v3791
  %v9046 = vsel %vm8984, %v8789, %v3793
  %v9047 = vsel %vm8984, %v8790, %v3795
  %v9048 = vsel %vm8984, %v8791, %v3797
  %v9049 = vsel %vm8984, %v8792, %v3799
  %v9050 = vsel %vm8984, %v8793, %v3801
  %v9051 = vsel %vm8984, %v8794, %v3803
  %v9052 = vsel %vm8984, %v8795, %v3805
  %v9053 = vsel %vm8984, %v8796, %v3807
  %v9054 = vsel %vm8984, %v8797, %v3809
  %v9055 = vsel %vm8984, %v8798, %v3811
  %v9056 = vsel %vm8984, %v8799, %v3813
  %v9057 = vsel %vm8984, %v8800, %v3815
  %v9058 = vsel %vm8984, %v8801, %v3817
  %v9059 = vsel %vm8984, %v8802, %v3819
  %v9060 = vsel %vm8984, %v8803, %v3821
  %v9061 = vsel %vm8984, %v8804, %v3823
  %v9062 = vsel %vm8984, %v8805, %v3825
  %v9063 = vsel %vm8984, %v8806, %v3827
  %v9064 = vsel %vm8984, %v8807, %v3829
  %v9065 = vsel %vm8984, %v8808, %v3831
  %v9066 = vsel %vm8984, %v8809, %v3833
  %v9067 = vsel %vm8984, %v8810, %v3835
  %v9068 = vsel %vm8984, %v8811, %v3837
  %v9069 = vsel %vm8984, %v8812, %v3839
  %v9070 = vsel %vm8984, %v8813, %v3841
  %v9071 = vsel %vm8984, %v8814, %v3843
  %v9072 = vsel %vm8984, %v8815, %v3845
  %v9073 = vsel %vm8984, %v8816, %v3847
  %v9074 = vsel %vm8984, %v8817, %v3849
  %v9075 = vsel %vm8984, %v8818, %v3851
  %v9076 = vsel %vm8984, %v8819, %v3853
  %v9077 = vsel %vm8984, %v8820, %v3855
  %v9078 = vsel %vm8984, %v8821, %v3857
  %v9079 = vsel %vm8984, %v8822, %v3859
  %v9080 = vsel %vm8984, %v8823, %v3861
  %v9081 = vsel %vm8984, %v8824, %v3863
  %v9082 = vsel %vm8984, %v8825, %v3865
  %v9083 = vsel %vm8984, %v8826, %v3867
  %v9084 = vsel %vm8984, %v8827, %v3869
  %v9085 = vsel %vm8984, %v8828, %v3871
  %v9086 = vsel %vm8984, %v8829, %v3873
  %v9087 = vsel %vm8984, %v8830, %v3875
  %v9088 = vsel %vm8984, %v8831, %v3877
  %v9089 = vsel %vm8984, %v8832, %v3879
  %v9090 = vsel %vm8984, %v8833, %v3881
  %v9091 = vsel %vm8984, %v8834, %v3883
  %v9092 = vsel %vm8984, %v8835, %v3885
  %v9093 = vsel %vm8984, %v8836, %v3887
  %v9094 = vsel %vm8984, %v8837, %v3889
  %v9095 = vsel %vm8984, %v8838, %v3891
  %v9096 = vsel %vm8984, %v8839, %v3893
  %v9097 = vsel %vm8984, %v8840, %v3895
  %v9098 = vsel %vm8984, %v8841, %v3897
  %v9099 = vsel %vm8984, %v8842, %v3899
  %v9100 = vsel %vm8984, %v8843, %v3901
  %v9101 = vsel %vm8984, %v8844, %v3903
  %v9102 = vsel %vm8984, %v8845, %v3905
  %v9103 = vsel %vm8984, %v8846, %v3907
  %v9104 = vsel %vm8984, %v8847, %v3909
  %v9105 = vsel %vm8984, %v8848, %v3911
  %v9106 = vsel %vm8984, %v8849, %v3913
  %v9107 = vsel %vm8984, %v8850, %v3915
  %v9108 = vsel %vm8984, %v8851, %v3917
  %v9109 = vsel %vm8984, %v8852, %v3919
  %v9110 = vsel %vm8984, %v8853, %v3921
  %v9111 = vsel %vm8984, %v8854, %v3923
  %v9112 = vsel %vm8984, %v8855, %v3925
  %v9113 = vsel %vm8984, %v8856, %v3927
  %v9114 = vsel %vm8984, %v8857, %v3929
  %v9115 = vsel %vm8984, %v8858, %v3931
  %v9116 = vsel %vm8984, %v8859, %v3933
  %v9117 = vsel %vm8984, %v8860, %v3935
  %v9118 = vsel %vm8984, %v8861, %v3937
  %v9119 = vsel %vm8984, %v8862, %v3939
  %v9120 = vsel %vm8984, %v8863, %v3941
  %v9121 = vsel %vm8984, %v8864, %v3943
  %v9122 = vsel %vm8984, %v8865, %v3945
  %v9123 = vsel %vm8984, %v8866, %v3947
  %v9124 = vsel %vm8984, %v8867, %v3949
  %v9125 = vsel %vm8984, %v8868, %v3951
  %v9126 = vsel %vm8984, %v8869, %v3953
  %v9127 = vsel %vm8984, %v8870, %v3955
  %v9128 = vsel %vm8984, %v8871, %v3957
  %v9129 = vsel %vm8984, %v8872, %v3959
  %v9130 = vsel %vm8984, %v8873, %v3961
  %v9131 = vsel %vm8984, %v8874, %v3963
  %v9132 = vsel %vm8984, %v8875, %v3965
  %v9133 = vsel %vm8984, %v8876, %v3967
  %v9134 = vsel %vm8984, %v8877, %v3969
  %v9135 = vsel %vm8984, %v8878, %v3971
  %v9136 = vsel %vm8984, %v8879, %v3973
  %v9137 = vsel %vm8984, %v8880, %v3975
  %v9138 = vsel %vm8984, %v8881, %v3977
  %v9139 = vsel %vm8984, %v8882, %v3979
  %v9140 = vsel %vm8984, %v8883, %v3981
  %v9141 = vsel %vm8984, %v8884, %v3983
  %v9142 = vsel %vm8984, %v8885, %v3985
  %v9143 = vsel %vm8984, %v8886, %v3987
  %v9144 = vsel %vm8984, %v8887, %v3989
  %v9145 = vsel %vm8984, %v8888, %v3991
  %v9146 = vsel %vm8984, %v8889, %v3993
  %v9147 = vsel %vm8984, %v8890, %v3995
  %v9148 = vsel %vm8984, %v8891, %v3997
  %v9149 = vsel %vm8984, %v8892, %v3999
  %v9150 = vsel %vm8984, %v8893, %v4001
  %v9151 = vsel %vm8984, %v8894, %v4003
  %v9152 = vsel %vm8984, %v8895, %v4005
  %v9153 = vsel %vm8984, %v8896, %v4007
  %v9154 = vsel %vm8984, %v8897, %v4009
  %v9155 = vsel %vm8984, %v8898, %v4011
  %v9156 = vsel %vm8984, %v8899, %v4013
  %v9157 = vsel %vm8984, %v8900, %v4015
  %v9158 = vsel %vm8984, %v8901, %v4017
  %v9159 = vsel %vm8984, %v8902, %v4019
  %v9160 = vsel %vm8984, %v8903, %v4021
  %v9161 = vsel %vm8984, %v8904, %v4023
  %v9162 = vsel %vm8984, %v8905, %v4025
  %v9163 = vsel %vm8984, %v8906, %v4027
  %v9164 = vsel %vm8984, %v8907, %v4029
  %v9165 = vsel %vm8984, %v8908, %v4031
  %v9166 = vsel %vm8984, %v8909, %v4033
  %v9167 = vsel %vm8984, %v8910, %v4035
  %v9168 = vsel %vm8984, %v8911, %v4037
  %v9169 = vsel %vm8984, %v8912, %v4039
  %v9170 = vsel %vm8984, %v8913, %v4041
  %v9171 = vsel %vm8984, %v8914, %v4043
  %v9172 = vsel %vm8984, %v8915, %v4045
  %v9173 = vsel %vm8984, %v8916, %v4047
  %v9174 = vsel %vm8984, %v8917, %v4049
  %v9175 = vsel %vm8984, %v8918, %v4051
  %v9176 = vsel %vm8984, %v8919, %v4053
  %v9177 = vsel %vm8984, %v8920, %v4055
  %v9178 = vsel %vm8984, %v8921, %v4057
  %v9179 = vsel %vm8984, %v8922, %v4059
  %v9180 = vsel %vm8984, %v8923, %v4061
  %v9181 = vsel %vm8984, %v8924, %v4063
  %v9182 = vsel %vm8984, %v8925, %v4065
  %v9183 = vsel %vm8984, %v8926, %v4067
  %v9184 = vsel %vm8984, %v8927, %v4069
  %v9185 = vsel %vm8984, %v8928, %v4071
  %v9186 = vsel %vm8984, %v8929, %v4073
  %v9187 = vsel %vm8984, %v8930, %v4075
  %v9188 = vsel %vm8984, %v8931, %v4077
  %v9189 = vsel %vm8984, %v8932, %v4079
  %v9190 = vsel %vm8984, %v8933, %v4081
  %v9191 = vsel %vm8984, %v8934, %v4083
  %v9192 = vsel %vm8984, %v8935, %v4085
  %v9193 = vsel %vm8984, %v8936, %v4087
  %v9194 = vsel %vm8984, %v8937, %v4089
  %v9195 = vsel %vm8984, %v8938, %v4091
  %v9196 = vsel %vm8984, %v8939, %v4093
  %v9197 = vsel %vm8984, %v8940, %v4095
  %v9198 = vsel %vm8984, %v8941, %v4097
  %v9199 = vsel %vm8984, %v8942, %v4099
  %v9200 = vsel %vm8984, %v8943, %v4101
  %v9201 = vsel %vm8984, %v8944, %v4103
  %v9202 = vsel %vm8984, %v8945, %v4105
  %v9203 = vsel %vm8984, %v8946, %v4107
  %v9204 = vsel %vm8984, %v8947, %v4109
  %v9205 = vsel %vm8984, %v8948, %v4111
  %v9206 = vsel %vm8984, %v8949, %v4113
  %v9207 = vsel %vm8984, %v8950, %v4115
  %v9208 = vsel %vm8984, %v8951, %v4117
  %v9209 = vsel %vm8984, %v8952, %v4119
  %v9210 = vsel %vm8984, %v8953, %v4121
  %v9211 = vsel %vm8984, %v8954, %v4123
  %v9212 = vsel %vm8984, %v8955, %v4125
  %v9213 = vsel %vm8984, %v8956, %v4127
  %v9214 = vsel %vm8984, %v8957, %v4129
  %v9215 = vsel %vm8984, %v8958, %v4131
  %v9216 = vsel %vm8984, %v8959, %v4133
  %v9217 = vsel %vm8984, %v8960, %v4135
  %v9218 = vsel %vm8984, %v8961, %v4137
  %v9219 = vsel %vm8984, %v8962, %v4139
  %v9220 = vsel %vm8984, %v8963, %v4141
  %v9221 = vsel %vm8984, %v8964, %v4143
  %v9222 = vsel %vm8984, %v8965, %v4145
  %v9223 = vsel %vm8984, %v8966, %v4147
  %v9224 = vsel %vm8984, %v8967, %v4149
  %v9225 = vsel %vm8984, %v8968, %v4151
  %v9226 = vsel %vm8984, %v8969, %v4153
  %v9227 = vsel %vm8984, %v8970, %v4155
  %v9228 = vsel %vm8984, %v8971, %v4157
  %v9229 = vsel %vm8984, %v8972, %v4159
  %v9230 = vsel %vm8984, %v8973, %v4161
  %v9231 = vsel %vm8984, %v8974, %v4163
  %v9232 = vsel %vm8984, %v8975, %v4165
  %v9233 = vsel %vm8984, %v8976, %v4167
  %v9234 = vsel %vm8984, %v8977, %v4169
  %v9235 = vsel %vm8984, %v8978, %v4171
  %v9236 = vsel %vm8984, %v8979, %v4173
  %v9237 = vsel %vm8984, %v8980, %v4175
  %v9238 = vsel %vm8984, %v8981, %v4177
  %v9239 = vsel %vm8984, %v8982, %v4179
  %v9240 = vsel %vm8984, %v8983, %v4181
  %vm9241 = vcmask 97280
  %v9242 = vsel %vm9241, %v8985, %v4487
  %v9243 = vsel %vm9241, %v8986, %v4489
  %v9244 = vsel %vm9241, %v8987, %v4491
  %v9245 = vsel %vm9241, %v8988, %v4493
  %v9246 = vsel %vm9241, %v8989, %v4495
  %v9247 = vsel %vm9241, %v8990, %v4497
  %v9248 = vsel %vm9241, %v8991, %v4499
  %v9249 = vsel %vm9241, %v8992, %v4501
  %v9250 = vsel %vm9241, %v8993, %v4503
  %v9251 = vsel %vm9241, %v8994, %v4505
  %v9252 = vsel %vm9241, %v8995, %v4507
  %v9253 = vsel %vm9241, %v8996, %v4509
  %v9254 = vsel %vm9241, %v8997, %v4511
  %v9255 = vsel %vm9241, %v8998, %v4513
  %v9256 = vsel %vm9241, %v8999, %v4515
  %v9257 = vsel %vm9241, %v9000, %v4517
  %v9258 = vsel %vm9241, %v9001, %v4519
  %v9259 = vsel %vm9241, %v9002, %v4521
  %v9260 = vsel %vm9241, %v9003, %v4523
  %v9261 = vsel %vm9241, %v9004, %v4525
  %v9262 = vsel %vm9241, %v9005, %v4527
  %v9263 = vsel %vm9241, %v9006, %v4529
  %v9264 = vsel %vm9241, %v9007, %v4531
  %v9265 = vsel %vm9241, %v9008, %v4533
  %v9266 = vsel %vm9241, %v9009, %v4535
  %v9267 = vsel %vm9241, %v9010, %v4537
  %v9268 = vsel %vm9241, %v9011, %v4539
  %v9269 = vsel %vm9241, %v9012, %v4541
  %v9270 = vsel %vm9241, %v9013, %v4543
  %v9271 = vsel %vm9241, %v9014, %v4545
  %v9272 = vsel %vm9241, %v9015, %v4547
  %v9273 = vsel %vm9241, %v9016, %v4549
  %v9274 = vsel %vm9241, %v9017, %v4551
  %v9275 = vsel %vm9241, %v9018, %v4553
  %v9276 = vsel %vm9241, %v9019, %v4555
  %v9277 = vsel %vm9241, %v9020, %v4557
  %v9278 = vsel %vm9241, %v9021, %v4559
  %v9279 = vsel %vm9241, %v9022, %v4561
  %v9280 = vsel %vm9241, %v9023, %v4563
  %v9281 = vsel %vm9241, %v9024, %v4565
  %v9282 = vsel %vm9241, %v9025, %v4567
  %v9283 = vsel %vm9241, %v9026, %v4569
  %v9284 = vsel %vm9241, %v9027, %v4571
  %v9285 = vsel %vm9241, %v9028, %v4573
  %v9286 = vsel %vm9241, %v9029, %v4575
  %v9287 = vsel %vm9241, %v9030, %v4577
  %v9288 = vsel %vm9241, %v9031, %v4579
  %v9289 = vsel %vm9241, %v9032, %v4581
  %v9290 = vsel %vm9241, %v9033, %v4583
  %v9291 = vsel %vm9241, %v9034, %v4585
  %v9292 = vsel %vm9241, %v9035, %v4587
  %v9293 = vsel %vm9241, %v9036, %v4589
  %v9294 = vsel %vm9241, %v9037, %v4591
  %v9295 = vsel %vm9241, %v9038, %v4593
  %v9296 = vsel %vm9241, %v9039, %v4595
  %v9297 = vsel %vm9241, %v9040, %v4597
  %v9298 = vsel %vm9241, %v9041, %v4599
  %v9299 = vsel %vm9241, %v9042, %v4601
  %v9300 = vsel %vm9241, %v9043, %v4603
  %v9301 = vsel %vm9241, %v9044, %v4605
  %v9302 = vsel %vm9241, %v9045, %v4607
  %v9303 = vsel %vm9241, %v9046, %v4609
  %v9304 = vsel %vm9241, %v9047, %v4611
  %v9305 = vsel %vm9241, %v9048, %v4613
  %v9306 = vsel %vm9241, %v9049, %v4615
  %v9307 = vsel %vm9241, %v9050, %v4617
  %v9308 = vsel %vm9241, %v9051, %v4619
  %v9309 = vsel %vm9241, %v9052, %v4621
  %v9310 = vsel %vm9241, %v9053, %v4623
  %v9311 = vsel %vm9241, %v9054, %v4625
  %v9312 = vsel %vm9241, %v9055, %v4627
  %v9313 = vsel %vm9241, %v9056, %v4629
  %v9314 = vsel %vm9241, %v9057, %v4631
  %v9315 = vsel %vm9241, %v9058, %v4633
  %v9316 = vsel %vm9241, %v9059, %v4635
  %v9317 = vsel %vm9241, %v9060, %v4637
  %v9318 = vsel %vm9241, %v9061, %v4639
  %v9319 = vsel %vm9241, %v9062, %v4641
  %v9320 = vsel %vm9241, %v9063, %v4643
  %v9321 = vsel %vm9241, %v9064, %v4645
  %v9322 = vsel %vm9241, %v9065, %v4647
  %v9323 = vsel %vm9241, %v9066, %v4649
  %v9324 = vsel %vm9241, %v9067, %v4651
  %v9325 = vsel %vm9241, %v9068, %v4653
  %v9326 = vsel %vm9241, %v9069, %v4655
  %v9327 = vsel %vm9241, %v9070, %v4657
  %v9328 = vsel %vm9241, %v9071, %v4659
  %v9329 = vsel %vm9241, %v9072, %v4661
  %v9330 = vsel %vm9241, %v9073, %v4663
  %v9331 = vsel %vm9241, %v9074, %v4665
  %v9332 = vsel %vm9241, %v9075, %v4667
  %v9333 = vsel %vm9241, %v9076, %v4669
  %v9334 = vsel %vm9241, %v9077, %v4671
  %v9335 = vsel %vm9241, %v9078, %v4673
  %v9336 = vsel %vm9241, %v9079, %v4675
  %v9337 = vsel %vm9241, %v9080, %v4677
  %v9338 = vsel %vm9241, %v9081, %v4679
  %v9339 = vsel %vm9241, %v9082, %v4681
  %v9340 = vsel %vm9241, %v9083, %v4683
  %v9341 = vsel %vm9241, %v9084, %v4685
  %v9342 = vsel %vm9241, %v9085, %v4687
  %v9343 = vsel %vm9241, %v9086, %v4689
  %v9344 = vsel %vm9241, %v9087, %v4691
  %v9345 = vsel %vm9241, %v9088, %v4693
  %v9346 = vsel %vm9241, %v9089, %v4695
  %v9347 = vsel %vm9241, %v9090, %v4697
  %v9348 = vsel %vm9241, %v9091, %v4699
  %v9349 = vsel %vm9241, %v9092, %v4701
  %v9350 = vsel %vm9241, %v9093, %v4703
  %v9351 = vsel %vm9241, %v9094, %v4705
  %v9352 = vsel %vm9241, %v9095, %v4707
  %v9353 = vsel %vm9241, %v9096, %v4709
  %v9354 = vsel %vm9241, %v9097, %v4711
  %v9355 = vsel %vm9241, %v9098, %v4713
  %v9356 = vsel %vm9241, %v9099, %v4715
  %v9357 = vsel %vm9241, %v9100, %v4717
  %v9358 = vsel %vm9241, %v9101, %v4719
  %v9359 = vsel %vm9241, %v9102, %v4721
  %v9360 = vsel %vm9241, %v9103, %v4723
  %v9361 = vsel %vm9241, %v9104, %v4725
  %v9362 = vsel %vm9241, %v9105, %v4727
  %v9363 = vsel %vm9241, %v9106, %v4729
  %v9364 = vsel %vm9241, %v9107, %v4731
  %v9365 = vsel %vm9241, %v9108, %v4733
  %v9366 = vsel %vm9241, %v9109, %v4735
  %v9367 = vsel %vm9241, %v9110, %v4737
  %v9368 = vsel %vm9241, %v9111, %v4739
  %v9369 = vsel %vm9241, %v9112, %v4741
  %v9370 = vsel %vm9241, %v9113, %v4743
  %v9371 = vsel %vm9241, %v9114, %v4745
  %v9372 = vsel %vm9241, %v9115, %v4747
  %v9373 = vsel %vm9241, %v9116, %v4749
  %v9374 = vsel %vm9241, %v9117, %v4751
  %v9375 = vsel %vm9241, %v9118, %v4753
  %v9376 = vsel %vm9241, %v9119, %v4755
  %v9377 = vsel %vm9241, %v9120, %v4757
  %v9378 = vsel %vm9241, %v9121, %v4759
  %v9379 = vsel %vm9241, %v9122, %v4761
  %v9380 = vsel %vm9241, %v9123, %v4763
  %v9381 = vsel %vm9241, %v9124, %v4765
  %v9382 = vsel %vm9241, %v9125, %v4767
  %v9383 = vsel %vm9241, %v9126, %v4769
  %v9384 = vsel %vm9241, %v9127, %v4771
  %v9385 = vsel %vm9241, %v9128, %v4773
  %v9386 = vsel %vm9241, %v9129, %v4775
  %v9387 = vsel %vm9241, %v9130, %v4777
  %v9388 = vsel %vm9241, %v9131, %v4779
  %v9389 = vsel %vm9241, %v9132, %v4781
  %v9390 = vsel %vm9241, %v9133, %v4783
  %v9391 = vsel %vm9241, %v9134, %v4785
  %v9392 = vsel %vm9241, %v9135, %v4787
  %v9393 = vsel %vm9241, %v9136, %v4789
  %v9394 = vsel %vm9241, %v9137, %v4791
  %v9395 = vsel %vm9241, %v9138, %v4793
  %v9396 = vsel %vm9241, %v9139, %v4795
  %v9397 = vsel %vm9241, %v9140, %v4797
  %v9398 = vsel %vm9241, %v9141, %v4799
  %v9399 = vsel %vm9241, %v9142, %v4801
  %v9400 = vsel %vm9241, %v9143, %v4803
  %v9401 = vsel %vm9241, %v9144, %v4805
  %v9402 = vsel %vm9241, %v9145, %v4807
  %v9403 = vsel %vm9241, %v9146, %v4809
  %v9404 = vsel %vm9241, %v9147, %v4811
  %v9405 = vsel %vm9241, %v9148, %v4813
  %v9406 = vsel %vm9241, %v9149, %v4815
  %v9407 = vsel %vm9241, %v9150, %v4817
  %v9408 = vsel %vm9241, %v9151, %v4819
  %v9409 = vsel %vm9241, %v9152, %v4821
  %v9410 = vsel %vm9241, %v9153, %v4823
  %v9411 = vsel %vm9241, %v9154, %v4825
  %v9412 = vsel %vm9241, %v9155, %v4827
  %v9413 = vsel %vm9241, %v9156, %v4829
  %v9414 = vsel %vm9241, %v9157, %v4831
  %v9415 = vsel %vm9241, %v9158, %v4833
  %v9416 = vsel %vm9241, %v9159, %v4835
  %v9417 = vsel %vm9241, %v9160, %v4837
  %v9418 = vsel %vm9241, %v9161, %v4839
  %v9419 = vsel %vm9241, %v9162, %v4841
  %v9420 = vsel %vm9241, %v9163, %v4843
  %v9421 = vsel %vm9241, %v9164, %v4845
  %v9422 = vsel %vm9241, %v9165, %v4847
  %v9423 = vsel %vm9241, %v9166, %v4849
  %v9424 = vsel %vm9241, %v9167, %v4851
  %v9425 = vsel %vm9241, %v9168, %v4853
  %v9426 = vsel %vm9241, %v9169, %v4855
  %v9427 = vsel %vm9241, %v9170, %v4857
  %v9428 = vsel %vm9241, %v9171, %v4859
  %v9429 = vsel %vm9241, %v9172, %v4861
  %v9430 = vsel %vm9241, %v9173, %v4863
  %v9431 = vsel %vm9241, %v9174, %v4865
  %v9432 = vsel %vm9241, %v9175, %v4867
  %v9433 = vsel %vm9241, %v9176, %v4869
  %v9434 = vsel %vm9241, %v9177, %v4871
  %v9435 = vsel %vm9241, %v9178, %v4873
  %v9436 = vsel %vm9241, %v9179, %v4875
  %v9437 = vsel %vm9241, %v9180, %v4877
  %v9438 = vsel %vm9241, %v9181, %v4879
  %v9439 = vsel %vm9241, %v9182, %v4881
  %v9440 = vsel %vm9241, %v9183, %v4883
  %v9441 = vsel %vm9241, %v9184, %v4885
  %v9442 = vsel %vm9241, %v9185, %v4887
  %v9443 = vsel %vm9241, %v9186, %v4889
  %v9444 = vsel %vm9241, %v9187, %v4891
  %v9445 = vsel %vm9241, %v9188, %v4893
  %v9446 = vsel %vm9241, %v9189, %v4895
  %v9447 = vsel %vm9241, %v9190, %v4897
  %v9448 = vsel %vm9241, %v9191, %v4899
  %v9449 = vsel %vm9241, %v9192, %v4901
  %v9450 = vsel %vm9241, %v9193, %v4903
  %v9451 = vsel %vm9241, %v9194, %v4905
  %v9452 = vsel %vm9241, %v9195, %v4907
  %v9453 = vsel %vm9241, %v9196, %v4909
  %v9454 = vsel %vm9241, %v9197, %v4911
  %v9455 = vsel %vm9241, %v9198, %v4913
  %v9456 = vsel %vm9241, %v9199, %v4915
  %v9457 = vsel %vm9241, %v9200, %v4917
  %v9458 = vsel %vm9241, %v9201, %v4919
  %v9459 = vsel %vm9241, %v9202, %v4921
  %v9460 = vsel %vm9241, %v9203, %v4923
  %v9461 = vsel %vm9241, %v9204, %v4925
  %v9462 = vsel %vm9241, %v9205, %v4927
  %v9463 = vsel %vm9241, %v9206, %v4929
  %v9464 = vsel %vm9241, %v9207, %v4931
  %v9465 = vsel %vm9241, %v9208, %v4933
  %v9466 = vsel %vm9241, %v9209, %v4935
  %v9467 = vsel %vm9241, %v9210, %v4937
  %v9468 = vsel %vm9241, %v9211, %v4939
  %v9469 = vsel %vm9241, %v9212, %v4941
  %v9470 = vsel %vm9241, %v9213, %v4943
  %v9471 = vsel %vm9241, %v9214, %v4945
  %v9472 = vsel %vm9241, %v9215, %v4947
  %v9473 = vsel %vm9241, %v9216, %v4949
  %v9474 = vsel %vm9241, %v9217, %v4951
  %v9475 = vsel %vm9241, %v9218, %v4953
  %v9476 = vsel %vm9241, %v9219, %v4955
  %v9477 = vsel %vm9241, %v9220, %v4957
  %v9478 = vsel %vm9241, %v9221, %v4959
  %v9479 = vsel %vm9241, %v9222, %v4961
  %v9480 = vsel %vm9241, %v9223, %v4963
  %v9481 = vsel %vm9241, %v9224, %v4965
  %v9482 = vsel %vm9241, %v9225, %v4967
  %v9483 = vsel %vm9241, %v9226, %v4969
  %v9484 = vsel %vm9241, %v9227, %v4971
  %v9485 = vsel %vm9241, %v9228, %v4973
  %v9486 = vsel %vm9241, %v9229, %v4975
  %v9487 = vsel %vm9241, %v9230, %v4977
  %v9488 = vsel %vm9241, %v9231, %v4979
  %v9489 = vsel %vm9241, %v9232, %v4981
  %v9490 = vsel %vm9241, %v9233, %v4983
  %v9491 = vsel %vm9241, %v9234, %v4985
  %v9492 = vsel %vm9241, %v9235, %v4987
  %v9493 = vsel %vm9241, %v9236, %v4989
  %v9494 = vsel %vm9241, %v9237, %v4991
  %v9495 = vsel %vm9241, %v9238, %v4993
  %v9496 = vsel %vm9241, %v9239, %v4995
  %v9497 = vsel %vm9241, %v9240, %v4997
  %vm9498 = vcmask 121856
  %v9499 = vsel %vm9498, %v9242, %v5295
  %v9500 = vsel %vm9498, %v9243, %v5297
  %v9501 = vsel %vm9498, %v9244, %v5299
  %v9502 = vsel %vm9498, %v9245, %v5301
  %v9503 = vsel %vm9498, %v9246, %v5303
  %v9504 = vsel %vm9498, %v9247, %v5305
  %v9505 = vsel %vm9498, %v9248, %v5307
  %v9506 = vsel %vm9498, %v9249, %v5309
  %v9507 = vsel %vm9498, %v9250, %v5311
  %v9508 = vsel %vm9498, %v9251, %v5313
  %v9509 = vsel %vm9498, %v9252, %v5315
  %v9510 = vsel %vm9498, %v9253, %v5317
  %v9511 = vsel %vm9498, %v9254, %v5319
  %v9512 = vsel %vm9498, %v9255, %v5321
  %v9513 = vsel %vm9498, %v9256, %v5323
  %v9514 = vsel %vm9498, %v9257, %v5325
  %v9515 = vsel %vm9498, %v9258, %v5327
  %v9516 = vsel %vm9498, %v9259, %v5329
  %v9517 = vsel %vm9498, %v9260, %v5331
  %v9518 = vsel %vm9498, %v9261, %v5333
  %v9519 = vsel %vm9498, %v9262, %v5335
  %v9520 = vsel %vm9498, %v9263, %v5337
  %v9521 = vsel %vm9498, %v9264, %v5339
  %v9522 = vsel %vm9498, %v9265, %v5341
  %v9523 = vsel %vm9498, %v9266, %v5343
  %v9524 = vsel %vm9498, %v9267, %v5345
  %v9525 = vsel %vm9498, %v9268, %v5347
  %v9526 = vsel %vm9498, %v9269, %v5349
  %v9527 = vsel %vm9498, %v9270, %v5351
  %v9528 = vsel %vm9498, %v9271, %v5353
  %v9529 = vsel %vm9498, %v9272, %v5355
  %v9530 = vsel %vm9498, %v9273, %v5357
  %v9531 = vsel %vm9498, %v9274, %v5359
  %v9532 = vsel %vm9498, %v9275, %v5361
  %v9533 = vsel %vm9498, %v9276, %v5363
  %v9534 = vsel %vm9498, %v9277, %v5365
  %v9535 = vsel %vm9498, %v9278, %v5367
  %v9536 = vsel %vm9498, %v9279, %v5369
  %v9537 = vsel %vm9498, %v9280, %v5371
  %v9538 = vsel %vm9498, %v9281, %v5373
  %v9539 = vsel %vm9498, %v9282, %v5375
  %v9540 = vsel %vm9498, %v9283, %v5377
  %v9541 = vsel %vm9498, %v9284, %v5379
  %v9542 = vsel %vm9498, %v9285, %v5381
  %v9543 = vsel %vm9498, %v9286, %v5383
  %v9544 = vsel %vm9498, %v9287, %v5385
  %v9545 = vsel %vm9498, %v9288, %v5387
  %v9546 = vsel %vm9498, %v9289, %v5389
  %v9547 = vsel %vm9498, %v9290, %v5391
  %v9548 = vsel %vm9498, %v9291, %v5393
  %v9549 = vsel %vm9498, %v9292, %v5395
  %v9550 = vsel %vm9498, %v9293, %v5397
  %v9551 = vsel %vm9498, %v9294, %v5399
  %v9552 = vsel %vm9498, %v9295, %v5401
  %v9553 = vsel %vm9498, %v9296, %v5403
  %v9554 = vsel %vm9498, %v9297, %v5405
  %v9555 = vsel %vm9498, %v9298, %v5407
  %v9556 = vsel %vm9498, %v9299, %v5409
  %v9557 = vsel %vm9498, %v9300, %v5411
  %v9558 = vsel %vm9498, %v9301, %v5413
  %v9559 = vsel %vm9498, %v9302, %v5415
  %v9560 = vsel %vm9498, %v9303, %v5417
  %v9561 = vsel %vm9498, %v9304, %v5419
  %v9562 = vsel %vm9498, %v9305, %v5421
  %v9563 = vsel %vm9498, %v9306, %v5423
  %v9564 = vsel %vm9498, %v9307, %v5425
  %v9565 = vsel %vm9498, %v9308, %v5427
  %v9566 = vsel %vm9498, %v9309, %v5429
  %v9567 = vsel %vm9498, %v9310, %v5431
  %v9568 = vsel %vm9498, %v9311, %v5433
  %v9569 = vsel %vm9498, %v9312, %v5435
  %v9570 = vsel %vm9498, %v9313, %v5437
  %v9571 = vsel %vm9498, %v9314, %v5439
  %v9572 = vsel %vm9498, %v9315, %v5441
  %v9573 = vsel %vm9498, %v9316, %v5443
  %v9574 = vsel %vm9498, %v9317, %v5445
  %v9575 = vsel %vm9498, %v9318, %v5447
  %v9576 = vsel %vm9498, %v9319, %v5449
  %v9577 = vsel %vm9498, %v9320, %v5451
  %v9578 = vsel %vm9498, %v9321, %v5453
  %v9579 = vsel %vm9498, %v9322, %v5455
  %v9580 = vsel %vm9498, %v9323, %v5457
  %v9581 = vsel %vm9498, %v9324, %v5459
  %v9582 = vsel %vm9498, %v9325, %v5461
  %v9583 = vsel %vm9498, %v9326, %v5463
  %v9584 = vsel %vm9498, %v9327, %v5465
  %v9585 = vsel %vm9498, %v9328, %v5467
  %v9586 = vsel %vm9498, %v9329, %v5469
  %v9587 = vsel %vm9498, %v9330, %v5471
  %v9588 = vsel %vm9498, %v9331, %v5473
  %v9589 = vsel %vm9498, %v9332, %v5475
  %v9590 = vsel %vm9498, %v9333, %v5477
  %v9591 = vsel %vm9498, %v9334, %v5479
  %v9592 = vsel %vm9498, %v9335, %v5481
  %v9593 = vsel %vm9498, %v9336, %v5483
  %v9594 = vsel %vm9498, %v9337, %v5485
  %v9595 = vsel %vm9498, %v9338, %v5487
  %v9596 = vsel %vm9498, %v9339, %v5489
  %v9597 = vsel %vm9498, %v9340, %v5491
  %v9598 = vsel %vm9498, %v9341, %v5493
  %v9599 = vsel %vm9498, %v9342, %v5495
  %v9600 = vsel %vm9498, %v9343, %v5497
  %v9601 = vsel %vm9498, %v9344, %v5499
  %v9602 = vsel %vm9498, %v9345, %v5501
  %v9603 = vsel %vm9498, %v9346, %v5503
  %v9604 = vsel %vm9498, %v9347, %v5505
  %v9605 = vsel %vm9498, %v9348, %v5507
  %v9606 = vsel %vm9498, %v9349, %v5509
  %v9607 = vsel %vm9498, %v9350, %v5511
  %v9608 = vsel %vm9498, %v9351, %v5513
  %v9609 = vsel %vm9498, %v9352, %v5515
  %v9610 = vsel %vm9498, %v9353, %v5517
  %v9611 = vsel %vm9498, %v9354, %v5519
  %v9612 = vsel %vm9498, %v9355, %v5521
  %v9613 = vsel %vm9498, %v9356, %v5523
  %v9614 = vsel %vm9498, %v9357, %v5525
  %v9615 = vsel %vm9498, %v9358, %v5527
  %v9616 = vsel %vm9498, %v9359, %v5529
  %v9617 = vsel %vm9498, %v9360, %v5531
  %v9618 = vsel %vm9498, %v9361, %v5533
  %v9619 = vsel %vm9498, %v9362, %v5535
  %v9620 = vsel %vm9498, %v9363, %v5537
  %v9621 = vsel %vm9498, %v9364, %v5539
  %v9622 = vsel %vm9498, %v9365, %v5541
  %v9623 = vsel %vm9498, %v9366, %v5543
  %v9624 = vsel %vm9498, %v9367, %v5545
  %v9625 = vsel %vm9498, %v9368, %v5547
  %v9626 = vsel %vm9498, %v9369, %v5549
  %v9627 = vsel %vm9498, %v9370, %v5551
  %v9628 = vsel %vm9498, %v9371, %v5553
  %v9629 = vsel %vm9498, %v9372, %v5555
  %v9630 = vsel %vm9498, %v9373, %v5557
  %v9631 = vsel %vm9498, %v9374, %v5559
  %v9632 = vsel %vm9498, %v9375, %v5561
  %v9633 = vsel %vm9498, %v9376, %v5563
  %v9634 = vsel %vm9498, %v9377, %v5565
  %v9635 = vsel %vm9498, %v9378, %v5567
  %v9636 = vsel %vm9498, %v9379, %v5569
  %v9637 = vsel %vm9498, %v9380, %v5571
  %v9638 = vsel %vm9498, %v9381, %v5573
  %v9639 = vsel %vm9498, %v9382, %v5575
  %v9640 = vsel %vm9498, %v9383, %v5577
  %v9641 = vsel %vm9498, %v9384, %v5579
  %v9642 = vsel %vm9498, %v9385, %v5581
  %v9643 = vsel %vm9498, %v9386, %v5583
  %v9644 = vsel %vm9498, %v9387, %v5585
  %v9645 = vsel %vm9498, %v9388, %v5587
  %v9646 = vsel %vm9498, %v9389, %v5589
  %v9647 = vsel %vm9498, %v9390, %v5591
  %v9648 = vsel %vm9498, %v9391, %v5593
  %v9649 = vsel %vm9498, %v9392, %v5595
  %v9650 = vsel %vm9498, %v9393, %v5597
  %v9651 = vsel %vm9498, %v9394, %v5599
  %v9652 = vsel %vm9498, %v9395, %v5601
  %v9653 = vsel %vm9498, %v9396, %v5603
  %v9654 = vsel %vm9498, %v9397, %v5605
  %v9655 = vsel %vm9498, %v9398, %v5607
  %v9656 = vsel %vm9498, %v9399, %v5609
  %v9657 = vsel %vm9498, %v9400, %v5611
  %v9658 = vsel %vm9498, %v9401, %v5613
  %v9659 = vsel %vm9498, %v9402, %v5615
  %v9660 = vsel %vm9498, %v9403, %v5617
  %v9661 = vsel %vm9498, %v9404, %v5619
  %v9662 = vsel %vm9498, %v9405, %v5621
  %v9663 = vsel %vm9498, %v9406, %v5623
  %v9664 = vsel %vm9498, %v9407, %v5625
  %v9665 = vsel %vm9498, %v9408, %v5627
  %v9666 = vsel %vm9498, %v9409, %v5629
  %v9667 = vsel %vm9498, %v9410, %v5631
  %v9668 = vsel %vm9498, %v9411, %v5633
  %v9669 = vsel %vm9498, %v9412, %v5635
  %v9670 = vsel %vm9498, %v9413, %v5637
  %v9671 = vsel %vm9498, %v9414, %v5639
  %v9672 = vsel %vm9498, %v9415, %v5641
  %v9673 = vsel %vm9498, %v9416, %v5643
  %v9674 = vsel %vm9498, %v9417, %v5645
  %v9675 = vsel %vm9498, %v9418, %v5647
  %v9676 = vsel %vm9498, %v9419, %v5649
  %v9677 = vsel %vm9498, %v9420, %v5651
  %v9678 = vsel %vm9498, %v9421, %v5653
  %v9679 = vsel %vm9498, %v9422, %v5655
  %v9680 = vsel %vm9498, %v9423, %v5657
  %v9681 = vsel %vm9498, %v9424, %v5659
  %v9682 = vsel %vm9498, %v9425, %v5661
  %v9683 = vsel %vm9498, %v9426, %v5663
  %v9684 = vsel %vm9498, %v9427, %v5665
  %v9685 = vsel %vm9498, %v9428, %v5667
  %v9686 = vsel %vm9498, %v9429, %v5669
  %v9687 = vsel %vm9498, %v9430, %v5671
  %v9688 = vsel %vm9498, %v9431, %v5673
  %v9689 = vsel %vm9498, %v9432, %v5675
  %v9690 = vsel %vm9498, %v9433, %v5677
  %v9691 = vsel %vm9498, %v9434, %v5679
  %v9692 = vsel %vm9498, %v9435, %v5681
  %v9693 = vsel %vm9498, %v9436, %v5683
  %v9694 = vsel %vm9498, %v9437, %v5685
  %v9695 = vsel %vm9498, %v9438, %v5687
  %v9696 = vsel %vm9498, %v9439, %v5689
  %v9697 = vsel %vm9498, %v9440, %v5691
  %v9698 = vsel %vm9498, %v9441, %v5693
  %v9699 = vsel %vm9498, %v9442, %v5695
  %v9700 = vsel %vm9498, %v9443, %v5697
  %v9701 = vsel %vm9498, %v9444, %v5699
  %v9702 = vsel %vm9498, %v9445, %v5701
  %v9703 = vsel %vm9498, %v9446, %v5703
  %v9704 = vsel %vm9498, %v9447, %v5705
  %v9705 = vsel %vm9498, %v9448, %v5707
  %v9706 = vsel %vm9498, %v9449, %v5709
  %v9707 = vsel %vm9498, %v9450, %v5711
  %v9708 = vsel %vm9498, %v9451, %v5713
  %v9709 = vsel %vm9498, %v9452, %v5715
  %v9710 = vsel %vm9498, %v9453, %v5717
  %v9711 = vsel %vm9498, %v9454, %v5719
  %v9712 = vsel %vm9498, %v9455, %v5721
  %v9713 = vsel %vm9498, %v9456, %v5723
  %v9714 = vsel %vm9498, %v9457, %v5725
  %v9715 = vsel %vm9498, %v9458, %v5727
  %v9716 = vsel %vm9498, %v9459, %v5729
  %v9717 = vsel %vm9498, %v9460, %v5731
  %v9718 = vsel %vm9498, %v9461, %v5733
  %v9719 = vsel %vm9498, %v9462, %v5735
  %v9720 = vsel %vm9498, %v9463, %v5737
  %v9721 = vsel %vm9498, %v9464, %v5739
  %v9722 = vsel %vm9498, %v9465, %v5741
  %v9723 = vsel %vm9498, %v9466, %v5743
  %v9724 = vsel %vm9498, %v9467, %v5745
  %v9725 = vsel %vm9498, %v9468, %v5747
  %v9726 = vsel %vm9498, %v9469, %v5749
  %v9727 = vsel %vm9498, %v9470, %v5751
  %v9728 = vsel %vm9498, %v9471, %v5753
  %v9729 = vsel %vm9498, %v9472, %v5755
  %v9730 = vsel %vm9498, %v9473, %v5757
  %v9731 = vsel %vm9498, %v9474, %v5759
  %v9732 = vsel %vm9498, %v9475, %v5761
  %v9733 = vsel %vm9498, %v9476, %v5763
  %v9734 = vsel %vm9498, %v9477, %v5765
  %v9735 = vsel %vm9498, %v9478, %v5767
  %v9736 = vsel %vm9498, %v9479, %v5769
  %v9737 = vsel %vm9498, %v9480, %v5771
  %v9738 = vsel %vm9498, %v9481, %v5773
  %v9739 = vsel %vm9498, %v9482, %v5775
  %v9740 = vsel %vm9498, %v9483, %v5777
  %v9741 = vsel %vm9498, %v9484, %v5779
  %v9742 = vsel %vm9498, %v9485, %v5781
  %v9743 = vsel %vm9498, %v9486, %v5783
  %v9744 = vsel %vm9498, %v9487, %v5785
  %v9745 = vsel %vm9498, %v9488, %v5787
  %v9746 = vsel %vm9498, %v9489, %v5789
  %v9747 = vsel %vm9498, %v9490, %v5791
  %v9748 = vsel %vm9498, %v9491, %v5793
  %v9749 = vsel %vm9498, %v9492, %v5795
  %v9750 = vsel %vm9498, %v9493, %v5797
  %v9751 = vsel %vm9498, %v9494, %v5799
  %v9752 = vsel %vm9498, %v9495, %v5801
  %v9753 = vsel %vm9498, %v9496, %v5803
  %v9754 = vsel %vm9498, %v9497, %v5805
  %vm9755 = vcmask 146432
  %v9756 = vsel %vm9755, %v9499, %v6079
  %v9757 = vsel %vm9755, %v9500, %v6081
  %v9758 = vsel %vm9755, %v9501, %v6083
  %v9759 = vsel %vm9755, %v9502, %v6085
  %v9760 = vsel %vm9755, %v9503, %v6087
  %v9761 = vsel %vm9755, %v9504, %v6089
  %v9762 = vsel %vm9755, %v9505, %v6091
  %v9763 = vsel %vm9755, %v9506, %v6093
  %v9764 = vsel %vm9755, %v9507, %v6095
  %v9765 = vsel %vm9755, %v9508, %v6097
  %v9766 = vsel %vm9755, %v9509, %v6099
  %v9767 = vsel %vm9755, %v9510, %v6101
  %v9768 = vsel %vm9755, %v9511, %v6103
  %v9769 = vsel %vm9755, %v9512, %v6105
  %v9770 = vsel %vm9755, %v9513, %v6107
  %v9771 = vsel %vm9755, %v9514, %v6109
  %v9772 = vsel %vm9755, %v9515, %v6111
  %v9773 = vsel %vm9755, %v9516, %v6113
  %v9774 = vsel %vm9755, %v9517, %v6115
  %v9775 = vsel %vm9755, %v9518, %v6117
  %v9776 = vsel %vm9755, %v9519, %v6119
  %v9777 = vsel %vm9755, %v9520, %v6121
  %v9778 = vsel %vm9755, %v9521, %v6123
  %v9779 = vsel %vm9755, %v9522, %v6125
  %v9780 = vsel %vm9755, %v9523, %v6127
  %v9781 = vsel %vm9755, %v9524, %v6129
  %v9782 = vsel %vm9755, %v9525, %v6131
  %v9783 = vsel %vm9755, %v9526, %v6133
  %v9784 = vsel %vm9755, %v9527, %v6135
  %v9785 = vsel %vm9755, %v9528, %v6137
  %v9786 = vsel %vm9755, %v9529, %v6139
  %v9787 = vsel %vm9755, %v9530, %v6141
  %v9788 = vsel %vm9755, %v9531, %v6143
  %v9789 = vsel %vm9755, %v9532, %v6145
  %v9790 = vsel %vm9755, %v9533, %v6147
  %v9791 = vsel %vm9755, %v9534, %v6149
  %v9792 = vsel %vm9755, %v9535, %v6151
  %v9793 = vsel %vm9755, %v9536, %v6153
  %v9794 = vsel %vm9755, %v9537, %v6155
  %v9795 = vsel %vm9755, %v9538, %v6157
  %v9796 = vsel %vm9755, %v9539, %v6159
  %v9797 = vsel %vm9755, %v9540, %v6161
  %v9798 = vsel %vm9755, %v9541, %v6163
  %v9799 = vsel %vm9755, %v9542, %v6165
  %v9800 = vsel %vm9755, %v9543, %v6167
  %v9801 = vsel %vm9755, %v9544, %v6169
  %v9802 = vsel %vm9755, %v9545, %v6171
  %v9803 = vsel %vm9755, %v9546, %v6173
  %v9804 = vsel %vm9755, %v9547, %v6175
  %v9805 = vsel %vm9755, %v9548, %v6177
  %v9806 = vsel %vm9755, %v9549, %v6179
  %v9807 = vsel %vm9755, %v9550, %v6181
  %v9808 = vsel %vm9755, %v9551, %v6183
  %v9809 = vsel %vm9755, %v9552, %v6185
  %v9810 = vsel %vm9755, %v9553, %v6187
  %v9811 = vsel %vm9755, %v9554, %v6189
  %v9812 = vsel %vm9755, %v9555, %v6191
  %v9813 = vsel %vm9755, %v9556, %v6193
  %v9814 = vsel %vm9755, %v9557, %v6195
  %v9815 = vsel %vm9755, %v9558, %v6197
  %v9816 = vsel %vm9755, %v9559, %v6199
  %v9817 = vsel %vm9755, %v9560, %v6201
  %v9818 = vsel %vm9755, %v9561, %v6203
  %v9819 = vsel %vm9755, %v9562, %v6205
  %v9820 = vsel %vm9755, %v9563, %v6207
  %v9821 = vsel %vm9755, %v9564, %v6209
  %v9822 = vsel %vm9755, %v9565, %v6211
  %v9823 = vsel %vm9755, %v9566, %v6213
  %v9824 = vsel %vm9755, %v9567, %v6215
  %v9825 = vsel %vm9755, %v9568, %v6217
  %v9826 = vsel %vm9755, %v9569, %v6219
  %v9827 = vsel %vm9755, %v9570, %v6221
  %v9828 = vsel %vm9755, %v9571, %v6223
  %v9829 = vsel %vm9755, %v9572, %v6225
  %v9830 = vsel %vm9755, %v9573, %v6227
  %v9831 = vsel %vm9755, %v9574, %v6229
  %v9832 = vsel %vm9755, %v9575, %v6231
  %v9833 = vsel %vm9755, %v9576, %v6233
  %v9834 = vsel %vm9755, %v9577, %v6235
  %v9835 = vsel %vm9755, %v9578, %v6237
  %v9836 = vsel %vm9755, %v9579, %v6239
  %v9837 = vsel %vm9755, %v9580, %v6241
  %v9838 = vsel %vm9755, %v9581, %v6243
  %v9839 = vsel %vm9755, %v9582, %v6245
  %v9840 = vsel %vm9755, %v9583, %v6247
  %v9841 = vsel %vm9755, %v9584, %v6249
  %v9842 = vsel %vm9755, %v9585, %v6251
  %v9843 = vsel %vm9755, %v9586, %v6253
  %v9844 = vsel %vm9755, %v9587, %v6255
  %v9845 = vsel %vm9755, %v9588, %v6257
  %v9846 = vsel %vm9755, %v9589, %v6259
  %v9847 = vsel %vm9755, %v9590, %v6261
  %v9848 = vsel %vm9755, %v9591, %v6263
  %v9849 = vsel %vm9755, %v9592, %v6265
  %v9850 = vsel %vm9755, %v9593, %v6267
  %v9851 = vsel %vm9755, %v9594, %v6269
  %v9852 = vsel %vm9755, %v9595, %v6271
  %v9853 = vsel %vm9755, %v9596, %v6273
  %v9854 = vsel %vm9755, %v9597, %v6275
  %v9855 = vsel %vm9755, %v9598, %v6277
  %v9856 = vsel %vm9755, %v9599, %v6279
  %v9857 = vsel %vm9755, %v9600, %v6281
  %v9858 = vsel %vm9755, %v9601, %v6283
  %v9859 = vsel %vm9755, %v9602, %v6285
  %v9860 = vsel %vm9755, %v9603, %v6287
  %v9861 = vsel %vm9755, %v9604, %v6289
  %v9862 = vsel %vm9755, %v9605, %v6291
  %v9863 = vsel %vm9755, %v9606, %v6293
  %v9864 = vsel %vm9755, %v9607, %v6295
  %v9865 = vsel %vm9755, %v9608, %v6297
  %v9866 = vsel %vm9755, %v9609, %v6299
  %v9867 = vsel %vm9755, %v9610, %v6301
  %v9868 = vsel %vm9755, %v9611, %v6303
  %v9869 = vsel %vm9755, %v9612, %v6305
  %v9870 = vsel %vm9755, %v9613, %v6307
  %v9871 = vsel %vm9755, %v9614, %v6309
  %v9872 = vsel %vm9755, %v9615, %v6311
  %v9873 = vsel %vm9755, %v9616, %v6313
  %v9874 = vsel %vm9755, %v9617, %v6315
  %v9875 = vsel %vm9755, %v9618, %v6317
  %v9876 = vsel %vm9755, %v9619, %v6319
  %v9877 = vsel %vm9755, %v9620, %v6321
  %v9878 = vsel %vm9755, %v9621, %v6323
  %v9879 = vsel %vm9755, %v9622, %v6325
  %v9880 = vsel %vm9755, %v9623, %v6327
  %v9881 = vsel %vm9755, %v9624, %v6329
  %v9882 = vsel %vm9755, %v9625, %v6331
  %v9883 = vsel %vm9755, %v9626, %v6333
  %v9884 = vsel %vm9755, %v9627, %v6335
  %v9885 = vsel %vm9755, %v9628, %v6337
  %v9886 = vsel %vm9755, %v9629, %v6339
  %v9887 = vsel %vm9755, %v9630, %v6341
  %v9888 = vsel %vm9755, %v9631, %v6343
  %v9889 = vsel %vm9755, %v9632, %v6345
  %v9890 = vsel %vm9755, %v9633, %v6347
  %v9891 = vsel %vm9755, %v9634, %v6349
  %v9892 = vsel %vm9755, %v9635, %v6351
  %v9893 = vsel %vm9755, %v9636, %v6353
  %v9894 = vsel %vm9755, %v9637, %v6355
  %v9895 = vsel %vm9755, %v9638, %v6357
  %v9896 = vsel %vm9755, %v9639, %v6359
  %v9897 = vsel %vm9755, %v9640, %v6361
  %v9898 = vsel %vm9755, %v9641, %v6363
  %v9899 = vsel %vm9755, %v9642, %v6365
  %v9900 = vsel %vm9755, %v9643, %v6367
  %v9901 = vsel %vm9755, %v9644, %v6369
  %v9902 = vsel %vm9755, %v9645, %v6371
  %v9903 = vsel %vm9755, %v9646, %v6373
  %v9904 = vsel %vm9755, %v9647, %v6375
  %v9905 = vsel %vm9755, %v9648, %v6377
  %v9906 = vsel %vm9755, %v9649, %v6379
  %v9907 = vsel %vm9755, %v9650, %v6381
  %v9908 = vsel %vm9755, %v9651, %v6383
  %v9909 = vsel %vm9755, %v9652, %v6385
  %v9910 = vsel %vm9755, %v9653, %v6387
  %v9911 = vsel %vm9755, %v9654, %v6389
  %v9912 = vsel %vm9755, %v9655, %v6391
  %v9913 = vsel %vm9755, %v9656, %v6393
  %v9914 = vsel %vm9755, %v9657, %v6395
  %v9915 = vsel %vm9755, %v9658, %v6397
  %v9916 = vsel %vm9755, %v9659, %v6399
  %v9917 = vsel %vm9755, %v9660, %v6401
  %v9918 = vsel %vm9755, %v9661, %v6403
  %v9919 = vsel %vm9755, %v9662, %v6405
  %v9920 = vsel %vm9755, %v9663, %v6407
  %v9921 = vsel %vm9755, %v9664, %v6409
  %v9922 = vsel %vm9755, %v9665, %v6411
  %v9923 = vsel %vm9755, %v9666, %v6413
  %v9924 = vsel %vm9755, %v9667, %v6415
  %v9925 = vsel %vm9755, %v9668, %v6417
  %v9926 = vsel %vm9755, %v9669, %v6419
  %v9927 = vsel %vm9755, %v9670, %v6421
  %v9928 = vsel %vm9755, %v9671, %v6423
  %v9929 = vsel %vm9755, %v9672, %v6425
  %v9930 = vsel %vm9755, %v9673, %v6427
  %v9931 = vsel %vm9755, %v9674, %v6429
  %v9932 = vsel %vm9755, %v9675, %v6431
  %v9933 = vsel %vm9755, %v9676, %v6433
  %v9934 = vsel %vm9755, %v9677, %v6435
  %v9935 = vsel %vm9755, %v9678, %v6437
  %v9936 = vsel %vm9755, %v9679, %v6439
  %v9937 = vsel %vm9755, %v9680, %v6441
  %v9938 = vsel %vm9755, %v9681, %v6443
  %v9939 = vsel %vm9755, %v9682, %v6445
  %v9940 = vsel %vm9755, %v9683, %v6447
  %v9941 = vsel %vm9755, %v9684, %v6449
  %v9942 = vsel %vm9755, %v9685, %v6451
  %v9943 = vsel %vm9755, %v9686, %v6453
  %v9944 = vsel %vm9755, %v9687, %v6455
  %v9945 = vsel %vm9755, %v9688, %v6457
  %v9946 = vsel %vm9755, %v9689, %v6459
  %v9947 = vsel %vm9755, %v9690, %v6461
  %v9948 = vsel %vm9755, %v9691, %v6463
  %v9949 = vsel %vm9755, %v9692, %v6465
  %v9950 = vsel %vm9755, %v9693, %v6467
  %v9951 = vsel %vm9755, %v9694, %v6469
  %v9952 = vsel %vm9755, %v9695, %v6471
  %v9953 = vsel %vm9755, %v9696, %v6473
  %v9954 = vsel %vm9755, %v9697, %v6475
  %v9955 = vsel %vm9755, %v9698, %v6477
  %v9956 = vsel %vm9755, %v9699, %v6479
  %v9957 = vsel %vm9755, %v9700, %v6481
  %v9958 = vsel %vm9755, %v9701, %v6483
  %v9959 = vsel %vm9755, %v9702, %v6485
  %v9960 = vsel %vm9755, %v9703, %v6487
  %v9961 = vsel %vm9755, %v9704, %v6489
  %v9962 = vsel %vm9755, %v9705, %v6491
  %v9963 = vsel %vm9755, %v9706, %v6493
  %v9964 = vsel %vm9755, %v9707, %v6495
  %v9965 = vsel %vm9755, %v9708, %v6497
  %v9966 = vsel %vm9755, %v9709, %v6499
  %v9967 = vsel %vm9755, %v9710, %v6501
  %v9968 = vsel %vm9755, %v9711, %v6503
  %v9969 = vsel %vm9755, %v9712, %v6505
  %v9970 = vsel %vm9755, %v9713, %v6507
  %v9971 = vsel %vm9755, %v9714, %v6509
  %v9972 = vsel %vm9755, %v9715, %v6511
  %v9973 = vsel %vm9755, %v9716, %v6513
  %v9974 = vsel %vm9755, %v9717, %v6515
  %v9975 = vsel %vm9755, %v9718, %v6517
  %v9976 = vsel %vm9755, %v9719, %v6519
  %v9977 = vsel %vm9755, %v9720, %v6521
  %v9978 = vsel %vm9755, %v9721, %v6523
  %v9979 = vsel %vm9755, %v9722, %v6525
  %v9980 = vsel %vm9755, %v9723, %v6527
  %v9981 = vsel %vm9755, %v9724, %v6529
  %v9982 = vsel %vm9755, %v9725, %v6531
  %v9983 = vsel %vm9755, %v9726, %v6533
  %v9984 = vsel %vm9755, %v9727, %v6535
  %v9985 = vsel %vm9755, %v9728, %v6537
  %v9986 = vsel %vm9755, %v9729, %v6539
  %v9987 = vsel %vm9755, %v9730, %v6541
  %v9988 = vsel %vm9755, %v9731, %v6543
  %v9989 = vsel %vm9755, %v9732, %v6545
  %v9990 = vsel %vm9755, %v9733, %v6547
  %v9991 = vsel %vm9755, %v9734, %v6549
  %v9992 = vsel %vm9755, %v9735, %v6551
  %v9993 = vsel %vm9755, %v9736, %v6553
  %v9994 = vsel %vm9755, %v9737, %v6555
  %v9995 = vsel %vm9755, %v9738, %v6557
  %v9996 = vsel %vm9755, %v9739, %v6559
  %v9997 = vsel %vm9755, %v9740, %v6561
  %v9998 = vsel %vm9755, %v9741, %v6563
  %v9999 = vsel %vm9755, %v9742, %v6565
  %v10000 = vsel %vm9755, %v9743, %v6567
  %v10001 = vsel %vm9755, %v9744, %v6569
  %v10002 = vsel %vm9755, %v9745, %v6571
  %v10003 = vsel %vm9755, %v9746, %v6573
  %v10004 = vsel %vm9755, %v9747, %v6575
  %v10005 = vsel %vm9755, %v9748, %v6577
  %v10006 = vsel %vm9755, %v9749, %v6579
  %v10007 = vsel %vm9755, %v9750, %v6581
  %v10008 = vsel %vm9755, %v9751, %v6583
  %v10009 = vsel %vm9755, %v9752, %v6585
  %v10010 = vsel %vm9755, %v9753, %v6587
  %v10011 = vsel %vm9755, %v9754, %v6589
  %vm10012 = vcmask 171008
  %v10013 = vsel %vm10012, %v9756, %v6895
  %v10014 = vsel %vm10012, %v9757, %v6897
  %v10015 = vsel %vm10012, %v9758, %v6899
  %v10016 = vsel %vm10012, %v9759, %v6901
  %v10017 = vsel %vm10012, %v9760, %v6903
  %v10018 = vsel %vm10012, %v9761, %v6905
  %v10019 = vsel %vm10012, %v9762, %v6907
  %v10020 = vsel %vm10012, %v9763, %v6909
  %v10021 = vsel %vm10012, %v9764, %v6911
  %v10022 = vsel %vm10012, %v9765, %v6913
  %v10023 = vsel %vm10012, %v9766, %v6915
  %v10024 = vsel %vm10012, %v9767, %v6917
  %v10025 = vsel %vm10012, %v9768, %v6919
  %v10026 = vsel %vm10012, %v9769, %v6921
  %v10027 = vsel %vm10012, %v9770, %v6923
  %v10028 = vsel %vm10012, %v9771, %v6925
  %v10029 = vsel %vm10012, %v9772, %v6927
  %v10030 = vsel %vm10012, %v9773, %v6929
  %v10031 = vsel %vm10012, %v9774, %v6931
  %v10032 = vsel %vm10012, %v9775, %v6933
  %v10033 = vsel %vm10012, %v9776, %v6935
  %v10034 = vsel %vm10012, %v9777, %v6937
  %v10035 = vsel %vm10012, %v9778, %v6939
  %v10036 = vsel %vm10012, %v9779, %v6941
  %v10037 = vsel %vm10012, %v9780, %v6943
  %v10038 = vsel %vm10012, %v9781, %v6945
  %v10039 = vsel %vm10012, %v9782, %v6947
  %v10040 = vsel %vm10012, %v9783, %v6949
  %v10041 = vsel %vm10012, %v9784, %v6951
  %v10042 = vsel %vm10012, %v9785, %v6953
  %v10043 = vsel %vm10012, %v9786, %v6955
  %v10044 = vsel %vm10012, %v9787, %v6957
  %v10045 = vsel %vm10012, %v9788, %v6959
  %v10046 = vsel %vm10012, %v9789, %v6961
  %v10047 = vsel %vm10012, %v9790, %v6963
  %v10048 = vsel %vm10012, %v9791, %v6965
  %v10049 = vsel %vm10012, %v9792, %v6967
  %v10050 = vsel %vm10012, %v9793, %v6969
  %v10051 = vsel %vm10012, %v9794, %v6971
  %v10052 = vsel %vm10012, %v9795, %v6973
  %v10053 = vsel %vm10012, %v9796, %v6975
  %v10054 = vsel %vm10012, %v9797, %v6977
  %v10055 = vsel %vm10012, %v9798, %v6979
  %v10056 = vsel %vm10012, %v9799, %v6981
  %v10057 = vsel %vm10012, %v9800, %v6983
  %v10058 = vsel %vm10012, %v9801, %v6985
  %v10059 = vsel %vm10012, %v9802, %v6987
  %v10060 = vsel %vm10012, %v9803, %v6989
  %v10061 = vsel %vm10012, %v9804, %v6991
  %v10062 = vsel %vm10012, %v9805, %v6993
  %v10063 = vsel %vm10012, %v9806, %v6995
  %v10064 = vsel %vm10012, %v9807, %v6997
  %v10065 = vsel %vm10012, %v9808, %v6999
  %v10066 = vsel %vm10012, %v9809, %v7001
  %v10067 = vsel %vm10012, %v9810, %v7003
  %v10068 = vsel %vm10012, %v9811, %v7005
  %v10069 = vsel %vm10012, %v9812, %v7007
  %v10070 = vsel %vm10012, %v9813, %v7009
  %v10071 = vsel %vm10012, %v9814, %v7011
  %v10072 = vsel %vm10012, %v9815, %v7013
  %v10073 = vsel %vm10012, %v9816, %v7015
  %v10074 = vsel %vm10012, %v9817, %v7017
  %v10075 = vsel %vm10012, %v9818, %v7019
  %v10076 = vsel %vm10012, %v9819, %v7021
  %v10077 = vsel %vm10012, %v9820, %v7023
  %v10078 = vsel %vm10012, %v9821, %v7025
  %v10079 = vsel %vm10012, %v9822, %v7027
  %v10080 = vsel %vm10012, %v9823, %v7029
  %v10081 = vsel %vm10012, %v9824, %v7031
  %v10082 = vsel %vm10012, %v9825, %v7033
  %v10083 = vsel %vm10012, %v9826, %v7035
  %v10084 = vsel %vm10012, %v9827, %v7037
  %v10085 = vsel %vm10012, %v9828, %v7039
  %v10086 = vsel %vm10012, %v9829, %v7041
  %v10087 = vsel %vm10012, %v9830, %v7043
  %v10088 = vsel %vm10012, %v9831, %v7045
  %v10089 = vsel %vm10012, %v9832, %v7047
  %v10090 = vsel %vm10012, %v9833, %v7049
  %v10091 = vsel %vm10012, %v9834, %v7051
  %v10092 = vsel %vm10012, %v9835, %v7053
  %v10093 = vsel %vm10012, %v9836, %v7055
  %v10094 = vsel %vm10012, %v9837, %v7057
  %v10095 = vsel %vm10012, %v9838, %v7059
  %v10096 = vsel %vm10012, %v9839, %v7061
  %v10097 = vsel %vm10012, %v9840, %v7063
  %v10098 = vsel %vm10012, %v9841, %v7065
  %v10099 = vsel %vm10012, %v9842, %v7067
  %v10100 = vsel %vm10012, %v9843, %v7069
  %v10101 = vsel %vm10012, %v9844, %v7071
  %v10102 = vsel %vm10012, %v9845, %v7073
  %v10103 = vsel %vm10012, %v9846, %v7075
  %v10104 = vsel %vm10012, %v9847, %v7077
  %v10105 = vsel %vm10012, %v9848, %v7079
  %v10106 = vsel %vm10012, %v9849, %v7081
  %v10107 = vsel %vm10012, %v9850, %v7083
  %v10108 = vsel %vm10012, %v9851, %v7085
  %v10109 = vsel %vm10012, %v9852, %v7087
  %v10110 = vsel %vm10012, %v9853, %v7089
  %v10111 = vsel %vm10012, %v9854, %v7091
  %v10112 = vsel %vm10012, %v9855, %v7093
  %v10113 = vsel %vm10012, %v9856, %v7095
  %v10114 = vsel %vm10012, %v9857, %v7097
  %v10115 = vsel %vm10012, %v9858, %v7099
  %v10116 = vsel %vm10012, %v9859, %v7101
  %v10117 = vsel %vm10012, %v9860, %v7103
  %v10118 = vsel %vm10012, %v9861, %v7105
  %v10119 = vsel %vm10012, %v9862, %v7107
  %v10120 = vsel %vm10012, %v9863, %v7109
  %v10121 = vsel %vm10012, %v9864, %v7111
  %v10122 = vsel %vm10012, %v9865, %v7113
  %v10123 = vsel %vm10012, %v9866, %v7115
  %v10124 = vsel %vm10012, %v9867, %v7117
  %v10125 = vsel %vm10012, %v9868, %v7119
  %v10126 = vsel %vm10012, %v9869, %v7121
  %v10127 = vsel %vm10012, %v9870, %v7123
  %v10128 = vsel %vm10012, %v9871, %v7125
  %v10129 = vsel %vm10012, %v9872, %v7127
  %v10130 = vsel %vm10012, %v9873, %v7129
  %v10131 = vsel %vm10012, %v9874, %v7131
  %v10132 = vsel %vm10012, %v9875, %v7133
  %v10133 = vsel %vm10012, %v9876, %v7135
  %v10134 = vsel %vm10012, %v9877, %v7137
  %v10135 = vsel %vm10012, %v9878, %v7139
  %v10136 = vsel %vm10012, %v9879, %v7141
  %v10137 = vsel %vm10012, %v9880, %v7143
  %v10138 = vsel %vm10012, %v9881, %v7145
  %v10139 = vsel %vm10012, %v9882, %v7147
  %v10140 = vsel %vm10012, %v9883, %v7149
  %v10141 = vsel %vm10012, %v9884, %v7151
  %v10142 = vsel %vm10012, %v9885, %v7153
  %v10143 = vsel %vm10012, %v9886, %v7155
  %v10144 = vsel %vm10012, %v9887, %v7157
  %v10145 = vsel %vm10012, %v9888, %v7159
  %v10146 = vsel %vm10012, %v9889, %v7161
  %v10147 = vsel %vm10012, %v9890, %v7163
  %v10148 = vsel %vm10012, %v9891, %v7165
  %v10149 = vsel %vm10012, %v9892, %v7167
  %v10150 = vsel %vm10012, %v9893, %v7169
  %v10151 = vsel %vm10012, %v9894, %v7171
  %v10152 = vsel %vm10012, %v9895, %v7173
  %v10153 = vsel %vm10012, %v9896, %v7175
  %v10154 = vsel %vm10012, %v9897, %v7177
  %v10155 = vsel %vm10012, %v9898, %v7179
  %v10156 = vsel %vm10012, %v9899, %v7181
  %v10157 = vsel %vm10012, %v9900, %v7183
  %v10158 = vsel %vm10012, %v9901, %v7185
  %v10159 = vsel %vm10012, %v9902, %v7187
  %v10160 = vsel %vm10012, %v9903, %v7189
  %v10161 = vsel %vm10012, %v9904, %v7191
  %v10162 = vsel %vm10012, %v9905, %v7193
  %v10163 = vsel %vm10012, %v9906, %v7195
  %v10164 = vsel %vm10012, %v9907, %v7197
  %v10165 = vsel %vm10012, %v9908, %v7199
  %v10166 = vsel %vm10012, %v9909, %v7201
  %v10167 = vsel %vm10012, %v9910, %v7203
  %v10168 = vsel %vm10012, %v9911, %v7205
  %v10169 = vsel %vm10012, %v9912, %v7207
  %v10170 = vsel %vm10012, %v9913, %v7209
  %v10171 = vsel %vm10012, %v9914, %v7211
  %v10172 = vsel %vm10012, %v9915, %v7213
  %v10173 = vsel %vm10012, %v9916, %v7215
  %v10174 = vsel %vm10012, %v9917, %v7217
  %v10175 = vsel %vm10012, %v9918, %v7219
  %v10176 = vsel %vm10012, %v9919, %v7221
  %v10177 = vsel %vm10012, %v9920, %v7223
  %v10178 = vsel %vm10012, %v9921, %v7225
  %v10179 = vsel %vm10012, %v9922, %v7227
  %v10180 = vsel %vm10012, %v9923, %v7229
  %v10181 = vsel %vm10012, %v9924, %v7231
  %v10182 = vsel %vm10012, %v9925, %v7233
  %v10183 = vsel %vm10012, %v9926, %v7235
  %v10184 = vsel %vm10012, %v9927, %v7237
  %v10185 = vsel %vm10012, %v9928, %v7239
  %v10186 = vsel %vm10012, %v9929, %v7241
  %v10187 = vsel %vm10012, %v9930, %v7243
  %v10188 = vsel %vm10012, %v9931, %v7245
  %v10189 = vsel %vm10012, %v9932, %v7247
  %v10190 = vsel %vm10012, %v9933, %v7249
  %v10191 = vsel %vm10012, %v9934, %v7251
  %v10192 = vsel %vm10012, %v9935, %v7253
  %v10193 = vsel %vm10012, %v9936, %v7255
  %v10194 = vsel %vm10012, %v9937, %v7257
  %v10195 = vsel %vm10012, %v9938, %v7259
  %v10196 = vsel %vm10012, %v9939, %v7261
  %v10197 = vsel %vm10012, %v9940, %v7263
  %v10198 = vsel %vm10012, %v9941, %v7265
  %v10199 = vsel %vm10012, %v9942, %v7267
  %v10200 = vsel %vm10012, %v9943, %v7269
  %v10201 = vsel %vm10012, %v9944, %v7271
  %v10202 = vsel %vm10012, %v9945, %v7273
  %v10203 = vsel %vm10012, %v9946, %v7275
  %v10204 = vsel %vm10012, %v9947, %v7277
  %v10205 = vsel %vm10012, %v9948, %v7279
  %v10206 = vsel %vm10012, %v9949, %v7281
  %v10207 = vsel %vm10012, %v9950, %v7283
  %v10208 = vsel %vm10012, %v9951, %v7285
  %v10209 = vsel %vm10012, %v9952, %v7287
  %v10210 = vsel %vm10012, %v9953, %v7289
  %v10211 = vsel %vm10012, %v9954, %v7291
  %v10212 = vsel %vm10012, %v9955, %v7293
  %v10213 = vsel %vm10012, %v9956, %v7295
  %v10214 = vsel %vm10012, %v9957, %v7297
  %v10215 = vsel %vm10012, %v9958, %v7299
  %v10216 = vsel %vm10012, %v9959, %v7301
  %v10217 = vsel %vm10012, %v9960, %v7303
  %v10218 = vsel %vm10012, %v9961, %v7305
  %v10219 = vsel %vm10012, %v9962, %v7307
  %v10220 = vsel %vm10012, %v9963, %v7309
  %v10221 = vsel %vm10012, %v9964, %v7311
  %v10222 = vsel %vm10012, %v9965, %v7313
  %v10223 = vsel %vm10012, %v9966, %v7315
  %v10224 = vsel %vm10012, %v9967, %v7317
  %v10225 = vsel %vm10012, %v9968, %v7319
  %v10226 = vsel %vm10012, %v9969, %v7321
  %v10227 = vsel %vm10012, %v9970, %v7323
  %v10228 = vsel %vm10012, %v9971, %v7325
  %v10229 = vsel %vm10012, %v9972, %v7327
  %v10230 = vsel %vm10012, %v9973, %v7329
  %v10231 = vsel %vm10012, %v9974, %v7331
  %v10232 = vsel %vm10012, %v9975, %v7333
  %v10233 = vsel %vm10012, %v9976, %v7335
  %v10234 = vsel %vm10012, %v9977, %v7337
  %v10235 = vsel %vm10012, %v9978, %v7339
  %v10236 = vsel %vm10012, %v9979, %v7341
  %v10237 = vsel %vm10012, %v9980, %v7343
  %v10238 = vsel %vm10012, %v9981, %v7345
  %v10239 = vsel %vm10012, %v9982, %v7347
  %v10240 = vsel %vm10012, %v9983, %v7349
  %v10241 = vsel %vm10012, %v9984, %v7351
  %v10242 = vsel %vm10012, %v9985, %v7353
  %v10243 = vsel %vm10012, %v9986, %v7355
  %v10244 = vsel %vm10012, %v9987, %v7357
  %v10245 = vsel %vm10012, %v9988, %v7359
  %v10246 = vsel %vm10012, %v9989, %v7361
  %v10247 = vsel %vm10012, %v9990, %v7363
  %v10248 = vsel %vm10012, %v9991, %v7365
  %v10249 = vsel %vm10012, %v9992, %v7367
  %v10250 = vsel %vm10012, %v9993, %v7369
  %v10251 = vsel %vm10012, %v9994, %v7371
  %v10252 = vsel %vm10012, %v9995, %v7373
  %v10253 = vsel %vm10012, %v9996, %v7375
  %v10254 = vsel %vm10012, %v9997, %v7377
  %v10255 = vsel %vm10012, %v9998, %v7379
  %v10256 = vsel %vm10012, %v9999, %v7381
  %v10257 = vsel %vm10012, %v10000, %v7383
  %v10258 = vsel %vm10012, %v10001, %v7385
  %v10259 = vsel %vm10012, %v10002, %v7387
  %v10260 = vsel %vm10012, %v10003, %v7389
  %v10261 = vsel %vm10012, %v10004, %v7391
  %v10262 = vsel %vm10012, %v10005, %v7393
  %v10263 = vsel %vm10012, %v10006, %v7395
  %v10264 = vsel %vm10012, %v10007, %v7397
  %v10265 = vsel %vm10012, %v10008, %v7399
  %v10266 = vsel %vm10012, %v10009, %v7401
  %v10267 = vsel %vm10012, %v10010, %v7403
  %v10268 = vsel %vm10012, %v10011, %v7405
  %vm10269 = vcmask 195584
  %v10270 = vsel %vm10269, %v10013, %v7703
  %v10271 = vsel %vm10269, %v10014, %v7705
  %v10272 = vsel %vm10269, %v10015, %v7707
  %v10273 = vsel %vm10269, %v10016, %v7709
  %v10274 = vsel %vm10269, %v10017, %v7711
  %v10275 = vsel %vm10269, %v10018, %v7713
  %v10276 = vsel %vm10269, %v10019, %v7715
  %v10277 = vsel %vm10269, %v10020, %v7717
  %v10278 = vsel %vm10269, %v10021, %v7719
  %v10279 = vsel %vm10269, %v10022, %v7721
  %v10280 = vsel %vm10269, %v10023, %v7723
  %v10281 = vsel %vm10269, %v10024, %v7725
  %v10282 = vsel %vm10269, %v10025, %v7727
  %v10283 = vsel %vm10269, %v10026, %v7729
  %v10284 = vsel %vm10269, %v10027, %v7731
  %v10285 = vsel %vm10269, %v10028, %v7733
  %v10286 = vsel %vm10269, %v10029, %v7735
  %v10287 = vsel %vm10269, %v10030, %v7737
  %v10288 = vsel %vm10269, %v10031, %v7739
  %v10289 = vsel %vm10269, %v10032, %v7741
  %v10290 = vsel %vm10269, %v10033, %v7743
  %v10291 = vsel %vm10269, %v10034, %v7745
  %v10292 = vsel %vm10269, %v10035, %v7747
  %v10293 = vsel %vm10269, %v10036, %v7749
  %v10294 = vsel %vm10269, %v10037, %v7751
  %v10295 = vsel %vm10269, %v10038, %v7753
  %v10296 = vsel %vm10269, %v10039, %v7755
  %v10297 = vsel %vm10269, %v10040, %v7757
  %v10298 = vsel %vm10269, %v10041, %v7759
  %v10299 = vsel %vm10269, %v10042, %v7761
  %v10300 = vsel %vm10269, %v10043, %v7763
  %v10301 = vsel %vm10269, %v10044, %v7765
  %v10302 = vsel %vm10269, %v10045, %v7767
  %v10303 = vsel %vm10269, %v10046, %v7769
  %v10304 = vsel %vm10269, %v10047, %v7771
  %v10305 = vsel %vm10269, %v10048, %v7773
  %v10306 = vsel %vm10269, %v10049, %v7775
  %v10307 = vsel %vm10269, %v10050, %v7777
  %v10308 = vsel %vm10269, %v10051, %v7779
  %v10309 = vsel %vm10269, %v10052, %v7781
  %v10310 = vsel %vm10269, %v10053, %v7783
  %v10311 = vsel %vm10269, %v10054, %v7785
  %v10312 = vsel %vm10269, %v10055, %v7787
  %v10313 = vsel %vm10269, %v10056, %v7789
  %v10314 = vsel %vm10269, %v10057, %v7791
  %v10315 = vsel %vm10269, %v10058, %v7793
  %v10316 = vsel %vm10269, %v10059, %v7795
  %v10317 = vsel %vm10269, %v10060, %v7797
  %v10318 = vsel %vm10269, %v10061, %v7799
  %v10319 = vsel %vm10269, %v10062, %v7801
  %v10320 = vsel %vm10269, %v10063, %v7803
  %v10321 = vsel %vm10269, %v10064, %v7805
  %v10322 = vsel %vm10269, %v10065, %v7807
  %v10323 = vsel %vm10269, %v10066, %v7809
  %v10324 = vsel %vm10269, %v10067, %v7811
  %v10325 = vsel %vm10269, %v10068, %v7813
  %v10326 = vsel %vm10269, %v10069, %v7815
  %v10327 = vsel %vm10269, %v10070, %v7817
  %v10328 = vsel %vm10269, %v10071, %v7819
  %v10329 = vsel %vm10269, %v10072, %v7821
  %v10330 = vsel %vm10269, %v10073, %v7823
  %v10331 = vsel %vm10269, %v10074, %v7825
  %v10332 = vsel %vm10269, %v10075, %v7827
  %v10333 = vsel %vm10269, %v10076, %v7829
  %v10334 = vsel %vm10269, %v10077, %v7831
  %v10335 = vsel %vm10269, %v10078, %v7833
  %v10336 = vsel %vm10269, %v10079, %v7835
  %v10337 = vsel %vm10269, %v10080, %v7837
  %v10338 = vsel %vm10269, %v10081, %v7839
  %v10339 = vsel %vm10269, %v10082, %v7841
  %v10340 = vsel %vm10269, %v10083, %v7843
  %v10341 = vsel %vm10269, %v10084, %v7845
  %v10342 = vsel %vm10269, %v10085, %v7847
  %v10343 = vsel %vm10269, %v10086, %v7849
  %v10344 = vsel %vm10269, %v10087, %v7851
  %v10345 = vsel %vm10269, %v10088, %v7853
  %v10346 = vsel %vm10269, %v10089, %v7855
  %v10347 = vsel %vm10269, %v10090, %v7857
  %v10348 = vsel %vm10269, %v10091, %v7859
  %v10349 = vsel %vm10269, %v10092, %v7861
  %v10350 = vsel %vm10269, %v10093, %v7863
  %v10351 = vsel %vm10269, %v10094, %v7865
  %v10352 = vsel %vm10269, %v10095, %v7867
  %v10353 = vsel %vm10269, %v10096, %v7869
  %v10354 = vsel %vm10269, %v10097, %v7871
  %v10355 = vsel %vm10269, %v10098, %v7873
  %v10356 = vsel %vm10269, %v10099, %v7875
  %v10357 = vsel %vm10269, %v10100, %v7877
  %v10358 = vsel %vm10269, %v10101, %v7879
  %v10359 = vsel %vm10269, %v10102, %v7881
  %v10360 = vsel %vm10269, %v10103, %v7883
  %v10361 = vsel %vm10269, %v10104, %v7885
  %v10362 = vsel %vm10269, %v10105, %v7887
  %v10363 = vsel %vm10269, %v10106, %v7889
  %v10364 = vsel %vm10269, %v10107, %v7891
  %v10365 = vsel %vm10269, %v10108, %v7893
  %v10366 = vsel %vm10269, %v10109, %v7895
  %v10367 = vsel %vm10269, %v10110, %v7897
  %v10368 = vsel %vm10269, %v10111, %v7899
  %v10369 = vsel %vm10269, %v10112, %v7901
  %v10370 = vsel %vm10269, %v10113, %v7903
  %v10371 = vsel %vm10269, %v10114, %v7905
  %v10372 = vsel %vm10269, %v10115, %v7907
  %v10373 = vsel %vm10269, %v10116, %v7909
  %v10374 = vsel %vm10269, %v10117, %v7911
  %v10375 = vsel %vm10269, %v10118, %v7913
  %v10376 = vsel %vm10269, %v10119, %v7915
  %v10377 = vsel %vm10269, %v10120, %v7917
  %v10378 = vsel %vm10269, %v10121, %v7919
  %v10379 = vsel %vm10269, %v10122, %v7921
  %v10380 = vsel %vm10269, %v10123, %v7923
  %v10381 = vsel %vm10269, %v10124, %v7925
  %v10382 = vsel %vm10269, %v10125, %v7927
  %v10383 = vsel %vm10269, %v10126, %v7929
  %v10384 = vsel %vm10269, %v10127, %v7931
  %v10385 = vsel %vm10269, %v10128, %v7933
  %v10386 = vsel %vm10269, %v10129, %v7935
  %v10387 = vsel %vm10269, %v10130, %v7937
  %v10388 = vsel %vm10269, %v10131, %v7939
  %v10389 = vsel %vm10269, %v10132, %v7941
  %v10390 = vsel %vm10269, %v10133, %v7943
  %v10391 = vsel %vm10269, %v10134, %v7945
  %v10392 = vsel %vm10269, %v10135, %v7947
  %v10393 = vsel %vm10269, %v10136, %v7949
  %v10394 = vsel %vm10269, %v10137, %v7951
  %v10395 = vsel %vm10269, %v10138, %v7953
  %v10396 = vsel %vm10269, %v10139, %v7955
  %v10397 = vsel %vm10269, %v10140, %v7957
  %v10398 = vsel %vm10269, %v10141, %v7959
  %v10399 = vsel %vm10269, %v10142, %v7961
  %v10400 = vsel %vm10269, %v10143, %v7963
  %v10401 = vsel %vm10269, %v10144, %v7965
  %v10402 = vsel %vm10269, %v10145, %v7967
  %v10403 = vsel %vm10269, %v10146, %v7969
  %v10404 = vsel %vm10269, %v10147, %v7971
  %v10405 = vsel %vm10269, %v10148, %v7973
  %v10406 = vsel %vm10269, %v10149, %v7975
  %v10407 = vsel %vm10269, %v10150, %v7977
  %v10408 = vsel %vm10269, %v10151, %v7979
  %v10409 = vsel %vm10269, %v10152, %v7981
  %v10410 = vsel %vm10269, %v10153, %v7983
  %v10411 = vsel %vm10269, %v10154, %v7985
  %v10412 = vsel %vm10269, %v10155, %v7987
  %v10413 = vsel %vm10269, %v10156, %v7989
  %v10414 = vsel %vm10269, %v10157, %v7991
  %v10415 = vsel %vm10269, %v10158, %v7993
  %v10416 = vsel %vm10269, %v10159, %v7995
  %v10417 = vsel %vm10269, %v10160, %v7997
  %v10418 = vsel %vm10269, %v10161, %v7999
  %v10419 = vsel %vm10269, %v10162, %v8001
  %v10420 = vsel %vm10269, %v10163, %v8003
  %v10421 = vsel %vm10269, %v10164, %v8005
  %v10422 = vsel %vm10269, %v10165, %v8007
  %v10423 = vsel %vm10269, %v10166, %v8009
  %v10424 = vsel %vm10269, %v10167, %v8011
  %v10425 = vsel %vm10269, %v10168, %v8013
  %v10426 = vsel %vm10269, %v10169, %v8015
  %v10427 = vsel %vm10269, %v10170, %v8017
  %v10428 = vsel %vm10269, %v10171, %v8019
  %v10429 = vsel %vm10269, %v10172, %v8021
  %v10430 = vsel %vm10269, %v10173, %v8023
  %v10431 = vsel %vm10269, %v10174, %v8025
  %v10432 = vsel %vm10269, %v10175, %v8027
  %v10433 = vsel %vm10269, %v10176, %v8029
  %v10434 = vsel %vm10269, %v10177, %v8031
  %v10435 = vsel %vm10269, %v10178, %v8033
  %v10436 = vsel %vm10269, %v10179, %v8035
  %v10437 = vsel %vm10269, %v10180, %v8037
  %v10438 = vsel %vm10269, %v10181, %v8039
  %v10439 = vsel %vm10269, %v10182, %v8041
  %v10440 = vsel %vm10269, %v10183, %v8043
  %v10441 = vsel %vm10269, %v10184, %v8045
  %v10442 = vsel %vm10269, %v10185, %v8047
  %v10443 = vsel %vm10269, %v10186, %v8049
  %v10444 = vsel %vm10269, %v10187, %v8051
  %v10445 = vsel %vm10269, %v10188, %v8053
  %v10446 = vsel %vm10269, %v10189, %v8055
  %v10447 = vsel %vm10269, %v10190, %v8057
  %v10448 = vsel %vm10269, %v10191, %v8059
  %v10449 = vsel %vm10269, %v10192, %v8061
  %v10450 = vsel %vm10269, %v10193, %v8063
  %v10451 = vsel %vm10269, %v10194, %v8065
  %v10452 = vsel %vm10269, %v10195, %v8067
  %v10453 = vsel %vm10269, %v10196, %v8069
  %v10454 = vsel %vm10269, %v10197, %v8071
  %v10455 = vsel %vm10269, %v10198, %v8073
  %v10456 = vsel %vm10269, %v10199, %v8075
  %v10457 = vsel %vm10269, %v10200, %v8077
  %v10458 = vsel %vm10269, %v10201, %v8079
  %v10459 = vsel %vm10269, %v10202, %v8081
  %v10460 = vsel %vm10269, %v10203, %v8083
  %v10461 = vsel %vm10269, %v10204, %v8085
  %v10462 = vsel %vm10269, %v10205, %v8087
  %v10463 = vsel %vm10269, %v10206, %v8089
  %v10464 = vsel %vm10269, %v10207, %v8091
  %v10465 = vsel %vm10269, %v10208, %v8093
  %v10466 = vsel %vm10269, %v10209, %v8095
  %v10467 = vsel %vm10269, %v10210, %v8097
  %v10468 = vsel %vm10269, %v10211, %v8099
  %v10469 = vsel %vm10269, %v10212, %v8101
  %v10470 = vsel %vm10269, %v10213, %v8103
  %v10471 = vsel %vm10269, %v10214, %v8105
  %v10472 = vsel %vm10269, %v10215, %v8107
  %v10473 = vsel %vm10269, %v10216, %v8109
  %v10474 = vsel %vm10269, %v10217, %v8111
  %v10475 = vsel %vm10269, %v10218, %v8113
  %v10476 = vsel %vm10269, %v10219, %v8115
  %v10477 = vsel %vm10269, %v10220, %v8117
  %v10478 = vsel %vm10269, %v10221, %v8119
  %v10479 = vsel %vm10269, %v10222, %v8121
  %v10480 = vsel %vm10269, %v10223, %v8123
  %v10481 = vsel %vm10269, %v10224, %v8125
  %v10482 = vsel %vm10269, %v10225, %v8127
  %v10483 = vsel %vm10269, %v10226, %v8129
  %v10484 = vsel %vm10269, %v10227, %v8131
  %v10485 = vsel %vm10269, %v10228, %v8133
  %v10486 = vsel %vm10269, %v10229, %v8135
  %v10487 = vsel %vm10269, %v10230, %v8137
  %v10488 = vsel %vm10269, %v10231, %v8139
  %v10489 = vsel %vm10269, %v10232, %v8141
  %v10490 = vsel %vm10269, %v10233, %v8143
  %v10491 = vsel %vm10269, %v10234, %v8145
  %v10492 = vsel %vm10269, %v10235, %v8147
  %v10493 = vsel %vm10269, %v10236, %v8149
  %v10494 = vsel %vm10269, %v10237, %v8151
  %v10495 = vsel %vm10269, %v10238, %v8153
  %v10496 = vsel %vm10269, %v10239, %v8155
  %v10497 = vsel %vm10269, %v10240, %v8157
  %v10498 = vsel %vm10269, %v10241, %v8159
  %v10499 = vsel %vm10269, %v10242, %v8161
  %v10500 = vsel %vm10269, %v10243, %v8163
  %v10501 = vsel %vm10269, %v10244, %v8165
  %v10502 = vsel %vm10269, %v10245, %v8167
  %v10503 = vsel %vm10269, %v10246, %v8169
  %v10504 = vsel %vm10269, %v10247, %v8171
  %v10505 = vsel %vm10269, %v10248, %v8173
  %v10506 = vsel %vm10269, %v10249, %v8175
  %v10507 = vsel %vm10269, %v10250, %v8177
  %v10508 = vsel %vm10269, %v10251, %v8179
  %v10509 = vsel %vm10269, %v10252, %v8181
  %v10510 = vsel %vm10269, %v10253, %v8183
  %v10511 = vsel %vm10269, %v10254, %v8185
  %v10512 = vsel %vm10269, %v10255, %v8187
  %v10513 = vsel %vm10269, %v10256, %v8189
  %v10514 = vsel %vm10269, %v10257, %v8191
  %v10515 = vsel %vm10269, %v10258, %v8193
  %v10516 = vsel %vm10269, %v10259, %v8195
  %v10517 = vsel %vm10269, %v10260, %v8197
  %v10518 = vsel %vm10269, %v10261, %v8199
  %v10519 = vsel %vm10269, %v10262, %v8201
  %v10520 = vsel %vm10269, %v10263, %v8203
  %v10521 = vsel %vm10269, %v10264, %v8205
  %v10522 = vsel %vm10269, %v10265, %v8207
  %v10523 = vsel %vm10269, %v10266, %v8209
  %v10524 = vsel %vm10269, %v10267, %v8211
  %v10525 = vsel %vm10269, %v10268, %v8213
  %v10526 = vld [vmem:[%s1] sm:$0xff]
  %v10527 = vld [vmem:[%s1 + $0x8] sm:$0xff]
  %v10528 = vld [vmem:[%s1 + $0x10] sm:$0xff]
  %v10529 = vld [vmem:[%s1 + $0x18] sm:$0x7]
  %v10530 = vld [vmem:[%s2] sm:$0x1]
  %v10532 = vlaneseq
  %v10533 = vshrl.u32 %v10532, 7
  %v10534 = vsub.s32 0, %v10533
  %v10535 = vrot.slane %v10530, %v10534
  %vm10537 = vcmask 220160
  %v10539 = vsel %vm10537, %v10270, 0
  %v10542 = vsel %vm10537, %v10271, 0
  %v10545 = vsel %vm10537, %v10272, 0
  %v10548 = vsel %vm10537, %v10273, 0
  %v10551 = vsel %vm10537, %v10274, 0
  %v10554 = vsel %vm10537, %v10275, 0
  %v10557 = vsel %vm10537, %v10276, 0
  %v10560 = vsel %vm10537, %v10277, 0
  %v10563 = vsel %vm10537, %v10278, 0
  %v10566 = vsel %vm10537, %v10279, 0
  %v10569 = vsel %vm10537, %v10280, 0
  %v10572 = vsel %vm10537, %v10281, 0
  %v10575 = vsel %vm10537, %v10282, 0
  %v10578 = vsel %vm10537, %v10283, 0
  %v10581 = vsel %vm10537, %v10284, 0
  %v10584 = vsel %vm10537, %v10285, 0
  %v10587 = vsel %vm10537, %v10286, 0
  %v10590 = vsel %vm10537, %v10287, 0
  %v10593 = vsel %vm10537, %v10288, 0
  %v10596 = vsel %vm10537, %v10289, 0
  %v10599 = vsel %vm10537, %v10290, 0
  %v10602 = vsel %vm10537, %v10291, 0
  %v10605 = vsel %vm10537, %v10292, 0
  %v10608 = vsel %vm10537, %v10293, 0
  %v10611 = vsel %vm10537, %v10294, 0
  %v10614 = vsel %vm10537, %v10295, 0
  %v10617 = vsel %vm10537, %v10296, 0
  %v10620 = vsel %vm10537, %v10297, 0
  %v10623 = vsel %vm10537, %v10298, 0
  %v10626 = vsel %vm10537, %v10299, 0
  %v10629 = vsel %vm10537, %v10300, 0
  %v10632 = vsel %vm10537, %v10301, 0
  %v10635 = vsel %vm10537, %v10302, 0
  %v10638 = vsel %vm10537, %v10303, 0
  %v10641 = vsel %vm10537, %v10304, 0
  %v10644 = vsel %vm10537, %v10305, 0
  %v10647 = vsel %vm10537, %v10306, 0
  %v10650 = vsel %vm10537, %v10307, 0
  %v10653 = vsel %vm10537, %v10308, 0
  %v10656 = vsel %vm10537, %v10309, 0
  %v10659 = vsel %vm10537, %v10310, 0
  %v10662 = vsel %vm10537, %v10311, 0
  %v10665 = vsel %vm10537, %v10312, 0
  %v10668 = vsel %vm10537, %v10313, 0
  %v10671 = vsel %vm10537, %v10314, 0
  %v10674 = vsel %vm10537, %v10315, 0
  %v10677 = vsel %vm10537, %v10316, 0
  %v10680 = vsel %vm10537, %v10317, 0
  %v10683 = vsel %vm10537, %v10318, 0
  %v10686 = vsel %vm10537, %v10319, 0
  %v10689 = vsel %vm10537, %v10320, 0
  %v10692 = vsel %vm10537, %v10321, 0
  %v10695 = vsel %vm10537, %v10322, 0
  %v10698 = vsel %vm10537, %v10323, 0
  %v10701 = vsel %vm10537, %v10324, 0
  %v10704 = vsel %vm10537, %v10325, 0
  %v10707 = vsel %vm10537, %v10326, 0
  %v10710 = vsel %vm10537, %v10327, 0
  %v10713 = vsel %vm10537, %v10328, 0
  %v10716 = vsel %vm10537, %v10329, 0
  %v10719 = vsel %vm10537, %v10330, 0
  %v10722 = vsel %vm10537, %v10331, 0
  %v10725 = vsel %vm10537, %v10332, 0
  %v10728 = vsel %vm10537, %v10333, 0
  %v10731 = vsel %vm10537, %v10334, 0
  %v10734 = vsel %vm10537, %v10335, 0
  %v10737 = vsel %vm10537, %v10336, 0
  %v10740 = vsel %vm10537, %v10337, 0
  %v10743 = vsel %vm10537, %v10338, 0
  %v10746 = vsel %vm10537, %v10339, 0
  %v10749 = vsel %vm10537, %v10340, 0
  %v10752 = vsel %vm10537, %v10341, 0
  %v10755 = vsel %vm10537, %v10342, 0
  %v10758 = vsel %vm10537, %v10343, 0
  %v10761 = vsel %vm10537, %v10344, 0
  %v10764 = vsel %vm10537, %v10345, 0
  %v10767 = vsel %vm10537, %v10346, 0
  %v10770 = vsel %vm10537, %v10347, 0
  %v10773 = vsel %vm10537, %v10348, 0
  %v10776 = vsel %vm10537, %v10349, 0
  %v10779 = vsel %vm10537, %v10350, 0
  %v10782 = vsel %vm10537, %v10351, 0
  %v10785 = vsel %vm10537, %v10352, 0
  %v10788 = vsel %vm10537, %v10353, 0
  %v10791 = vsel %vm10537, %v10354, 0
  %v10794 = vsel %vm10537, %v10355, 0
  %v10797 = vsel %vm10537, %v10356, 0
  %v10800 = vsel %vm10537, %v10357, 0
  %v10803 = vsel %vm10537, %v10358, 0
  %v10806 = vsel %vm10537, %v10359, 0
  %v10809 = vsel %vm10537, %v10360, 0
  %v10812 = vsel %vm10537, %v10361, 0
  %v10815 = vsel %vm10537, %v10362, 0
  %v10818 = vsel %vm10537, %v10363, 0
  %v10821 = vsel %vm10537, %v10364, 0
  %v10824 = vsel %vm10537, %v10365, 0
  %v10827 = vsel %vm10537, %v10366, 0
  %v10830 = vsel %vm10537, %v10367, 0
  %v10833 = vsel %vm10537, %v10368, 0
  %v10836 = vsel %vm10537, %v10369, 0
  %v10839 = vsel %vm10537, %v10370, 0
  %v10842 = vsel %vm10537, %v10371, 0
  %v10845 = vsel %vm10537, %v10372, 0
  %v10848 = vsel %vm10537, %v10373, 0
  %v10851 = vsel %vm10537, %v10374, 0
  %v10854 = vsel %vm10537, %v10375, 0
  %v10857 = vsel %vm10537, %v10376, 0
  %v10860 = vsel %vm10537, %v10377, 0
  %v10863 = vsel %vm10537, %v10378, 0
  %v10866 = vsel %vm10537, %v10379, 0
  %v10869 = vsel %vm10537, %v10380, 0
  %v10872 = vsel %vm10537, %v10381, 0
  %v10875 = vsel %vm10537, %v10382, 0
  %v10878 = vsel %vm10537, %v10383, 0
  %v10881 = vsel %vm10537, %v10384, 0
  %v10884 = vsel %vm10537, %v10385, 0
  %v10887 = vsel %vm10537, %v10386, 0
  %v10890 = vsel %vm10537, %v10387, 0
  %v10893 = vsel %vm10537, %v10388, 0
  %v10896 = vsel %vm10537, %v10389, 0
  %v10899 = vsel %vm10537, %v10390, 0
  %v10902 = vsel %vm10537, %v10391, 0
  %v10905 = vsel %vm10537, %v10392, 0
  %v10908 = vsel %vm10537, %v10393, 0
  %v10911 = vsel %vm10537, %v10394, 0
  %v10914 = vsel %vm10537, %v10395, 0
  %v10917 = vsel %vm10537, %v10396, 0
  %v10920 = vsel %vm10537, %v10397, 0
  %v10923 = vsel %vm10537, %v10398, 0
  %v10926 = vsel %vm10537, %v10399, 0
  %v10929 = vsel %vm10537, %v10400, 0
  %v10932 = vsel %vm10537, %v10401, 0
  %v10935 = vsel %vm10537, %v10402, 0
  %v10938 = vsel %vm10537, %v10403, 0
  %v10941 = vsel %vm10537, %v10404, 0
  %v10944 = vsel %vm10537, %v10405, 0
  %v10947 = vsel %vm10537, %v10406, 0
  %v10950 = vsel %vm10537, %v10407, 0
  %v10953 = vsel %vm10537, %v10408, 0
  %v10956 = vsel %vm10537, %v10409, 0
  %v10959 = vsel %vm10537, %v10410, 0
  %v10962 = vsel %vm10537, %v10411, 0
  %v10965 = vsel %vm10537, %v10412, 0
  %v10968 = vsel %vm10537, %v10413, 0
  %v10971 = vsel %vm10537, %v10414, 0
  %v10974 = vsel %vm10537, %v10415, 0
  %v10977 = vsel %vm10537, %v10416, 0
  %v10980 = vsel %vm10537, %v10417, 0
  %v10983 = vsel %vm10537, %v10418, 0
  %v10986 = vsel %vm10537, %v10419, 0
  %v10989 = vsel %vm10537, %v10420, 0
  %v10992 = vsel %vm10537, %v10421, 0
  %v10995 = vsel %vm10537, %v10422, 0
  %v10998 = vsel %vm10537, %v10423, 0
  %v11001 = vsel %vm10537, %v10424, 0
  %v11004 = vsel %vm10537, %v10425, 0
  %v11007 = vsel %vm10537, %v10426, 0
  %v11010 = vsel %vm10537, %v10427, 0
  %v11013 = vsel %vm10537, %v10428, 0
  %v11016 = vsel %vm10537, %v10429, 0
  %v11019 = vsel %vm10537, %v10430, 0
  %v11022 = vsel %vm10537, %v10431, 0
  %v11025 = vsel %vm10537, %v10432, 0
  %v11028 = vsel %vm10537, %v10433, 0
  %v11031 = vsel %vm10537, %v10434, 0
  %v11034 = vsel %vm10537, %v10435, 0
  %v11037 = vsel %vm10537, %v10436, 0
  %v11040 = vsel %vm10537, %v10437, 0
  %v11043 = vsel %vm10537, %v10438, 0
  %v11046 = vsel %vm10537, %v10439, 0
  %v11049 = vsel %vm10537, %v10440, 0
  %v11052 = vsel %vm10537, %v10441, 0
  %v11055 = vsel %vm10537, %v10442, 0
  %v11058 = vsel %vm10537, %v10443, 0
  %v11061 = vsel %vm10537, %v10444, 0
  %v11064 = vsel %vm10537, %v10445, 0
  %v11067 = vsel %vm10537, %v10446, 0
  %v11070 = vsel %vm10537, %v10447, 0
  %v11073 = vsel %vm10537, %v10448, 0
  %v11076 = vsel %vm10537, %v10449, 0
  %v11079 = vsel %vm10537, %v10450, 0
  %v11082 = vsel %vm10537, %v10451, 0
  %v11085 = vsel %vm10537, %v10452, 0
  %v11088 = vsel %vm10537, %v10453, 0
  %v11091 = vsel %vm10537, %v10454, 0
  %v11094 = vsel %vm10537, %v10455, 0
  %v11097 = vsel %vm10537, %v10456, 0
  %v11100 = vsel %vm10537, %v10457, 0
  %v11103 = vsel %vm10537, %v10458, 0
  %v11106 = vsel %vm10537, %v10459, 0
  %v11109 = vsel %vm10537, %v10460, 0
  %v11112 = vsel %vm10537, %v10461, 0
  %v11115 = vsel %vm10537, %v10462, 0
  %v11118 = vsel %vm10537, %v10463, 0
  %v11121 = vsel %vm10537, %v10464, 0
  %v11124 = vsel %vm10537, %v10465, 0
  %v11127 = vsel %vm10537, %v10466, 0
  %v11130 = vsel %vm10537, %v10467, 0
  %v11133 = vsel %vm10537, %v10468, 0
  %v11136 = vsel %vm10537, %v10469, 0
  %v11139 = vsel %vm10537, %v10470, 0
  %v11142 = vsel %vm10537, %v10471, 0
  %v11145 = vsel %vm10537, %v10472, 0
  %v11148 = vsel %vm10537, %v10473, 0
  %v11151 = vsel %vm10537, %v10474, 0
  %v11154 = vsel %vm10537, %v10475, 0
  %v11157 = vsel %vm10537, %v10476, 0
  %v11160 = vsel %vm10537, %v10477, 0
  %v11163 = vsel %vm10537, %v10478, 0
  %v11166 = vsel %vm10537, %v10479, 0
  %v11169 = vsel %vm10537, %v10480, 0
  %v11172 = vsel %vm10537, %v10481, 0
  %v11175 = vsel %vm10537, %v10482, 0
  %v11178 = vsel %vm10537, %v10483, 0
  %v11181 = vsel %vm10537, %v10484, 0
  %v11184 = vsel %vm10537, %v10485, 0
  %v11187 = vsel %vm10537, %v10486, 0
  %v11190 = vsel %vm10537, %v10487, 0
  %v11193 = vsel %vm10537, %v10488, 0
  %v11196 = vsel %vm10537, %v10489, 0
  %v11199 = vsel %vm10537, %v10490, 0
  %v11202 = vsel %vm10537, %v10491, 0
  %v11205 = vsel %vm10537, %v10492, 0
  %v11208 = vsel %vm10537, %v10493, 0
  %v11211 = vsel %vm10537, %v10494, 0
  %v11214 = vsel %vm10537, %v10495, 0
  %v11217 = vsel %vm10537, %v10496, 0
  %v11220 = vsel %vm10537, %v10497, 0
  %v11223 = vsel %vm10537, %v10498, 0
  %v11226 = vsel %vm10537, %v10499, 0
  %v11229 = vsel %vm10537, %v10500, 0
  %v11232 = vsel %vm10537, %v10501, 0
  %v11235 = vsel %vm10537, %v10502, 0
  %v11238 = vsel %vm10537, %v10503, 0
  %v11241 = vsel %vm10537, %v10504, 0
  %v11244 = vsel %vm10537, %v10505, 0
  %v11247 = vsel %vm10537, %v10506, 0
  %v11250 = vsel %vm10537, %v10507, 0
  %v11253 = vsel %vm10537, %v10508, 0
  %v11256 = vsel %vm10537, %v10509, 0
  %v11259 = vsel %vm10537, %v10510, 0
  %v11262 = vsel %vm10537, %v10511, 0
  %v11265 = vsel %vm10537, %v10512, 0
  %v11268 = vsel %vm10537, %v10513, 0
  %v11271 = vsel %vm10537, %v10514, 0
  %v11274 = vsel %vm10537, %v10515, 0
  %v11277 = vsel %vm10537, %v10516, 0
  %v11280 = vsel %vm10537, %v10517, 0
  %v11283 = vsel %vm10537, %v10518, 0
  %v11286 = vsel %vm10537, %v10519, 0
  %v11289 = vsel %vm10537, %v10520, 0
  %v11292 = vsel %vm10537, %v10521, 0
  %v11295 = vsel %vm10537, %v10522, 0
  %v11298 = vsel %vm10537, %v10523, 0
  %v11301 = vsel %vm10537, %v10524, 0
  %v11304 = vsel %vm10537, %v10525, 0
  %vm11306 = vcmask 1042432
  %v11308 = vsel %vm11306, %v10529, 0
  %11310 = vmatprep.subr.mxu0 0.0
  %11311 = vmatpush1.msra.mxu0 0.0
  %11312 = vmatprep.subr.mxu0 0.0
  %11313 = vmatpush1.msra.mxu0 0.0
  %11314 = vmatprep.subr.mxu0 0.0
  %11315 = vmatpush1.msra.mxu0 0.0
  %11316 = vmatprep.subr.mxu0 0.0
  %11317 = vmatpush1.msra.mxu0 0.0
  %11318 = vmatprep.subr.mxu0 0.0
  %11319 = vmatpush1.msra.mxu0 0.0
  %11320 = vmatprep.subr.mxu0 0.0
  %11321 = vmatpush1.msra.mxu0 0.0
  %11322 = vmatprep.subr.mxu0 0.0
  %11323 = vmatpush1.msra.mxu0 0.0
  %11324 = vmatprep.subr.mxu0 0.0
  %11325 = vmatpush1.msra.mxu0 0.0
  %11326 = vmatprep.subr.mxu0 0.0
  %11327 = vmatpush1.msra.mxu0 0.0
  %11328 = vmatprep.subr.mxu0 0.0
  %11329 = vmatpush1.msra.mxu0 0.0
  %11330 = vmatprep.subr.mxu0 0.0
  %11331 = vmatpush1.msra.mxu0 0.0
  %11332 = vmatprep.subr.mxu0 0.0
  %11333 = vmatpush1.msra.mxu0 0.0
  %11334 = vmatprep.subr.mxu0 0.0
  %11335 = vmatpush1.msra.mxu0 %v11308
  %11336 = vmatprep.subr.mxu0 0.0
  %11337 = vmatpush1.msra.mxu0 %v10528
  %11338 = vmatprep.subr.mxu0 0.0
  %11339 = vmatpush1.msra.mxu0 %v10527
  %11340 = vmatprep.subr.mxu0 0.0
  %11341 = vmatpush1.msra.mxu0 %v10526
  %11342 = vmatprep.subr.mxu0 0.0
  %11343 = vmatpush2.msra.mxu0 0.0
  %11344 = vmatprep.subr.mxu0 0.0
  %11345 = vmatpush2.msra.mxu0 0.0
  %11346 = vmatprep.subr.mxu0 0.0
  %11347 = vmatpush2.msra.mxu0 0.0
  %11348 = vmatprep.subr.mxu0 0.0
  %11349 = vmatpush2.msra.mxu0 0.0
  %11350 = vmatprep.subr.mxu0 0.0
  %11351 = vmatpush2.msra.mxu0 0.0
  %11352 = vmatprep.subr.mxu0 0.0
  %11353 = vmatpush2.msra.mxu0 0.0
  %11354 = vmatprep.subr.mxu0 0.0
  %11355 = vmatpush2.msra.mxu0 0.0
  %11356 = vmatprep.subr.mxu0 0.0
  %11357 = vmatpush2.msra.mxu0 0.0
  %11358 = vmatprep.subr.mxu0 0.0
  %11359 = vmatpush2.msra.mxu0 0.0
  %11360 = vmatprep.subr.mxu0 0.0
  %11361 = vmatpush2.msra.mxu0 0.0
  %11362 = vmatprep.subr.mxu0 0.0
  %11363 = vmatpush2.msra.mxu0 0.0
  %11364 = vmatprep.subr.mxu0 0.0
  %11365 = vmatpush2.msra.mxu0 0.0
  %11366 = vmatprep.subr.mxu0 0.0
  %11367 = vmatpush2.msra.mxu0 0.0
  %11368 = vmatprep.subr.mxu0 0.0
  %11369 = vmatpush2.msra.mxu0 0.0
  %11370 = vmatprep.subr.mxu0 0.0
  %11371 = vmatpush2.msra.mxu0 0.0
  %11372 = vmatprep.subr.mxu0 0.0
  %11373 = vmatpush2.msra.mxu0 0.0
  %11374 = vmatprep.mubr.f32.mxu0 0.0
  %11375 = vmatmul.mubr.f32.gmra.mxu0 %v10539
  %v11376 = vpop.f32.mrf.mxu0
  %v11377 = vadd.f32 %v10535, %v11376
  %v11378 = vpop.f32.mrf.mxu0
  %11379 = vmatprep.mubr.f32.mxu0 0.0
  %11380 = vmatmul.mubr.f32.gmra.mxu0 %v10542
  %v11381 = vpop.f32.mrf.mxu0
  %v11382 = vadd.f32 %v10535, %v11381
  %v11383 = vpop.f32.mrf.mxu0
  %11384 = vmatprep.mubr.f32.mxu0 0.0
  %11385 = vmatmul.mubr.f32.gmra.mxu0 %v10545
  %v11386 = vpop.f32.mrf.mxu0
  %v11387 = vadd.f32 %v10535, %v11386
  %v11388 = vpop.f32.mrf.mxu0
  %11389 = vmatprep.mubr.f32.mxu0 0.0
  %11390 = vmatmul.mubr.f32.gmra.mxu0 %v10548
  %v11391 = vpop.f32.mrf.mxu0
  %v11392 = vadd.f32 %v10535, %v11391
  %v11393 = vpop.f32.mrf.mxu0
  %11394 = vmatprep.mubr.f32.mxu0 0.0
  %11395 = vmatmul.mubr.f32.gmra.mxu0 %v10551
  %v11396 = vpop.f32.mrf.mxu0
  %v11397 = vadd.f32 %v10535, %v11396
  %v11398 = vpop.f32.mrf.mxu0
  %11399 = vmatprep.mubr.f32.mxu0 0.0
  %11400 = vmatmul.mubr.f32.gmra.mxu0 %v10554
  %v11401 = vpop.f32.mrf.mxu0
  %v11402 = vadd.f32 %v10535, %v11401
  %v11403 = vpop.f32.mrf.mxu0
  %11404 = vmatprep.mubr.f32.mxu0 0.0
  %11405 = vmatmul.mubr.f32.gmra.mxu0 %v10557
  %v11406 = vpop.f32.mrf.mxu0
  %v11407 = vadd.f32 %v10535, %v11406
  %v11408 = vpop.f32.mrf.mxu0
  %11409 = vmatprep.mubr.f32.mxu0 0.0
  %11410 = vmatmul.mubr.f32.gmra.mxu0 %v10560
  %v11411 = vpop.f32.mrf.mxu0
  %v11412 = vadd.f32 %v10535, %v11411
  %v11413 = vpop.f32.mrf.mxu0
  %11414 = vmatprep.mubr.f32.mxu0 0.0
  %11415 = vmatmul.mubr.f32.gmra.mxu0 %v10563
  %v11416 = vpop.f32.mrf.mxu0
  %v11417 = vadd.f32 %v10535, %v11416
  %v11418 = vpop.f32.mrf.mxu0
  %11419 = vmatprep.mubr.f32.mxu0 0.0
  %11420 = vmatmul.mubr.f32.gmra.mxu0 %v10566
  %v11421 = vpop.f32.mrf.mxu0
  %v11422 = vadd.f32 %v10535, %v11421
  %v11423 = vpop.f32.mrf.mxu0
  %11424 = vmatprep.mubr.f32.mxu0 0.0
  %11425 = vmatmul.mubr.f32.gmra.mxu0 %v10569
  %v11426 = vpop.f32.mrf.mxu0
  %v11427 = vadd.f32 %v10535, %v11426
  %v11428 = vpop.f32.mrf.mxu0
  %11429 = vmatprep.mubr.f32.mxu0 0.0
  %11430 = vmatmul.mubr.f32.gmra.mxu0 %v10572
  %v11431 = vpop.f32.mrf.mxu0
  %v11432 = vadd.f32 %v10535, %v11431
  %v11433 = vpop.f32.mrf.mxu0
  %11434 = vmatprep.mubr.f32.mxu0 0.0
  %11435 = vmatmul.mubr.f32.gmra.mxu0 %v10575
  %v11436 = vpop.f32.mrf.mxu0
  %v11437 = vadd.f32 %v10535, %v11436
  %v11438 = vpop.f32.mrf.mxu0
  %11439 = vmatprep.mubr.f32.mxu0 0.0
  %11440 = vmatmul.mubr.f32.gmra.mxu0 %v10578
  %v11441 = vpop.f32.mrf.mxu0
  %v11442 = vadd.f32 %v10535, %v11441
  %v11443 = vpop.f32.mrf.mxu0
  %11444 = vmatprep.mubr.f32.mxu0 0.0
  %11445 = vmatmul.mubr.f32.gmra.mxu0 %v10581
  %v11446 = vpop.f32.mrf.mxu0
  %v11447 = vadd.f32 %v10535, %v11446
  %v11448 = vpop.f32.mrf.mxu0
  %11449 = vmatprep.mubr.f32.mxu0 0.0
  %11450 = vmatmul.mubr.f32.gmra.mxu0 %v10584
  %v11451 = vpop.f32.mrf.mxu0
  %v11452 = vadd.f32 %v10535, %v11451
  %v11453 = vpop.f32.mrf.mxu0
  %11454 = vmatprep.mubr.f32.mxu0 0.0
  %11455 = vmatmul.mubr.f32.gmra.mxu0 %v10587
  %v11456 = vpop.f32.mrf.mxu0
  %v11457 = vadd.f32 %v10535, %v11456
  %v11458 = vpop.f32.mrf.mxu0
  %11459 = vmatprep.mubr.f32.mxu0 0.0
  %11460 = vmatmul.mubr.f32.gmra.mxu0 %v10590
  %v11461 = vpop.f32.mrf.mxu0
  %v11462 = vadd.f32 %v10535, %v11461
  %v11463 = vpop.f32.mrf.mxu0
  %11464 = vmatprep.mubr.f32.mxu0 0.0
  %11465 = vmatmul.mubr.f32.gmra.mxu0 %v10593
  %v11466 = vpop.f32.mrf.mxu0
  %v11467 = vadd.f32 %v10535, %v11466
  %v11468 = vpop.f32.mrf.mxu0
  %11469 = vmatprep.mubr.f32.mxu0 0.0
  %11470 = vmatmul.mubr.f32.gmra.mxu0 %v10596
  %v11471 = vpop.f32.mrf.mxu0
  %v11472 = vadd.f32 %v10535, %v11471
  %v11473 = vpop.f32.mrf.mxu0
  %11474 = vmatprep.mubr.f32.mxu0 0.0
  %11475 = vmatmul.mubr.f32.gmra.mxu0 %v10599
  %v11476 = vpop.f32.mrf.mxu0
  %v11477 = vadd.f32 %v10535, %v11476
  %v11478 = vpop.f32.mrf.mxu0
  %11479 = vmatprep.mubr.f32.mxu0 0.0
  %11480 = vmatmul.mubr.f32.gmra.mxu0 %v10602
  %v11481 = vpop.f32.mrf.mxu0
  %v11482 = vadd.f32 %v10535, %v11481
  %v11483 = vpop.f32.mrf.mxu0
  %11484 = vmatprep.mubr.f32.mxu0 0.0
  %11485 = vmatmul.mubr.f32.gmra.mxu0 %v10605
  %v11486 = vpop.f32.mrf.mxu0
  %v11487 = vadd.f32 %v10535, %v11486
  %v11488 = vpop.f32.mrf.mxu0
  %11489 = vmatprep.mubr.f32.mxu0 0.0
  %11490 = vmatmul.mubr.f32.gmra.mxu0 %v10608
  %v11491 = vpop.f32.mrf.mxu0
  %v11492 = vadd.f32 %v10535, %v11491
  %v11493 = vpop.f32.mrf.mxu0
  %11494 = vmatprep.mubr.f32.mxu0 0.0
  %11495 = vmatmul.mubr.f32.gmra.mxu0 %v10611
  %v11496 = vpop.f32.mrf.mxu0
  %v11497 = vadd.f32 %v10535, %v11496
  %v11498 = vpop.f32.mrf.mxu0
  %11499 = vmatprep.mubr.f32.mxu0 0.0
  %11500 = vmatmul.mubr.f32.gmra.mxu0 %v10614
  %v11501 = vpop.f32.mrf.mxu0
  %v11502 = vadd.f32 %v10535, %v11501
  %v11503 = vpop.f32.mrf.mxu0
  %11504 = vmatprep.mubr.f32.mxu0 0.0
  %11505 = vmatmul.mubr.f32.gmra.mxu0 %v10617
  %v11506 = vpop.f32.mrf.mxu0
  %v11507 = vadd.f32 %v10535, %v11506
  %v11508 = vpop.f32.mrf.mxu0
  %11509 = vmatprep.mubr.f32.mxu0 0.0
  %11510 = vmatmul.mubr.f32.gmra.mxu0 %v10620
  %v11511 = vpop.f32.mrf.mxu0
  %v11512 = vadd.f32 %v10535, %v11511
  %v11513 = vpop.f32.mrf.mxu0
  %11514 = vmatprep.mubr.f32.mxu0 0.0
  %11515 = vmatmul.mubr.f32.gmra.mxu0 %v10623
  %v11516 = vpop.f32.mrf.mxu0
  %v11517 = vadd.f32 %v10535, %v11516
  %v11518 = vpop.f32.mrf.mxu0
  %11519 = vmatprep.mubr.f32.mxu0 0.0
  %11520 = vmatmul.mubr.f32.gmra.mxu0 %v10626
  %v11521 = vpop.f32.mrf.mxu0
  %v11522 = vadd.f32 %v10535, %v11521
  %v11523 = vpop.f32.mrf.mxu0
  %11524 = vmatprep.mubr.f32.mxu0 0.0
  %11525 = vmatmul.mubr.f32.gmra.mxu0 %v10629
  %v11526 = vpop.f32.mrf.mxu0
  %v11527 = vadd.f32 %v10535, %v11526
  %v11528 = vpop.f32.mrf.mxu0
  %11529 = vmatprep.mubr.f32.mxu0 0.0
  %11530 = vmatmul.mubr.f32.gmra.mxu0 %v10632
  %v11531 = vpop.f32.mrf.mxu0
  %v11532 = vadd.f32 %v10535, %v11531
  %v11533 = vpop.f32.mrf.mxu0
  %11534 = vmatprep.mubr.f32.mxu0 0.0
  %11535 = vmatmul.mubr.f32.gmra.mxu0 %v10635
  %v11536 = vpop.f32.mrf.mxu0
  %v11537 = vadd.f32 %v10535, %v11536
  %v11538 = vpop.f32.mrf.mxu0
  %11539 = vmatprep.mubr.f32.mxu0 0.0
  %11540 = vmatmul.mubr.f32.gmra.mxu0 %v10638
  %v11541 = vpop.f32.mrf.mxu0
  %v11542 = vadd.f32 %v10535, %v11541
  %v11543 = vpop.f32.mrf.mxu0
  %11544 = vmatprep.mubr.f32.mxu0 0.0
  %11545 = vmatmul.mubr.f32.gmra.mxu0 %v10641
  %v11546 = vpop.f32.mrf.mxu0
  %v11547 = vadd.f32 %v10535, %v11546
  %v11548 = vpop.f32.mrf.mxu0
  %11549 = vmatprep.mubr.f32.mxu0 0.0
  %11550 = vmatmul.mubr.f32.gmra.mxu0 %v10644
  %v11551 = vpop.f32.mrf.mxu0
  %v11552 = vadd.f32 %v10535, %v11551
  %v11553 = vpop.f32.mrf.mxu0
  %11554 = vmatprep.mubr.f32.mxu0 0.0
  %11555 = vmatmul.mubr.f32.gmra.mxu0 %v10647
  %v11556 = vpop.f32.mrf.mxu0
  %v11557 = vadd.f32 %v10535, %v11556
  %v11558 = vpop.f32.mrf.mxu0
  %11559 = vmatprep.mubr.f32.mxu0 0.0
  %11560 = vmatmul.mubr.f32.gmra.mxu0 %v10650
  %v11561 = vpop.f32.mrf.mxu0
  %v11562 = vadd.f32 %v10535, %v11561
  %v11563 = vpop.f32.mrf.mxu0
  %11564 = vmatprep.mubr.f32.mxu0 0.0
  %11565 = vmatmul.mubr.f32.gmra.mxu0 %v10653
  %v11566 = vpop.f32.mrf.mxu0
  %v11567 = vadd.f32 %v10535, %v11566
  %v11568 = vpop.f32.mrf.mxu0
  %11569 = vmatprep.mubr.f32.mxu0 0.0
  %11570 = vmatmul.mubr.f32.gmra.mxu0 %v10656
  %v11571 = vpop.f32.mrf.mxu0
  %v11572 = vadd.f32 %v10535, %v11571
  %v11573 = vpop.f32.mrf.mxu0
  %11574 = vmatprep.mubr.f32.mxu0 0.0
  %11575 = vmatmul.mubr.f32.gmra.mxu0 %v10659
  %v11576 = vpop.f32.mrf.mxu0
  %v11577 = vadd.f32 %v10535, %v11576
  %v11578 = vpop.f32.mrf.mxu0
  %11579 = vmatprep.mubr.f32.mxu0 0.0
  %11580 = vmatmul.mubr.f32.gmra.mxu0 %v10662
  %v11581 = vpop.f32.mrf.mxu0
  %v11582 = vadd.f32 %v10535, %v11581
  %v11583 = vpop.f32.mrf.mxu0
  %11584 = vmatprep.mubr.f32.mxu0 0.0
  %11585 = vmatmul.mubr.f32.gmra.mxu0 %v10665
  %v11586 = vpop.f32.mrf.mxu0
  %v11587 = vadd.f32 %v10535, %v11586
  %v11588 = vpop.f32.mrf.mxu0
  %11589 = vmatprep.mubr.f32.mxu0 0.0
  %11590 = vmatmul.mubr.f32.gmra.mxu0 %v10668
  %v11591 = vpop.f32.mrf.mxu0
  %v11592 = vadd.f32 %v10535, %v11591
  %v11593 = vpop.f32.mrf.mxu0
  %11594 = vmatprep.mubr.f32.mxu0 0.0
  %11595 = vmatmul.mubr.f32.gmra.mxu0 %v10671
  %v11596 = vpop.f32.mrf.mxu0
  %v11597 = vadd.f32 %v10535, %v11596
  %v11598 = vpop.f32.mrf.mxu0
  %11599 = vmatprep.mubr.f32.mxu0 0.0
  %11600 = vmatmul.mubr.f32.gmra.mxu0 %v10674
  %v11601 = vpop.f32.mrf.mxu0
  %v11602 = vadd.f32 %v10535, %v11601
  %v11603 = vpop.f32.mrf.mxu0
  %11604 = vmatprep.mubr.f32.mxu0 0.0
  %11605 = vmatmul.mubr.f32.gmra.mxu0 %v10677
  %v11606 = vpop.f32.mrf.mxu0
  %v11607 = vadd.f32 %v10535, %v11606
  %v11608 = vpop.f32.mrf.mxu0
  %11609 = vmatprep.mubr.f32.mxu0 0.0
  %11610 = vmatmul.mubr.f32.gmra.mxu0 %v10680
  %v11611 = vpop.f32.mrf.mxu0
  %v11612 = vadd.f32 %v10535, %v11611
  %v11613 = vpop.f32.mrf.mxu0
  %11614 = vmatprep.mubr.f32.mxu0 0.0
  %11615 = vmatmul.mubr.f32.gmra.mxu0 %v10683
  %v11616 = vpop.f32.mrf.mxu0
  %v11617 = vadd.f32 %v10535, %v11616
  %v11618 = vpop.f32.mrf.mxu0
  %11619 = vmatprep.mubr.f32.mxu0 0.0
  %11620 = vmatmul.mubr.f32.gmra.mxu0 %v10686
  %v11621 = vpop.f32.mrf.mxu0
  %v11622 = vadd.f32 %v10535, %v11621
  %v11623 = vpop.f32.mrf.mxu0
  %11624 = vmatprep.mubr.f32.mxu0 0.0
  %11625 = vmatmul.mubr.f32.gmra.mxu0 %v10689
  %v11626 = vpop.f32.mrf.mxu0
  %v11627 = vadd.f32 %v10535, %v11626
  %v11628 = vpop.f32.mrf.mxu0
  %11629 = vmatprep.mubr.f32.mxu0 0.0
  %11630 = vmatmul.mubr.f32.gmra.mxu0 %v10692
  %v11631 = vpop.f32.mrf.mxu0
  %v11632 = vadd.f32 %v10535, %v11631
  %v11633 = vpop.f32.mrf.mxu0
  %11634 = vmatprep.mubr.f32.mxu0 0.0
  %11635 = vmatmul.mubr.f32.gmra.mxu0 %v10695
  %v11636 = vpop.f32.mrf.mxu0
  %v11637 = vadd.f32 %v10535, %v11636
  %v11638 = vpop.f32.mrf.mxu0
  %11639 = vmatprep.mubr.f32.mxu0 0.0
  %11640 = vmatmul.mubr.f32.gmra.mxu0 %v10698
  %v11641 = vpop.f32.mrf.mxu0
  %v11642 = vadd.f32 %v10535, %v11641
  %v11643 = vpop.f32.mrf.mxu0
  %11644 = vmatprep.mubr.f32.mxu0 0.0
  %11645 = vmatmul.mubr.f32.gmra.mxu0 %v10701
  %v11646 = vpop.f32.mrf.mxu0
  %v11647 = vadd.f32 %v10535, %v11646
  %v11648 = vpop.f32.mrf.mxu0
  %11649 = vmatprep.mubr.f32.mxu0 0.0
  %11650 = vmatmul.mubr.f32.gmra.mxu0 %v10704
  %v11651 = vpop.f32.mrf.mxu0
  %v11652 = vadd.f32 %v10535, %v11651
  %v11653 = vpop.f32.mrf.mxu0
  %11654 = vmatprep.mubr.f32.mxu0 0.0
  %11655 = vmatmul.mubr.f32.gmra.mxu0 %v10707
  %v11656 = vpop.f32.mrf.mxu0
  %v11657 = vadd.f32 %v10535, %v11656
  %v11658 = vpop.f32.mrf.mxu0
  %11659 = vmatprep.mubr.f32.mxu0 0.0
  %11660 = vmatmul.mubr.f32.gmra.mxu0 %v10710
  %v11661 = vpop.f32.mrf.mxu0
  %v11662 = vadd.f32 %v10535, %v11661
  %v11663 = vpop.f32.mrf.mxu0
  %11664 = vmatprep.mubr.f32.mxu0 0.0
  %11665 = vmatmul.mubr.f32.gmra.mxu0 %v10713
  %v11666 = vpop.f32.mrf.mxu0
  %v11667 = vadd.f32 %v10535, %v11666
  %v11668 = vpop.f32.mrf.mxu0
  %11669 = vmatprep.mubr.f32.mxu0 0.0
  %11670 = vmatmul.mubr.f32.gmra.mxu0 %v10716
  %v11671 = vpop.f32.mrf.mxu0
  %v11672 = vadd.f32 %v10535, %v11671
  %v11673 = vpop.f32.mrf.mxu0
  %11674 = vmatprep.mubr.f32.mxu0 0.0
  %11675 = vmatmul.mubr.f32.gmra.mxu0 %v10719
  %v11676 = vpop.f32.mrf.mxu0
  %v11677 = vadd.f32 %v10535, %v11676
  %v11678 = vpop.f32.mrf.mxu0
  %11679 = vmatprep.mubr.f32.mxu0 0.0
  %11680 = vmatmul.mubr.f32.gmra.mxu0 %v10722
  %v11681 = vpop.f32.mrf.mxu0
  %v11682 = vadd.f32 %v10535, %v11681
  %v11683 = vpop.f32.mrf.mxu0
  %11684 = vmatprep.mubr.f32.mxu0 0.0
  %11685 = vmatmul.mubr.f32.gmra.mxu0 %v10725
  %v11686 = vpop.f32.mrf.mxu0
  %v11687 = vadd.f32 %v10535, %v11686
  %v11688 = vpop.f32.mrf.mxu0
  %11689 = vmatprep.mubr.f32.mxu0 0.0
  %11690 = vmatmul.mubr.f32.gmra.mxu0 %v10728
  %v11691 = vpop.f32.mrf.mxu0
  %v11692 = vadd.f32 %v10535, %v11691
  %v11693 = vpop.f32.mrf.mxu0
  %11694 = vmatprep.mubr.f32.mxu0 0.0
  %11695 = vmatmul.mubr.f32.gmra.mxu0 %v10731
  %v11696 = vpop.f32.mrf.mxu0
  %v11697 = vadd.f32 %v10535, %v11696
  %v11698 = vpop.f32.mrf.mxu0
  %11699 = vmatprep.mubr.f32.mxu0 0.0
  %11700 = vmatmul.mubr.f32.gmra.mxu0 %v10734
  %v11701 = vpop.f32.mrf.mxu0
  %v11702 = vadd.f32 %v10535, %v11701
  %v11703 = vpop.f32.mrf.mxu0
  %11704 = vmatprep.mubr.f32.mxu0 0.0
  %11705 = vmatmul.mubr.f32.gmra.mxu0 %v10737
  %v11706 = vpop.f32.mrf.mxu0
  %v11707 = vadd.f32 %v10535, %v11706
  %v11708 = vpop.f32.mrf.mxu0
  %11709 = vmatprep.mubr.f32.mxu0 0.0
  %11710 = vmatmul.mubr.f32.gmra.mxu0 %v10740
  %v11711 = vpop.f32.mrf.mxu0
  %v11712 = vadd.f32 %v10535, %v11711
  %v11713 = vpop.f32.mrf.mxu0
  %11714 = vmatprep.mubr.f32.mxu0 0.0
  %11715 = vmatmul.mubr.f32.gmra.mxu0 %v10743
  %v11716 = vpop.f32.mrf.mxu0
  %v11717 = vadd.f32 %v10535, %v11716
  %v11718 = vpop.f32.mrf.mxu0
  %11719 = vmatprep.mubr.f32.mxu0 0.0
  %11720 = vmatmul.mubr.f32.gmra.mxu0 %v10746
  %v11721 = vpop.f32.mrf.mxu0
  %v11722 = vadd.f32 %v10535, %v11721
  %v11723 = vpop.f32.mrf.mxu0
  %11724 = vmatprep.mubr.f32.mxu0 0.0
  %11725 = vmatmul.mubr.f32.gmra.mxu0 %v10749
  %v11726 = vpop.f32.mrf.mxu0
  %v11727 = vadd.f32 %v10535, %v11726
  %v11728 = vpop.f32.mrf.mxu0
  %11729 = vmatprep.mubr.f32.mxu0 0.0
  %11730 = vmatmul.mubr.f32.gmra.mxu0 %v10752
  %v11731 = vpop.f32.mrf.mxu0
  %v11732 = vadd.f32 %v10535, %v11731
  %v11733 = vpop.f32.mrf.mxu0
  %11734 = vmatprep.mubr.f32.mxu0 0.0
  %11735 = vmatmul.mubr.f32.gmra.mxu0 %v10755
  %v11736 = vpop.f32.mrf.mxu0
  %v11737 = vadd.f32 %v10535, %v11736
  %v11738 = vpop.f32.mrf.mxu0
  %11739 = vmatprep.mubr.f32.mxu0 0.0
  %11740 = vmatmul.mubr.f32.gmra.mxu0 %v10758
  %v11741 = vpop.f32.mrf.mxu0
  %v11742 = vadd.f32 %v10535, %v11741
  %v11743 = vpop.f32.mrf.mxu0
  %11744 = vmatprep.mubr.f32.mxu0 0.0
  %11745 = vmatmul.mubr.f32.gmra.mxu0 %v10761
  %v11746 = vpop.f32.mrf.mxu0
  %v11747 = vadd.f32 %v10535, %v11746
  %v11748 = vpop.f32.mrf.mxu0
  %11749 = vmatprep.mubr.f32.mxu0 0.0
  %11750 = vmatmul.mubr.f32.gmra.mxu0 %v10764
  %v11751 = vpop.f32.mrf.mxu0
  %v11752 = vadd.f32 %v10535, %v11751
  %v11753 = vpop.f32.mrf.mxu0
  %11754 = vmatprep.mubr.f32.mxu0 0.0
  %11755 = vmatmul.mubr.f32.gmra.mxu0 %v10767
  %v11756 = vpop.f32.mrf.mxu0
  %v11757 = vadd.f32 %v10535, %v11756
  %v11758 = vpop.f32.mrf.mxu0
  %11759 = vmatprep.mubr.f32.mxu0 0.0
  %11760 = vmatmul.mubr.f32.gmra.mxu0 %v10770
  %v11761 = vpop.f32.mrf.mxu0
  %v11762 = vadd.f32 %v10535, %v11761
  %v11763 = vpop.f32.mrf.mxu0
  %11764 = vmatprep.mubr.f32.mxu0 0.0
  %11765 = vmatmul.mubr.f32.gmra.mxu0 %v10773
  %v11766 = vpop.f32.mrf.mxu0
  %v11767 = vadd.f32 %v10535, %v11766
  %v11768 = vpop.f32.mrf.mxu0
  %11769 = vmatprep.mubr.f32.mxu0 0.0
  %11770 = vmatmul.mubr.f32.gmra.mxu0 %v10776
  %v11771 = vpop.f32.mrf.mxu0
  %v11772 = vadd.f32 %v10535, %v11771
  %v11773 = vpop.f32.mrf.mxu0
  %11774 = vmatprep.mubr.f32.mxu0 0.0
  %11775 = vmatmul.mubr.f32.gmra.mxu0 %v10779
  %v11776 = vpop.f32.mrf.mxu0
  %v11777 = vadd.f32 %v10535, %v11776
  %v11778 = vpop.f32.mrf.mxu0
  %11779 = vmatprep.mubr.f32.mxu0 0.0
  %11780 = vmatmul.mubr.f32.gmra.mxu0 %v10782
  %v11781 = vpop.f32.mrf.mxu0
  %v11782 = vadd.f32 %v10535, %v11781
  %v11783 = vpop.f32.mrf.mxu0
  %11784 = vmatprep.mubr.f32.mxu0 0.0
  %11785 = vmatmul.mubr.f32.gmra.mxu0 %v10785
  %v11786 = vpop.f32.mrf.mxu0
  %v11787 = vadd.f32 %v10535, %v11786
  %v11788 = vpop.f32.mrf.mxu0
  %11789 = vmatprep.mubr.f32.mxu0 0.0
  %11790 = vmatmul.mubr.f32.gmra.mxu0 %v10788
  %v11791 = vpop.f32.mrf.mxu0
  %v11792 = vadd.f32 %v10535, %v11791
  %v11793 = vpop.f32.mrf.mxu0
  %11794 = vmatprep.mubr.f32.mxu0 0.0
  %11795 = vmatmul.mubr.f32.gmra.mxu0 %v10791
  %v11796 = vpop.f32.mrf.mxu0
  %v11797 = vadd.f32 %v10535, %v11796
  %v11798 = vpop.f32.mrf.mxu0
  %11799 = vmatprep.mubr.f32.mxu0 0.0
  %11800 = vmatmul.mubr.f32.gmra.mxu0 %v10794
  %v11801 = vpop.f32.mrf.mxu0
  %v11802 = vadd.f32 %v10535, %v11801
  %v11803 = vpop.f32.mrf.mxu0
  %11804 = vmatprep.mubr.f32.mxu0 0.0
  %11805 = vmatmul.mubr.f32.gmra.mxu0 %v10797
  %v11806 = vpop.f32.mrf.mxu0
  %v11807 = vadd.f32 %v10535, %v11806
  %v11808 = vpop.f32.mrf.mxu0
  %11809 = vmatprep.mubr.f32.mxu0 0.0
  %11810 = vmatmul.mubr.f32.gmra.mxu0 %v10800
  %v11811 = vpop.f32.mrf.mxu0
  %v11812 = vadd.f32 %v10535, %v11811
  %v11813 = vpop.f32.mrf.mxu0
  %11814 = vmatprep.mubr.f32.mxu0 0.0
  %11815 = vmatmul.mubr.f32.gmra.mxu0 %v10803
  %v11816 = vpop.f32.mrf.mxu0
  %v11817 = vadd.f32 %v10535, %v11816
  %v11818 = vpop.f32.mrf.mxu0
  %11819 = vmatprep.mubr.f32.mxu0 0.0
  %11820 = vmatmul.mubr.f32.gmra.mxu0 %v10806
  %v11821 = vpop.f32.mrf.mxu0
  %v11822 = vadd.f32 %v10535, %v11821
  %v11823 = vpop.f32.mrf.mxu0
  %11824 = vmatprep.mubr.f32.mxu0 0.0
  %11825 = vmatmul.mubr.f32.gmra.mxu0 %v10809
  %v11826 = vpop.f32.mrf.mxu0
  %v11827 = vadd.f32 %v10535, %v11826
  %v11828 = vpop.f32.mrf.mxu0
  %11829 = vmatprep.mubr.f32.mxu0 0.0
  %11830 = vmatmul.mubr.f32.gmra.mxu0 %v10812
  %v11831 = vpop.f32.mrf.mxu0
  %v11832 = vadd.f32 %v10535, %v11831
  %v11833 = vpop.f32.mrf.mxu0
  %11834 = vmatprep.mubr.f32.mxu0 0.0
  %11835 = vmatmul.mubr.f32.gmra.mxu0 %v10815
  %v11836 = vpop.f32.mrf.mxu0
  %v11837 = vadd.f32 %v10535, %v11836
  %v11838 = vpop.f32.mrf.mxu0
  %11839 = vmatprep.mubr.f32.mxu0 0.0
  %11840 = vmatmul.mubr.f32.gmra.mxu0 %v10818
  %v11841 = vpop.f32.mrf.mxu0
  %v11842 = vadd.f32 %v10535, %v11841
  %v11843 = vpop.f32.mrf.mxu0
  %11844 = vmatprep.mubr.f32.mxu0 0.0
  %11845 = vmatmul.mubr.f32.gmra.mxu0 %v10821
  %v11846 = vpop.f32.mrf.mxu0
  %v11847 = vadd.f32 %v10535, %v11846
  %v11848 = vpop.f32.mrf.mxu0
  %11849 = vmatprep.mubr.f32.mxu0 0.0
  %11850 = vmatmul.mubr.f32.gmra.mxu0 %v10824
  %v11851 = vpop.f32.mrf.mxu0
  %v11852 = vadd.f32 %v10535, %v11851
  %v11853 = vpop.f32.mrf.mxu0
  %11854 = vmatprep.mubr.f32.mxu0 0.0
  %11855 = vmatmul.mubr.f32.gmra.mxu0 %v10827
  %v11856 = vpop.f32.mrf.mxu0
  %v11857 = vadd.f32 %v10535, %v11856
  %v11858 = vpop.f32.mrf.mxu0
  %11859 = vmatprep.mubr.f32.mxu0 0.0
  %11860 = vmatmul.mubr.f32.gmra.mxu0 %v10830
  %v11861 = vpop.f32.mrf.mxu0
  %v11862 = vadd.f32 %v10535, %v11861
  %v11863 = vpop.f32.mrf.mxu0
  %11864 = vmatprep.mubr.f32.mxu0 0.0
  %11865 = vmatmul.mubr.f32.gmra.mxu0 %v10833
  %v11866 = vpop.f32.mrf.mxu0
  %v11867 = vadd.f32 %v10535, %v11866
  %v11868 = vpop.f32.mrf.mxu0
  %11869 = vmatprep.mubr.f32.mxu0 0.0
  %11870 = vmatmul.mubr.f32.gmra.mxu0 %v10836
  %v11871 = vpop.f32.mrf.mxu0
  %v11872 = vadd.f32 %v10535, %v11871
  %v11873 = vpop.f32.mrf.mxu0
  %11874 = vmatprep.mubr.f32.mxu0 0.0
  %11875 = vmatmul.mubr.f32.gmra.mxu0 %v10839
  %v11876 = vpop.f32.mrf.mxu0
  %v11877 = vadd.f32 %v10535, %v11876
  %v11878 = vpop.f32.mrf.mxu0
  %11879 = vmatprep.mubr.f32.mxu0 0.0
  %11880 = vmatmul.mubr.f32.gmra.mxu0 %v10842
  %v11881 = vpop.f32.mrf.mxu0
  %v11882 = vadd.f32 %v10535, %v11881
  %v11883 = vpop.f32.mrf.mxu0
  %11884 = vmatprep.mubr.f32.mxu0 0.0
  %11885 = vmatmul.mubr.f32.gmra.mxu0 %v10845
  %v11886 = vpop.f32.mrf.mxu0
  %v11887 = vadd.f32 %v10535, %v11886
  %v11888 = vpop.f32.mrf.mxu0
  %11889 = vmatprep.mubr.f32.mxu0 0.0
  %11890 = vmatmul.mubr.f32.gmra.mxu0 %v10848
  %v11891 = vpop.f32.mrf.mxu0
  %v11892 = vadd.f32 %v10535, %v11891
  %v11893 = vpop.f32.mrf.mxu0
  %11894 = vmatprep.mubr.f32.mxu0 0.0
  %11895 = vmatmul.mubr.f32.gmra.mxu0 %v10851
  %v11896 = vpop.f32.mrf.mxu0
  %v11897 = vadd.f32 %v10535, %v11896
  %v11898 = vpop.f32.mrf.mxu0
  %11899 = vmatprep.mubr.f32.mxu0 0.0
  %11900 = vmatmul.mubr.f32.gmra.mxu0 %v10854
  %v11901 = vpop.f32.mrf.mxu0
  %v11902 = vadd.f32 %v10535, %v11901
  %v11903 = vpop.f32.mrf.mxu0
  %11904 = vmatprep.mubr.f32.mxu0 0.0
  %11905 = vmatmul.mubr.f32.gmra.mxu0 %v10857
  %v11906 = vpop.f32.mrf.mxu0
  %v11907 = vadd.f32 %v10535, %v11906
  %v11908 = vpop.f32.mrf.mxu0
  %11909 = vmatprep.mubr.f32.mxu0 0.0
  %11910 = vmatmul.mubr.f32.gmra.mxu0 %v10860
  %v11911 = vpop.f32.mrf.mxu0
  %v11912 = vadd.f32 %v10535, %v11911
  %v11913 = vpop.f32.mrf.mxu0
  %11914 = vmatprep.mubr.f32.mxu0 0.0
  %11915 = vmatmul.mubr.f32.gmra.mxu0 %v10863
  %v11916 = vpop.f32.mrf.mxu0
  %v11917 = vadd.f32 %v10535, %v11916
  %v11918 = vpop.f32.mrf.mxu0
  %11919 = vmatprep.mubr.f32.mxu0 0.0
  %11920 = vmatmul.mubr.f32.gmra.mxu0 %v10866
  %v11921 = vpop.f32.mrf.mxu0
  %v11922 = vadd.f32 %v10535, %v11921
  %v11923 = vpop.f32.mrf.mxu0
  %11924 = vmatprep.mubr.f32.mxu0 0.0
  %11925 = vmatmul.mubr.f32.gmra.mxu0 %v10869
  %v11926 = vpop.f32.mrf.mxu0
  %v11927 = vadd.f32 %v10535, %v11926
  %v11928 = vpop.f32.mrf.mxu0
  %11929 = vmatprep.mubr.f32.mxu0 0.0
  %11930 = vmatmul.mubr.f32.gmra.mxu0 %v10872
  %v11931 = vpop.f32.mrf.mxu0
  %v11932 = vadd.f32 %v10535, %v11931
  %v11933 = vpop.f32.mrf.mxu0
  %11934 = vmatprep.mubr.f32.mxu0 0.0
  %11935 = vmatmul.mubr.f32.gmra.mxu0 %v10875
  %v11936 = vpop.f32.mrf.mxu0
  %v11937 = vadd.f32 %v10535, %v11936
  %v11938 = vpop.f32.mrf.mxu0
  %11939 = vmatprep.mubr.f32.mxu0 0.0
  %11940 = vmatmul.mubr.f32.gmra.mxu0 %v10878
  %v11941 = vpop.f32.mrf.mxu0
  %v11942 = vadd.f32 %v10535, %v11941
  %v11943 = vpop.f32.mrf.mxu0
  %11944 = vmatprep.mubr.f32.mxu0 0.0
  %11945 = vmatmul.mubr.f32.gmra.mxu0 %v10881
  %v11946 = vpop.f32.mrf.mxu0
  %v11947 = vadd.f32 %v10535, %v11946
  %v11948 = vpop.f32.mrf.mxu0
  %11949 = vmatprep.mubr.f32.mxu0 0.0
  %11950 = vmatmul.mubr.f32.gmra.mxu0 %v10884
  %v11951 = vpop.f32.mrf.mxu0
  %v11952 = vadd.f32 %v10535, %v11951
  %v11953 = vpop.f32.mrf.mxu0
  %11954 = vmatprep.mubr.f32.mxu0 0.0
  %11955 = vmatmul.mubr.f32.gmra.mxu0 %v10887
  %v11956 = vpop.f32.mrf.mxu0
  %v11957 = vadd.f32 %v10535, %v11956
  %v11958 = vpop.f32.mrf.mxu0
  %11959 = vmatprep.mubr.f32.mxu0 0.0
  %11960 = vmatmul.mubr.f32.gmra.mxu0 %v10890
  %v11961 = vpop.f32.mrf.mxu0
  %v11962 = vadd.f32 %v10535, %v11961
  %v11963 = vpop.f32.mrf.mxu0
  %11964 = vmatprep.mubr.f32.mxu0 0.0
  %11965 = vmatmul.mubr.f32.gmra.mxu0 %v10893
  %v11966 = vpop.f32.mrf.mxu0
  %v11967 = vadd.f32 %v10535, %v11966
  %v11968 = vpop.f32.mrf.mxu0
  %11969 = vmatprep.mubr.f32.mxu0 0.0
  %11970 = vmatmul.mubr.f32.gmra.mxu0 %v10896
  %v11971 = vpop.f32.mrf.mxu0
  %v11972 = vadd.f32 %v10535, %v11971
  %v11973 = vpop.f32.mrf.mxu0
  %11974 = vmatprep.mubr.f32.mxu0 0.0
  %11975 = vmatmul.mubr.f32.gmra.mxu0 %v10899
  %v11976 = vpop.f32.mrf.mxu0
  %v11977 = vadd.f32 %v10535, %v11976
  %v11978 = vpop.f32.mrf.mxu0
  %11979 = vmatprep.mubr.f32.mxu0 0.0
  %11980 = vmatmul.mubr.f32.gmra.mxu0 %v10902
  %v11981 = vpop.f32.mrf.mxu0
  %v11982 = vadd.f32 %v10535, %v11981
  %v11983 = vpop.f32.mrf.mxu0
  %11984 = vmatprep.mubr.f32.mxu0 0.0
  %11985 = vmatmul.mubr.f32.gmra.mxu0 %v10905
  %v11986 = vpop.f32.mrf.mxu0
  %v11987 = vadd.f32 %v10535, %v11986
  %v11988 = vpop.f32.mrf.mxu0
  %11989 = vmatprep.mubr.f32.mxu0 0.0
  %11990 = vmatmul.mubr.f32.gmra.mxu0 %v10908
  %v11991 = vpop.f32.mrf.mxu0
  %v11992 = vadd.f32 %v10535, %v11991
  %v11993 = vpop.f32.mrf.mxu0
  %11994 = vmatprep.mubr.f32.mxu0 0.0
  %11995 = vmatmul.mubr.f32.gmra.mxu0 %v10911
  %v11996 = vpop.f32.mrf.mxu0
  %v11997 = vadd.f32 %v10535, %v11996
  %v11998 = vpop.f32.mrf.mxu0
  %11999 = vmatprep.mubr.f32.mxu0 0.0
  %12000 = vmatmul.mubr.f32.gmra.mxu0 %v10914
  %v12001 = vpop.f32.mrf.mxu0
  %v12002 = vadd.f32 %v10535, %v12001
  %v12003 = vpop.f32.mrf.mxu0
  %12004 = vmatprep.mubr.f32.mxu0 0.0
  %12005 = vmatmul.mubr.f32.gmra.mxu0 %v10917
  %v12006 = vpop.f32.mrf.mxu0
  %v12007 = vadd.f32 %v10535, %v12006
  %v12008 = vpop.f32.mrf.mxu0
  %12009 = vmatprep.mubr.f32.mxu0 0.0
  %12010 = vmatmul.mubr.f32.gmra.mxu0 %v10920
  %v12011 = vpop.f32.mrf.mxu0
  %v12012 = vadd.f32 %v10535, %v12011
  %v12013 = vpop.f32.mrf.mxu0
  %12014 = vmatprep.mubr.f32.mxu0 0.0
  %12015 = vmatmul.mubr.f32.gmra.mxu0 %v10923
  %v12016 = vpop.f32.mrf.mxu0
  %v12017 = vadd.f32 %v10535, %v12016
  %v12018 = vpop.f32.mrf.mxu0
  %12019 = vmatprep.mubr.f32.mxu0 0.0
  %12020 = vmatmul.mubr.f32.gmra.mxu0 %v10926
  %v12021 = vpop.f32.mrf.mxu0
  %v12022 = vadd.f32 %v10535, %v12021
  %v12023 = vpop.f32.mrf.mxu0
  %12024 = vmatprep.mubr.f32.mxu0 0.0
  %12025 = vmatmul.mubr.f32.gmra.mxu0 %v10929
  %v12026 = vpop.f32.mrf.mxu0
  %v12027 = vadd.f32 %v10535, %v12026
  %v12028 = vpop.f32.mrf.mxu0
  %12029 = vmatprep.mubr.f32.mxu0 0.0
  %12030 = vmatmul.mubr.f32.gmra.mxu0 %v10932
  %v12031 = vpop.f32.mrf.mxu0
  %v12032 = vadd.f32 %v10535, %v12031
  %v12033 = vpop.f32.mrf.mxu0
  %12034 = vmatprep.mubr.f32.mxu0 0.0
  %12035 = vmatmul.mubr.f32.gmra.mxu0 %v10935
  %v12036 = vpop.f32.mrf.mxu0
  %v12037 = vadd.f32 %v10535, %v12036
  %v12038 = vpop.f32.mrf.mxu0
  %12039 = vmatprep.mubr.f32.mxu0 0.0
  %12040 = vmatmul.mubr.f32.gmra.mxu0 %v10938
  %v12041 = vpop.f32.mrf.mxu0
  %v12042 = vadd.f32 %v10535, %v12041
  %v12043 = vpop.f32.mrf.mxu0
  %12044 = vmatprep.mubr.f32.mxu0 0.0
  %12045 = vmatmul.mubr.f32.gmra.mxu0 %v10941
  %v12046 = vpop.f32.mrf.mxu0
  %v12047 = vadd.f32 %v10535, %v12046
  %v12048 = vpop.f32.mrf.mxu0
  %12049 = vmatprep.mubr.f32.mxu0 0.0
  %12050 = vmatmul.mubr.f32.gmra.mxu0 %v10944
  %v12051 = vpop.f32.mrf.mxu0
  %v12052 = vadd.f32 %v10535, %v12051
  %v12053 = vpop.f32.mrf.mxu0
  %12054 = vmatprep.mubr.f32.mxu0 0.0
  %12055 = vmatmul.mubr.f32.gmra.mxu0 %v10947
  %v12056 = vpop.f32.mrf.mxu0
  %v12057 = vadd.f32 %v10535, %v12056
  %v12058 = vpop.f32.mrf.mxu0
  %12059 = vmatprep.mubr.f32.mxu0 0.0
  %12060 = vmatmul.mubr.f32.gmra.mxu0 %v10950
  %v12061 = vpop.f32.mrf.mxu0
  %v12062 = vadd.f32 %v10535, %v12061
  %v12063 = vpop.f32.mrf.mxu0
  %12064 = vmatprep.mubr.f32.mxu0 0.0
  %12065 = vmatmul.mubr.f32.gmra.mxu0 %v10953
  %v12066 = vpop.f32.mrf.mxu0
  %v12067 = vadd.f32 %v10535, %v12066
  %v12068 = vpop.f32.mrf.mxu0
  %12069 = vmatprep.mubr.f32.mxu0 0.0
  %12070 = vmatmul.mubr.f32.gmra.mxu0 %v10956
  %v12071 = vpop.f32.mrf.mxu0
  %v12072 = vadd.f32 %v10535, %v12071
  %v12073 = vpop.f32.mrf.mxu0
  %12074 = vmatprep.mubr.f32.mxu0 0.0
  %12075 = vmatmul.mubr.f32.gmra.mxu0 %v10959
  %v12076 = vpop.f32.mrf.mxu0
  %v12077 = vadd.f32 %v10535, %v12076
  %v12078 = vpop.f32.mrf.mxu0
  %12079 = vmatprep.mubr.f32.mxu0 0.0
  %12080 = vmatmul.mubr.f32.gmra.mxu0 %v10962
  %v12081 = vpop.f32.mrf.mxu0
  %v12082 = vadd.f32 %v10535, %v12081
  %v12083 = vpop.f32.mrf.mxu0
  %12084 = vmatprep.mubr.f32.mxu0 0.0
  %12085 = vmatmul.mubr.f32.gmra.mxu0 %v10965
  %v12086 = vpop.f32.mrf.mxu0
  %v12087 = vadd.f32 %v10535, %v12086
  %v12088 = vpop.f32.mrf.mxu0
  %12089 = vmatprep.mubr.f32.mxu0 0.0
  %12090 = vmatmul.mubr.f32.gmra.mxu0 %v10968
  %v12091 = vpop.f32.mrf.mxu0
  %v12092 = vadd.f32 %v10535, %v12091
  %v12093 = vpop.f32.mrf.mxu0
  %12094 = vmatprep.mubr.f32.mxu0 0.0
  %12095 = vmatmul.mubr.f32.gmra.mxu0 %v10971
  %v12096 = vpop.f32.mrf.mxu0
  %v12097 = vadd.f32 %v10535, %v12096
  %v12098 = vpop.f32.mrf.mxu0
  %12099 = vmatprep.mubr.f32.mxu0 0.0
  %12100 = vmatmul.mubr.f32.gmra.mxu0 %v10974
  %v12101 = vpop.f32.mrf.mxu0
  %v12102 = vadd.f32 %v10535, %v12101
  %v12103 = vpop.f32.mrf.mxu0
  %12104 = vmatprep.mubr.f32.mxu0 0.0
  %12105 = vmatmul.mubr.f32.gmra.mxu0 %v10977
  %v12106 = vpop.f32.mrf.mxu0
  %v12107 = vadd.f32 %v10535, %v12106
  %v12108 = vpop.f32.mrf.mxu0
  %12109 = vmatprep.mubr.f32.mxu0 0.0
  %12110 = vmatmul.mubr.f32.gmra.mxu0 %v10980
  %v12111 = vpop.f32.mrf.mxu0
  %v12112 = vadd.f32 %v10535, %v12111
  %v12113 = vpop.f32.mrf.mxu0
  %12114 = vmatprep.mubr.f32.mxu0 0.0
  %12115 = vmatmul.mubr.f32.gmra.mxu0 %v10983
  %v12116 = vpop.f32.mrf.mxu0
  %v12117 = vadd.f32 %v10535, %v12116
  %v12118 = vpop.f32.mrf.mxu0
  %12119 = vmatprep.mubr.f32.mxu0 0.0
  %12120 = vmatmul.mubr.f32.gmra.mxu0 %v10986
  %v12121 = vpop.f32.mrf.mxu0
  %v12122 = vadd.f32 %v10535, %v12121
  %v12123 = vpop.f32.mrf.mxu0
  %12124 = vmatprep.mubr.f32.mxu0 0.0
  %12125 = vmatmul.mubr.f32.gmra.mxu0 %v10989
  %v12126 = vpop.f32.mrf.mxu0
  %v12127 = vadd.f32 %v10535, %v12126
  %v12128 = vpop.f32.mrf.mxu0
  %12129 = vmatprep.mubr.f32.mxu0 0.0
  %12130 = vmatmul.mubr.f32.gmra.mxu0 %v10992
  %v12131 = vpop.f32.mrf.mxu0
  %v12132 = vadd.f32 %v10535, %v12131
  %v12133 = vpop.f32.mrf.mxu0
  %12134 = vmatprep.mubr.f32.mxu0 0.0
  %12135 = vmatmul.mubr.f32.gmra.mxu0 %v10995
  %v12136 = vpop.f32.mrf.mxu0
  %v12137 = vadd.f32 %v10535, %v12136
  %v12138 = vpop.f32.mrf.mxu0
  %12139 = vmatprep.mubr.f32.mxu0 0.0
  %12140 = vmatmul.mubr.f32.gmra.mxu0 %v10998
  %v12141 = vpop.f32.mrf.mxu0
  %v12142 = vadd.f32 %v10535, %v12141
  %v12143 = vpop.f32.mrf.mxu0
  %12144 = vmatprep.mubr.f32.mxu0 0.0
  %12145 = vmatmul.mubr.f32.gmra.mxu0 %v11001
  %v12146 = vpop.f32.mrf.mxu0
  %v12147 = vadd.f32 %v10535, %v12146
  %v12148 = vpop.f32.mrf.mxu0
  %12149 = vmatprep.mubr.f32.mxu0 0.0
  %12150 = vmatmul.mubr.f32.gmra.mxu0 %v11004
  %v12151 = vpop.f32.mrf.mxu0
  %v12152 = vadd.f32 %v10535, %v12151
  %v12153 = vpop.f32.mrf.mxu0
  %12154 = vmatprep.mubr.f32.mxu0 0.0
  %12155 = vmatmul.mubr.f32.gmra.mxu0 %v11007
  %v12156 = vpop.f32.mrf.mxu0
  %v12157 = vadd.f32 %v10535, %v12156
  %v12158 = vpop.f32.mrf.mxu0
  %12159 = vmatprep.mubr.f32.mxu0 0.0
  %12160 = vmatmul.mubr.f32.gmra.mxu0 %v11010
  %v12161 = vpop.f32.mrf.mxu0
  %v12162 = vadd.f32 %v10535, %v12161
  %v12163 = vpop.f32.mrf.mxu0
  %12164 = vmatprep.mubr.f32.mxu0 0.0
  %12165 = vmatmul.mubr.f32.gmra.mxu0 %v11013
  %v12166 = vpop.f32.mrf.mxu0
  %v12167 = vadd.f32 %v10535, %v12166
  %v12168 = vpop.f32.mrf.mxu0
  %12169 = vmatprep.mubr.f32.mxu0 0.0
  %12170 = vmatmul.mubr.f32.gmra.mxu0 %v11016
  %v12171 = vpop.f32.mrf.mxu0
  %v12172 = vadd.f32 %v10535, %v12171
  %v12173 = vpop.f32.mrf.mxu0
  %12174 = vmatprep.mubr.f32.mxu0 0.0
  %12175 = vmatmul.mubr.f32.gmra.mxu0 %v11019
  %v12176 = vpop.f32.mrf.mxu0
  %v12177 = vadd.f32 %v10535, %v12176
  %v12178 = vpop.f32.mrf.mxu0
  %12179 = vmatprep.mubr.f32.mxu0 0.0
  %12180 = vmatmul.mubr.f32.gmra.mxu0 %v11022
  %v12181 = vpop.f32.mrf.mxu0
  %v12182 = vadd.f32 %v10535, %v12181
  %v12183 = vpop.f32.mrf.mxu0
  %12184 = vmatprep.mubr.f32.mxu0 0.0
  %12185 = vmatmul.mubr.f32.gmra.mxu0 %v11025
  %v12186 = vpop.f32.mrf.mxu0
  %v12187 = vadd.f32 %v10535, %v12186
  %v12188 = vpop.f32.mrf.mxu0
  %12189 = vmatprep.mubr.f32.mxu0 0.0
  %12190 = vmatmul.mubr.f32.gmra.mxu0 %v11028
  %v12191 = vpop.f32.mrf.mxu0
  %v12192 = vadd.f32 %v10535, %v12191
  %v12193 = vpop.f32.mrf.mxu0
  %12194 = vmatprep.mubr.f32.mxu0 0.0
  %12195 = vmatmul.mubr.f32.gmra.mxu0 %v11031
  %v12196 = vpop.f32.mrf.mxu0
  %v12197 = vadd.f32 %v10535, %v12196
  %v12198 = vpop.f32.mrf.mxu0
  %12199 = vmatprep.mubr.f32.mxu0 0.0
  %12200 = vmatmul.mubr.f32.gmra.mxu0 %v11034
  %v12201 = vpop.f32.mrf.mxu0
  %v12202 = vadd.f32 %v10535, %v12201
  %v12203 = vpop.f32.mrf.mxu0
  %12204 = vmatprep.mubr.f32.mxu0 0.0
  %12205 = vmatmul.mubr.f32.gmra.mxu0 %v11037
  %v12206 = vpop.f32.mrf.mxu0
  %v12207 = vadd.f32 %v10535, %v12206
  %v12208 = vpop.f32.mrf.mxu0
  %12209 = vmatprep.mubr.f32.mxu0 0.0
  %12210 = vmatmul.mubr.f32.gmra.mxu0 %v11040
  %v12211 = vpop.f32.mrf.mxu0
  %v12212 = vadd.f32 %v10535, %v12211
  %v12213 = vpop.f32.mrf.mxu0
  %12214 = vmatprep.mubr.f32.mxu0 0.0
  %12215 = vmatmul.mubr.f32.gmra.mxu0 %v11043
  %v12216 = vpop.f32.mrf.mxu0
  %v12217 = vadd.f32 %v10535, %v12216
  %v12218 = vpop.f32.mrf.mxu0
  %12219 = vmatprep.mubr.f32.mxu0 0.0
  %12220 = vmatmul.mubr.f32.gmra.mxu0 %v11046
  %v12221 = vpop.f32.mrf.mxu0
  %v12222 = vadd.f32 %v10535, %v12221
  %v12223 = vpop.f32.mrf.mxu0
  %12224 = vmatprep.mubr.f32.mxu0 0.0
  %12225 = vmatmul.mubr.f32.gmra.mxu0 %v11049
  %v12226 = vpop.f32.mrf.mxu0
  %v12227 = vadd.f32 %v10535, %v12226
  %v12228 = vpop.f32.mrf.mxu0
  %12229 = vmatprep.mubr.f32.mxu0 0.0
  %12230 = vmatmul.mubr.f32.gmra.mxu0 %v11052
  %v12231 = vpop.f32.mrf.mxu0
  %v12232 = vadd.f32 %v10535, %v12231
  %v12233 = vpop.f32.mrf.mxu0
  %12234 = vmatprep.mubr.f32.mxu0 0.0
  %12235 = vmatmul.mubr.f32.gmra.mxu0 %v11055
  %v12236 = vpop.f32.mrf.mxu0
  %v12237 = vadd.f32 %v10535, %v12236
  %v12238 = vpop.f32.mrf.mxu0
  %12239 = vmatprep.mubr.f32.mxu0 0.0
  %12240 = vmatmul.mubr.f32.gmra.mxu0 %v11058
  %v12241 = vpop.f32.mrf.mxu0
  %v12242 = vadd.f32 %v10535, %v12241
  %v12243 = vpop.f32.mrf.mxu0
  %12244 = vmatprep.mubr.f32.mxu0 0.0
  %12245 = vmatmul.mubr.f32.gmra.mxu0 %v11061
  %v12246 = vpop.f32.mrf.mxu0
  %v12247 = vadd.f32 %v10535, %v12246
  %v12248 = vpop.f32.mrf.mxu0
  %12249 = vmatprep.mubr.f32.mxu0 0.0
  %12250 = vmatmul.mubr.f32.gmra.mxu0 %v11064
  %v12251 = vpop.f32.mrf.mxu0
  %v12252 = vadd.f32 %v10535, %v12251
  %v12253 = vpop.f32.mrf.mxu0
  %12254 = vmatprep.mubr.f32.mxu0 0.0
  %12255 = vmatmul.mubr.f32.gmra.mxu0 %v11067
  %v12256 = vpop.f32.mrf.mxu0
  %v12257 = vadd.f32 %v10535, %v12256
  %v12258 = vpop.f32.mrf.mxu0
  %12259 = vmatprep.mubr.f32.mxu0 0.0
  %12260 = vmatmul.mubr.f32.gmra.mxu0 %v11070
  %v12261 = vpop.f32.mrf.mxu0
  %v12262 = vadd.f32 %v10535, %v12261
  %v12263 = vpop.f32.mrf.mxu0
  %12264 = vmatprep.mubr.f32.mxu0 0.0
  %12265 = vmatmul.mubr.f32.gmra.mxu0 %v11073
  %v12266 = vpop.f32.mrf.mxu0
  %v12267 = vadd.f32 %v10535, %v12266
  %v12268 = vpop.f32.mrf.mxu0
  %12269 = vmatprep.mubr.f32.mxu0 0.0
  %12270 = vmatmul.mubr.f32.gmra.mxu0 %v11076
  %v12271 = vpop.f32.mrf.mxu0
  %v12272 = vadd.f32 %v10535, %v12271
  %v12273 = vpop.f32.mrf.mxu0
  %12274 = vmatprep.mubr.f32.mxu0 0.0
  %12275 = vmatmul.mubr.f32.gmra.mxu0 %v11079
  %v12276 = vpop.f32.mrf.mxu0
  %v12277 = vadd.f32 %v10535, %v12276
  %v12278 = vpop.f32.mrf.mxu0
  %12279 = vmatprep.mubr.f32.mxu0 0.0
  %12280 = vmatmul.mubr.f32.gmra.mxu0 %v11082
  %v12281 = vpop.f32.mrf.mxu0
  %v12282 = vadd.f32 %v10535, %v12281
  %v12283 = vpop.f32.mrf.mxu0
  %12284 = vmatprep.mubr.f32.mxu0 0.0
  %12285 = vmatmul.mubr.f32.gmra.mxu0 %v11085
  %v12286 = vpop.f32.mrf.mxu0
  %v12287 = vadd.f32 %v10535, %v12286
  %v12288 = vpop.f32.mrf.mxu0
  %12289 = vmatprep.mubr.f32.mxu0 0.0
  %12290 = vmatmul.mubr.f32.gmra.mxu0 %v11088
  %v12291 = vpop.f32.mrf.mxu0
  %v12292 = vadd.f32 %v10535, %v12291
  %v12293 = vpop.f32.mrf.mxu0
  %12294 = vmatprep.mubr.f32.mxu0 0.0
  %12295 = vmatmul.mubr.f32.gmra.mxu0 %v11091
  %v12296 = vpop.f32.mrf.mxu0
  %v12297 = vadd.f32 %v10535, %v12296
  %v12298 = vpop.f32.mrf.mxu0
  %12299 = vmatprep.mubr.f32.mxu0 0.0
  %12300 = vmatmul.mubr.f32.gmra.mxu0 %v11094
  %v12301 = vpop.f32.mrf.mxu0
  %v12302 = vadd.f32 %v10535, %v12301
  %v12303 = vpop.f32.mrf.mxu0
  %12304 = vmatprep.mubr.f32.mxu0 0.0
  %12305 = vmatmul.mubr.f32.gmra.mxu0 %v11097
  %v12306 = vpop.f32.mrf.mxu0
  %v12307 = vadd.f32 %v10535, %v12306
  %v12308 = vpop.f32.mrf.mxu0
  %12309 = vmatprep.mubr.f32.mxu0 0.0
  %12310 = vmatmul.mubr.f32.gmra.mxu0 %v11100
  %v12311 = vpop.f32.mrf.mxu0
  %v12312 = vadd.f32 %v10535, %v12311
  %v12313 = vpop.f32.mrf.mxu0
  %12314 = vmatprep.mubr.f32.mxu0 0.0
  %12315 = vmatmul.mubr.f32.gmra.mxu0 %v11103
  %v12316 = vpop.f32.mrf.mxu0
  %v12317 = vadd.f32 %v10535, %v12316
  %v12318 = vpop.f32.mrf.mxu0
  %12319 = vmatprep.mubr.f32.mxu0 0.0
  %12320 = vmatmul.mubr.f32.gmra.mxu0 %v11106
  %v12321 = vpop.f32.mrf.mxu0
  %v12322 = vadd.f32 %v10535, %v12321
  %v12323 = vpop.f32.mrf.mxu0
  %12324 = vmatprep.mubr.f32.mxu0 0.0
  %12325 = vmatmul.mubr.f32.gmra.mxu0 %v11109
  %v12326 = vpop.f32.mrf.mxu0
  %v12327 = vadd.f32 %v10535, %v12326
  %v12328 = vpop.f32.mrf.mxu0
  %12329 = vmatprep.mubr.f32.mxu0 0.0
  %12330 = vmatmul.mubr.f32.gmra.mxu0 %v11112
  %v12331 = vpop.f32.mrf.mxu0
  %v12332 = vadd.f32 %v10535, %v12331
  %v12333 = vpop.f32.mrf.mxu0
  %12334 = vmatprep.mubr.f32.mxu0 0.0
  %12335 = vmatmul.mubr.f32.gmra.mxu0 %v11115
  %v12336 = vpop.f32.mrf.mxu0
  %v12337 = vadd.f32 %v10535, %v12336
  %v12338 = vpop.f32.mrf.mxu0
  %12339 = vmatprep.mubr.f32.mxu0 0.0
  %12340 = vmatmul.mubr.f32.gmra.mxu0 %v11118
  %v12341 = vpop.f32.mrf.mxu0
  %v12342 = vadd.f32 %v10535, %v12341
  %v12343 = vpop.f32.mrf.mxu0
  %12344 = vmatprep.mubr.f32.mxu0 0.0
  %12345 = vmatmul.mubr.f32.gmra.mxu0 %v11121
  %v12346 = vpop.f32.mrf.mxu0
  %v12347 = vadd.f32 %v10535, %v12346
  %v12348 = vpop.f32.mrf.mxu0
  %12349 = vmatprep.mubr.f32.mxu0 0.0
  %12350 = vmatmul.mubr.f32.gmra.mxu0 %v11124
  %v12351 = vpop.f32.mrf.mxu0
  %v12352 = vadd.f32 %v10535, %v12351
  %v12353 = vpop.f32.mrf.mxu0
  %12354 = vmatprep.mubr.f32.mxu0 0.0
  %12355 = vmatmul.mubr.f32.gmra.mxu0 %v11127
  %v12356 = vpop.f32.mrf.mxu0
  %v12357 = vadd.f32 %v10535, %v12356
  %v12358 = vpop.f32.mrf.mxu0
  %12359 = vmatprep.mubr.f32.mxu0 0.0
  %12360 = vmatmul.mubr.f32.gmra.mxu0 %v11130
  %v12361 = vpop.f32.mrf.mxu0
  %v12362 = vadd.f32 %v10535, %v12361
  %v12363 = vpop.f32.mrf.mxu0
  %12364 = vmatprep.mubr.f32.mxu0 0.0
  %12365 = vmatmul.mubr.f32.gmra.mxu0 %v11133
  %v12366 = vpop.f32.mrf.mxu0
  %v12367 = vadd.f32 %v10535, %v12366
  %v12368 = vpop.f32.mrf.mxu0
  %12369 = vmatprep.mubr.f32.mxu0 0.0
  %12370 = vmatmul.mubr.f32.gmra.mxu0 %v11136
  %v12371 = vpop.f32.mrf.mxu0
  %v12372 = vadd.f32 %v10535, %v12371
  %v12373 = vpop.f32.mrf.mxu0
  %12374 = vmatprep.mubr.f32.mxu0 0.0
  %12375 = vmatmul.mubr.f32.gmra.mxu0 %v11139
  %v12376 = vpop.f32.mrf.mxu0
  %v12377 = vadd.f32 %v10535, %v12376
  %v12378 = vpop.f32.mrf.mxu0
  %12379 = vmatprep.mubr.f32.mxu0 0.0
  %12380 = vmatmul.mubr.f32.gmra.mxu0 %v11142
  %v12381 = vpop.f32.mrf.mxu0
  %v12382 = vadd.f32 %v10535, %v12381
  %v12383 = vpop.f32.mrf.mxu0
  %12384 = vmatprep.mubr.f32.mxu0 0.0
  %12385 = vmatmul.mubr.f32.gmra.mxu0 %v11145
  %v12386 = vpop.f32.mrf.mxu0
  %v12387 = vadd.f32 %v10535, %v12386
  %v12388 = vpop.f32.mrf.mxu0
  %12389 = vmatprep.mubr.f32.mxu0 0.0
  %12390 = vmatmul.mubr.f32.gmra.mxu0 %v11148
  %v12391 = vpop.f32.mrf.mxu0
  %v12392 = vadd.f32 %v10535, %v12391
  %v12393 = vpop.f32.mrf.mxu0
  %12394 = vmatprep.mubr.f32.mxu0 0.0
  %12395 = vmatmul.mubr.f32.gmra.mxu0 %v11151
  %v12396 = vpop.f32.mrf.mxu0
  %v12397 = vadd.f32 %v10535, %v12396
  %v12398 = vpop.f32.mrf.mxu0
  %12399 = vmatprep.mubr.f32.mxu0 0.0
  %12400 = vmatmul.mubr.f32.gmra.mxu0 %v11154
  %v12401 = vpop.f32.mrf.mxu0
  %v12402 = vadd.f32 %v10535, %v12401
  %v12403 = vpop.f32.mrf.mxu0
  %12404 = vmatprep.mubr.f32.mxu0 0.0
  %12405 = vmatmul.mubr.f32.gmra.mxu0 %v11157
  %v12406 = vpop.f32.mrf.mxu0
  %v12407 = vadd.f32 %v10535, %v12406
  %v12408 = vpop.f32.mrf.mxu0
  %12409 = vmatprep.mubr.f32.mxu0 0.0
  %12410 = vmatmul.mubr.f32.gmra.mxu0 %v11160
  %v12411 = vpop.f32.mrf.mxu0
  %v12412 = vadd.f32 %v10535, %v12411
  %v12413 = vpop.f32.mrf.mxu0
  %12414 = vmatprep.mubr.f32.mxu0 0.0
  %12415 = vmatmul.mubr.f32.gmra.mxu0 %v11163
  %v12416 = vpop.f32.mrf.mxu0
  %v12417 = vadd.f32 %v10535, %v12416
  %v12418 = vpop.f32.mrf.mxu0
  %12419 = vmatprep.mubr.f32.mxu0 0.0
  %12420 = vmatmul.mubr.f32.gmra.mxu0 %v11166
  %v12421 = vpop.f32.mrf.mxu0
  %v12422 = vadd.f32 %v10535, %v12421
  %v12423 = vpop.f32.mrf.mxu0
  %12424 = vmatprep.mubr.f32.mxu0 0.0
  %12425 = vmatmul.mubr.f32.gmra.mxu0 %v11169
  %v12426 = vpop.f32.mrf.mxu0
  %v12427 = vadd.f32 %v10535, %v12426
  %v12428 = vpop.f32.mrf.mxu0
  %12429 = vmatprep.mubr.f32.mxu0 0.0
  %12430 = vmatmul.mubr.f32.gmra.mxu0 %v11172
  %v12431 = vpop.f32.mrf.mxu0
  %v12432 = vadd.f32 %v10535, %v12431
  %v12433 = vpop.f32.mrf.mxu0
  %12434 = vmatprep.mubr.f32.mxu0 0.0
  %12435 = vmatmul.mubr.f32.gmra.mxu0 %v11175
  %v12436 = vpop.f32.mrf.mxu0
  %v12437 = vadd.f32 %v10535, %v12436
  %v12438 = vpop.f32.mrf.mxu0
  %12439 = vmatprep.mubr.f32.mxu0 0.0
  %12440 = vmatmul.mubr.f32.gmra.mxu0 %v11178
  %v12441 = vpop.f32.mrf.mxu0
  %v12442 = vadd.f32 %v10535, %v12441
  %v12443 = vpop.f32.mrf.mxu0
  %12444 = vmatprep.mubr.f32.mxu0 0.0
  %12445 = vmatmul.mubr.f32.gmra.mxu0 %v11181
  %v12446 = vpop.f32.mrf.mxu0
  %v12447 = vadd.f32 %v10535, %v12446
  %v12448 = vpop.f32.mrf.mxu0
  %12449 = vmatprep.mubr.f32.mxu0 0.0
  %12450 = vmatmul.mubr.f32.gmra.mxu0 %v11184
  %v12451 = vpop.f32.mrf.mxu0
  %v12452 = vadd.f32 %v10535, %v12451
  %v12453 = vpop.f32.mrf.mxu0
  %12454 = vmatprep.mubr.f32.mxu0 0.0
  %12455 = vmatmul.mubr.f32.gmra.mxu0 %v11187
  %v12456 = vpop.f32.mrf.mxu0
  %v12457 = vadd.f32 %v10535, %v12456
  %v12458 = vpop.f32.mrf.mxu0
  %12459 = vmatprep.mubr.f32.mxu0 0.0
  %12460 = vmatmul.mubr.f32.gmra.mxu0 %v11190
  %v12461 = vpop.f32.mrf.mxu0
  %v12462 = vadd.f32 %v10535, %v12461
  %v12463 = vpop.f32.mrf.mxu0
  %12464 = vmatprep.mubr.f32.mxu0 0.0
  %12465 = vmatmul.mubr.f32.gmra.mxu0 %v11193
  %v12466 = vpop.f32.mrf.mxu0
  %v12467 = vadd.f32 %v10535, %v12466
  %v12468 = vpop.f32.mrf.mxu0
  %12469 = vmatprep.mubr.f32.mxu0 0.0
  %12470 = vmatmul.mubr.f32.gmra.mxu0 %v11196
  %v12471 = vpop.f32.mrf.mxu0
  %v12472 = vadd.f32 %v10535, %v12471
  %v12473 = vpop.f32.mrf.mxu0
  %12474 = vmatprep.mubr.f32.mxu0 0.0
  %12475 = vmatmul.mubr.f32.gmra.mxu0 %v11199
  %v12476 = vpop.f32.mrf.mxu0
  %v12477 = vadd.f32 %v10535, %v12476
  %v12478 = vpop.f32.mrf.mxu0
  %12479 = vmatprep.mubr.f32.mxu0 0.0
  %12480 = vmatmul.mubr.f32.gmra.mxu0 %v11202
  %v12481 = vpop.f32.mrf.mxu0
  %v12482 = vadd.f32 %v10535, %v12481
  %v12483 = vpop.f32.mrf.mxu0
  %12484 = vmatprep.mubr.f32.mxu0 0.0
  %12485 = vmatmul.mubr.f32.gmra.mxu0 %v11205
  %v12486 = vpop.f32.mrf.mxu0
  %v12487 = vadd.f32 %v10535, %v12486
  %v12488 = vpop.f32.mrf.mxu0
  %12489 = vmatprep.mubr.f32.mxu0 0.0
  %12490 = vmatmul.mubr.f32.gmra.mxu0 %v11208
  %v12491 = vpop.f32.mrf.mxu0
  %v12492 = vadd.f32 %v10535, %v12491
  %v12493 = vpop.f32.mrf.mxu0
  %12494 = vmatprep.mubr.f32.mxu0 0.0
  %12495 = vmatmul.mubr.f32.gmra.mxu0 %v11211
  %v12496 = vpop.f32.mrf.mxu0
  %v12497 = vadd.f32 %v10535, %v12496
  %v12498 = vpop.f32.mrf.mxu0
  %12499 = vmatprep.mubr.f32.mxu0 0.0
  %12500 = vmatmul.mubr.f32.gmra.mxu0 %v11214
  %v12501 = vpop.f32.mrf.mxu0
  %v12502 = vadd.f32 %v10535, %v12501
  %v12503 = vpop.f32.mrf.mxu0
  %12504 = vmatprep.mubr.f32.mxu0 0.0
  %12505 = vmatmul.mubr.f32.gmra.mxu0 %v11217
  %v12506 = vpop.f32.mrf.mxu0
  %v12507 = vadd.f32 %v10535, %v12506
  %v12508 = vpop.f32.mrf.mxu0
  %12509 = vmatprep.mubr.f32.mxu0 0.0
  %12510 = vmatmul.mubr.f32.gmra.mxu0 %v11220
  %v12511 = vpop.f32.mrf.mxu0
  %v12512 = vadd.f32 %v10535, %v12511
  %v12513 = vpop.f32.mrf.mxu0
  %12514 = vmatprep.mubr.f32.mxu0 0.0
  %12515 = vmatmul.mubr.f32.gmra.mxu0 %v11223
  %v12516 = vpop.f32.mrf.mxu0
  %v12517 = vadd.f32 %v10535, %v12516
  %v12518 = vpop.f32.mrf.mxu0
  %12519 = vmatprep.mubr.f32.mxu0 0.0
  %12520 = vmatmul.mubr.f32.gmra.mxu0 %v11226
  %v12521 = vpop.f32.mrf.mxu0
  %v12522 = vadd.f32 %v10535, %v12521
  %v12523 = vpop.f32.mrf.mxu0
  %12524 = vmatprep.mubr.f32.mxu0 0.0
  %12525 = vmatmul.mubr.f32.gmra.mxu0 %v11229
  %v12526 = vpop.f32.mrf.mxu0
  %v12527 = vadd.f32 %v10535, %v12526
  %v12528 = vpop.f32.mrf.mxu0
  %12529 = vmatprep.mubr.f32.mxu0 0.0
  %12530 = vmatmul.mubr.f32.gmra.mxu0 %v11232
  %v12531 = vpop.f32.mrf.mxu0
  %v12532 = vadd.f32 %v10535, %v12531
  %v12533 = vpop.f32.mrf.mxu0
  %12534 = vmatprep.mubr.f32.mxu0 0.0
  %12535 = vmatmul.mubr.f32.gmra.mxu0 %v11235
  %v12536 = vpop.f32.mrf.mxu0
  %v12537 = vadd.f32 %v10535, %v12536
  %v12538 = vpop.f32.mrf.mxu0
  %12539 = vmatprep.mubr.f32.mxu0 0.0
  %12540 = vmatmul.mubr.f32.gmra.mxu0 %v11238
  %v12541 = vpop.f32.mrf.mxu0
  %v12542 = vadd.f32 %v10535, %v12541
  %v12543 = vpop.f32.mrf.mxu0
  %12544 = vmatprep.mubr.f32.mxu0 0.0
  %12545 = vmatmul.mubr.f32.gmra.mxu0 %v11241
  %v12546 = vpop.f32.mrf.mxu0
  %v12547 = vadd.f32 %v10535, %v12546
  %v12548 = vpop.f32.mrf.mxu0
  %12549 = vmatprep.mubr.f32.mxu0 0.0
  %12550 = vmatmul.mubr.f32.gmra.mxu0 %v11244
  %v12551 = vpop.f32.mrf.mxu0
  %v12552 = vadd.f32 %v10535, %v12551
  %v12553 = vpop.f32.mrf.mxu0
  %12554 = vmatprep.mubr.f32.mxu0 0.0
  %12555 = vmatmul.mubr.f32.gmra.mxu0 %v11247
  %v12556 = vpop.f32.mrf.mxu0
  %v12557 = vadd.f32 %v10535, %v12556
  %v12558 = vpop.f32.mrf.mxu0
  %12559 = vmatprep.mubr.f32.mxu0 0.0
  %12560 = vmatmul.mubr.f32.gmra.mxu0 %v11250
  %v12561 = vpop.f32.mrf.mxu0
  %v12562 = vadd.f32 %v10535, %v12561
  %v12563 = vpop.f32.mrf.mxu0
  %12564 = vmatprep.mubr.f32.mxu0 0.0
  %12565 = vmatmul.mubr.f32.gmra.mxu0 %v11253
  %v12566 = vpop.f32.mrf.mxu0
  %v12567 = vadd.f32 %v10535, %v12566
  %v12568 = vpop.f32.mrf.mxu0
  %12569 = vmatprep.mubr.f32.mxu0 0.0
  %12570 = vmatmul.mubr.f32.gmra.mxu0 %v11256
  %v12571 = vpop.f32.mrf.mxu0
  %v12572 = vadd.f32 %v10535, %v12571
  %v12573 = vpop.f32.mrf.mxu0
  %12574 = vmatprep.mubr.f32.mxu0 0.0
  %12575 = vmatmul.mubr.f32.gmra.mxu0 %v11259
  %v12576 = vpop.f32.mrf.mxu0
  %v12577 = vadd.f32 %v10535, %v12576
  %v12578 = vpop.f32.mrf.mxu0
  %12579 = vmatprep.mubr.f32.mxu0 0.0
  %12580 = vmatmul.mubr.f32.gmra.mxu0 %v11262
  %v12581 = vpop.f32.mrf.mxu0
  %v12582 = vadd.f32 %v10535, %v12581
  %v12583 = vpop.f32.mrf.mxu0
  %12584 = vmatprep.mubr.f32.mxu0 0.0
  %12585 = vmatmul.mubr.f32.gmra.mxu0 %v11265
  %v12586 = vpop.f32.mrf.mxu0
  %v12587 = vadd.f32 %v10535, %v12586
  %v12588 = vpop.f32.mrf.mxu0
  %12589 = vmatprep.mubr.f32.mxu0 0.0
  %12590 = vmatmul.mubr.f32.gmra.mxu0 %v11268
  %v12591 = vpop.f32.mrf.mxu0
  %v12592 = vadd.f32 %v10535, %v12591
  %v12593 = vpop.f32.mrf.mxu0
  %12594 = vmatprep.mubr.f32.mxu0 0.0
  %12595 = vmatmul.mubr.f32.gmra.mxu0 %v11271
  %v12596 = vpop.f32.mrf.mxu0
  %v12597 = vadd.f32 %v10535, %v12596
  %v12598 = vpop.f32.mrf.mxu0
  %12599 = vmatprep.mubr.f32.mxu0 0.0
  %12600 = vmatmul.mubr.f32.gmra.mxu0 %v11274
  %v12601 = vpop.f32.mrf.mxu0
  %v12602 = vadd.f32 %v10535, %v12601
  %v12603 = vpop.f32.mrf.mxu0
  %12604 = vmatprep.mubr.f32.mxu0 0.0
  %12605 = vmatmul.mubr.f32.gmra.mxu0 %v11277
  %v12606 = vpop.f32.mrf.mxu0
  %v12607 = vadd.f32 %v10535, %v12606
  %v12608 = vpop.f32.mrf.mxu0
  %12609 = vmatprep.mubr.f32.mxu0 0.0
  %12610 = vmatmul.mubr.f32.gmra.mxu0 %v11280
  %v12611 = vpop.f32.mrf.mxu0
  %v12612 = vadd.f32 %v10535, %v12611
  %v12613 = vpop.f32.mrf.mxu0
  %12614 = vmatprep.mubr.f32.mxu0 0.0
  %12615 = vmatmul.mubr.f32.gmra.mxu0 %v11283
  %v12616 = vpop.f32.mrf.mxu0
  %v12617 = vadd.f32 %v10535, %v12616
  %v12618 = vpop.f32.mrf.mxu0
  %12619 = vmatprep.mubr.f32.mxu0 0.0
  %12620 = vmatmul.mubr.f32.gmra.mxu0 %v11286
  %v12621 = vpop.f32.mrf.mxu0
  %v12622 = vadd.f32 %v10535, %v12621
  %v12623 = vpop.f32.mrf.mxu0
  %12624 = vmatprep.mubr.f32.mxu0 0.0
  %12625 = vmatmul.mubr.f32.gmra.mxu0 %v11289
  %v12626 = vpop.f32.mrf.mxu0
  %v12627 = vadd.f32 %v10535, %v12626
  %v12628 = vpop.f32.mrf.mxu0
  %12629 = vmatprep.mubr.f32.mxu0 0.0
  %12630 = vmatmul.mubr.f32.gmra.mxu0 %v11292
  %v12631 = vpop.f32.mrf.mxu0
  %v12632 = vadd.f32 %v10535, %v12631
  %v12633 = vpop.f32.mrf.mxu0
  %12634 = vmatprep.mubr.f32.mxu0 0.0
  %12635 = vmatmul.mubr.f32.gmra.mxu0 %v11295
  %v12636 = vpop.f32.mrf.mxu0
  %v12637 = vadd.f32 %v10535, %v12636
  %v12638 = vpop.f32.mrf.mxu0
  %12639 = vmatprep.mubr.f32.mxu0 0.0
  %12640 = vmatmul.mubr.f32.gmra.mxu0 %v11298
  %v12641 = vpop.f32.mrf.mxu0
  %v12642 = vadd.f32 %v10535, %v12641
  %v12643 = vpop.f32.mrf.mxu0
  %12644 = vmatprep.mubr.f32.mxu0 0.0
  %12645 = vmatmul.mubr.f32.gmra.mxu0 %v11301
  %v12646 = vpop.f32.mrf.mxu0
  %v12647 = vadd.f32 %v10535, %v12646
  %v12648 = vpop.f32.mrf.mxu0
  %12649 = vmatprep.mubr.f32.mxu0 0.0
  %12650 = vmatmul.mubr.f32.gmra.mxu0 %v11304
  %v12651 = vpop.f32.mrf.mxu0
  %v12652 = vadd.f32 %v10535, %v12651
  %v12653 = vpop.f32.mrf.mxu0
  %12654 = vdwg.mxu0
  %v12655 = vmax.f32 %v11377, 0.0
  %v12656 = vmax.f32 %v11382, 0.0
  %v12657 = vmax.f32 %v11387, 0.0
  %v12658 = vmax.f32 %v11392, 0.0
  %v12659 = vmax.f32 %v11397, 0.0
  %v12660 = vmax.f32 %v11402, 0.0
  %v12661 = vmax.f32 %v11407, 0.0
  %v12662 = vmax.f32 %v11412, 0.0
  %v12663 = vmax.f32 %v11417, 0.0
  %v12664 = vmax.f32 %v11422, 0.0
  %v12665 = vmax.f32 %v11427, 0.0
  %v12666 = vmax.f32 %v11432, 0.0
  %v12667 = vmax.f32 %v11437, 0.0
  %v12668 = vmax.f32 %v11442, 0.0
  %v12669 = vmax.f32 %v11447, 0.0
  %v12670 = vmax.f32 %v11452, 0.0
  %v12671 = vmax.f32 %v11457, 0.0
  %v12672 = vmax.f32 %v11462, 0.0
  %v12673 = vmax.f32 %v11467, 0.0
  %v12674 = vmax.f32 %v11472, 0.0
  %v12675 = vmax.f32 %v11477, 0.0
  %v12676 = vmax.f32 %v11482, 0.0
  %v12677 = vmax.f32 %v11487, 0.0
  %v12678 = vmax.f32 %v11492, 0.0
  %v12679 = vmax.f32 %v11497, 0.0
  %v12680 = vmax.f32 %v11502, 0.0
  %v12681 = vmax.f32 %v11507, 0.0
  %v12682 = vmax.f32 %v11512, 0.0
  %v12683 = vmax.f32 %v11517, 0.0
  %v12684 = vmax.f32 %v11522, 0.0
  %v12685 = vmax.f32 %v11527, 0.0
  %v12686 = vmax.f32 %v11532, 0.0
  %v12687 = vmax.f32 %v11537, 0.0
  %v12688 = vmax.f32 %v11542, 0.0
  %v12689 = vmax.f32 %v11547, 0.0
  %v12690 = vmax.f32 %v11552, 0.0
  %v12691 = vmax.f32 %v11557, 0.0
  %v12692 = vmax.f32 %v11562, 0.0
  %v12693 = vmax.f32 %v11567, 0.0
  %v12694 = vmax.f32 %v11572, 0.0
  %v12695 = vmax.f32 %v11577, 0.0
  %v12696 = vmax.f32 %v11582, 0.0
  %v12697 = vmax.f32 %v11587, 0.0
  %v12698 = vmax.f32 %v11592, 0.0
  %v12699 = vmax.f32 %v11597, 0.0
  %v12700 = vmax.f32 %v11602, 0.0
  %v12701 = vmax.f32 %v11607, 0.0
  %v12702 = vmax.f32 %v11612, 0.0
  %v12703 = vmax.f32 %v11617, 0.0
  %v12704 = vmax.f32 %v11622, 0.0
  %v12705 = vmax.f32 %v11627, 0.0
  %v12706 = vmax.f32 %v11632, 0.0
  %v12707 = vmax.f32 %v11637, 0.0
  %v12708 = vmax.f32 %v11642, 0.0
  %v12709 = vmax.f32 %v11647, 0.0
  %v12710 = vmax.f32 %v11652, 0.0
  %v12711 = vmax.f32 %v11657, 0.0
  %v12712 = vmax.f32 %v11662, 0.0
  %v12713 = vmax.f32 %v11667, 0.0
  %v12714 = vmax.f32 %v11672, 0.0
  %v12715 = vmax.f32 %v11677, 0.0
  %v12716 = vmax.f32 %v11682, 0.0
  %v12717 = vmax.f32 %v11687, 0.0
  %v12718 = vmax.f32 %v11692, 0.0
  %v12719 = vmax.f32 %v11697, 0.0
  %v12720 = vmax.f32 %v11702, 0.0
  %v12721 = vmax.f32 %v11707, 0.0
  %v12722 = vmax.f32 %v11712, 0.0
  %v12723 = vmax.f32 %v11717, 0.0
  %v12724 = vmax.f32 %v11722, 0.0
  %v12725 = vmax.f32 %v11727, 0.0
  %v12726 = vmax.f32 %v11732, 0.0
  %v12727 = vmax.f32 %v11737, 0.0
  %v12728 = vmax.f32 %v11742, 0.0
  %v12729 = vmax.f32 %v11747, 0.0
  %v12730 = vmax.f32 %v11752, 0.0
  %v12731 = vmax.f32 %v11757, 0.0
  %v12732 = vmax.f32 %v11762, 0.0
  %v12733 = vmax.f32 %v11767, 0.0
  %v12734 = vmax.f32 %v11772, 0.0
  %v12735 = vmax.f32 %v11777, 0.0
  %v12736 = vmax.f32 %v11782, 0.0
  %v12737 = vmax.f32 %v11787, 0.0
  %v12738 = vmax.f32 %v11792, 0.0
  %v12739 = vmax.f32 %v11797, 0.0
  %v12740 = vmax.f32 %v11802, 0.0
  %v12741 = vmax.f32 %v11807, 0.0
  %v12742 = vmax.f32 %v11812, 0.0
  %v12743 = vmax.f32 %v11817, 0.0
  %v12744 = vmax.f32 %v11822, 0.0
  %v12745 = vmax.f32 %v11827, 0.0
  %v12746 = vmax.f32 %v11832, 0.0
  %v12747 = vmax.f32 %v11837, 0.0
  %v12748 = vmax.f32 %v11842, 0.0
  %v12749 = vmax.f32 %v11847, 0.0
  %v12750 = vmax.f32 %v11852, 0.0
  %v12751 = vmax.f32 %v11857, 0.0
  %v12752 = vmax.f32 %v11862, 0.0
  %v12753 = vmax.f32 %v11867, 0.0
  %v12754 = vmax.f32 %v11872, 0.0
  %v12755 = vmax.f32 %v11877, 0.0
  %v12756 = vmax.f32 %v11882, 0.0
  %v12757 = vmax.f32 %v11887, 0.0
  %v12758 = vmax.f32 %v11892, 0.0
  %v12759 = vmax.f32 %v11897, 0.0
  %v12760 = vmax.f32 %v11902, 0.0
  %v12761 = vmax.f32 %v11907, 0.0
  %v12762 = vmax.f32 %v11912, 0.0
  %v12763 = vmax.f32 %v11917, 0.0
  %v12764 = vmax.f32 %v11922, 0.0
  %v12765 = vmax.f32 %v11927, 0.0
  %v12766 = vmax.f32 %v11932, 0.0
  %v12767 = vmax.f32 %v11937, 0.0
  %v12768 = vmax.f32 %v11942, 0.0
  %v12769 = vmax.f32 %v11947, 0.0
  %v12770 = vmax.f32 %v11952, 0.0
  %v12771 = vmax.f32 %v11957, 0.0
  %v12772 = vmax.f32 %v11962, 0.0
  %v12773 = vmax.f32 %v11967, 0.0
  %v12774 = vmax.f32 %v11972, 0.0
  %v12775 = vmax.f32 %v11977, 0.0
  %v12776 = vmax.f32 %v11982, 0.0
  %v12777 = vmax.f32 %v11987, 0.0
  %v12778 = vmax.f32 %v11992, 0.0
  %v12779 = vmax.f32 %v11997, 0.0
  %v12780 = vmax.f32 %v12002, 0.0
  %v12781 = vmax.f32 %v12007, 0.0
  %v12782 = vmax.f32 %v12012, 0.0
  %v12783 = vmax.f32 %v12017, 0.0
  %v12784 = vmax.f32 %v12022, 0.0
  %v12785 = vmax.f32 %v12027, 0.0
  %v12786 = vmax.f32 %v12032, 0.0
  %v12787 = vmax.f32 %v12037, 0.0
  %v12788 = vmax.f32 %v12042, 0.0
  %v12789 = vmax.f32 %v12047, 0.0
  %v12790 = vmax.f32 %v12052, 0.0
  %v12791 = vmax.f32 %v12057, 0.0
  %v12792 = vmax.f32 %v12062, 0.0
  %v12793 = vmax.f32 %v12067, 0.0
  %v12794 = vmax.f32 %v12072, 0.0
  %v12795 = vmax.f32 %v12077, 0.0
  %v12796 = vmax.f32 %v12082, 0.0
  %v12797 = vmax.f32 %v12087, 0.0
  %v12798 = vmax.f32 %v12092, 0.0
  %v12799 = vmax.f32 %v12097, 0.0
  %v12800 = vmax.f32 %v12102, 0.0
  %v12801 = vmax.f32 %v12107, 0.0
  %v12802 = vmax.f32 %v12112, 0.0
  %v12803 = vmax.f32 %v12117, 0.0
  %v12804 = vmax.f32 %v12122, 0.0
  %v12805 = vmax.f32 %v12127, 0.0
  %v12806 = vmax.f32 %v12132, 0.0
  %v12807 = vmax.f32 %v12137, 0.0
  %v12808 = vmax.f32 %v12142, 0.0
  %v12809 = vmax.f32 %v12147, 0.0
  %v12810 = vmax.f32 %v12152, 0.0
  %v12811 = vmax.f32 %v12157, 0.0
  %v12812 = vmax.f32 %v12162, 0.0
  %v12813 = vmax.f32 %v12167, 0.0
  %v12814 = vmax.f32 %v12172, 0.0
  %v12815 = vmax.f32 %v12177, 0.0
  %v12816 = vmax.f32 %v12182, 0.0
  %v12817 = vmax.f32 %v12187, 0.0
  %v12818 = vmax.f32 %v12192, 0.0
  %v12819 = vmax.f32 %v12197, 0.0
  %v12820 = vmax.f32 %v12202, 0.0
  %v12821 = vmax.f32 %v12207, 0.0
  %v12822 = vmax.f32 %v12212, 0.0
  %v12823 = vmax.f32 %v12217, 0.0
  %v12824 = vmax.f32 %v12222, 0.0
  %v12825 = vmax.f32 %v12227, 0.0
  %v12826 = vmax.f32 %v12232, 0.0
  %v12827 = vmax.f32 %v12237, 0.0
  %v12828 = vmax.f32 %v12242, 0.0
  %v12829 = vmax.f32 %v12247, 0.0
  %v12830 = vmax.f32 %v12252, 0.0
  %v12831 = vmax.f32 %v12257, 0.0
  %v12832 = vmax.f32 %v12262, 0.0
  %v12833 = vmax.f32 %v12267, 0.0
  %v12834 = vmax.f32 %v12272, 0.0
  %v12835 = vmax.f32 %v12277, 0.0
  %v12836 = vmax.f32 %v12282, 0.0
  %v12837 = vmax.f32 %v12287, 0.0
  %v12838 = vmax.f32 %v12292, 0.0
  %v12839 = vmax.f32 %v12297, 0.0
  %v12840 = vmax.f32 %v12302, 0.0
  %v12841 = vmax.f32 %v12307, 0.0
  %v12842 = vmax.f32 %v12312, 0.0
  %v12843 = vmax.f32 %v12317, 0.0
  %v12844 = vmax.f32 %v12322, 0.0
  %v12845 = vmax.f32 %v12327, 0.0
  %v12846 = vmax.f32 %v12332, 0.0
  %v12847 = vmax.f32 %v12337, 0.0
  %v12848 = vmax.f32 %v12342, 0.0
  %v12849 = vmax.f32 %v12347, 0.0
  %v12850 = vmax.f32 %v12352, 0.0
  %v12851 = vmax.f32 %v12357, 0.0
  %v12852 = vmax.f32 %v12362, 0.0
  %v12853 = vmax.f32 %v12367, 0.0
  %v12854 = vmax.f32 %v12372, 0.0
  %v12855 = vmax.f32 %v12377, 0.0
  %v12856 = vmax.f32 %v12382, 0.0
  %v12857 = vmax.f32 %v12387, 0.0
  %v12858 = vmax.f32 %v12392, 0.0
  %v12859 = vmax.f32 %v12397, 0.0
  %v12860 = vmax.f32 %v12402, 0.0
  %v12861 = vmax.f32 %v12407, 0.0
  %v12862 = vmax.f32 %v12412, 0.0
  %v12863 = vmax.f32 %v12417, 0.0
  %v12864 = vmax.f32 %v12422, 0.0
  %v12865 = vmax.f32 %v12427, 0.0
  %v12866 = vmax.f32 %v12432, 0.0
  %v12867 = vmax.f32 %v12437, 0.0
  %v12868 = vmax.f32 %v12442, 0.0
  %v12869 = vmax.f32 %v12447, 0.0
  %v12870 = vmax.f32 %v12452, 0.0
  %v12871 = vmax.f32 %v12457, 0.0
  %v12872 = vmax.f32 %v12462, 0.0
  %v12873 = vmax.f32 %v12467, 0.0
  %v12874 = vmax.f32 %v12472, 0.0
  %v12875 = vmax.f32 %v12477, 0.0
  %v12876 = vmax.f32 %v12482, 0.0
  %v12877 = vmax.f32 %v12487, 0.0
  %v12878 = vmax.f32 %v12492, 0.0
  %v12879 = vmax.f32 %v12497, 0.0
  %v12880 = vmax.f32 %v12502, 0.0
  %v12881 = vmax.f32 %v12507, 0.0
  %v12882 = vmax.f32 %v12512, 0.0
  %v12883 = vmax.f32 %v12517, 0.0
  %v12884 = vmax.f32 %v12522, 0.0
  %v12885 = vmax.f32 %v12527, 0.0
  %v12886 = vmax.f32 %v12532, 0.0
  %v12887 = vmax.f32 %v12537, 0.0
  %v12888 = vmax.f32 %v12542, 0.0
  %v12889 = vmax.f32 %v12547, 0.0
  %v12890 = vmax.f32 %v12552, 0.0
  %v12891 = vmax.f32 %v12557, 0.0
  %v12892 = vmax.f32 %v12562, 0.0
  %v12893 = vmax.f32 %v12567, 0.0
  %v12894 = vmax.f32 %v12572, 0.0
  %v12895 = vmax.f32 %v12577, 0.0
  %v12896 = vmax.f32 %v12582, 0.0
  %v12897 = vmax.f32 %v12587, 0.0
  %v12898 = vmax.f32 %v12592, 0.0
  %v12899 = vmax.f32 %v12597, 0.0
  %v12900 = vmax.f32 %v12602, 0.0
  %v12901 = vmax.f32 %v12607, 0.0
  %v12902 = vmax.f32 %v12612, 0.0
  %v12903 = vmax.f32 %v12617, 0.0
  %v12904 = vmax.f32 %v12622, 0.0
  %v12905 = vmax.f32 %v12627, 0.0
  %v12906 = vmax.f32 %v12632, 0.0
  %v12907 = vmax.f32 %v12637, 0.0
  %v12908 = vmax.f32 %v12642, 0.0
  %v12909 = vmax.f32 %v12647, 0.0
  %v12910 = vmax.f32 %v12652, 0.0
  %v12911 = vmin.f32 %v12655, 6.0
  %v12912 = vmin.f32 %v12656, 6.0
  %v12913 = vmin.f32 %v12657, 6.0
  %v12914 = vmin.f32 %v12658, 6.0
  %v12915 = vmin.f32 %v12659, 6.0
  %v12916 = vmin.f32 %v12660, 6.0
  %v12917 = vmin.f32 %v12661, 6.0
  %v12918 = vmin.f32 %v12662, 6.0
  %v12919 = vmin.f32 %v12663, 6.0
  %v12920 = vmin.f32 %v12664, 6.0
  %v12921 = vmin.f32 %v12665, 6.0
  %v12922 = vmin.f32 %v12666, 6.0
  %v12923 = vmin.f32 %v12667, 6.0
  %v12924 = vmin.f32 %v12668, 6.0
  %v12925 = vmin.f32 %v12669, 6.0
  %v12926 = vmin.f32 %v12670, 6.0
  %v12927 = vmin.f32 %v12671, 6.0
  %v12928 = vmin.f32 %v12672, 6.0
  %v12929 = vmin.f32 %v12673, 6.0
  %v12930 = vmin.f32 %v12674, 6.0
  %v12931 = vmin.f32 %v12675, 6.0
  %v12932 = vmin.f32 %v12676, 6.0
  %v12933 = vmin.f32 %v12677, 6.0
  %v12934 = vmin.f32 %v12678, 6.0
  %v12935 = vmin.f32 %v12679, 6.0
  %v12936 = vmin.f32 %v12680, 6.0
  %v12937 = vmin.f32 %v12681, 6.0
  %v12938 = vmin.f32 %v12682, 6.0
  %v12939 = vmin.f32 %v12683, 6.0
  %v12940 = vmin.f32 %v12684, 6.0
  %v12941 = vmin.f32 %v12685, 6.0
  %v12942 = vmin.f32 %v12686, 6.0
  %v12943 = vmin.f32 %v12687, 6.0
  %v12944 = vmin.f32 %v12688, 6.0
  %v12945 = vmin.f32 %v12689, 6.0
  %v12946 = vmin.f32 %v12690, 6.0
  %v12947 = vmin.f32 %v12691, 6.0
  %v12948 = vmin.f32 %v12692, 6.0
  %v12949 = vmin.f32 %v12693, 6.0
  %v12950 = vmin.f32 %v12694, 6.0
  %v12951 = vmin.f32 %v12695, 6.0
  %v12952 = vmin.f32 %v12696, 6.0
  %v12953 = vmin.f32 %v12697, 6.0
  %v12954 = vmin.f32 %v12698, 6.0
  %v12955 = vmin.f32 %v12699, 6.0
  %v12956 = vmin.f32 %v12700, 6.0
  %v12957 = vmin.f32 %v12701, 6.0
  %v12958 = vmin.f32 %v12702, 6.0
  %v12959 = vmin.f32 %v12703, 6.0
  %v12960 = vmin.f32 %v12704, 6.0
  %v12961 = vmin.f32 %v12705, 6.0
  %v12962 = vmin.f32 %v12706, 6.0
  %v12963 = vmin.f32 %v12707, 6.0
  %v12964 = vmin.f32 %v12708, 6.0
  %v12965 = vmin.f32 %v12709, 6.0
  %v12966 = vmin.f32 %v12710, 6.0
  %v12967 = vmin.f32 %v12711, 6.0
  %v12968 = vmin.f32 %v12712, 6.0
  %v12969 = vmin.f32 %v12713, 6.0
  %v12970 = vmin.f32 %v12714, 6.0
  %v12971 = vmin.f32 %v12715, 6.0
  %v12972 = vmin.f32 %v12716, 6.0
  %v12973 = vmin.f32 %v12717, 6.0
  %v12974 = vmin.f32 %v12718, 6.0
  %v12975 = vmin.f32 %v12719, 6.0
  %v12976 = vmin.f32 %v12720, 6.0
  %v12977 = vmin.f32 %v12721, 6.0
  %v12978 = vmin.f32 %v12722, 6.0
  %v12979 = vmin.f32 %v12723, 6.0
  %v12980 = vmin.f32 %v12724, 6.0
  %v12981 = vmin.f32 %v12725, 6.0
  %v12982 = vmin.f32 %v12726, 6.0
  %v12983 = vmin.f32 %v12727, 6.0
  %v12984 = vmin.f32 %v12728, 6.0
  %v12985 = vmin.f32 %v12729, 6.0
  %v12986 = vmin.f32 %v12730, 6.0
  %v12987 = vmin.f32 %v12731, 6.0
  %v12988 = vmin.f32 %v12732, 6.0
  %v12989 = vmin.f32 %v12733, 6.0
  %v12990 = vmin.f32 %v12734, 6.0
  %v12991 = vmin.f32 %v12735, 6.0
  %v12992 = vmin.f32 %v12736, 6.0
  %v12993 = vmin.f32 %v12737, 6.0
  %v12994 = vmin.f32 %v12738, 6.0
  %v12995 = vmin.f32 %v12739, 6.0
  %v12996 = vmin.f32 %v12740, 6.0
  %v12997 = vmin.f32 %v12741, 6.0
  %v12998 = vmin.f32 %v12742, 6.0
  %v12999 = vmin.f32 %v12743, 6.0
  %v13000 = vmin.f32 %v12744, 6.0
  %v13001 = vmin.f32 %v12745, 6.0
  %v13002 = vmin.f32 %v12746, 6.0
  %v13003 = vmin.f32 %v12747, 6.0
  %v13004 = vmin.f32 %v12748, 6.0
  %v13005 = vmin.f32 %v12749, 6.0
  %v13006 = vmin.f32 %v12750, 6.0
  %v13007 = vmin.f32 %v12751, 6.0
  %v13008 = vmin.f32 %v12752, 6.0
  %v13009 = vmin.f32 %v12753, 6.0
  %v13010 = vmin.f32 %v12754, 6.0
  %v13011 = vmin.f32 %v12755, 6.0
  %v13012 = vmin.f32 %v12756, 6.0
  %v13013 = vmin.f32 %v12757, 6.0
  %v13014 = vmin.f32 %v12758, 6.0
  %v13015 = vmin.f32 %v12759, 6.0
  %v13016 = vmin.f32 %v12760, 6.0
  %v13017 = vmin.f32 %v12761, 6.0
  %v13018 = vmin.f32 %v12762, 6.0
  %v13019 = vmin.f32 %v12763, 6.0
  %v13020 = vmin.f32 %v12764, 6.0
  %v13021 = vmin.f32 %v12765, 6.0
  %v13022 = vmin.f32 %v12766, 6.0
  %v13023 = vmin.f32 %v12767, 6.0
  %v13024 = vmin.f32 %v12768, 6.0
  %v13025 = vmin.f32 %v12769, 6.0
  %v13026 = vmin.f32 %v12770, 6.0
  %v13027 = vmin.f32 %v12771, 6.0
  %v13028 = vmin.f32 %v12772, 6.0
  %v13029 = vmin.f32 %v12773, 6.0
  %v13030 = vmin.f32 %v12774, 6.0
  %v13031 = vmin.f32 %v12775, 6.0
  %v13032 = vmin.f32 %v12776, 6.0
  %v13033 = vmin.f32 %v12777, 6.0
  %v13034 = vmin.f32 %v12778, 6.0
  %v13035 = vmin.f32 %v12779, 6.0
  %v13036 = vmin.f32 %v12780, 6.0
  %v13037 = vmin.f32 %v12781, 6.0
  %v13038 = vmin.f32 %v12782, 6.0
  %v13039 = vmin.f32 %v12783, 6.0
  %v13040 = vmin.f32 %v12784, 6.0
  %v13041 = vmin.f32 %v12785, 6.0
  %v13042 = vmin.f32 %v12786, 6.0
  %v13043 = vmin.f32 %v12787, 6.0
  %v13044 = vmin.f32 %v12788, 6.0
  %v13045 = vmin.f32 %v12789, 6.0
  %v13046 = vmin.f32 %v12790, 6.0
  %v13047 = vmin.f32 %v12791, 6.0
  %v13048 = vmin.f32 %v12792, 6.0
  %v13049 = vmin.f32 %v12793, 6.0
  %v13050 = vmin.f32 %v12794, 6.0
  %v13051 = vmin.f32 %v12795, 6.0
  %v13052 = vmin.f32 %v12796, 6.0
  %v13053 = vmin.f32 %v12797, 6.0
  %v13054 = vmin.f32 %v12798, 6.0
  %v13055 = vmin.f32 %v12799, 6.0
  %v13056 = vmin.f32 %v12800, 6.0
  %v13057 = vmin.f32 %v12801, 6.0
  %v13058 = vmin.f32 %v12802, 6.0
  %v13059 = vmin.f32 %v12803, 6.0
  %v13060 = vmin.f32 %v12804, 6.0
  %v13061 = vmin.f32 %v12805, 6.0
  %v13062 = vmin.f32 %v12806, 6.0
  %v13063 = vmin.f32 %v12807, 6.0
  %v13064 = vmin.f32 %v12808, 6.0
  %v13065 = vmin.f32 %v12809, 6.0
  %v13066 = vmin.f32 %v12810, 6.0
  %v13067 = vmin.f32 %v12811, 6.0
  %v13068 = vmin.f32 %v12812, 6.0
  %v13069 = vmin.f32 %v12813, 6.0
  %v13070 = vmin.f32 %v12814, 6.0
  %v13071 = vmin.f32 %v12815, 6.0
  %v13072 = vmin.f32 %v12816, 6.0
  %v13073 = vmin.f32 %v12817, 6.0
  %v13074 = vmin.f32 %v12818, 6.0
  %v13075 = vmin.f32 %v12819, 6.0
  %v13076 = vmin.f32 %v12820, 6.0
  %v13077 = vmin.f32 %v12821, 6.0
  %v13078 = vmin.f32 %v12822, 6.0
  %v13079 = vmin.f32 %v12823, 6.0
  %v13080 = vmin.f32 %v12824, 6.0
  %v13081 = vmin.f32 %v12825, 6.0
  %v13082 = vmin.f32 %v12826, 6.0
  %v13083 = vmin.f32 %v12827, 6.0
  %v13084 = vmin.f32 %v12828, 6.0
  %v13085 = vmin.f32 %v12829, 6.0
  %v13086 = vmin.f32 %v12830, 6.0
  %v13087 = vmin.f32 %v12831, 6.0
  %v13088 = vmin.f32 %v12832, 6.0
  %v13089 = vmin.f32 %v12833, 6.0
  %v13090 = vmin.f32 %v12834, 6.0
  %v13091 = vmin.f32 %v12835, 6.0
  %v13092 = vmin.f32 %v12836, 6.0
  %v13093 = vmin.f32 %v12837, 6.0
  %v13094 = vmin.f32 %v12838, 6.0
  %v13095 = vmin.f32 %v12839, 6.0
  %v13096 = vmin.f32 %v12840, 6.0
  %v13097 = vmin.f32 %v12841, 6.0
  %v13098 = vmin.f32 %v12842, 6.0
  %v13099 = vmin.f32 %v12843, 6.0
  %v13100 = vmin.f32 %v12844, 6.0
  %v13101 = vmin.f32 %v12845, 6.0
  %v13102 = vmin.f32 %v12846, 6.0
  %v13103 = vmin.f32 %v12847, 6.0
  %v13104 = vmin.f32 %v12848, 6.0
  %v13105 = vmin.f32 %v12849, 6.0
  %v13106 = vmin.f32 %v12850, 6.0
  %v13107 = vmin.f32 %v12851, 6.0
  %v13108 = vmin.f32 %v12852, 6.0
  %v13109 = vmin.f32 %v12853, 6.0
  %v13110 = vmin.f32 %v12854, 6.0
  %v13111 = vmin.f32 %v12855, 6.0
  %v13112 = vmin.f32 %v12856, 6.0
  %v13113 = vmin.f32 %v12857, 6.0
  %v13114 = vmin.f32 %v12858, 6.0
  %v13115 = vmin.f32 %v12859, 6.0
  %v13116 = vmin.f32 %v12860, 6.0
  %v13117 = vmin.f32 %v12861, 6.0
  %v13118 = vmin.f32 %v12862, 6.0
  %v13119 = vmin.f32 %v12863, 6.0
  %v13120 = vmin.f32 %v12864, 6.0
  %v13121 = vmin.f32 %v12865, 6.0
  %v13122 = vmin.f32 %v12866, 6.0
  %v13123 = vmin.f32 %v12867, 6.0
  %v13124 = vmin.f32 %v12868, 6.0
  %v13125 = vmin.f32 %v12869, 6.0
  %v13126 = vmin.f32 %v12870, 6.0
  %v13127 = vmin.f32 %v12871, 6.0
  %v13128 = vmin.f32 %v12872, 6.0
  %v13129 = vmin.f32 %v12873, 6.0
  %v13130 = vmin.f32 %v12874, 6.0
  %v13131 = vmin.f32 %v12875, 6.0
  %v13132 = vmin.f32 %v12876, 6.0
  %v13133 = vmin.f32 %v12877, 6.0
  %v13134 = vmin.f32 %v12878, 6.0
  %v13135 = vmin.f32 %v12879, 6.0
  %v13136 = vmin.f32 %v12880, 6.0
  %v13137 = vmin.f32 %v12881, 6.0
  %v13138 = vmin.f32 %v12882, 6.0
  %v13139 = vmin.f32 %v12883, 6.0
  %v13140 = vmin.f32 %v12884, 6.0
  %v13141 = vmin.f32 %v12885, 6.0
  %v13142 = vmin.f32 %v12886, 6.0
  %v13143 = vmin.f32 %v12887, 6.0
  %v13144 = vmin.f32 %v12888, 6.0
  %v13145 = vmin.f32 %v12889, 6.0
  %v13146 = vmin.f32 %v12890, 6.0
  %v13147 = vmin.f32 %v12891, 6.0
  %v13148 = vmin.f32 %v12892, 6.0
  %v13149 = vmin.f32 %v12893, 6.0
  %v13150 = vmin.f32 %v12894, 6.0
  %v13151 = vmin.f32 %v12895, 6.0
  %v13152 = vmin.f32 %v12896, 6.0
  %v13153 = vmin.f32 %v12897, 6.0
  %v13154 = vmin.f32 %v12898, 6.0
  %v13155 = vmin.f32 %v12899, 6.0
  %v13156 = vmin.f32 %v12900, 6.0
  %v13157 = vmin.f32 %v12901, 6.0
  %v13158 = vmin.f32 %v12902, 6.0
  %v13159 = vmin.f32 %v12903, 6.0
  %v13160 = vmin.f32 %v12904, 6.0
  %v13161 = vmin.f32 %v12905, 6.0
  %v13162 = vmin.f32 %v12906, 6.0
  %v13163 = vmin.f32 %v12907, 6.0
  %v13164 = vmin.f32 %v12908, 6.0
  %v13165 = vmin.f32 %v12909, 6.0
  %v13166 = vmin.f32 %v12910, 6.0
  %vm13167 = vcmask 261120
  %v13168 = vsel %vm13167, %v12911, 0.0
  %v13169 = vsel %vm13167, %v12912, 0.0
  %v13170 = vadd.f32 %v13168, %v13169
  %v13171 = vsel %vm13167, %v12913, 0.0
  %v13172 = vadd.f32 %v13170, %v13171
  %v13173 = vsel %vm13167, %v12914, 0.0
  %v13174 = vadd.f32 %v13172, %v13173
  %v13175 = vsel %vm13167, %v12915, 0.0
  %v13176 = vadd.f32 %v13174, %v13175
  %v13177 = vsel %vm13167, %v12916, 0.0
  %v13178 = vadd.f32 %v13176, %v13177
  %v13179 = vsel %vm13167, %v12917, 0.0
  %v13180 = vadd.f32 %v13178, %v13179
  %v13181 = vsel %vm13167, %v12918, 0.0
  %v13182 = vadd.f32 %v13180, %v13181
  %v13183 = vsel %vm13167, %v12919, 0.0
  %v13184 = vadd.f32 %v13182, %v13183
  %v13185 = vsel %vm13167, %v12920, 0.0
  %v13186 = vadd.f32 %v13184, %v13185
  %v13187 = vsel %vm13167, %v12921, 0.0
  %v13188 = vadd.f32 %v13186, %v13187
  %v13189 = vsel %vm13167, %v12922, 0.0
  %v13190 = vadd.f32 %v13188, %v13189
  %v13191 = vsel %vm13167, %v12923, 0.0
  %v13192 = vadd.f32 %v13190, %v13191
  %v13193 = vsel %vm13167, %v12924, 0.0
  %v13194 = vadd.f32 %v13192, %v13193
  %v13195 = vsel %vm13167, %v12925, 0.0
  %v13196 = vadd.f32 %v13194, %v13195
  %v13197 = vsel %vm13167, %v12926, 0.0
  %v13198 = vadd.f32 %v13196, %v13197
  %v13199 = vsel %vm13167, %v12927, 0.0
  %v13200 = vadd.f32 %v13198, %v13199
  %v13201 = vsel %vm13167, %v12928, 0.0
  %v13202 = vadd.f32 %v13200, %v13201
  %v13203 = vsel %vm13167, %v12929, 0.0
  %v13204 = vadd.f32 %v13202, %v13203
  %v13205 = vsel %vm13167, %v12930, 0.0
  %v13206 = vadd.f32 %v13204, %v13205
  %v13207 = vsel %vm13167, %v12931, 0.0
  %v13208 = vadd.f32 %v13206, %v13207
  %v13209 = vsel %vm13167, %v12932, 0.0
  %v13210 = vadd.f32 %v13208, %v13209
  %v13211 = vsel %vm13167, %v12933, 0.0
  %v13212 = vadd.f32 %v13210, %v13211
  %v13213 = vsel %vm13167, %v12934, 0.0
  %v13214 = vadd.f32 %v13212, %v13213
  %v13215 = vsel %vm13167, %v12935, 0.0
  %v13216 = vadd.f32 %v13214, %v13215
  %v13217 = vsel %vm13167, %v12936, 0.0
  %v13218 = vadd.f32 %v13216, %v13217
  %v13219 = vsel %vm13167, %v12937, 0.0
  %v13220 = vadd.f32 %v13218, %v13219
  %v13221 = vsel %vm13167, %v12938, 0.0
  %v13222 = vadd.f32 %v13220, %v13221
  %v13223 = vsel %vm13167, %v12939, 0.0
  %v13224 = vadd.f32 %v13222, %v13223
  %v13225 = vsel %vm13167, %v12940, 0.0
  %v13226 = vadd.f32 %v13224, %v13225
  %v13227 = vsel %vm13167, %v12941, 0.0
  %v13228 = vadd.f32 %v13226, %v13227
  %v13229 = vsel %vm13167, %v12942, 0.0
  %v13230 = vadd.f32 %v13228, %v13229
  %v13231 = vrot.slane %v13230, 4
  %v13232 = vadd.f32 %v13230, %v13231
  %v13233 = vrot.slane %v13232, 2
  %v13234 = vadd.f32 %v13232, %v13233
  %v13235 = vrot.slane %v13234, 1
  %v13236 = vadd.f32 %v13234, %v13235
  %v13237 = vsel %vm13167, %v12943, 0.0
  %v13238 = vsel %vm13167, %v12944, 0.0
  %v13239 = vadd.f32 %v13237, %v13238
  %v13240 = vsel %vm13167, %v12945, 0.0
  %v13241 = vadd.f32 %v13239, %v13240
  %v13242 = vsel %vm13167, %v12946, 0.0
  %v13243 = vadd.f32 %v13241, %v13242
  %v13244 = vsel %vm13167, %v12947, 0.0
  %v13245 = vadd.f32 %v13243, %v13244
  %v13246 = vsel %vm13167, %v12948, 0.0
  %v13247 = vadd.f32 %v13245, %v13246
  %v13248 = vsel %vm13167, %v12949, 0.0
  %v13249 = vadd.f32 %v13247, %v13248
  %v13250 = vsel %vm13167, %v12950, 0.0
  %v13251 = vadd.f32 %v13249, %v13250
  %v13252 = vsel %vm13167, %v12951, 0.0
  %v13253 = vadd.f32 %v13251, %v13252
  %v13254 = vsel %vm13167, %v12952, 0.0
  %v13255 = vadd.f32 %v13253, %v13254
  %v13256 = vsel %vm13167, %v12953, 0.0
  %v13257 = vadd.f32 %v13255, %v13256
  %v13258 = vsel %vm13167, %v12954, 0.0
  %v13259 = vadd.f32 %v13257, %v13258
  %v13260 = vsel %vm13167, %v12955, 0.0
  %v13261 = vadd.f32 %v13259, %v13260
  %v13262 = vsel %vm13167, %v12956, 0.0
  %v13263 = vadd.f32 %v13261, %v13262
  %v13264 = vsel %vm13167, %v12957, 0.0
  %v13265 = vadd.f32 %v13263, %v13264
  %v13266 = vsel %vm13167, %v12958, 0.0
  %v13267 = vadd.f32 %v13265, %v13266
  %v13268 = vsel %vm13167, %v12959, 0.0
  %v13269 = vadd.f32 %v13267, %v13268
  %v13270 = vsel %vm13167, %v12960, 0.0
  %v13271 = vadd.f32 %v13269, %v13270
  %v13272 = vsel %vm13167, %v12961, 0.0
  %v13273 = vadd.f32 %v13271, %v13272
  %v13274 = vsel %vm13167, %v12962, 0.0
  %v13275 = vadd.f32 %v13273, %v13274
  %v13276 = vsel %vm13167, %v12963, 0.0
  %v13277 = vadd.f32 %v13275, %v13276
  %v13278 = vsel %vm13167, %v12964, 0.0
  %v13279 = vadd.f32 %v13277, %v13278
  %v13280 = vsel %vm13167, %v12965, 0.0
  %v13281 = vadd.f32 %v13279, %v13280
  %v13282 = vsel %vm13167, %v12966, 0.0
  %v13283 = vadd.f32 %v13281, %v13282
  %v13284 = vsel %vm13167, %v12967, 0.0
  %v13285 = vadd.f32 %v13283, %v13284
  %v13286 = vsel %vm13167, %v12968, 0.0
  %v13287 = vadd.f32 %v13285, %v13286
  %v13288 = vsel %vm13167, %v12969, 0.0
  %v13289 = vadd.f32 %v13287, %v13288
  %v13290 = vsel %vm13167, %v12970, 0.0
  %v13291 = vadd.f32 %v13289, %v13290
  %v13292 = vsel %vm13167, %v12971, 0.0
  %v13293 = vadd.f32 %v13291, %v13292
  %v13294 = vsel %vm13167, %v12972, 0.0
  %v13295 = vadd.f32 %v13293, %v13294
  %v13296 = vsel %vm13167, %v12973, 0.0
  %v13297 = vadd.f32 %v13295, %v13296
  %v13298 = vsel %vm13167, %v12974, 0.0
  %v13299 = vadd.f32 %v13297, %v13298
  %v13300 = vrot.slane %v13299, 4
  %v13301 = vadd.f32 %v13299, %v13300
  %v13302 = vrot.slane %v13301, 2
  %v13303 = vadd.f32 %v13301, %v13302
  %v13304 = vrot.slane %v13303, 1
  %v13305 = vadd.f32 %v13303, %v13304
  %v13306 = vsel %vm13167, %v12975, 0.0
  %v13307 = vsel %vm13167, %v12976, 0.0
  %v13308 = vadd.f32 %v13306, %v13307
  %v13309 = vsel %vm13167, %v12977, 0.0
  %v13310 = vadd.f32 %v13308, %v13309
  %v13311 = vsel %vm13167, %v12978, 0.0
  %v13312 = vadd.f32 %v13310, %v13311
  %v13313 = vsel %vm13167, %v12979, 0.0
  %v13314 = vadd.f32 %v13312, %v13313
  %v13315 = vsel %vm13167, %v12980, 0.0
  %v13316 = vadd.f32 %v13314, %v13315
  %v13317 = vsel %vm13167, %v12981, 0.0
  %v13318 = vadd.f32 %v13316, %v13317
  %v13319 = vsel %vm13167, %v12982, 0.0
  %v13320 = vadd.f32 %v13318, %v13319
  %v13321 = vsel %vm13167, %v12983, 0.0
  %v13322 = vadd.f32 %v13320, %v13321
  %v13323 = vsel %vm13167, %v12984, 0.0
  %v13324 = vadd.f32 %v13322, %v13323
  %v13325 = vsel %vm13167, %v12985, 0.0
  %v13326 = vadd.f32 %v13324, %v13325
  %v13327 = vsel %vm13167, %v12986, 0.0
  %v13328 = vadd.f32 %v13326, %v13327
  %v13329 = vsel %vm13167, %v12987, 0.0
  %v13330 = vadd.f32 %v13328, %v13329
  %v13331 = vsel %vm13167, %v12988, 0.0
  %v13332 = vadd.f32 %v13330, %v13331
  %v13333 = vsel %vm13167, %v12989, 0.0
  %v13334 = vadd.f32 %v13332, %v13333
  %v13335 = vsel %vm13167, %v12990, 0.0
  %v13336 = vadd.f32 %v13334, %v13335
  %v13337 = vsel %vm13167, %v12991, 0.0
  %v13338 = vadd.f32 %v13336, %v13337
  %v13339 = vsel %vm13167, %v12992, 0.0
  %v13340 = vadd.f32 %v13338, %v13339
  %v13341 = vsel %vm13167, %v12993, 0.0
  %v13342 = vadd.f32 %v13340, %v13341
  %v13343 = vsel %vm13167, %v12994, 0.0
  %v13344 = vadd.f32 %v13342, %v13343
  %v13345 = vsel %vm13167, %v12995, 0.0
  %v13346 = vadd.f32 %v13344, %v13345
  %v13347 = vsel %vm13167, %v12996, 0.0
  %v13348 = vadd.f32 %v13346, %v13347
  %v13349 = vsel %vm13167, %v12997, 0.0
  %v13350 = vadd.f32 %v13348, %v13349
  %v13351 = vsel %vm13167, %v12998, 0.0
  %v13352 = vadd.f32 %v13350, %v13351
  %v13353 = vsel %vm13167, %v12999, 0.0
  %v13354 = vadd.f32 %v13352, %v13353
  %v13355 = vsel %vm13167, %v13000, 0.0
  %v13356 = vadd.f32 %v13354, %v13355
  %v13357 = vsel %vm13167, %v13001, 0.0
  %v13358 = vadd.f32 %v13356, %v13357
  %v13359 = vsel %vm13167, %v13002, 0.0
  %v13360 = vadd.f32 %v13358, %v13359
  %v13361 = vsel %vm13167, %v13003, 0.0
  %v13362 = vadd.f32 %v13360, %v13361
  %v13363 = vsel %vm13167, %v13004, 0.0
  %v13364 = vadd.f32 %v13362, %v13363
  %v13365 = vsel %vm13167, %v13005, 0.0
  %v13366 = vadd.f32 %v13364, %v13365
  %v13367 = vsel %vm13167, %v13006, 0.0
  %v13368 = vadd.f32 %v13366, %v13367
  %v13369 = vrot.slane %v13368, 4
  %v13370 = vadd.f32 %v13368, %v13369
  %v13371 = vrot.slane %v13370, 2
  %v13372 = vadd.f32 %v13370, %v13371
  %v13373 = vrot.slane %v13372, 1
  %v13374 = vadd.f32 %v13372, %v13373
  %v13375 = vsel %vm13167, %v13007, 0.0
  %v13376 = vsel %vm13167, %v13008, 0.0
  %v13377 = vadd.f32 %v13375, %v13376
  %v13378 = vsel %vm13167, %v13009, 0.0
  %v13379 = vadd.f32 %v13377, %v13378
  %v13380 = vsel %vm13167, %v13010, 0.0
  %v13381 = vadd.f32 %v13379, %v13380
  %v13382 = vsel %vm13167, %v13011, 0.0
  %v13383 = vadd.f32 %v13381, %v13382
  %v13384 = vsel %vm13167, %v13012, 0.0
  %v13385 = vadd.f32 %v13383, %v13384
  %v13386 = vsel %vm13167, %v13013, 0.0
  %v13387 = vadd.f32 %v13385, %v13386
  %v13388 = vsel %vm13167, %v13014, 0.0
  %v13389 = vadd.f32 %v13387, %v13388
  %v13390 = vsel %vm13167, %v13015, 0.0
  %v13391 = vadd.f32 %v13389, %v13390
  %v13392 = vsel %vm13167, %v13016, 0.0
  %v13393 = vadd.f32 %v13391, %v13392
  %v13394 = vsel %vm13167, %v13017, 0.0
  %v13395 = vadd.f32 %v13393, %v13394
  %v13396 = vsel %vm13167, %v13018, 0.0
  %v13397 = vadd.f32 %v13395, %v13396
  %v13398 = vsel %vm13167, %v13019, 0.0
  %v13399 = vadd.f32 %v13397, %v13398
  %v13400 = vsel %vm13167, %v13020, 0.0
  %v13401 = vadd.f32 %v13399, %v13400
  %v13402 = vsel %vm13167, %v13021, 0.0
  %v13403 = vadd.f32 %v13401, %v13402
  %v13404 = vsel %vm13167, %v13022, 0.0
  %v13405 = vadd.f32 %v13403, %v13404
  %v13406 = vsel %vm13167, %v13023, 0.0
  %v13407 = vadd.f32 %v13405, %v13406
  %v13408 = vsel %vm13167, %v13024, 0.0
  %v13409 = vadd.f32 %v13407, %v13408
  %v13410 = vsel %vm13167, %v13025, 0.0
  %v13411 = vadd.f32 %v13409, %v13410
  %v13412 = vsel %vm13167, %v13026, 0.0
  %v13413 = vadd.f32 %v13411, %v13412
  %v13414 = vsel %vm13167, %v13027, 0.0
  %v13415 = vadd.f32 %v13413, %v13414
  %v13416 = vsel %vm13167, %v13028, 0.0
  %v13417 = vadd.f32 %v13415, %v13416
  %v13418 = vsel %vm13167, %v13029, 0.0
  %v13419 = vadd.f32 %v13417, %v13418
  %v13420 = vsel %vm13167, %v13030, 0.0
  %v13421 = vadd.f32 %v13419, %v13420
  %v13422 = vsel %vm13167, %v13031, 0.0
  %v13423 = vadd.f32 %v13421, %v13422
  %v13424 = vsel %vm13167, %v13032, 0.0
  %v13425 = vadd.f32 %v13423, %v13424
  %v13426 = vsel %vm13167, %v13033, 0.0
  %v13427 = vadd.f32 %v13425, %v13426
  %v13428 = vsel %vm13167, %v13034, 0.0
  %v13429 = vadd.f32 %v13427, %v13428
  %v13430 = vsel %vm13167, %v13035, 0.0
  %v13431 = vadd.f32 %v13429, %v13430
  %v13432 = vsel %vm13167, %v13036, 0.0
  %v13433 = vadd.f32 %v13431, %v13432
  %v13434 = vsel %vm13167, %v13037, 0.0
  %v13435 = vadd.f32 %v13433, %v13434
  %v13436 = vsel %vm13167, %v13038, 0.0
  %v13437 = vadd.f32 %v13435, %v13436
  %v13438 = vrot.slane %v13437, 4
  %v13439 = vadd.f32 %v13437, %v13438
  %v13440 = vrot.slane %v13439, 2
  %v13441 = vadd.f32 %v13439, %v13440
  %v13442 = vrot.slane %v13441, 1
  %v13443 = vadd.f32 %v13441, %v13442
  %v13444 = vsel %vm13167, %v13039, 0.0
  %v13445 = vsel %vm13167, %v13040, 0.0
  %v13446 = vadd.f32 %v13444, %v13445
  %v13447 = vsel %vm13167, %v13041, 0.0
  %v13448 = vadd.f32 %v13446, %v13447
  %v13449 = vsel %vm13167, %v13042, 0.0
  %v13450 = vadd.f32 %v13448, %v13449
  %v13451 = vsel %vm13167, %v13043, 0.0
  %v13452 = vadd.f32 %v13450, %v13451
  %v13453 = vsel %vm13167, %v13044, 0.0
  %v13454 = vadd.f32 %v13452, %v13453
  %v13455 = vsel %vm13167, %v13045, 0.0
  %v13456 = vadd.f32 %v13454, %v13455
  %v13457 = vsel %vm13167, %v13046, 0.0
  %v13458 = vadd.f32 %v13456, %v13457
  %v13459 = vsel %vm13167, %v13047, 0.0
  %v13460 = vadd.f32 %v13458, %v13459
  %v13461 = vsel %vm13167, %v13048, 0.0
  %v13462 = vadd.f32 %v13460, %v13461
  %v13463 = vsel %vm13167, %v13049, 0.0
  %v13464 = vadd.f32 %v13462, %v13463
  %v13465 = vsel %vm13167, %v13050, 0.0
  %v13466 = vadd.f32 %v13464, %v13465
  %v13467 = vsel %vm13167, %v13051, 0.0
  %v13468 = vadd.f32 %v13466, %v13467
  %v13469 = vsel %vm13167, %v13052, 0.0
  %v13470 = vadd.f32 %v13468, %v13469
  %v13471 = vsel %vm13167, %v13053, 0.0
  %v13472 = vadd.f32 %v13470, %v13471
  %v13473 = vsel %vm13167, %v13054, 0.0
  %v13474 = vadd.f32 %v13472, %v13473
  %v13475 = vsel %vm13167, %v13055, 0.0
  %v13476 = vadd.f32 %v13474, %v13475
  %v13477 = vsel %vm13167, %v13056, 0.0
  %v13478 = vadd.f32 %v13476, %v13477
  %v13479 = vsel %vm13167, %v13057, 0.0
  %v13480 = vadd.f32 %v13478, %v13479
  %v13481 = vsel %vm13167, %v13058, 0.0
  %v13482 = vadd.f32 %v13480, %v13481
  %v13483 = vsel %vm13167, %v13059, 0.0
  %v13484 = vadd.f32 %v13482, %v13483
  %v13485 = vsel %vm13167, %v13060, 0.0
  %v13486 = vadd.f32 %v13484, %v13485
  %v13487 = vsel %vm13167, %v13061, 0.0
  %v13488 = vadd.f32 %v13486, %v13487
  %v13489 = vsel %vm13167, %v13062, 0.0
  %v13490 = vadd.f32 %v13488, %v13489
  %v13491 = vsel %vm13167, %v13063, 0.0
  %v13492 = vadd.f32 %v13490, %v13491
  %v13493 = vsel %vm13167, %v13064, 0.0
  %v13494 = vadd.f32 %v13492, %v13493
  %v13495 = vsel %vm13167, %v13065, 0.0
  %v13496 = vadd.f32 %v13494, %v13495
  %v13497 = vsel %vm13167, %v13066, 0.0
  %v13498 = vadd.f32 %v13496, %v13497
  %v13499 = vsel %vm13167, %v13067, 0.0
  %v13500 = vadd.f32 %v13498, %v13499
  %v13501 = vsel %vm13167, %v13068, 0.0
  %v13502 = vadd.f32 %v13500, %v13501
  %v13503 = vsel %vm13167, %v13069, 0.0
  %v13504 = vadd.f32 %v13502, %v13503
  %v13505 = vsel %vm13167, %v13070, 0.0
  %v13506 = vadd.f32 %v13504, %v13505
  %v13507 = vrot.slane %v13506, 4
  %v13508 = vadd.f32 %v13506, %v13507
  %v13509 = vrot.slane %v13508, 2
  %v13510 = vadd.f32 %v13508, %v13509
  %v13511 = vrot.slane %v13510, 1
  %v13512 = vadd.f32 %v13510, %v13511
  %v13513 = vsel %vm13167, %v13071, 0.0
  %v13514 = vsel %vm13167, %v13072, 0.0
  %v13515 = vadd.f32 %v13513, %v13514
  %v13516 = vsel %vm13167, %v13073, 0.0
  %v13517 = vadd.f32 %v13515, %v13516
  %v13518 = vsel %vm13167, %v13074, 0.0
  %v13519 = vadd.f32 %v13517, %v13518
  %v13520 = vsel %vm13167, %v13075, 0.0
  %v13521 = vadd.f32 %v13519, %v13520
  %v13522 = vsel %vm13167, %v13076, 0.0
  %v13523 = vadd.f32 %v13521, %v13522
  %v13524 = vsel %vm13167, %v13077, 0.0
  %v13525 = vadd.f32 %v13523, %v13524
  %v13526 = vsel %vm13167, %v13078, 0.0
  %v13527 = vadd.f32 %v13525, %v13526
  %v13528 = vsel %vm13167, %v13079, 0.0
  %v13529 = vadd.f32 %v13527, %v13528
  %v13530 = vsel %vm13167, %v13080, 0.0
  %v13531 = vadd.f32 %v13529, %v13530
  %v13532 = vsel %vm13167, %v13081, 0.0
  %v13533 = vadd.f32 %v13531, %v13532
  %v13534 = vsel %vm13167, %v13082, 0.0
  %v13535 = vadd.f32 %v13533, %v13534
  %v13536 = vsel %vm13167, %v13083, 0.0
  %v13537 = vadd.f32 %v13535, %v13536
  %v13538 = vsel %vm13167, %v13084, 0.0
  %v13539 = vadd.f32 %v13537, %v13538
  %v13540 = vsel %vm13167, %v13085, 0.0
  %v13541 = vadd.f32 %v13539, %v13540
  %v13542 = vsel %vm13167, %v13086, 0.0
  %v13543 = vadd.f32 %v13541, %v13542
  %v13544 = vsel %vm13167, %v13087, 0.0
  %v13545 = vadd.f32 %v13543, %v13544
  %v13546 = vsel %vm13167, %v13088, 0.0
  %v13547 = vadd.f32 %v13545, %v13546
  %v13548 = vsel %vm13167, %v13089, 0.0
  %v13549 = vadd.f32 %v13547, %v13548
  %v13550 = vsel %vm13167, %v13090, 0.0
  %v13551 = vadd.f32 %v13549, %v13550
  %v13552 = vsel %vm13167, %v13091, 0.0
  %v13553 = vadd.f32 %v13551, %v13552
  %v13554 = vsel %vm13167, %v13092, 0.0
  %v13555 = vadd.f32 %v13553, %v13554
  %v13556 = vsel %vm13167, %v13093, 0.0
  %v13557 = vadd.f32 %v13555, %v13556
  %v13558 = vsel %vm13167, %v13094, 0.0
  %v13559 = vadd.f32 %v13557, %v13558
  %v13560 = vsel %vm13167, %v13095, 0.0
  %v13561 = vadd.f32 %v13559, %v13560
  %v13562 = vsel %vm13167, %v13096, 0.0
  %v13563 = vadd.f32 %v13561, %v13562
  %v13564 = vsel %vm13167, %v13097, 0.0
  %v13565 = vadd.f32 %v13563, %v13564
  %v13566 = vsel %vm13167, %v13098, 0.0
  %v13567 = vadd.f32 %v13565, %v13566
  %v13568 = vsel %vm13167, %v13099, 0.0
  %v13569 = vadd.f32 %v13567, %v13568
  %v13570 = vsel %vm13167, %v13100, 0.0
  %v13571 = vadd.f32 %v13569, %v13570
  %v13572 = vsel %vm13167, %v13101, 0.0
  %v13573 = vadd.f32 %v13571, %v13572
  %v13574 = vsel %vm13167, %v13102, 0.0
  %v13575 = vadd.f32 %v13573, %v13574
  %v13576 = vrot.slane %v13575, 4
  %v13577 = vadd.f32 %v13575, %v13576
  %v13578 = vrot.slane %v13577, 2
  %v13579 = vadd.f32 %v13577, %v13578
  %v13580 = vrot.slane %v13579, 1
  %v13581 = vadd.f32 %v13579, %v13580
  %v13582 = vsel %vm13167, %v13103, 0.0
  %v13583 = vsel %vm13167, %v13104, 0.0
  %v13584 = vadd.f32 %v13582, %v13583
  %v13585 = vsel %vm13167, %v13105, 0.0
  %v13586 = vadd.f32 %v13584, %v13585
  %v13587 = vsel %vm13167, %v13106, 0.0
  %v13588 = vadd.f32 %v13586, %v13587
  %v13589 = vsel %vm13167, %v13107, 0.0
  %v13590 = vadd.f32 %v13588, %v13589
  %v13591 = vsel %vm13167, %v13108, 0.0
  %v13592 = vadd.f32 %v13590, %v13591
  %v13593 = vsel %vm13167, %v13109, 0.0
  %v13594 = vadd.f32 %v13592, %v13593
  %v13595 = vsel %vm13167, %v13110, 0.0
  %v13596 = vadd.f32 %v13594, %v13595
  %v13597 = vsel %vm13167, %v13111, 0.0
  %v13598 = vadd.f32 %v13596, %v13597
  %v13599 = vsel %vm13167, %v13112, 0.0
  %v13600 = vadd.f32 %v13598, %v13599
  %v13601 = vsel %vm13167, %v13113, 0.0
  %v13602 = vadd.f32 %v13600, %v13601
  %v13603 = vsel %vm13167, %v13114, 0.0
  %v13604 = vadd.f32 %v13602, %v13603
  %v13605 = vsel %vm13167, %v13115, 0.0
  %v13606 = vadd.f32 %v13604, %v13605
  %v13607 = vsel %vm13167, %v13116, 0.0
  %v13608 = vadd.f32 %v13606, %v13607
  %v13609 = vsel %vm13167, %v13117, 0.0
  %v13610 = vadd.f32 %v13608, %v13609
  %v13611 = vsel %vm13167, %v13118, 0.0
  %v13612 = vadd.f32 %v13610, %v13611
  %v13613 = vsel %vm13167, %v13119, 0.0
  %v13614 = vadd.f32 %v13612, %v13613
  %v13615 = vsel %vm13167, %v13120, 0.0
  %v13616 = vadd.f32 %v13614, %v13615
  %v13617 = vsel %vm13167, %v13121, 0.0
  %v13618 = vadd.f32 %v13616, %v13617
  %v13619 = vsel %vm13167, %v13122, 0.0
  %v13620 = vadd.f32 %v13618, %v13619
  %v13621 = vsel %vm13167, %v13123, 0.0
  %v13622 = vadd.f32 %v13620, %v13621
  %v13623 = vsel %vm13167, %v13124, 0.0
  %v13624 = vadd.f32 %v13622, %v13623
  %v13625 = vsel %vm13167, %v13125, 0.0
  %v13626 = vadd.f32 %v13624, %v13625
  %v13627 = vsel %vm13167, %v13126, 0.0
  %v13628 = vadd.f32 %v13626, %v13627
  %v13629 = vsel %vm13167, %v13127, 0.0
  %v13630 = vadd.f32 %v13628, %v13629
  %v13631 = vsel %vm13167, %v13128, 0.0
  %v13632 = vadd.f32 %v13630, %v13631
  %v13633 = vsel %vm13167, %v13129, 0.0
  %v13634 = vadd.f32 %v13632, %v13633
  %v13635 = vsel %vm13167, %v13130, 0.0
  %v13636 = vadd.f32 %v13634, %v13635
  %v13637 = vsel %vm13167, %v13131, 0.0
  %v13638 = vadd.f32 %v13636, %v13637
  %v13639 = vsel %vm13167, %v13132, 0.0
  %v13640 = vadd.f32 %v13638, %v13639
  %v13641 = vsel %vm13167, %v13133, 0.0
  %v13642 = vadd.f32 %v13640, %v13641
  %v13643 = vsel %vm13167, %v13134, 0.0
  %v13644 = vadd.f32 %v13642, %v13643
  %v13645 = vrot.slane %v13644, 4
  %v13646 = vadd.f32 %v13644, %v13645
  %v13647 = vrot.slane %v13646, 2
  %v13648 = vadd.f32 %v13646, %v13647
  %v13649 = vrot.slane %v13648, 1
  %v13650 = vadd.f32 %v13648, %v13649
  %v13651 = vsel %vm13167, %v13135, 0.0
  %v13652 = vsel %vm13167, %v13136, 0.0
  %v13653 = vadd.f32 %v13651, %v13652
  %v13654 = vsel %vm13167, %v13137, 0.0
  %v13655 = vadd.f32 %v13653, %v13654
  %v13656 = vsel %vm13167, %v13138, 0.0
  %v13657 = vadd.f32 %v13655, %v13656
  %v13658 = vsel %vm13167, %v13139, 0.0
  %v13659 = vadd.f32 %v13657, %v13658
  %v13660 = vsel %vm13167, %v13140, 0.0
  %v13661 = vadd.f32 %v13659, %v13660
  %v13662 = vsel %vm13167, %v13141, 0.0
  %v13663 = vadd.f32 %v13661, %v13662
  %v13664 = vsel %vm13167, %v13142, 0.0
  %v13665 = vadd.f32 %v13663, %v13664
  %v13666 = vsel %vm13167, %v13143, 0.0
  %v13667 = vadd.f32 %v13665, %v13666
  %v13668 = vsel %vm13167, %v13144, 0.0
  %v13669 = vadd.f32 %v13667, %v13668
  %v13670 = vsel %vm13167, %v13145, 0.0
  %v13671 = vadd.f32 %v13669, %v13670
  %v13672 = vsel %vm13167, %v13146, 0.0
  %v13673 = vadd.f32 %v13671, %v13672
  %v13674 = vsel %vm13167, %v13147, 0.0
  %v13675 = vadd.f32 %v13673, %v13674
  %v13676 = vsel %vm13167, %v13148, 0.0
  %v13677 = vadd.f32 %v13675, %v13676
  %v13678 = vsel %vm13167, %v13149, 0.0
  %v13679 = vadd.f32 %v13677, %v13678
  %v13680 = vsel %vm13167, %v13150, 0.0
  %v13681 = vadd.f32 %v13679, %v13680
  %v13682 = vsel %vm13167, %v13151, 0.0
  %v13683 = vadd.f32 %v13681, %v13682
  %v13684 = vsel %vm13167, %v13152, 0.0
  %v13685 = vadd.f32 %v13683, %v13684
  %v13686 = vsel %vm13167, %v13153, 0.0
  %v13687 = vadd.f32 %v13685, %v13686
  %v13688 = vsel %vm13167, %v13154, 0.0
  %v13689 = vadd.f32 %v13687, %v13688
  %v13690 = vsel %vm13167, %v13155, 0.0
  %v13691 = vadd.f32 %v13689, %v13690
  %v13692 = vsel %vm13167, %v13156, 0.0
  %v13693 = vadd.f32 %v13691, %v13692
  %v13694 = vsel %vm13167, %v13157, 0.0
  %v13695 = vadd.f32 %v13693, %v13694
  %v13696 = vsel %vm13167, %v13158, 0.0
  %v13697 = vadd.f32 %v13695, %v13696
  %v13698 = vsel %vm13167, %v13159, 0.0
  %v13699 = vadd.f32 %v13697, %v13698
  %v13700 = vsel %vm13167, %v13160, 0.0
  %v13701 = vadd.f32 %v13699, %v13700
  %v13702 = vsel %vm13167, %v13161, 0.0
  %v13703 = vadd.f32 %v13701, %v13702
  %v13704 = vsel %vm13167, %v13162, 0.0
  %v13705 = vadd.f32 %v13703, %v13704
  %v13706 = vsel %vm13167, %v13163, 0.0
  %v13707 = vadd.f32 %v13705, %v13706
  %v13708 = vsel %vm13167, %v13164, 0.0
  %v13709 = vadd.f32 %v13707, %v13708
  %v13710 = vsel %vm13167, %v13165, 0.0
  %v13711 = vadd.f32 %v13709, %v13710
  %v13712 = vsel %vm13167, %v13166, 0.0
  %v13713 = vadd.f32 %v13711, %v13712
  %v13714 = vrot.slane %v13713, 4
  %v13715 = vadd.f32 %v13713, %v13714
  %v13716 = vrot.slane %v13715, 2
  %v13717 = vadd.f32 %v13715, %v13716
  %v13718 = vrot.slane %v13717, 1
  %v13719 = vadd.f32 %v13717, %v13718
  %v13720 = vld [vmem:[%s3] sm:$0xff]
  %v13721 = vld [vmem:[%s3 + $0x8] sm:$0xff]
  %v13722 = vld [vmem:[%s3 + $0x10] sm:$0xff]
  %v13723 = vld [vmem:[%s3 + $0x18] sm:$0xff]
  %v13724 = vld [vmem:[%s4] sm:$0x1]
  %v13726 = vlaneseq
  %v13727 = vshrl.u32 %v13726, 7
  %v13728 = vsub.s32 0, %v13727
  %v13729 = vrot.slane %v13724, %v13728
  %vm13739 = vcmask 1041409
  %v13740 = vsel %vm13739, %v13305, %v13236
  %vm13741 = vcmask 1042434
  %v13742 = vsel %vm13741, %v13374, %v13740
  %vm13743 = vcmask 1043459
  %v13744 = vsel %vm13743, %v13443, %v13742
  %vm13745 = vcmask 1044484
  %v13746 = vsel %vm13745, %v13512, %v13744
  %vm13747 = vcmask 1045509
  %v13748 = vsel %vm13747, %v13581, %v13746
  %vm13749 = vcmask 1046534
  %v13750 = vsel %vm13749, %v13650, %v13748
  %vm13751 = vcmask 1047559
  %v13752 = vsel %vm13751, %v13719, %v13750
  %v13753 = vsel %vm13167, %v13752, 0
  %13755 = vmatprep.subr.mxu0 0.0
  %13756 = vmatpush1.msra.mxu0 0.0
  %13757 = vmatprep.subr.mxu0 0.0
  %13758 = vmatpush1.msra.mxu0 0.0
  %13759 = vmatprep.subr.mxu0 0.0
  %13760 = vmatpush1.msra.mxu0 0.0
  %13761 = vmatprep.subr.mxu0 0.0
  %13762 = vmatpush1.msra.mxu0 0.0
  %13763 = vmatprep.subr.mxu0 0.0
  %13764 = vmatpush1.msra.mxu0 0.0
  %13765 = vmatprep.subr.mxu0 0.0
  %13766 = vmatpush1.msra.mxu0 0.0
  %13767 = vmatprep.subr.mxu0 0.0
  %13768 = vmatpush1.msra.mxu0 0.0
  %13769 = vmatprep.subr.mxu0 0.0
  %13770 = vmatpush1.msra.mxu0 0.0
  %13771 = vmatprep.subr.mxu0 0.0
  %13772 = vmatpush1.msra.mxu0 0.0
  %13773 = vmatprep.subr.mxu0 0.0
  %13774 = vmatpush1.msra.mxu0 0.0
  %13775 = vmatprep.subr.mxu0 0.0
  %13776 = vmatpush1.msra.mxu0 0.0
  %13777 = vmatprep.subr.mxu0 0.0
  %13778 = vmatpush1.msra.mxu0 0.0
  %13779 = vmatprep.subr.mxu0 0.0
  %13780 = vmatpush1.msra.mxu0 %v13723
  %13781 = vmatprep.subr.mxu0 0.0
  %13782 = vmatpush1.msra.mxu0 %v13722
  %13783 = vmatprep.subr.mxu0 0.0
  %13784 = vmatpush1.msra.mxu0 %v13721
  %13785 = vmatprep.subr.mxu0 0.0
  %13786 = vmatpush1.msra.mxu0 %v13720
  %13787 = vmatprep.subr.mxu0 0.0
  %13788 = vmatpush2.msra.mxu0 0.0
  %13789 = vmatprep.subr.mxu0 0.0
  %13790 = vmatpush2.msra.mxu0 0.0
  %13791 = vmatprep.subr.mxu0 0.0
  %13792 = vmatpush2.msra.mxu0 0.0
  %13793 = vmatprep.subr.mxu0 0.0
  %13794 = vmatpush2.msra.mxu0 0.0
  %13795 = vmatprep.subr.mxu0 0.0
  %13796 = vmatpush2.msra.mxu0 0.0
  %13797 = vmatprep.subr.mxu0 0.0
  %13798 = vmatpush2.msra.mxu0 0.0
  %13799 = vmatprep.subr.mxu0 0.0
  %13800 = vmatpush2.msra.mxu0 0.0
  %13801 = vmatprep.subr.mxu0 0.0
  %13802 = vmatpush2.msra.mxu0 0.0
  %13803 = vmatprep.subr.mxu0 0.0
  %13804 = vmatpush2.msra.mxu0 0.0
  %13805 = vmatprep.subr.mxu0 0.0
  %13806 = vmatpush2.msra.mxu0 0.0
  %13807 = vmatprep.subr.mxu0 0.0
  %13808 = vmatpush2.msra.mxu0 0.0
  %13809 = vmatprep.subr.mxu0 0.0
  %13810 = vmatpush2.msra.mxu0 0.0
  %13811 = vmatprep.subr.mxu0 0.0
  %13812 = vmatpush2.msra.mxu0 0.0
  %13813 = vmatprep.subr.mxu0 0.0
  %13814 = vmatpush2.msra.mxu0 0.0
  %13815 = vmatprep.subr.mxu0 0.0
  %13816 = vmatpush2.msra.mxu0 0.0
  %13817 = vmatprep.subr.mxu0 0.0
  %13818 = vmatpush2.msra.mxu0 0.0
  %13819 = vmatprep.mubr.f32.mxu0 0.0
  %13820 = vmatmul.mubr.f32.gmra.mxu0 %v13753
  %v13821 = vpop.f32.mrf.mxu0
  %v13822 = vadd.f32 %v13729, %v13821
  %v13823 = vpop.f32.mrf.mxu0
  %13824 = vdwg.mxu0
  %13825 = vst [vmem:[%s5] sm:$0xff] %v13822
  // Predicated region
  $region22: #{base_classifier_forward.1} parent=0 // pred_check
    _
  $region23: #{base_classifier_forward.1} parent=0 // pred_check_branch
    %13827 = sbr.rel (0) target = $region25
  $region24: #{base_classifier_forward.1} parent=0 // pred_region
    _
  $region25: #{base_classifier_forward.1} parent=0 // pred_fallthru
    _
  // Predicated region
  $region26: #{base_classifier_forward.1} parent=0 // pred_check
    _
  $region27: #{base_classifier_forward.1} parent=0 // pred_check_branch
    %13829 = sbr.rel (0) target = $region29
  $region28: #{base_classifier_forward.1} parent=0 // pred_region
    _
  $region29: #{base_classifier_forward.1} parent=0 // pred_fallthru
    _

</llo_original>
